<compile_context>
chip_gen: v5e
topology: v5e:2x2
jax: 0.10.0
libtpu: 0.0.40
codegen_flags: <defaults>
</compile_context>

<pallas_src>
import functools
import math

import jax
import jax.numpy as jnp
from jax.experimental import pallas as pl
from jax.experimental.pallas import tpu as pltpu


_GELU_C = math.sqrt(2.0 / math.pi)
_HIGH = jax.lax.Precision.HIGHEST


def _gelu_tanh(x):
    # TODO(synk): PyTorch nn.GELU() defaults to the exact erf-based GELU; the
    # tanh approximation (max abs err ~3e-4) is used here so the nonlinearity
    # lowers onto the EUP cleanly. The pure-JAX reference uses the same form.
    return 0.5 * x * (1.0 + jnp.tanh(_GELU_C * (x + 0.044715 * x * x * x)))


def _layernorm(t, gamma, beta, eps):
    mu = jnp.mean(t, axis=-1, keepdims=True)
    var = jnp.mean((t - mu) ** 2, axis=-1, keepdims=True)
    return (t - mu) * jax.lax.rsqrt(var + eps) * gamma + beta


def block_kernel(x_ref, g1_ref, b1_ref, wq_ref, wk_ref, wv_ref, wp_ref, bp_ref,
                 g2_ref, b2_ref, w1_ref, bf1_ref, w2_ref, bf2_ref, o_ref,
                 *, num_heads, head_dim, eps):
    # x_ref block: (1, N, D) for one batch element.
    x = x_ref[0].astype(jnp.float32)                       # (N, D)
    scale = float(head_dim) ** -0.5

    # --- LayerNorm 1 ---
    xn = _layernorm(x, g1_ref[...], b1_ref[...], eps)      # (N, D)

    # --- Q / K / V projections (qkv_bias=False, matches module default) ---
    q = jnp.dot(xn, wq_ref[...], preferred_element_type=jnp.float32,
                precision=_HIGH)
    k = jnp.dot(xn, wk_ref[...], preferred_element_type=jnp.float32,
                precision=_HIGH)
    v = jnp.dot(xn, wv_ref[...], preferred_element_type=jnp.float32,
                precision=_HIGH)

    # --- per-head attention, fused with the output projection ---
    attn_out = jnp.zeros(x.shape, jnp.float32)
    for h in range(num_heads):                             # static unrolled loop
        lo = h * head_dim
        qh = q[:, lo:lo + head_dim]                        # (N, Hd) lane-aligned
        kh = k[:, lo:lo + head_dim]
        vh = v[:, lo:lo + head_dim]
        # scores = q @ k^T  (contract the head dim of both; no explicit transpose)
        s = jax.lax.dot_general(qh, kh, (((1,), (1,)), ((), ())),
                                preferred_element_type=jnp.float32,
                                precision=_HIGH) * scale   # (N, N)
        s = s - jnp.max(s, axis=-1, keepdims=True)
        p = jnp.exp(s)
        p = p / jnp.sum(p, axis=-1, keepdims=True)
        oh = jnp.dot(p, vh, preferred_element_type=jnp.float32,
                     precision=_HIGH)                      # (N, Hd)
        # concat-then-proj == sum over heads of (o_h @ Wp[rows of head h])
        attn_out = attn_out + jnp.dot(oh, wp_ref[lo:lo + head_dim, :],
                                      preferred_element_type=jnp.float32,
                                      precision=_HIGH)
    attn_out = attn_out + bp_ref[...]

    # --- first residual ---
    y = x + attn_out

    # --- LayerNorm 2 ---
    yn = _layernorm(y, g2_ref[...], b2_ref[...], eps)

    # --- MLP: fc1 -> GELU -> fc2 ---
    h1 = jnp.dot(yn, w1_ref[...], preferred_element_type=jnp.float32,
                 precision=_HIGH) + bf1_ref[...]
    h1 = _gelu_tanh(h1)
    m = jnp.dot(h1, w2_ref[...], preferred_element_type=jnp.float32,
                precision=_HIGH) + bf2_ref[...]

    # --- second residual + store (single cast at the store boundary) ---
    o_ref[0] = (y + m).astype(o_ref.dtype)


def block_forward(x, params, *, num_heads, eps=1e-5):
    """x: (B, N, D). params: PyTorch-layout weights. Returns (B, N, D)."""
    B, N, D = x.shape
    Hd = D // num_heads
    Dh = params["w_fc1"].shape[0]                           # mlp hidden dim

    # Pre-split / pre-transpose weights -> kernel does plain (in, out) matmuls.
    w_qkv = params["w_qkv"]                                 # (3D, D) torch layout
    wq = jnp.transpose(w_qkv[0:D, :])                       # (D, D)
    wk = jnp.transpose(w_qkv[D:2 * D, :])                   # (D, D)
    wv = jnp.transpose(w_qkv[2 * D:3 * D, :])               # (D, D)
    wp = jnp.transpose(params["w_proj"])                    # (D, D)
    w1 = jnp.transpose(params["w_fc1"])                     # (D, Dh)
    w2 = jnp.transpose(params["w_fc2"])                     # (Dh, D)

    g1 = params["g1"].reshape(1, D)
    b1 = params["b1"].reshape(1, D)
    g2 = params["g2"].reshape(1, D)
    b2 = params["b2"].reshape(1, D)
    bp = params["b_proj"].reshape(1, D)
    bf1 = params["b_fc1"].reshape(1, Dh)
    bf2 = params["b_fc2"].reshape(1, D)

    kernel = functools.partial(block_kernel, num_heads=num_heads,
                               head_dim=Hd, eps=eps)

    def full_spec(shape):
        return pl.BlockSpec(shape, lambda b: (0,) * len(shape))

    # --- explicit VMEM budget (per-step slabs are double-buffered) ---
    elt = jnp.dtype(x.dtype).itemsize
    slab_bytes = N * D * elt                                # one (N, D) block
    weight_bytes = 4 * (4 * D * D + D * Dh + Dh * D + 5 * D + D + Dh)
    vmem_need = 2 * (2 * slab_bytes) + 2 * weight_bytes     # dbl-buffered io + w
    vmem_limit = int(min(96 * 2 ** 20, max(16 * 2 ** 20, 4 * vmem_need)))

    # --- advisory cost estimate for the XLA scheduler ---
    flops = (2 * B * N * D * 3 * D            # qkv
             + 4 * B * num_heads * N * N * Hd  # qk^T and attn@v
             + 2 * B * N * D * D               # output proj
             + 2 * B * N * D * Dh + 2 * B * N * Dh * D)  # mlp
    transcendentals = B * (num_heads * N * N + N * Dh)      # softmax exp + gelu
    bytes_accessed = elt * 2 * B * N * D + weight_bytes

    out = pl.pallas_call(
        kernel,
        out_shape=jax.ShapeDtypeStruct((B, N, D), x.dtype),
        grid=(B,),
        in_specs=[
            pl.BlockSpec((1, N, D), lambda b: (b, 0, 0)),   # x (per-batch slab)
            full_spec((1, D)),                              # g1
            full_spec((1, D)),                              # b1
            full_spec((D, D)),                              # Wq
            full_spec((D, D)),                              # Wk
            full_spec((D, D)),                              # Wv
            full_spec((D, D)),                              # Wproj
            full_spec((1, D)),                              # bproj
            full_spec((1, D)),                              # g2
            full_spec((1, D)),                              # b2
            full_spec((D, Dh)),                             # W fc1
            full_spec((1, Dh)),                             # b fc1
            full_spec((Dh, D)),                             # W fc2
            full_spec((1, D)),                              # b fc2
        ],
        out_specs=pl.BlockSpec((1, N, D), lambda b: (b, 0, 0)),
        compiler_params=pltpu.CompilerParams(
            dimension_semantics=("parallel",),
            vmem_limit_bytes=vmem_limit),
        cost_estimate=pl.CostEstimate(
            flops=int(flops),
            transcendentals=int(transcendentals),
            bytes_accessed=int(bytes_accessed)),
    )(x, g1, b1, wq, wk, wv, wp, bp, g2, b2, w1, bf1, w2, bf2)

    return out


def block_reference(x, params, *, num_heads, eps=1e-5):
    """Pure-JAX reference mirroring the PyTorch Block (eval mode)."""
    B, N, D = x.shape
    Hd = D // num_heads
    scale = Hd ** -0.5

    def ln(t, g, b):
        mu = jnp.mean(t, axis=-1, keepdims=True)
        var = jnp.mean((t - mu) ** 2, axis=-1, keepdims=True)
        return (t - mu) / jnp.sqrt(var + eps) * g + b

    h = ln(x, params["g1"], params["b1"])
    qkv = h @ params["w_qkv"].T                              # (B, N, 3D)
    qkv = qkv.reshape(B, N, 3, num_heads, Hd).transpose(2, 0, 3, 1, 4)
    q, k, v = qkv[0], qkv[1], qkv[2]                         # (B, H, N, Hd)
    attn = jnp.einsum("bhnd,bhmd->bhnm", q, k) * scale
    attn = jax.nn.softmax(attn, axis=-1)
    o = jnp.einsum("bhnm,bhmd->bhnd", attn, v)
    o = o.transpose(0, 2, 1, 3).reshape(B, N, D)
    o = o @ params["w_proj"].T + params["b_proj"]
    y = x + o

    h2 = ln(y, params["g2"], params["b2"])
    m = _gelu_tanh(h2 @ params["w_fc1"].T + params["b_fc1"])
    m = m @ params["w_fc2"].T + params["b_fc2"]
    return y + m


if __name__ == "__main__":
    # Small but TPU-friendly shapes: dim=256 (2x128 lanes), 2 heads of 128,
    # seq=8 (one sublane tile), batch=2 (even -> both v7x TensorCores busy).
    B, N, D = 2, 8, 256
    num_heads = 2
    mlp_ratio = 1.0
    Dh = int(D * mlp_ratio)

    key = jax.random.PRNGKey(0)
    keys = jax.random.split(key, 12)

    def rnd(k, shape, scale=1.0):
        return jax.random.normal(k, shape, dtype=jnp.float32) * scale

    x = rnd(keys[0], (B, N, D))

    params = dict(
        g1=1.0 + 0.1 * rnd(keys[1], (D,)),
        b1=0.05 * rnd(keys[2], (D,)),
        w_qkv=rnd(keys[3], (3 * D, D), D ** -0.5),
        w_proj=rnd(keys[4], (D, D), D ** -0.5),
        b_proj=0.05 * rnd(keys[5], (D,)),
        g2=1.0 + 0.1 * rnd(keys[6], (D,)),
        b2=0.05 * rnd(keys[7], (D,)),
        w_fc1=rnd(keys[8], (Dh, D), D ** -0.5),
        b_fc1=0.05 * rnd(keys[9], (Dh,)),
        w_fc2=rnd(keys[10], (D, Dh), Dh ** -0.5),
        b_fc2=0.05 * rnd(keys[11], (D,)),
    )

    out = block_forward(x, params, num_heads=num_heads)
    out = jax.block_until_ready(out)

    with jax.default_matmul_precision("highest"):
        ref = block_reference(x, params, num_heads=num_heads)
    ref = jax.block_until_ready(ref)

    assert out.shape == x.shape
    max_err = float(jnp.max(jnp.abs(out - ref)))
    assert jnp.allclose(out, ref, atol=2e-3, rtol=2e-3), \
        f"mismatch vs reference, max |err| = {max_err}"

    print("KERNEL_OK")
</pallas_src>

<mosaic_0001>
module attributes {stable_mosaic.version = 11 : i64} {
  func.func @block_kernel(%arg0: i32, %arg1: memref<1x8x256xf32, #tpu.memory_space<vmem>>, %arg2: memref<1x256xf32, #tpu.memory_space<vmem>>, %arg3: memref<1x256xf32, #tpu.memory_space<vmem>>, %arg4: memref<256x256xf32, #tpu.memory_space<vmem>>, %arg5: memref<256x256xf32, #tpu.memory_space<vmem>>, %arg6: memref<256x256xf32, #tpu.memory_space<vmem>>, %arg7: memref<256x256xf32, #tpu.memory_space<vmem>>, %arg8: memref<1x256xf32, #tpu.memory_space<vmem>>, %arg9: memref<1x256xf32, #tpu.memory_space<vmem>>, %arg10: memref<1x256xf32, #tpu.memory_space<vmem>>, %arg11: memref<256x256xf32, #tpu.memory_space<vmem>>, %arg12: memref<1x256xf32, #tpu.memory_space<vmem>>, %arg13: memref<256x256xf32, #tpu.memory_space<vmem>>, %arg14: memref<1x256xf32, #tpu.memory_space<vmem>>, %arg15: memref<1x8x256xf32, #tpu.memory_space<vmem>>) attributes {dimension_semantics = [#tpu.dimension_semantics<parallel>], iteration_bounds = array<i64: 2>, scalar_prefetch = 0 : i64, scratch_operands = 0 : i64, tpu.core_type = #tpu.core_type<tc>, window_params = [{transform_indices = @transform_0, window_bounds = array<i64: 1, 8, 256>}, {pipeline_mode = #tpu.pipeline_mode<synchronous>, transform_indices = @transform_1, window_bounds = array<i64: 1, 256>}, {pipeline_mode = #tpu.pipeline_mode<synchronous>, transform_indices = @transform_2, window_bounds = array<i64: 1, 256>}, {pipeline_mode = #tpu.pipeline_mode<synchronous>, transform_indices = @transform_3, window_bounds = array<i64: 256, 256>}, {pipeline_mode = #tpu.pipeline_mode<synchronous>, transform_indices = @transform_4, window_bounds = array<i64: 256, 256>}, {pipeline_mode = #tpu.pipeline_mode<synchronous>, transform_indices = @transform_5, window_bounds = array<i64: 256, 256>}, {pipeline_mode = #tpu.pipeline_mode<synchronous>, transform_indices = @transform_6, window_bounds = array<i64: 256, 256>}, {pipeline_mode = #tpu.pipeline_mode<synchronous>, transform_indices = @transform_7, window_bounds = array<i64: 1, 256>}, {pipeline_mode = #tpu.pipeline_mode<synchronous>, transform_indices = @transform_8, window_bounds = array<i64: 1, 256>}, {pipeline_mode = #tpu.pipeline_mode<synchronous>, transform_indices = @transform_9, window_bounds = array<i64: 1, 256>}, {pipeline_mode = #tpu.pipeline_mode<synchronous>, transform_indices = @transform_10, window_bounds = array<i64: 256, 256>}, {pipeline_mode = #tpu.pipeline_mode<synchronous>, transform_indices = @transform_11, window_bounds = array<i64: 1, 256>}, {pipeline_mode = #tpu.pipeline_mode<synchronous>, transform_indices = @transform_12, window_bounds = array<i64: 256, 256>}, {pipeline_mode = #tpu.pipeline_mode<synchronous>, transform_indices = @transform_13, window_bounds = array<i64: 1, 256>}, {transform_indices = @transform_14, window_bounds = array<i64: 1, 8, 256>}]} {
    %c0 = arith.constant 0 : index
    %c0_0 = arith.constant 0 : index
    %c0_1 = arith.constant 0 : index
    %0 = vector.load %arg1[%c0, %c0_0, %c0_1] : memref<1x8x256xf32, #tpu.memory_space<vmem>>, vector<1x8x256xf32>
    %1 = vector.shape_cast %0 : vector<1x8x256xf32> to vector<8x256xf32>
    %c0_2 = arith.constant 0 : index
    %c0_3 = arith.constant 0 : index
    %2 = vector.load %arg2[%c0_2, %c0_3] : memref<1x256xf32, #tpu.memory_space<vmem>>, vector<1x256xf32>
    %c0_4 = arith.constant 0 : index
    %c0_5 = arith.constant 0 : index
    %3 = vector.load %arg3[%c0_4, %c0_5] : memref<1x256xf32, #tpu.memory_space<vmem>>, vector<1x256xf32>
    %cst = arith.constant dense<0.000000e+00> : vector<8xf32>
    %4 = vector.multi_reduction <add>, %1, %cst [1] : vector<8x256xf32> to vector<8xf32>
    %5 = vector.shape_cast %4 : vector<8xf32> to vector<8x1xf32>
    %cst_6 = arith.constant 2.560000e+02 : f32
    %6 = vector.broadcast %cst_6 : f32 to vector<8x1xf32>
    %7 = arith.divf %5, %6 : vector<8x1xf32>
    %8 = vector.broadcast %7 : vector<8x1xf32> to vector<8x256xf32>
    %9 = arith.subf %1, %8 : vector<8x256xf32>
    %10 = arith.mulf %9, %9 : vector<8x256xf32>
    %cst_7 = arith.constant dense<0.000000e+00> : vector<8xf32>
    %11 = vector.multi_reduction <add>, %10, %cst_7 [1] : vector<8x256xf32> to vector<8xf32>
    %12 = vector.shape_cast %11 : vector<8xf32> to vector<8x1xf32>
    %cst_8 = arith.constant 2.560000e+02 : f32
    %13 = vector.broadcast %cst_8 : f32 to vector<8x1xf32>
    %14 = arith.divf %12, %13 : vector<8x1xf32>
    %15 = vector.broadcast %7 : vector<8x1xf32> to vector<8x256xf32>
    %16 = arith.subf %1, %15 : vector<8x256xf32>
    %cst_9 = arith.constant 9.99999974E-6 : f32
    %17 = vector.broadcast %cst_9 : f32 to vector<8x1xf32>
    %18 = arith.addf %14, %17 : vector<8x1xf32>
    %19 = math.rsqrt %18 : vector<8x1xf32>
    %20 = vector.broadcast %19 : vector<8x1xf32> to vector<8x256xf32>
    %21 = arith.mulf %16, %20 : vector<8x256xf32>
    %22 = vector.broadcast %2 : vector<1x256xf32> to vector<8x256xf32>
    %23 = arith.mulf %21, %22 : vector<8x256xf32>
    %24 = vector.broadcast %3 : vector<1x256xf32> to vector<8x256xf32>
    %25 = arith.addf %23, %24 : vector<8x256xf32>
    %c0_10 = arith.constant 0 : index
    %c0_11 = arith.constant 0 : index
    %26 = vector.load %arg4[%c0_10, %c0_11] : memref<256x256xf32, #tpu.memory_space<vmem>>, vector<256x256xf32>
    %cst_12 = arith.constant dense<0.000000e+00> : vector<8x256xf32>
    %27 = tpu.matmul %25, %26, %cst_12 {dimension_numbers = #tpu.dot_dimension_numbers<[1], [0], [0], [1], [0, 0, 1, 1], [], []>, precision = #tpu.contract_precision<fp32>} : vector<8x256xf32>, vector<256x256xf32>, vector<8x256xf32> -> vector<8x256xf32>
    %c0_13 = arith.constant 0 : index
    %c0_14 = arith.constant 0 : index
    %28 = vector.load %arg5[%c0_13, %c0_14] : memref<256x256xf32, #tpu.memory_space<vmem>>, vector<256x256xf32>
    %cst_15 = arith.constant dense<0.000000e+00> : vector<8x256xf32>
    %29 = tpu.matmul %25, %28, %cst_15 {dimension_numbers = #tpu.dot_dimension_numbers<[1], [0], [0], [1], [0, 0, 1, 1], [], []>, precision = #tpu.contract_precision<fp32>} : vector<8x256xf32>, vector<256x256xf32>, vector<8x256xf32> -> vector<8x256xf32>
    %c0_16 = arith.constant 0 : index
    %c0_17 = arith.constant 0 : index
    %30 = vector.load %arg6[%c0_16, %c0_17] : memref<256x256xf32, #tpu.memory_space<vmem>>, vector<256x256xf32>
    %cst_18 = arith.constant dense<0.000000e+00> : vector<8x256xf32>
    %31 = tpu.matmul %25, %30, %cst_18 {dimension_numbers = #tpu.dot_dimension_numbers<[1], [0], [0], [1], [0, 0, 1, 1], [], []>, precision = #tpu.contract_precision<fp32>} : vector<8x256xf32>, vector<256x256xf32>, vector<8x256xf32> -> vector<8x256xf32>
    %cst_19 = arith.constant 0.000000e+00 : f32
    %32 = vector.broadcast %cst_19 : f32 to vector<8x256xf32>
    %33 = vector.extract_strided_slice %27 {offsets = [0, 0], sizes = [8, 128], strides = [1, 1]} : vector<8x256xf32> to vector<8x128xf32>
    %34 = vector.extract_strided_slice %29 {offsets = [0, 0], sizes = [8, 128], strides = [1, 1]} : vector<8x256xf32> to vector<8x128xf32>
    %35 = vector.extract_strided_slice %31 {offsets = [0, 0], sizes = [8, 128], strides = [1, 1]} : vector<8x256xf32> to vector<8x128xf32>
    %cst_20 = arith.constant dense<0.000000e+00> : vector<8x8xf32>
    %36 = tpu.matmul %33, %34, %cst_20 {dimension_numbers = #tpu.dot_dimension_numbers<[1], [1], [0], [0], [0, 0, 1, 0], [], []>, precision = #tpu.contract_precision<fp32>} : vector<8x128xf32>, vector<8x128xf32>, vector<8x8xf32> -> vector<8x8xf32>
    %cst_21 = arith.constant 0.0883883461 : f32
    %37 = vector.broadcast %cst_21 : f32 to vector<8x8xf32>
    %38 = arith.mulf %36, %37 : vector<8x8xf32>
    %cst_22 = arith.constant dense<0xFF800000> : vector<8xf32>
    %39 = vector.multi_reduction <maximumf>, %38, %cst_22 [1] : vector<8x8xf32> to vector<8xf32>
    %40 = vector.shape_cast %39 : vector<8xf32> to vector<8x1xf32>
    %41 = vector.broadcast %40 : vector<8x1xf32> to vector<8x8xf32>
    %42 = arith.subf %38, %41 : vector<8x8xf32>
    %43 = math.exp %42 : vector<8x8xf32>
    %cst_23 = arith.constant dense<0.000000e+00> : vector<8xf32>
    %44 = vector.multi_reduction <add>, %43, %cst_23 [1] : vector<8x8xf32> to vector<8xf32>
    %45 = vector.shape_cast %44 : vector<8xf32> to vector<8x1xf32>
    %46 = vector.broadcast %45 : vector<8x1xf32> to vector<8x8xf32>
    %47 = arith.divf %43, %46 : vector<8x8xf32>
    %cst_24 = arith.constant dense<0.000000e+00> : vector<8x128xf32>
    %48 = tpu.matmul %47, %35, %cst_24 {dimension_numbers = #tpu.dot_dimension_numbers<[1], [0], [0], [1], [0, 0, 1, 1], [], []>, precision = #tpu.contract_precision<fp32>} : vector<8x8xf32>, vector<8x128xf32>, vector<8x128xf32> -> vector<8x128xf32>
    %c0_25 = arith.constant 0 : index
    %c0_26 = arith.constant 0 : index
    %49 = vector.load %arg7[%c0_25, %c0_26] : memref<256x256xf32, #tpu.memory_space<vmem>>, vector<128x256xf32>
    %cst_27 = arith.constant dense<0.000000e+00> : vector<8x256xf32>
    %50 = tpu.matmul %48, %49, %cst_27 {dimension_numbers = #tpu.dot_dimension_numbers<[1], [0], [0], [1], [0, 0, 1, 1], [], []>, precision = #tpu.contract_precision<fp32>} : vector<8x128xf32>, vector<128x256xf32>, vector<8x256xf32> -> vector<8x256xf32>
    %51 = arith.addf %32, %50 : vector<8x256xf32>
    %52 = vector.extract_strided_slice %27 {offsets = [0, 128], sizes = [8, 128], strides = [1, 1]} : vector<8x256xf32> to vector<8x128xf32>
    %53 = vector.extract_strided_slice %29 {offsets = [0, 128], sizes = [8, 128], strides = [1, 1]} : vector<8x256xf32> to vector<8x128xf32>
    %54 = vector.extract_strided_slice %31 {offsets = [0, 128], sizes = [8, 128], strides = [1, 1]} : vector<8x256xf32> to vector<8x128xf32>
    %cst_28 = arith.constant dense<0.000000e+00> : vector<8x8xf32>
    %55 = tpu.matmul %52, %53, %cst_28 {dimension_numbers = #tpu.dot_dimension_numbers<[1], [1], [0], [0], [0, 0, 1, 0], [], []>, precision = #tpu.contract_precision<fp32>} : vector<8x128xf32>, vector<8x128xf32>, vector<8x8xf32> -> vector<8x8xf32>
    %cst_29 = arith.constant 0.0883883461 : f32
    %56 = vector.broadcast %cst_29 : f32 to vector<8x8xf32>
    %57 = arith.mulf %55, %56 : vector<8x8xf32>
    %cst_30 = arith.constant dense<0xFF800000> : vector<8xf32>
    %58 = vector.multi_reduction <maximumf>, %57, %cst_30 [1] : vector<8x8xf32> to vector<8xf32>
    %59 = vector.shape_cast %58 : vector<8xf32> to vector<8x1xf32>
    %60 = vector.broadcast %59 : vector<8x1xf32> to vector<8x8xf32>
    %61 = arith.subf %57, %60 : vector<8x8xf32>
    %62 = math.exp %61 : vector<8x8xf32>
    %cst_31 = arith.constant dense<0.000000e+00> : vector<8xf32>
    %63 = vector.multi_reduction <add>, %62, %cst_31 [1] : vector<8x8xf32> to vector<8xf32>
    %64 = vector.shape_cast %63 : vector<8xf32> to vector<8x1xf32>
    %65 = vector.broadcast %64 : vector<8x1xf32> to vector<8x8xf32>
    %66 = arith.divf %62, %65 : vector<8x8xf32>
    %cst_32 = arith.constant dense<0.000000e+00> : vector<8x128xf32>
    %67 = tpu.matmul %66, %54, %cst_32 {dimension_numbers = #tpu.dot_dimension_numbers<[1], [0], [0], [1], [0, 0, 1, 1], [], []>, precision = #tpu.contract_precision<fp32>} : vector<8x8xf32>, vector<8x128xf32>, vector<8x128xf32> -> vector<8x128xf32>
    %c128 = arith.constant 128 : index
    %c0_33 = arith.constant 0 : index
    %68 = vector.load %arg7[%c128, %c0_33] : memref<256x256xf32, #tpu.memory_space<vmem>>, vector<128x256xf32>
    %cst_34 = arith.constant dense<0.000000e+00> : vector<8x256xf32>
    %69 = tpu.matmul %67, %68, %cst_34 {dimension_numbers = #tpu.dot_dimension_numbers<[1], [0], [0], [1], [0, 0, 1, 1], [], []>, precision = #tpu.contract_precision<fp32>} : vector<8x128xf32>, vector<128x256xf32>, vector<8x256xf32> -> vector<8x256xf32>
    %70 = arith.addf %51, %69 : vector<8x256xf32>
    %c0_35 = arith.constant 0 : index
    %c0_36 = arith.constant 0 : index
    %71 = vector.load %arg8[%c0_35, %c0_36] : memref<1x256xf32, #tpu.memory_space<vmem>>, vector<1x256xf32>
    %72 = vector.broadcast %71 : vector<1x256xf32> to vector<8x256xf32>
    %73 = arith.addf %70, %72 : vector<8x256xf32>
    %74 = arith.addf %1, %73 : vector<8x256xf32>
    %c0_37 = arith.constant 0 : index
    %c0_38 = arith.constant 0 : index
    %75 = vector.load %arg9[%c0_37, %c0_38] : memref<1x256xf32, #tpu.memory_space<vmem>>, vector<1x256xf32>
    %c0_39 = arith.constant 0 : index
    %c0_40 = arith.constant 0 : index
    %76 = vector.load %arg10[%c0_39, %c0_40] : memref<1x256xf32, #tpu.memory_space<vmem>>, vector<1x256xf32>
    %cst_41 = arith.constant dense<0.000000e+00> : vector<8xf32>
    %77 = vector.multi_reduction <add>, %74, %cst_41 [1] : vector<8x256xf32> to vector<8xf32>
    %78 = vector.shape_cast %77 : vector<8xf32> to vector<8x1xf32>
    %cst_42 = arith.constant 2.560000e+02 : f32
    %79 = vector.broadcast %cst_42 : f32 to vector<8x1xf32>
    %80 = arith.divf %78, %79 : vector<8x1xf32>
    %81 = vector.broadcast %80 : vector<8x1xf32> to vector<8x256xf32>
    %82 = arith.subf %74, %81 : vector<8x256xf32>
    %83 = arith.mulf %82, %82 : vector<8x256xf32>
    %cst_43 = arith.constant dense<0.000000e+00> : vector<8xf32>
    %84 = vector.multi_reduction <add>, %83, %cst_43 [1] : vector<8x256xf32> to vector<8xf32>
    %85 = vector.shape_cast %84 : vector<8xf32> to vector<8x1xf32>
    %cst_44 = arith.constant 2.560000e+02 : f32
    %86 = vector.broadcast %cst_44 : f32 to vector<8x1xf32>
    %87 = arith.divf %85, %86 : vector<8x1xf32>
    %88 = vector.broadcast %80 : vector<8x1xf32> to vector<8x256xf32>
    %89 = arith.subf %74, %88 : vector<8x256xf32>
    %cst_45 = arith.constant 9.99999974E-6 : f32
    %90 = vector.broadcast %cst_45 : f32 to vector<8x1xf32>
    %91 = arith.addf %87, %90 : vector<8x1xf32>
    %92 = math.rsqrt %91 : vector<8x1xf32>
    %93 = vector.broadcast %92 : vector<8x1xf32> to vector<8x256xf32>
    %94 = arith.mulf %89, %93 : vector<8x256xf32>
    %95 = vector.broadcast %75 : vector<1x256xf32> to vector<8x256xf32>
    %96 = arith.mulf %94, %95 : vector<8x256xf32>
    %97 = vector.broadcast %76 : vector<1x256xf32> to vector<8x256xf32>
    %98 = arith.addf %96, %97 : vector<8x256xf32>
    %c0_46 = arith.constant 0 : index
    %c0_47 = arith.constant 0 : index
    %99 = vector.load %arg11[%c0_46, %c0_47] : memref<256x256xf32, #tpu.memory_space<vmem>>, vector<256x256xf32>
    %cst_48 = arith.constant dense<0.000000e+00> : vector<8x256xf32>
    %100 = tpu.matmul %98, %99, %cst_48 {dimension_numbers = #tpu.dot_dimension_numbers<[1], [0], [0], [1], [0, 0, 1, 1], [], []>, precision = #tpu.contract_precision<fp32>} : vector<8x256xf32>, vector<256x256xf32>, vector<8x256xf32> -> vector<8x256xf32>
    %c0_49 = arith.constant 0 : index
    %c0_50 = arith.constant 0 : index
    %101 = vector.load %arg12[%c0_49, %c0_50] : memref<1x256xf32, #tpu.memory_space<vmem>>, vector<1x256xf32>
    %102 = vector.broadcast %101 : vector<1x256xf32> to vector<8x256xf32>
    %103 = arith.addf %100, %102 : vector<8x256xf32>
    %cst_51 = arith.constant 5.000000e-01 : f32
    %104 = vector.broadcast %cst_51 : f32 to vector<8x256xf32>
    %105 = arith.mulf %104, %103 : vector<8x256xf32>
    %cst_52 = arith.constant 4.471500e-02 : f32
    %106 = vector.broadcast %cst_52 : f32 to vector<8x256xf32>
    %107 = arith.mulf %106, %103 : vector<8x256xf32>
    %108 = arith.mulf %107, %103 : vector<8x256xf32>
    %109 = arith.mulf %108, %103 : vector<8x256xf32>
    %110 = arith.addf %103, %109 : vector<8x256xf32>
    %cst_53 = arith.constant 0.797884583 : f32
    %111 = vector.broadcast %cst_53 : f32 to vector<8x256xf32>
    %112 = arith.mulf %111, %110 : vector<8x256xf32>
    %113 = math.tanh %112 : vector<8x256xf32>
    %cst_54 = arith.constant 1.000000e+00 : f32
    %114 = vector.broadcast %cst_54 : f32 to vector<8x256xf32>
    %115 = arith.addf %114, %113 : vector<8x256xf32>
    %116 = arith.mulf %105, %115 : vector<8x256xf32>
    %c0_55 = arith.constant 0 : index
    %c0_56 = arith.constant 0 : index
    %117 = vector.load %arg13[%c0_55, %c0_56] : memref<256x256xf32, #tpu.memory_space<vmem>>, vector<256x256xf32>
    %cst_57 = arith.constant dense<0.000000e+00> : vector<8x256xf32>
    %118 = tpu.matmul %116, %117, %cst_57 {dimension_numbers = #tpu.dot_dimension_numbers<[1], [0], [0], [1], [0, 0, 1, 1], [], []>, precision = #tpu.contract_precision<fp32>} : vector<8x256xf32>, vector<256x256xf32>, vector<8x256xf32> -> vector<8x256xf32>
    %c0_58 = arith.constant 0 : index
    %c0_59 = arith.constant 0 : index
    %119 = vector.load %arg14[%c0_58, %c0_59] : memref<1x256xf32, #tpu.memory_space<vmem>>, vector<1x256xf32>
    %120 = vector.broadcast %119 : vector<1x256xf32> to vector<8x256xf32>
    %121 = arith.addf %118, %120 : vector<8x256xf32>
    %122 = arith.addf %74, %121 : vector<8x256xf32>
    %c0_60 = arith.constant 0 : index
    %c0_61 = arith.constant 0 : index
    %c0_62 = arith.constant 0 : index
    %123 = vector.load %arg15[%c0_60, %c0_61, %c0_62] : memref<1x8x256xf32, #tpu.memory_space<vmem>>, vector<1x8x256xf32>
    %124 = vector.shape_cast %123 : vector<1x8x256xf32> to vector<8x256xf32>
    %125 = vector.shape_cast %122 : vector<8x256xf32> to vector<1x8x256xf32>
    tpu.vector_store %arg15[%c0_60, %c0_61, %c0_62], %125 {strides = array<i32>} : memref<1x8x256xf32, #tpu.memory_space<vmem>>, vector<1x8x256xf32>,
    return
  }
  func.func @transform_0(%arg0: i32) -> (i32, i32, i32) {
    %c0_i32 = arith.constant 0 : i32
    %c0_i32_0 = arith.constant 0 : i32
    %c0_i32_1 = arith.constant 0 : i32
    return %arg0, %c0_i32, %c0_i32_0 : i32, i32, i32
  }
  func.func @transform_1(%arg0: i32) -> (i32, i32) {
    %c0_i32 = arith.constant 0 : i32
    %c0_i32_0 = arith.constant 0 : i32
    %c0_i32_1 = arith.constant 0 : i32
    return %c0_i32, %c0_i32_0 : i32, i32
  }
  func.func @transform_2(%arg0: i32) -> (i32, i32) {
    %c0_i32 = arith.constant 0 : i32
    %c0_i32_0 = arith.constant 0 : i32
    %c0_i32_1 = arith.constant 0 : i32
    return %c0_i32, %c0_i32_0 : i32, i32
  }
  func.func @transform_3(%arg0: i32) -> (i32, i32) {
    %c0_i32 = arith.constant 0 : i32
    %c0_i32_0 = arith.constant 0 : i32
    %c0_i32_1 = arith.constant 0 : i32
    return %c0_i32, %c0_i32_0 : i32, i32
  }
  func.func @transform_4(%arg0: i32) -> (i32, i32) {
    %c0_i32 = arith.constant 0 : i32
    %c0_i32_0 = arith.constant 0 : i32
    %c0_i32_1 = arith.constant 0 : i32
    return %c0_i32, %c0_i32_0 : i32, i32
  }
  func.func @transform_5(%arg0: i32) -> (i32, i32) {
    %c0_i32 = arith.constant 0 : i32
    %c0_i32_0 = arith.constant 0 : i32
    %c0_i32_1 = arith.constant 0 : i32
    return %c0_i32, %c0_i32_0 : i32, i32
  }
  func.func @transform_6(%arg0: i32) -> (i32, i32) {
    %c0_i32 = arith.constant 0 : i32
    %c0_i32_0 = arith.constant 0 : i32
    %c0_i32_1 = arith.constant 0 : i32
    return %c0_i32, %c0_i32_0 : i32, i32
  }
  func.func @transform_7(%arg0: i32) -> (i32, i32) {
    %c0_i32 = arith.constant 0 : i32
    %c0_i32_0 = arith.constant 0 : i32
    %c0_i32_1 = arith.constant 0 : i32
    return %c0_i32, %c0_i32_0 : i32, i32
  }
  func.func @transform_8(%arg0: i32) -> (i32, i32) {
    %c0_i32 = arith.constant 0 : i32
    %c0_i32_0 = arith.constant 0 : i32
    %c0_i32_1 = arith.constant 0 : i32
    return %c0_i32, %c0_i32_0 : i32, i32
  }
  func.func @transform_9(%arg0: i32) -> (i32, i32) {
    %c0_i32 = arith.constant 0 : i32
    %c0_i32_0 = arith.constant 0 : i32
    %c0_i32_1 = arith.constant 0 : i32
    return %c0_i32, %c0_i32_0 : i32, i32
  }
  func.func @transform_10(%arg0: i32) -> (i32, i32) {
    %c0_i32 = arith.constant 0 : i32
    %c0_i32_0 = arith.constant 0 : i32
    %c0_i32_1 = arith.constant 0 : i32
    return %c0_i32, %c0_i32_0 : i32, i32
  }
  func.func @transform_11(%arg0: i32) -> (i32, i32) {
    %c0_i32 = arith.constant 0 : i32
    %c0_i32_0 = arith.constant 0 : i32
    %c0_i32_1 = arith.constant 0 : i32
    return %c0_i32, %c0_i32_0 : i32, i32
  }
  func.func @transform_12(%arg0: i32) -> (i32, i32) {
    %c0_i32 = arith.constant 0 : i32
    %c0_i32_0 = arith.constant 0 : i32
    %c0_i32_1 = arith.constant 0 : i32
    return %c0_i32, %c0_i32_0 : i32, i32
  }
  func.func @transform_13(%arg0: i32) -> (i32, i32) {
    %c0_i32 = arith.constant 0 : i32
    %c0_i32_0 = arith.constant 0 : i32
    %c0_i32_1 = arith.constant 0 : i32
    return %c0_i32, %c0_i32_0 : i32, i32
  }
  func.func @transform_14(%arg0: i32) -> (i32, i32, i32) {
    %c0_i32 = arith.constant 0 : i32
    %c0_i32_0 = arith.constant 0 : i32
    %c0_i32_1 = arith.constant 0 : i32
    return %arg0, %c0_i32, %c0_i32_0 : i32, i32, i32
  }
}

</mosaic_0001>

<llo_original>
// kernel: tpu_custom_call.1
$region0: #{tpu_custom_call.1}
  #allocation0 [shape = 'u32[]', space=smem, size = 0x4, offset = 0x4, fixed_abs, tag = 'smem constant byte address 0x4 - core index']
  #allocation1 [shape = 'u32[72,128]{1,0:T(1,128)}', space=vmem, size = 0x9000, scoped, tag = 'internal scratch']
  %s0 = inlined_call_operand.hbm [shape: f32[2,8,256], index: 0, kind: input, shape index: {}]
  %s1 = inlined_call_operand.hbm [shape: f32[1,256], index: 1, kind: input, shape index: {}]
  %s2 = inlined_call_operand.hbm [shape: f32[1,256], index: 2, kind: input, shape index: {}]
  %s3 = inlined_call_operand.hbm [shape: f32[256,256], index: 3, kind: input, shape index: {}]
  %s4 = inlined_call_operand.hbm [shape: f32[256,256], index: 4, kind: input, shape index: {}]
  %s5 = inlined_call_operand.hbm [shape: f32[256,256], index: 5, kind: input, shape index: {}]
  %s6 = inlined_call_operand.hbm [shape: f32[256,256], index: 6, kind: input, shape index: {}]
  %s7 = inlined_call_operand.vmem [shape: f32[1,256], index: 7, kind: input, shape index: {}]
  %s8 = inlined_call_operand.vmem [shape: f32[1,256], index: 8, kind: input, shape index: {}]
  %s9 = inlined_call_operand.vmem [shape: f32[1,256], index: 9, kind: input, shape index: {}]
  %s10 = inlined_call_operand.hbm [shape: f32[256,256], index: 10, kind: input, shape index: {}]
  %s11 = inlined_call_operand.vmem [shape: f32[1,256], index: 11, kind: input, shape index: {}]
  %s12 = inlined_call_operand.hbm [shape: f32[256,256], index: 12, kind: input, shape index: {}]
  %s13 = inlined_call_operand.vmem [shape: f32[1,256], index: 13, kind: input, shape index: {}]
  %s14 = inlined_call_operand.hbm [shape: f32[2,8,256], index: 14, kind: output, shape index: {}]
  %s15 = sld [smem:[#allocation0]]
  $region125: #{tpu_custom_call.1} parent=0
    _
  %s17 = ssub.s32 1, %s15
  %s18 = scalar_select 0, %s17, %s15
  $region1: #{tpu_custom_call.1} parent=0
    #allocation2 [shape = 'u8[16384]{0}', space=vmem, size = 0x4000, scoped, tag = 'input window, operand 0']
    #allocation3 [shape = 's32[2]{0}', space=sflag, size = 0x8, scoped, tag = 'scoped memory for tpu_custom_call.1']
    #allocation4 [shape = 's32[2]{0}', space=sflag, size = 0x8, scoped, tag = 'scoped memory for tpu_custom_call.1']
    #allocation5 [shape = 'u8[1024]{0}', space=vmem, size = 0x400, scoped, tag = 'input window, operand 1, single buffered']
    #allocation6 [shape = 's32[1]{0}', space=sflag, size = 0x4, scoped, tag = 'scoped memory for tpu_custom_call.1']
    #allocation7 [shape = 'u8[1024]{0}', space=vmem, size = 0x400, scoped, tag = 'input window, operand 2, single buffered']
    #allocation8 [shape = 'u8[262144]{0}', space=vmem, size = 0x40000, scoped, tag = 'input window, operand 3, single buffered']
    #allocation9 [shape = 's32[1]{0}', space=sflag, size = 0x4, scoped, tag = 'scoped memory for tpu_custom_call.1']
    #allocation10 [shape = 'u8[262144]{0}', space=vmem, size = 0x40000, scoped, tag = 'input window, operand 4, single buffered']
    #allocation11 [shape = 'u8[262144]{0}', space=vmem, size = 0x40000, scoped, tag = 'input window, operand 5, single buffered']
    #allocation12 [shape = 's32[1]{0}', space=sflag, size = 0x4, scoped, tag = 'scoped memory for tpu_custom_call.1']
    #allocation13 [shape = 'u8[262144]{0}', space=vmem, size = 0x40000, scoped, tag = 'input window, operand 6, single buffered']
    #allocation14 [shape = 'u8[262144]{0}', space=vmem, size = 0x40000, scoped, tag = 'input window, operand 10, single buffered']
    #allocation15 [shape = 's32[1]{0}', space=sflag, size = 0x4, scoped, tag = 'scoped memory for tpu_custom_call.1']
    #allocation16 [shape = 'u8[262144]{0}', space=vmem, size = 0x40000, scoped, tag = 'input window, operand 12, single buffered']
    #allocation17 [shape = 'u8[16384]{0}', space=vmem, size = 0x4000, scoped, tag = 'output window, operand 0']
    %19 = vsyncpa [#allocation3], 0
    %s20 = scalar_lea.sflag [#allocation3], 1
    %21 = vsyncpa %s20, 0
    %22 = vsyncpa [#allocation6], 0
    %23 = vsyncpa [#allocation9], 0
    %24 = vsyncpa [#allocation12], 0
    %25 = vsyncpa [#allocation15], 0
    %26 = vsyncpa [#allocation4], 0
    %s27 = scalar_lea.sflag [#allocation4], 1
    %28 = vsyncpa %s27, 0
    loop: start=0, step=1, limit=4
    $region2: #{tpu_custom_call.1} parent=1 // loop_pre_header
      _
    $region3: #{tpu_custom_call.1} parent=1 // loop_header
      %s30 = sphi 0, %s34
      %p31 = scmp.ge.s32.totalorder %s30, 4
      %s40 = sphi 0, %s42
      %s43 = sphi 0, %s40
      %s44 = sphi 0, %s43
      %s60 = sphi 0, %s44
      %s64 = sphi 0, %s64
      %s66 = sphi 0, %s64
      %s67 = sphi 0, %s66
      %s81 = sphi 0, %s67
      %s85 = sphi 0, %s85
      %s87 = sphi 0, %s85
      %s88 = sphi 0, %s87
      %s102 = sphi 0, %s88
      %s106 = sphi 0, %s106
      %s108 = sphi 0, %s106
      %s109 = sphi 0, %s108
      %s123 = sphi 0, %s109
      %s127 = sphi 0, %s127
      %s129 = sphi 0, %s127
      %s130 = sphi 0, %s129
      %s144 = sphi 0, %s130
      %s148 = sphi 0, %s148
      %s150 = sphi 0, %s148
      %s151 = sphi 0, %s150
      %s165 = sphi 0, %s151
      %s169 = sphi 0, %s169
      %s171 = sphi 0, %s169
      %s172 = sphi 0, %s171
      %s186 = sphi 0, %s172
      %s190 = sphi 0, %s190
      %s192 = sphi 0, %s190
      %s193 = sphi 0, %s192
      %s207 = sphi 0, %s193
      %s211 = sphi 0, %s211
      %s213 = sphi 0, %s211
      %s214 = sphi 0, %s213
      %s228 = sphi 0, %s214
      %s232 = sphi 0, %s232
      %s234 = sphi 0, %s232
      %s235 = sphi 0, %s234
      %s249 = sphi 0, %s235
      %s253 = sphi 0, %s253
      %s255 = sphi 0, %s253
      %s256 = sphi 0, %s255
      %s270 = sphi 0, %s256
      %s274 = sphi 0, %s274
      %s276 = sphi 0, %s274
      %s277 = sphi 0, %s276
      %s291 = sphi 0, %s277
      %s295 = sphi 0, %s295
      %s297 = sphi 0, %s295
      %s298 = sphi 0, %s297
      %s312 = sphi 0, %s298
      %s316 = sphi 0, %s316
      %s318 = sphi 0, %s316
      %s319 = sphi 0, %s318
      %s333 = sphi 0, %s319
      %s339 = sphi 0, %s341
      %s342 = sphi 0, %s339
      %s343 = sphi 0, %s342
      %s359 = sphi 0, %s343
    $region4: #{tpu_custom_call.1} parent=1 // loop_header_branch
      %33 = sbr.rel (%p31) target = $region8
    $region5: #{tpu_custom_call.1} parent=1 // loop_body
      %s35 = ssub.s32 %s30, 1
      %s36 = ssub.s32 %s30, 2
      %s37 = sadd.s32 %s30, 1
      %s38 = ssub.s32 %s30, %s37
      %p39 = scmp.eq.s32.totalorder %s38, 0
      %s41 = sadd.s32 %s40, 1
      %s42 = scalar_select %p39, %s40, %s41
      %p45 = pneg %p39
      %p46 = scmp.eq.s32.totalorder %s30, 1
      %p47 = por %p45, %p46
      %p48 = scmp.ne.s32.totalorder %s40, %s43
      %p49 = scmp.eq.s32.totalorder %s30, 0
      %p50 = por %p48, %p49
      %p51 = scmp.ne.s32.totalorder %s40, %s43
      %p52 = scmp.eq.s32.totalorder %s35, 1
      %p53 = por %p51, %p52
      %p54 = scmp.ne.s32.totalorder %s43, %s44
      %p55 = scmp.eq.s32.totalorder %s35, 0
      %p56 = por %p54, %p55
      %p57 = scmp.ne.s32.totalorder %s43, %s44
      %p58 = scmp.eq.s32.totalorder %s36, 1
      %p59 = por %p57, %p58
      %p61 = scmp.ne.s32.totalorder %s44, %s60
      %p62 = scmp.eq.s32.totalorder %s36, 0
      %p63 = por %p61, %p62
      %s65 = sadd.s32 %s64, 1
      %p68 = scmp.eq.s32.totalorder %s30, 1
      %p69 = scmp.ne.s32.totalorder %s64, %s66
      %p70 = scmp.eq.s32.totalorder %s30, 0
      %p71 = por %p69, %p70
      %p72 = scmp.ne.s32.totalorder %s64, %s66
      %p73 = scmp.eq.s32.totalorder %s35, 1
      %p74 = por %p72, %p73
      %p75 = scmp.ne.s32.totalorder %s66, %s67
      %p76 = scmp.eq.s32.totalorder %s35, 0
      %p77 = por %p75, %p76
      %p78 = scmp.ne.s32.totalorder %s66, %s67
      %p79 = scmp.eq.s32.totalorder %s36, 1
      %p80 = por %p78, %p79
      %p82 = scmp.ne.s32.totalorder %s67, %s81
      %p83 = scmp.eq.s32.totalorder %s36, 0
      %p84 = por %p82, %p83
      %s86 = sadd.s32 %s85, 1
      %p89 = scmp.eq.s32.totalorder %s30, 1
      %p90 = scmp.ne.s32.totalorder %s85, %s87
      %p91 = scmp.eq.s32.totalorder %s30, 0
      %p92 = por %p90, %p91
      %p93 = scmp.ne.s32.totalorder %s85, %s87
      %p94 = scmp.eq.s32.totalorder %s35, 1
      %p95 = por %p93, %p94
      %p96 = scmp.ne.s32.totalorder %s87, %s88
      %p97 = scmp.eq.s32.totalorder %s35, 0
      %p98 = por %p96, %p97
      %p99 = scmp.ne.s32.totalorder %s87, %s88
      %p100 = scmp.eq.s32.totalorder %s36, 1
      %p101 = por %p99, %p100
      %p103 = scmp.ne.s32.totalorder %s88, %s102
      %p104 = scmp.eq.s32.totalorder %s36, 0
      %p105 = por %p103, %p104
      %s107 = sadd.s32 %s106, 1
      %p110 = scmp.eq.s32.totalorder %s30, 1
      %p111 = scmp.ne.s32.totalorder %s106, %s108
      %p112 = scmp.eq.s32.totalorder %s30, 0
      %p113 = por %p111, %p112
      %p114 = scmp.ne.s32.totalorder %s106, %s108
      %p115 = scmp.eq.s32.totalorder %s35, 1
      %p116 = por %p114, %p115
      %p117 = scmp.ne.s32.totalorder %s108, %s109
      %p118 = scmp.eq.s32.totalorder %s35, 0
      %p119 = por %p117, %p118
      %p120 = scmp.ne.s32.totalorder %s108, %s109
      %p121 = scmp.eq.s32.totalorder %s36, 1
      %p122 = por %p120, %p121
      %p124 = scmp.ne.s32.totalorder %s109, %s123
      %p125 = scmp.eq.s32.totalorder %s36, 0
      %p126 = por %p124, %p125
      %s128 = sadd.s32 %s127, 1
      %p131 = scmp.eq.s32.totalorder %s30, 1
      %p132 = scmp.ne.s32.totalorder %s127, %s129
      %p133 = scmp.eq.s32.totalorder %s30, 0
      %p134 = por %p132, %p133
      %p135 = scmp.ne.s32.totalorder %s127, %s129
      %p136 = scmp.eq.s32.totalorder %s35, 1
      %p137 = por %p135, %p136
      %p138 = scmp.ne.s32.totalorder %s129, %s130
      %p139 = scmp.eq.s32.totalorder %s35, 0
      %p140 = por %p138, %p139
      %p141 = scmp.ne.s32.totalorder %s129, %s130
      %p142 = scmp.eq.s32.totalorder %s36, 1
      %p143 = por %p141, %p142
      %p145 = scmp.ne.s32.totalorder %s130, %s144
      %p146 = scmp.eq.s32.totalorder %s36, 0
      %p147 = por %p145, %p146
      %s149 = sadd.s32 %s148, 1
      %p152 = scmp.eq.s32.totalorder %s30, 1
      %p153 = scmp.ne.s32.totalorder %s148, %s150
      %p154 = scmp.eq.s32.totalorder %s30, 0
      %p155 = por %p153, %p154
      %p156 = scmp.ne.s32.totalorder %s148, %s150
      %p157 = scmp.eq.s32.totalorder %s35, 1
      %p158 = por %p156, %p157
      %p159 = scmp.ne.s32.totalorder %s150, %s151
      %p160 = scmp.eq.s32.totalorder %s35, 0
      %p161 = por %p159, %p160
      %p162 = scmp.ne.s32.totalorder %s150, %s151
      %p163 = scmp.eq.s32.totalorder %s36, 1
      %p164 = por %p162, %p163
      %p166 = scmp.ne.s32.totalorder %s151, %s165
      %p167 = scmp.eq.s32.totalorder %s36, 0
      %p168 = por %p166, %p167
      %s170 = sadd.s32 %s169, 1
      %p173 = scmp.eq.s32.totalorder %s30, 1
      %p174 = scmp.ne.s32.totalorder %s169, %s171
      %p175 = scmp.eq.s32.totalorder %s30, 0
      %p176 = por %p174, %p175
      %p177 = scmp.ne.s32.totalorder %s169, %s171
      %p178 = scmp.eq.s32.totalorder %s35, 1
      %p179 = por %p177, %p178
      %p180 = scmp.ne.s32.totalorder %s171, %s172
      %p181 = scmp.eq.s32.totalorder %s35, 0
      %p182 = por %p180, %p181
      %p183 = scmp.ne.s32.totalorder %s171, %s172
      %p184 = scmp.eq.s32.totalorder %s36, 1
      %p185 = por %p183, %p184
      %p187 = scmp.ne.s32.totalorder %s172, %s186
      %p188 = scmp.eq.s32.totalorder %s36, 0
      %p189 = por %p187, %p188
      %s191 = sadd.s32 %s190, 1
      %p194 = scmp.eq.s32.totalorder %s30, 1
      %p195 = scmp.ne.s32.totalorder %s190, %s192
      %p196 = scmp.eq.s32.totalorder %s30, 0
      %p197 = por %p195, %p196
      %p198 = scmp.ne.s32.totalorder %s190, %s192
      %p199 = scmp.eq.s32.totalorder %s35, 1
      %p200 = por %p198, %p199
      %p201 = scmp.ne.s32.totalorder %s192, %s193
      %p202 = scmp.eq.s32.totalorder %s35, 0
      %p203 = por %p201, %p202
      %p204 = scmp.ne.s32.totalorder %s192, %s193
      %p205 = scmp.eq.s32.totalorder %s36, 1
      %p206 = por %p204, %p205
      %p208 = scmp.ne.s32.totalorder %s193, %s207
      %p209 = scmp.eq.s32.totalorder %s36, 0
      %p210 = por %p208, %p209
      %s212 = sadd.s32 %s211, 1
      %p215 = scmp.eq.s32.totalorder %s30, 1
      %p216 = scmp.ne.s32.totalorder %s211, %s213
      %p217 = scmp.eq.s32.totalorder %s30, 0
      %p218 = por %p216, %p217
      %p219 = scmp.ne.s32.totalorder %s211, %s213
      %p220 = scmp.eq.s32.totalorder %s35, 1
      %p221 = por %p219, %p220
      %p222 = scmp.ne.s32.totalorder %s213, %s214
      %p223 = scmp.eq.s32.totalorder %s35, 0
      %p224 = por %p222, %p223
      %p225 = scmp.ne.s32.totalorder %s213, %s214
      %p226 = scmp.eq.s32.totalorder %s36, 1
      %p227 = por %p225, %p226
      %p229 = scmp.ne.s32.totalorder %s214, %s228
      %p230 = scmp.eq.s32.totalorder %s36, 0
      %p231 = por %p229, %p230
      %s233 = sadd.s32 %s232, 1
      %p236 = scmp.eq.s32.totalorder %s30, 1
      %p237 = scmp.ne.s32.totalorder %s232, %s234
      %p238 = scmp.eq.s32.totalorder %s30, 0
      %p239 = por %p237, %p238
      %p240 = scmp.ne.s32.totalorder %s232, %s234
      %p241 = scmp.eq.s32.totalorder %s35, 1
      %p242 = por %p240, %p241
      %p243 = scmp.ne.s32.totalorder %s234, %s235
      %p244 = scmp.eq.s32.totalorder %s35, 0
      %p245 = por %p243, %p244
      %p246 = scmp.ne.s32.totalorder %s234, %s235
      %p247 = scmp.eq.s32.totalorder %s36, 1
      %p248 = por %p246, %p247
      %p250 = scmp.ne.s32.totalorder %s235, %s249
      %p251 = scmp.eq.s32.totalorder %s36, 0
      %p252 = por %p250, %p251
      %s254 = sadd.s32 %s253, 1
      %p257 = scmp.eq.s32.totalorder %s30, 1
      %p258 = scmp.ne.s32.totalorder %s253, %s255
      %p259 = scmp.eq.s32.totalorder %s30, 0
      %p260 = por %p258, %p259
      %p261 = scmp.ne.s32.totalorder %s253, %s255
      %p262 = scmp.eq.s32.totalorder %s35, 1
      %p263 = por %p261, %p262
      %p264 = scmp.ne.s32.totalorder %s255, %s256
      %p265 = scmp.eq.s32.totalorder %s35, 0
      %p266 = por %p264, %p265
      %p267 = scmp.ne.s32.totalorder %s255, %s256
      %p268 = scmp.eq.s32.totalorder %s36, 1
      %p269 = por %p267, %p268
      %p271 = scmp.ne.s32.totalorder %s256, %s270
      %p272 = scmp.eq.s32.totalorder %s36, 0
      %p273 = por %p271, %p272
      %s275 = sadd.s32 %s274, 1
      %p278 = scmp.eq.s32.totalorder %s30, 1
      %p279 = scmp.ne.s32.totalorder %s274, %s276
      %p280 = scmp.eq.s32.totalorder %s30, 0
      %p281 = por %p279, %p280
      %p282 = scmp.ne.s32.totalorder %s274, %s276
      %p283 = scmp.eq.s32.totalorder %s35, 1
      %p284 = por %p282, %p283
      %p285 = scmp.ne.s32.totalorder %s276, %s277
      %p286 = scmp.eq.s32.totalorder %s35, 0
      %p287 = por %p285, %p286
      %p288 = scmp.ne.s32.totalorder %s276, %s277
      %p289 = scmp.eq.s32.totalorder %s36, 1
      %p290 = por %p288, %p289
      %p292 = scmp.ne.s32.totalorder %s277, %s291
      %p293 = scmp.eq.s32.totalorder %s36, 0
      %p294 = por %p292, %p293
      %s296 = sadd.s32 %s295, 1
      %p299 = scmp.eq.s32.totalorder %s30, 1
      %p300 = scmp.ne.s32.totalorder %s295, %s297
      %p301 = scmp.eq.s32.totalorder %s30, 0
      %p302 = por %p300, %p301
      %p303 = scmp.ne.s32.totalorder %s295, %s297
      %p304 = scmp.eq.s32.totalorder %s35, 1
      %p305 = por %p303, %p304
      %p306 = scmp.ne.s32.totalorder %s297, %s298
      %p307 = scmp.eq.s32.totalorder %s35, 0
      %p308 = por %p306, %p307
      %p309 = scmp.ne.s32.totalorder %s297, %s298
      %p310 = scmp.eq.s32.totalorder %s36, 1
      %p311 = por %p309, %p310
      %p313 = scmp.ne.s32.totalorder %s298, %s312
      %p314 = scmp.eq.s32.totalorder %s36, 0
      %p315 = por %p313, %p314
      %s317 = sadd.s32 %s316, 1
      %p320 = scmp.eq.s32.totalorder %s30, 1
      %p321 = scmp.ne.s32.totalorder %s316, %s318
      %p322 = scmp.eq.s32.totalorder %s30, 0
      %p323 = por %p321, %p322
      %p324 = scmp.ne.s32.totalorder %s316, %s318
      %p325 = scmp.eq.s32.totalorder %s35, 1
      %p326 = por %p324, %p325
      %p327 = scmp.ne.s32.totalorder %s318, %s319
      %p328 = scmp.eq.s32.totalorder %s35, 0
      %p329 = por %p327, %p328
      %p330 = scmp.ne.s32.totalorder %s318, %s319
      %p331 = scmp.eq.s32.totalorder %s36, 1
      %p332 = por %p330, %p331
      %p334 = scmp.ne.s32.totalorder %s319, %s333
      %p335 = scmp.eq.s32.totalorder %s36, 0
      %p336 = por %p334, %p335
      %s337 = ssub.s32 %s30, %s37
      %p338 = scmp.eq.s32.totalorder %s337, 0
      %s340 = sadd.s32 %s339, 1
      %s341 = scalar_select %p338, %s339, %s340
      %p344 = pneg %p338
      %p345 = scmp.eq.s32.totalorder %s30, 1
      %p346 = por %p344, %p345
      %p347 = scmp.ne.s32.totalorder %s339, %s342
      %p348 = scmp.eq.s32.totalorder %s30, 0
      %p349 = por %p347, %p348
      %p350 = scmp.ne.s32.totalorder %s339, %s342
      %p351 = scmp.eq.s32.totalorder %s35, 1
      %p352 = por %p350, %p351
      %p353 = scmp.ne.s32.totalorder %s342, %s343
      %p354 = scmp.eq.s32.totalorder %s35, 0
      %p355 = por %p353, %p354
      %p356 = scmp.ne.s32.totalorder %s342, %s343
      %p357 = scmp.eq.s32.totalorder %s36, 1
      %p358 = por %p356, %p357
      %p360 = scmp.ne.s32.totalorder %s343, %s359
      %p361 = scmp.eq.s32.totalorder %s36, 0
      %p362 = por %p360, %p361
      %p363 = scmp.le.s32.totalorder 1, %s30
      %p364 = scmp.lt.s32.totalorder %s30, 3
      %p365 = pnand %p363, %p364
      %p366 = pneg %p365
      // Predicated region
      $region9: #{tpu_custom_call.1} parent=5 // pred_check
        _
      $region10: #{tpu_custom_call.1} parent=5 // pred_check_branch
        %368 = sbr.rel (%p365) target = $region12
      $region11: #{tpu_custom_call.1} parent=5 // pred_region
        %s369 = ssub.s32 %s30, 1
        // Predicated region
        $region13: #{tpu_custom_call.1} parent=11 // pred_check
          %p370 = pneg %p77
        $region14: #{tpu_custom_call.1} parent=11 // pred_check_branch
          %372 = sbr.rel (%p370) target = $region16
        $region15: #{tpu_custom_call.1} parent=11 // pred_region
          %374 = vsyncadd [#allocation6], 0
          %s376 = sshll.u32 %s1, 4
          %s377 = int_to_ptr.hbm [resolvable:$true] %s376
          %s378 = sshll.u32 [#allocation5], 4
          %s379 = int_to_ptr.vmem [resolvable:$true] %s378
          %381 = dma.hbm_to_vmem [thread:$0]  %s377, 32, %s379, [#allocation6]
        $region16: #{tpu_custom_call.1} parent=11 // pred_fallthru
          _
        // Predicated region
        $region17: #{tpu_custom_call.1} parent=11 // pred_check
          %p382 = pneg %p98
        $region18: #{tpu_custom_call.1} parent=11 // pred_check_branch
          %384 = sbr.rel (%p382) target = $region20
        $region19: #{tpu_custom_call.1} parent=11 // pred_region
          %386 = vsyncadd [#allocation6], 0
          %s388 = sshll.u32 %s2, 4
          %s389 = int_to_ptr.hbm [resolvable:$true] %s388
          %s390 = sshll.u32 [#allocation7], 4
          %s391 = int_to_ptr.vmem [resolvable:$true] %s390
          %393 = dma.hbm_to_vmem [thread:$0]  %s389, 32, %s391, [#allocation6]
        $region20: #{tpu_custom_call.1} parent=11 // pred_fallthru
          _
        // Predicated region
        $region21: #{tpu_custom_call.1} parent=11 // pred_check
          %p394 = pneg %p119
        $region22: #{tpu_custom_call.1} parent=11 // pred_check_branch
          %396 = sbr.rel (%p394) target = $region24
        $region23: #{tpu_custom_call.1} parent=11 // pred_region
          %398 = vsyncadd [#allocation9], 0
          %s399 = sshll.u32 %s3, 4
          %s400 = int_to_ptr.hbm [resolvable:$true] %s399
          %s401 = sshll.u32 [#allocation8], 4
          %s402 = int_to_ptr.vmem [resolvable:$true] %s401
          %407 = dma.hbm_to_vmem [thread:$0]  %s400, 8192, %s402, [#allocation9], 256, 256, 16
        $region24: #{tpu_custom_call.1} parent=11 // pred_fallthru
          _
        // Predicated region
        $region25: #{tpu_custom_call.1} parent=11 // pred_check
          %p408 = pneg %p140
        $region26: #{tpu_custom_call.1} parent=11 // pred_check_branch
          %410 = sbr.rel (%p408) target = $region28
        $region27: #{tpu_custom_call.1} parent=11 // pred_region
          %412 = vsyncadd [#allocation9], 0
          %s413 = sshll.u32 %s4, 4
          %s414 = int_to_ptr.hbm [resolvable:$true] %s413
          %s415 = sshll.u32 [#allocation10], 4
          %s416 = int_to_ptr.vmem [resolvable:$true] %s415
          %421 = dma.hbm_to_vmem [thread:$0]  %s414, 8192, %s416, [#allocation9], 256, 256, 16
        $region28: #{tpu_custom_call.1} parent=11 // pred_fallthru
          _
        // Predicated region
        $region29: #{tpu_custom_call.1} parent=11 // pred_check
          %p422 = pneg %p161
        $region30: #{tpu_custom_call.1} parent=11 // pred_check_branch
          %424 = sbr.rel (%p422) target = $region32
        $region31: #{tpu_custom_call.1} parent=11 // pred_region
          %426 = vsyncadd [#allocation12], 0
          %s427 = sshll.u32 %s5, 4
          %s428 = int_to_ptr.hbm [resolvable:$true] %s427
          %s429 = sshll.u32 [#allocation11], 4
          %s430 = int_to_ptr.vmem [resolvable:$true] %s429
          %435 = dma.hbm_to_vmem [thread:$0]  %s428, 8192, %s430, [#allocation12], 256, 256, 16
        $region32: #{tpu_custom_call.1} parent=11 // pred_fallthru
          _
        // Predicated region
        $region33: #{tpu_custom_call.1} parent=11 // pred_check
          %p436 = pneg %p182
        $region34: #{tpu_custom_call.1} parent=11 // pred_check_branch
          %438 = sbr.rel (%p436) target = $region36
        $region35: #{tpu_custom_call.1} parent=11 // pred_region
          %440 = vsyncadd [#allocation12], 0
          %s441 = sshll.u32 %s6, 4
          %s442 = int_to_ptr.hbm [resolvable:$true] %s441
          %s443 = sshll.u32 [#allocation13], 4
          %s444 = int_to_ptr.vmem [resolvable:$true] %s443
          %449 = dma.hbm_to_vmem [thread:$0]  %s442, 8192, %s444, [#allocation12], 256, 256, 16
        $region36: #{tpu_custom_call.1} parent=11 // pred_fallthru
          _
        // Predicated region
        $region37: #{tpu_custom_call.1} parent=11 // pred_check
          %p450 = pneg %p203
        $region38: #{tpu_custom_call.1} parent=11 // pred_check_branch
          %452 = sbr.rel (%p450) target = $region40
        $region39: #{tpu_custom_call.1} parent=11 // pred_region
          _
        $region40: #{tpu_custom_call.1} parent=11 // pred_fallthru
          _
        // Predicated region
        $region41: #{tpu_custom_call.1} parent=11 // pred_check
          %p453 = pneg %p224
        $region42: #{tpu_custom_call.1} parent=11 // pred_check_branch
          %455 = sbr.rel (%p453) target = $region44
        $region43: #{tpu_custom_call.1} parent=11 // pred_region
          _
        $region44: #{tpu_custom_call.1} parent=11 // pred_fallthru
          _
        // Predicated region
        $region45: #{tpu_custom_call.1} parent=11 // pred_check
          %p456 = pneg %p245
        $region46: #{tpu_custom_call.1} parent=11 // pred_check_branch
          %458 = sbr.rel (%p456) target = $region48
        $region47: #{tpu_custom_call.1} parent=11 // pred_region
          _
        $region48: #{tpu_custom_call.1} parent=11 // pred_fallthru
          _
        // Predicated region
        $region49: #{tpu_custom_call.1} parent=11 // pred_check
          %p459 = pneg %p266
        $region50: #{tpu_custom_call.1} parent=11 // pred_check_branch
          %461 = sbr.rel (%p459) target = $region52
        $region51: #{tpu_custom_call.1} parent=11 // pred_region
          %463 = vsyncadd [#allocation15], 0
          %s464 = sshll.u32 %s10, 4
          %s465 = int_to_ptr.hbm [resolvable:$true] %s464
          %s466 = sshll.u32 [#allocation14], 4
          %s467 = int_to_ptr.vmem [resolvable:$true] %s466
          %472 = dma.hbm_to_vmem [thread:$0]  %s465, 8192, %s467, [#allocation15], 256, 256, 16
        $region52: #{tpu_custom_call.1} parent=11 // pred_fallthru
          _
        // Predicated region
        $region53: #{tpu_custom_call.1} parent=11 // pred_check
          %p473 = pneg %p287
        $region54: #{tpu_custom_call.1} parent=11 // pred_check_branch
          %475 = sbr.rel (%p473) target = $region56
        $region55: #{tpu_custom_call.1} parent=11 // pred_region
          _
        $region56: #{tpu_custom_call.1} parent=11 // pred_fallthru
          _
        // Predicated region
        $region57: #{tpu_custom_call.1} parent=11 // pred_check
          %p476 = pneg %p308
        $region58: #{tpu_custom_call.1} parent=11 // pred_check_branch
          %478 = sbr.rel (%p476) target = $region60
        $region59: #{tpu_custom_call.1} parent=11 // pred_region
          %480 = vsyncadd [#allocation15], 0
          %s481 = sshll.u32 %s12, 4
          %s482 = int_to_ptr.hbm [resolvable:$true] %s481
          %s483 = sshll.u32 [#allocation16], 4
          %s484 = int_to_ptr.vmem [resolvable:$true] %s483
          %489 = dma.hbm_to_vmem [thread:$0]  %s482, 8192, %s484, [#allocation15], 256, 256, 16
        $region60: #{tpu_custom_call.1} parent=11 // pred_fallthru
          _
        // Predicated region
        $region61: #{tpu_custom_call.1} parent=11 // pred_check
          %p490 = pneg %p329
        $region62: #{tpu_custom_call.1} parent=11 // pred_check_branch
          %492 = sbr.rel (%p490) target = $region64
        $region63: #{tpu_custom_call.1} parent=11 // pred_region
          _
        $region64: #{tpu_custom_call.1} parent=11 // pred_fallthru
          _
      $region12: #{tpu_custom_call.1} parent=5 // pred_fallthru
        _
      %p493 = scmp.lt.s32.totalorder %s30, 2
      // Predicated region
      $region65: #{tpu_custom_call.1} parent=5 // pred_check
        %p494 = pneg %p493
      $region66: #{tpu_custom_call.1} parent=5 // pred_check_branch
        %496 = sbr.rel (%p494) target = $region68
      $region67: #{tpu_custom_call.1} parent=5 // pred_region
        // Predicated region
        $region69: #{tpu_custom_call.1} parent=67 // pred_check
          %p497 = pneg %p50
        $region70: #{tpu_custom_call.1} parent=67 // pred_check_branch
          %499 = sbr.rel (%p497) target = $region72
        $region71: #{tpu_custom_call.1} parent=67 // pred_region
          %s500 = sand.u32 %s40, 1
          %s501 = scalar_lea.sflag [#allocation3], %s500
          %s502 = sand.u32 %s40, 1
          %s503 = smul.addr %s502, 16
          %s504 = scalar_lea.vmem [#allocation2], %s503
          %506 = vsyncadd %s501, 0
          %s507 = smul.addr %s30, 2
          %s508 = smul.addr %s507, 8
          %s509 = scalar_lea.hbm %s0, %s508
          %s511 = sshll.u32 %s509, 4
          %s512 = int_to_ptr.hbm [resolvable:$true] %s511
          %s513 = sshll.u32 %s504, 4
          %s514 = int_to_ptr.vmem [resolvable:$true] %s513
          %516 = dma.hbm_to_vmem [thread:$0]  %s512, 256, %s514, %s501
        $region72: #{tpu_custom_call.1} parent=67 // pred_fallthru
          _
      $region68: #{tpu_custom_call.1} parent=5 // pred_fallthru
        _
      %p517 = scmp.le.s32.totalorder 1, %s30
      %p518 = scmp.lt.s32.totalorder %s30, 3
      %p519 = pnand %p517, %p518
      %p520 = pneg %p519
      // Predicated region
      $region73: #{tpu_custom_call.1} parent=5 // pred_check
        _
      $region74: #{tpu_custom_call.1} parent=5 // pred_check_branch
        %522 = sbr.rel (%p519) target = $region76
      $region75: #{tpu_custom_call.1} parent=5 // pred_region
        %s523 = ssub.s32 %s30, 1
        %s524 = sand.u32 %s43, 1
        %s525 = scalar_lea.sflag [#allocation3], %s524
        %s526 = sand.u32 %s43, 1
        %s527 = smul.addr %s526, 16
        %s528 = scalar_lea.vmem [#allocation2], %s527
        // Predicated region
        $region77: #{tpu_custom_call.1} parent=75 // pred_check
          %p529 = pneg %p56
        $region78: #{tpu_custom_call.1} parent=75 // pred_check_branch
          %531 = sbr.rel (%p529) target = $region80
        $region79: #{tpu_custom_call.1} parent=75 // pred_region
          %533 = dma.done %s525, 256
        $region80: #{tpu_custom_call.1} parent=75 // pred_fallthru
          _
        // Predicated region
        $region81: #{tpu_custom_call.1} parent=75 // pred_check
          %p534 = pneg %p77
        $region82: #{tpu_custom_call.1} parent=75 // pred_check_branch
          %536 = sbr.rel (%p534) target = $region84
        $region83: #{tpu_custom_call.1} parent=75 // pred_region
          %538 = dma.done [#allocation6], 32
        $region84: #{tpu_custom_call.1} parent=75 // pred_fallthru
          _
        // Predicated region
        $region85: #{tpu_custom_call.1} parent=75 // pred_check
          %p539 = pneg %p98
        $region86: #{tpu_custom_call.1} parent=75 // pred_check_branch
          %541 = sbr.rel (%p539) target = $region88
        $region87: #{tpu_custom_call.1} parent=75 // pred_region
          %543 = dma.done [#allocation6], 32
        $region88: #{tpu_custom_call.1} parent=75 // pred_fallthru
          _
        // Predicated region
        $region89: #{tpu_custom_call.1} parent=75 // pred_check
          %p544 = pneg %p119
        $region90: #{tpu_custom_call.1} parent=75 // pred_check_branch
          %546 = sbr.rel (%p544) target = $region92
        $region91: #{tpu_custom_call.1} parent=75 // pred_region
          %548 = dma.done [#allocation9], 8192
        $region92: #{tpu_custom_call.1} parent=75 // pred_fallthru
          _
        // Predicated region
        $region93: #{tpu_custom_call.1} parent=75 // pred_check
          %p549 = pneg %p140
        $region94: #{tpu_custom_call.1} parent=75 // pred_check_branch
          %551 = sbr.rel (%p549) target = $region96
        $region95: #{tpu_custom_call.1} parent=75 // pred_region
          %553 = dma.done [#allocation9], 8192
        $region96: #{tpu_custom_call.1} parent=75 // pred_fallthru
          _
        // Predicated region
        $region97: #{tpu_custom_call.1} parent=75 // pred_check
          %p554 = pneg %p161
        $region98: #{tpu_custom_call.1} parent=75 // pred_check_branch
          %556 = sbr.rel (%p554) target = $region100
        $region99: #{tpu_custom_call.1} parent=75 // pred_region
          %558 = dma.done [#allocation12], 8192
        $region100: #{tpu_custom_call.1} parent=75 // pred_fallthru
          _
        // Predicated region
        $region101: #{tpu_custom_call.1} parent=75 // pred_check
          %p559 = pneg %p182
        $region102: #{tpu_custom_call.1} parent=75 // pred_check_branch
          %561 = sbr.rel (%p559) target = $region104
        $region103: #{tpu_custom_call.1} parent=75 // pred_region
          %563 = dma.done [#allocation12], 8192
        $region104: #{tpu_custom_call.1} parent=75 // pred_fallthru
          _
        // Predicated region
        $region105: #{tpu_custom_call.1} parent=75 // pred_check
          %p564 = pneg %p266
        $region106: #{tpu_custom_call.1} parent=75 // pred_check_branch
          %566 = sbr.rel (%p564) target = $region108
        $region107: #{tpu_custom_call.1} parent=75 // pred_region
          %568 = dma.done [#allocation15], 8192
        $region108: #{tpu_custom_call.1} parent=75 // pred_fallthru
          _
        // Predicated region
        $region109: #{tpu_custom_call.1} parent=75 // pred_check
          %p569 = pneg %p308
        $region110: #{tpu_custom_call.1} parent=75 // pred_check_branch
          %571 = sbr.rel (%p569) target = $region112
        $region111: #{tpu_custom_call.1} parent=75 // pred_region
          %573 = dma.done [#allocation15], 8192
        $region112: #{tpu_custom_call.1} parent=75 // pred_fallthru
          _
        %s574 = sand.u32 %s43, 1
        %s575 = scalar_lea.sflag [#allocation3], %s574
        %s576 = sand.u32 %s43, 1
        %s577 = smul.addr %s576, 16
        %s578 = scalar_lea.vmem [#allocation2], %s577
        %p579 = pneg %p56
        %p580 = pneg %p53
        %p581 = pneg %p77
        %p582 = pneg %p74
        %p583 = pneg %p98
        %p584 = pneg %p95
        %p585 = pneg %p119
        %p586 = pneg %p116
        %p587 = pneg %p140
        %p588 = pneg %p137
        %p589 = pneg %p161
        %p590 = pneg %p158
        %p591 = pneg %p182
        %p592 = pneg %p179
        %p593 = pneg %p203
        %p594 = pneg %p200
        %p595 = pneg %p224
        %p596 = pneg %p221
        %p597 = pneg %p245
        %p598 = pneg %p242
        %p599 = pneg %p266
        %p600 = pneg %p263
        %p601 = pneg %p287
        %p602 = pneg %p284
        %p603 = pneg %p308
        %p604 = pneg %p305
        %p605 = pneg %p329
        %p606 = pneg %p326
        %p607 = pneg %p355
        %p608 = pneg %p352
        %s609 = sand.u32 %s342, 1
        %s610 = scalar_lea.sflag [#allocation4], %s609
        %s611 = sand.u32 %s342, 1
        %s612 = smul.addr %s611, 16
        %s613 = scalar_lea.vmem [#allocation17], %s612
        %v614 = vld [vmem:[%s528] sm:$0xff]
        %v615 = vld [vmem:[%s528 + $0x8] sm:$0xff]
        %v616 = vld [vmem:[#allocation5] sm:$0x3]
        %v617 = vld [vmem:[#allocation7] sm:$0x3]
        %v618 = vadd.f32 %v614, %v615
        %619 = vadd.xlane.f32.xlu0 %v618
        %v620 = vpop.xlane.xlu0 %619
        %v621 = vrcp.pop 256.0
        %v622 = vmul.f32 256.0, %v621
        %v623 = vsub.f32 1.0, %v622
        %v624 = vmul.f32 %v621, %v623
        %v625 = vadd.f32 %v621, %v624
        %vm626 = vweird.f32 %v621
        %v627 = vsel %vm626, %v621, %v625
        %v628 = vmul.f32 %v620, %v627
        %v629 = vsub.f32 %v614, %v628
        %v630 = vsub.f32 %v615, %v628
        %v631 = vmul.f32 %v629, %v629
        %v632 = vmul.f32 %v630, %v630
        %v633 = vadd.f32 %v631, %v632
        %634 = vadd.xlane.f32.xlu0 %v633
        %v635 = vpop.xlane.xlu0 %634
        %v636 = vmul.f32 %v635, %v627
        %v637 = vadd.f32 %v636, 1e-05
        %v638 = vrsqrt.pop %v637
        %v639 = vmul.f32 %v638, %v637
        %v640 = vmul.f32 %v639, %v638
        %v641 = vmul.f32 0.5, %v640
        %v642 = vsub.f32 1.5, %v641
        %v643 = vmul.f32 %v638, %v642
        %vm644 = vweird.f32 %v637
        %vm645 = vweird.f32 %v638
        %vm646 = vmor %vm644, %vm645
        %v647 = vsel %vm646, %v638, %v643
        %v648 = vmul.f32 %v629, %v647
        %v649 = vmul.f32 %v630, %v647
        %v651 = vperm.slane %v616, 0
        %v652 = vperm.slane %v616, 1
        %v655 = vmul.f32 %v648, %v651
        %v656 = vmul.f32 %v649, %v652
        %v658 = vperm.slane %v617, 0
        %v659 = vperm.slane %v617, 1
        %v662 = vadd.f32 %v655, %v658
        %v663 = vadd.f32 %v656, %v659
        %v664 = vld [vmem:[#allocation8] sm:$0xff]
        %v665 = vld [vmem:[#allocation8 + $0x8] sm:$0xff]
        %v666 = vld [vmem:[#allocation8 + $0x10] sm:$0xff]
        %v667 = vld [vmem:[#allocation8 + $0x18] sm:$0xff]
        %v668 = vld [vmem:[#allocation8 + $0x20] sm:$0xff]
        %v669 = vld [vmem:[#allocation8 + $0x28] sm:$0xff]
        %v670 = vld [vmem:[#allocation8 + $0x30] sm:$0xff]
        %v671 = vld [vmem:[#allocation8 + $0x38] sm:$0xff]
        %v672 = vld [vmem:[#allocation8 + $0x40] sm:$0xff]
        %v673 = vld [vmem:[#allocation8 + $0x48] sm:$0xff]
        %v674 = vld [vmem:[#allocation8 + $0x50] sm:$0xff]
        %v675 = vld [vmem:[#allocation8 + $0x58] sm:$0xff]
        %v676 = vld [vmem:[#allocation8 + $0x60] sm:$0xff]
        %v677 = vld [vmem:[#allocation8 + $0x68] sm:$0xff]
        %v678 = vld [vmem:[#allocation8 + $0x70] sm:$0xff]
        %v679 = vld [vmem:[#allocation8 + $0x78] sm:$0xff]
        %v680 = vld [vmem:[#allocation8 + $0x80] sm:$0xff]
        %v681 = vld [vmem:[#allocation8 + $0x88] sm:$0xff]
        %v682 = vld [vmem:[#allocation8 + $0x90] sm:$0xff]
        %v683 = vld [vmem:[#allocation8 + $0x98] sm:$0xff]
        %v684 = vld [vmem:[#allocation8 + $0xa0] sm:$0xff]
        %v685 = vld [vmem:[#allocation8 + $0xa8] sm:$0xff]
        %v686 = vld [vmem:[#allocation8 + $0xb0] sm:$0xff]
        %v687 = vld [vmem:[#allocation8 + $0xb8] sm:$0xff]
        %v688 = vld [vmem:[#allocation8 + $0xc0] sm:$0xff]
        %v689 = vld [vmem:[#allocation8 + $0xc8] sm:$0xff]
        %v690 = vld [vmem:[#allocation8 + $0xd0] sm:$0xff]
        %v691 = vld [vmem:[#allocation8 + $0xd8] sm:$0xff]
        %v692 = vld [vmem:[#allocation8 + $0xe0] sm:$0xff]
        %v693 = vld [vmem:[#allocation8 + $0xe8] sm:$0xff]
        %v694 = vld [vmem:[#allocation8 + $0xf0] sm:$0xff]
        %v695 = vld [vmem:[#allocation8 + $0xf8] sm:$0xff]
        %v696 = vld [vmem:[#allocation8 + $0x100] sm:$0xff]
        %v697 = vld [vmem:[#allocation8 + $0x108] sm:$0xff]
        %v698 = vld [vmem:[#allocation8 + $0x110] sm:$0xff]
        %v699 = vld [vmem:[#allocation8 + $0x118] sm:$0xff]
        %v700 = vld [vmem:[#allocation8 + $0x120] sm:$0xff]
        %v701 = vld [vmem:[#allocation8 + $0x128] sm:$0xff]
        %v702 = vld [vmem:[#allocation8 + $0x130] sm:$0xff]
        %v703 = vld [vmem:[#allocation8 + $0x138] sm:$0xff]
        %v704 = vld [vmem:[#allocation8 + $0x140] sm:$0xff]
        %v705 = vld [vmem:[#allocation8 + $0x148] sm:$0xff]
        %v706 = vld [vmem:[#allocation8 + $0x150] sm:$0xff]
        %v707 = vld [vmem:[#allocation8 + $0x158] sm:$0xff]
        %v708 = vld [vmem:[#allocation8 + $0x160] sm:$0xff]
        %v709 = vld [vmem:[#allocation8 + $0x168] sm:$0xff]
        %v710 = vld [vmem:[#allocation8 + $0x170] sm:$0xff]
        %v711 = vld [vmem:[#allocation8 + $0x178] sm:$0xff]
        %v712 = vld [vmem:[#allocation8 + $0x180] sm:$0xff]
        %v713 = vld [vmem:[#allocation8 + $0x188] sm:$0xff]
        %v714 = vld [vmem:[#allocation8 + $0x190] sm:$0xff]
        %v715 = vld [vmem:[#allocation8 + $0x198] sm:$0xff]
        %v716 = vld [vmem:[#allocation8 + $0x1a0] sm:$0xff]
        %v717 = vld [vmem:[#allocation8 + $0x1a8] sm:$0xff]
        %v718 = vld [vmem:[#allocation8 + $0x1b0] sm:$0xff]
        %v719 = vld [vmem:[#allocation8 + $0x1b8] sm:$0xff]
        %v720 = vld [vmem:[#allocation8 + $0x1c0] sm:$0xff]
        %v721 = vld [vmem:[#allocation8 + $0x1c8] sm:$0xff]
        %v722 = vld [vmem:[#allocation8 + $0x1d0] sm:$0xff]
        %v723 = vld [vmem:[#allocation8 + $0x1d8] sm:$0xff]
        %v724 = vld [vmem:[#allocation8 + $0x1e0] sm:$0xff]
        %v725 = vld [vmem:[#allocation8 + $0x1e8] sm:$0xff]
        %v726 = vld [vmem:[#allocation8 + $0x1f0] sm:$0xff]
        %v727 = vld [vmem:[#allocation8 + $0x1f8] sm:$0xff]
        %v728 = vand.u32 %v694, 4294901760
        %729 = vmatpush.msra.mxu0 %v728
        %v730 = vand.u32 %v692, 4294901760
        %731 = vmatpush.msra.mxu0 %v730
        %v732 = vand.u32 %v690, 4294901760
        %733 = vmatpush.msra.mxu0 %v732
        %v734 = vand.u32 %v688, 4294901760
        %735 = vmatpush.msra.mxu0 %v734
        %v736 = vand.u32 %v686, 4294901760
        %737 = vmatpush.msra.mxu0 %v736
        %v738 = vand.u32 %v684, 4294901760
        %739 = vmatpush.msra.mxu0 %v738
        %v740 = vand.u32 %v682, 4294901760
        %741 = vmatpush.msra.mxu0 %v740
        %v742 = vand.u32 %v680, 4294901760
        %743 = vmatpush.msra.mxu0 %v742
        %v744 = vand.u32 %v678, 4294901760
        %745 = vmatpush.msra.mxu0 %v744
        %v746 = vand.u32 %v676, 4294901760
        %747 = vmatpush.msra.mxu0 %v746
        %v748 = vand.u32 %v674, 4294901760
        %749 = vmatpush.msra.mxu0 %v748
        %v750 = vand.u32 %v672, 4294901760
        %751 = vmatpush.msra.mxu0 %v750
        %v752 = vand.u32 %v670, 4294901760
        %753 = vmatpush.msra.mxu0 %v752
        %v754 = vand.u32 %v668, 4294901760
        %755 = vmatpush.msra.mxu0 %v754
        %v756 = vand.u32 %v666, 4294901760
        %757 = vmatpush.msra.mxu0 %v756
        %v758 = vand.u32 %v664, 4294901760
        %759 = vmatpush.msra.mxu0 %v758
        %v760 = vand.u32 %v662, 4294901760
        %v761 = vsub.f32 %v662, %v760
        %v762 = vand.u32 %v761, 4294901760
        %v763 = vsub.f32 %v761, %v762
        %v764 = vand.u32 %v763, 4294901760
        %765 = vmatmul.f32.gmra.mxu0 %v764
        %v766 = vpop.f32.mrf.mxu0
        %v767 = vadd.f32 0.0, %v766
        %768 = vdwg.mxu0
        %v769 = vand.u32 %v694, 4294901760
        %v770 = vsub.f32 %v694, %v769
        %v771 = vand.u32 %v770, 4294901760
        %v772 = vsub.f32 %v770, %v771
        %v773 = vand.u32 %v772, 4294901760
        %774 = vmatpush.msra.mxu0 %v773
        %v775 = vand.u32 %v692, 4294901760
        %v776 = vsub.f32 %v692, %v775
        %v777 = vand.u32 %v776, 4294901760
        %v778 = vsub.f32 %v776, %v777
        %v779 = vand.u32 %v778, 4294901760
        %780 = vmatpush.msra.mxu0 %v779
        %v781 = vand.u32 %v690, 4294901760
        %v782 = vsub.f32 %v690, %v781
        %v783 = vand.u32 %v782, 4294901760
        %v784 = vsub.f32 %v782, %v783
        %v785 = vand.u32 %v784, 4294901760
        %786 = vmatpush.msra.mxu0 %v785
        %v787 = vand.u32 %v688, 4294901760
        %v788 = vsub.f32 %v688, %v787
        %v789 = vand.u32 %v788, 4294901760
        %v790 = vsub.f32 %v788, %v789
        %v791 = vand.u32 %v790, 4294901760
        %792 = vmatpush.msra.mxu0 %v791
        %v793 = vand.u32 %v686, 4294901760
        %v794 = vsub.f32 %v686, %v793
        %v795 = vand.u32 %v794, 4294901760
        %v796 = vsub.f32 %v794, %v795
        %v797 = vand.u32 %v796, 4294901760
        %798 = vmatpush.msra.mxu0 %v797
        %v799 = vand.u32 %v684, 4294901760
        %v800 = vsub.f32 %v684, %v799
        %v801 = vand.u32 %v800, 4294901760
        %v802 = vsub.f32 %v800, %v801
        %v803 = vand.u32 %v802, 4294901760
        %804 = vmatpush.msra.mxu0 %v803
        %v805 = vand.u32 %v682, 4294901760
        %v806 = vsub.f32 %v682, %v805
        %v807 = vand.u32 %v806, 4294901760
        %v808 = vsub.f32 %v806, %v807
        %v809 = vand.u32 %v808, 4294901760
        %810 = vmatpush.msra.mxu0 %v809
        %v811 = vand.u32 %v680, 4294901760
        %v812 = vsub.f32 %v680, %v811
        %v813 = vand.u32 %v812, 4294901760
        %v814 = vsub.f32 %v812, %v813
        %v815 = vand.u32 %v814, 4294901760
        %816 = vmatpush.msra.mxu0 %v815
        %v817 = vand.u32 %v678, 4294901760
        %v818 = vsub.f32 %v678, %v817
        %v819 = vand.u32 %v818, 4294901760
        %v820 = vsub.f32 %v818, %v819
        %v821 = vand.u32 %v820, 4294901760
        %822 = vmatpush.msra.mxu0 %v821
        %v823 = vand.u32 %v676, 4294901760
        %v824 = vsub.f32 %v676, %v823
        %v825 = vand.u32 %v824, 4294901760
        %v826 = vsub.f32 %v824, %v825
        %v827 = vand.u32 %v826, 4294901760
        %828 = vmatpush.msra.mxu0 %v827
        %v829 = vand.u32 %v674, 4294901760
        %v830 = vsub.f32 %v674, %v829
        %v831 = vand.u32 %v830, 4294901760
        %v832 = vsub.f32 %v830, %v831
        %v833 = vand.u32 %v832, 4294901760
        %834 = vmatpush.msra.mxu0 %v833
        %v835 = vand.u32 %v672, 4294901760
        %v836 = vsub.f32 %v672, %v835
        %v837 = vand.u32 %v836, 4294901760
        %v838 = vsub.f32 %v836, %v837
        %v839 = vand.u32 %v838, 4294901760
        %840 = vmatpush.msra.mxu0 %v839
        %v841 = vand.u32 %v670, 4294901760
        %v842 = vsub.f32 %v670, %v841
        %v843 = vand.u32 %v842, 4294901760
        %v844 = vsub.f32 %v842, %v843
        %v845 = vand.u32 %v844, 4294901760
        %846 = vmatpush.msra.mxu0 %v845
        %v847 = vand.u32 %v668, 4294901760
        %v848 = vsub.f32 %v668, %v847
        %v849 = vand.u32 %v848, 4294901760
        %v850 = vsub.f32 %v848, %v849
        %v851 = vand.u32 %v850, 4294901760
        %852 = vmatpush.msra.mxu0 %v851
        %v853 = vand.u32 %v666, 4294901760
        %v854 = vsub.f32 %v666, %v853
        %v855 = vand.u32 %v854, 4294901760
        %v856 = vsub.f32 %v854, %v855
        %v857 = vand.u32 %v856, 4294901760
        %858 = vmatpush.msra.mxu0 %v857
        %v859 = vand.u32 %v664, 4294901760
        %v860 = vsub.f32 %v664, %v859
        %v861 = vand.u32 %v860, 4294901760
        %v862 = vsub.f32 %v860, %v861
        %v863 = vand.u32 %v862, 4294901760
        %864 = vmatpush.msra.mxu0 %v863
        %v865 = vand.u32 %v662, 4294901760
        %866 = vmatmul.f32.gmra.mxu0 %v865
        %v867 = vpop.f32.mrf.mxu0
        %v868 = vadd.f32 %v767, %v867
        %869 = vdwg.mxu0
        %v870 = vand.u32 %v694, 4294901760
        %v871 = vsub.f32 %v694, %v870
        %872 = vmatpush.msra.mxu0 %v871
        %v873 = vand.u32 %v692, 4294901760
        %v874 = vsub.f32 %v692, %v873
        %875 = vmatpush.msra.mxu0 %v874
        %v876 = vand.u32 %v690, 4294901760
        %v877 = vsub.f32 %v690, %v876
        %878 = vmatpush.msra.mxu0 %v877
        %v879 = vand.u32 %v688, 4294901760
        %v880 = vsub.f32 %v688, %v879
        %881 = vmatpush.msra.mxu0 %v880
        %v882 = vand.u32 %v686, 4294901760
        %v883 = vsub.f32 %v686, %v882
        %884 = vmatpush.msra.mxu0 %v883
        %v885 = vand.u32 %v684, 4294901760
        %v886 = vsub.f32 %v684, %v885
        %887 = vmatpush.msra.mxu0 %v886
        %v888 = vand.u32 %v682, 4294901760
        %v889 = vsub.f32 %v682, %v888
        %890 = vmatpush.msra.mxu0 %v889
        %v891 = vand.u32 %v680, 4294901760
        %v892 = vsub.f32 %v680, %v891
        %893 = vmatpush.msra.mxu0 %v892
        %v894 = vand.u32 %v678, 4294901760
        %v895 = vsub.f32 %v678, %v894
        %896 = vmatpush.msra.mxu0 %v895
        %v897 = vand.u32 %v676, 4294901760
        %v898 = vsub.f32 %v676, %v897
        %899 = vmatpush.msra.mxu0 %v898
        %v900 = vand.u32 %v674, 4294901760
        %v901 = vsub.f32 %v674, %v900
        %902 = vmatpush.msra.mxu0 %v901
        %v903 = vand.u32 %v672, 4294901760
        %v904 = vsub.f32 %v672, %v903
        %905 = vmatpush.msra.mxu0 %v904
        %v906 = vand.u32 %v670, 4294901760
        %v907 = vsub.f32 %v670, %v906
        %908 = vmatpush.msra.mxu0 %v907
        %v909 = vand.u32 %v668, 4294901760
        %v910 = vsub.f32 %v668, %v909
        %911 = vmatpush.msra.mxu0 %v910
        %v912 = vand.u32 %v666, 4294901760
        %v913 = vsub.f32 %v666, %v912
        %914 = vmatpush.msra.mxu0 %v913
        %v915 = vand.u32 %v664, 4294901760
        %v916 = vsub.f32 %v664, %v915
        %917 = vmatpush.msra.mxu0 %v916
        %v918 = vand.u32 %v662, 4294901760
        %v919 = vsub.f32 %v662, %v918
        %920 = vmatmul.f32.gmra.mxu0 %v919
        %v921 = vpop.f32.mrf.mxu0
        %v922 = vadd.f32 %v868, %v921
        %923 = vdwg.mxu0
        %v924 = vand.u32 %v694, 4294901760
        %925 = vmatpush.msra.mxu0 %v924
        %v926 = vand.u32 %v692, 4294901760
        %927 = vmatpush.msra.mxu0 %v926
        %v928 = vand.u32 %v690, 4294901760
        %929 = vmatpush.msra.mxu0 %v928
        %v930 = vand.u32 %v688, 4294901760
        %931 = vmatpush.msra.mxu0 %v930
        %v932 = vand.u32 %v686, 4294901760
        %933 = vmatpush.msra.mxu0 %v932
        %v934 = vand.u32 %v684, 4294901760
        %935 = vmatpush.msra.mxu0 %v934
        %v936 = vand.u32 %v682, 4294901760
        %937 = vmatpush.msra.mxu0 %v936
        %v938 = vand.u32 %v680, 4294901760
        %939 = vmatpush.msra.mxu0 %v938
        %v940 = vand.u32 %v678, 4294901760
        %941 = vmatpush.msra.mxu0 %v940
        %v942 = vand.u32 %v676, 4294901760
        %943 = vmatpush.msra.mxu0 %v942
        %v944 = vand.u32 %v674, 4294901760
        %945 = vmatpush.msra.mxu0 %v944
        %v946 = vand.u32 %v672, 4294901760
        %947 = vmatpush.msra.mxu0 %v946
        %v948 = vand.u32 %v670, 4294901760
        %949 = vmatpush.msra.mxu0 %v948
        %v950 = vand.u32 %v668, 4294901760
        %951 = vmatpush.msra.mxu0 %v950
        %v952 = vand.u32 %v666, 4294901760
        %953 = vmatpush.msra.mxu0 %v952
        %v954 = vand.u32 %v664, 4294901760
        %955 = vmatpush.msra.mxu0 %v954
        %v956 = vand.u32 %v662, 4294901760
        %v957 = vsub.f32 %v662, %v956
        %v958 = vand.u32 %v957, 4294901760
        %959 = vmatmul.f32.gmra.mxu0 %v958
        %v960 = vpop.f32.mrf.mxu0
        %v961 = vadd.f32 %v922, %v960
        %962 = vdwg.mxu0
        %v963 = vand.u32 %v694, 4294901760
        %v964 = vsub.f32 %v694, %v963
        %v965 = vand.u32 %v964, 4294901760
        %966 = vmatpush.msra.mxu0 %v965
        %v967 = vand.u32 %v692, 4294901760
        %v968 = vsub.f32 %v692, %v967
        %v969 = vand.u32 %v968, 4294901760
        %970 = vmatpush.msra.mxu0 %v969
        %v971 = vand.u32 %v690, 4294901760
        %v972 = vsub.f32 %v690, %v971
        %v973 = vand.u32 %v972, 4294901760
        %974 = vmatpush.msra.mxu0 %v973
        %v975 = vand.u32 %v688, 4294901760
        %v976 = vsub.f32 %v688, %v975
        %v977 = vand.u32 %v976, 4294901760
        %978 = vmatpush.msra.mxu0 %v977
        %v979 = vand.u32 %v686, 4294901760
        %v980 = vsub.f32 %v686, %v979
        %v981 = vand.u32 %v980, 4294901760
        %982 = vmatpush.msra.mxu0 %v981
        %v983 = vand.u32 %v684, 4294901760
        %v984 = vsub.f32 %v684, %v983
        %v985 = vand.u32 %v984, 4294901760
        %986 = vmatpush.msra.mxu0 %v985
        %v987 = vand.u32 %v682, 4294901760
        %v988 = vsub.f32 %v682, %v987
        %v989 = vand.u32 %v988, 4294901760
        %990 = vmatpush.msra.mxu0 %v989
        %v991 = vand.u32 %v680, 4294901760
        %v992 = vsub.f32 %v680, %v991
        %v993 = vand.u32 %v992, 4294901760
        %994 = vmatpush.msra.mxu0 %v993
        %v995 = vand.u32 %v678, 4294901760
        %v996 = vsub.f32 %v678, %v995
        %v997 = vand.u32 %v996, 4294901760
        %998 = vmatpush.msra.mxu0 %v997
        %v999 = vand.u32 %v676, 4294901760
        %v1000 = vsub.f32 %v676, %v999
        %v1001 = vand.u32 %v1000, 4294901760
        %1002 = vmatpush.msra.mxu0 %v1001
        %v1003 = vand.u32 %v674, 4294901760
        %v1004 = vsub.f32 %v674, %v1003
        %v1005 = vand.u32 %v1004, 4294901760
        %1006 = vmatpush.msra.mxu0 %v1005
        %v1007 = vand.u32 %v672, 4294901760
        %v1008 = vsub.f32 %v672, %v1007
        %v1009 = vand.u32 %v1008, 4294901760
        %1010 = vmatpush.msra.mxu0 %v1009
        %v1011 = vand.u32 %v670, 4294901760
        %v1012 = vsub.f32 %v670, %v1011
        %v1013 = vand.u32 %v1012, 4294901760
        %1014 = vmatpush.msra.mxu0 %v1013
        %v1015 = vand.u32 %v668, 4294901760
        %v1016 = vsub.f32 %v668, %v1015
        %v1017 = vand.u32 %v1016, 4294901760
        %1018 = vmatpush.msra.mxu0 %v1017
        %v1019 = vand.u32 %v666, 4294901760
        %v1020 = vsub.f32 %v666, %v1019
        %v1021 = vand.u32 %v1020, 4294901760
        %1022 = vmatpush.msra.mxu0 %v1021
        %v1023 = vand.u32 %v664, 4294901760
        %v1024 = vsub.f32 %v664, %v1023
        %v1025 = vand.u32 %v1024, 4294901760
        %1026 = vmatpush.msra.mxu0 %v1025
        %v1027 = vand.u32 %v662, 4294901760
        %1028 = vmatmul.f32.gmra.mxu0 %v1027
        %v1029 = vpop.f32.mrf.mxu0
        %v1030 = vadd.f32 %v961, %v1029
        %1031 = vdwg.mxu0
        %v1032 = vand.u32 %v694, 4294901760
        %1033 = vmatpush.msra.mxu0 %v1032
        %v1034 = vand.u32 %v692, 4294901760
        %1035 = vmatpush.msra.mxu0 %v1034
        %v1036 = vand.u32 %v690, 4294901760
        %1037 = vmatpush.msra.mxu0 %v1036
        %v1038 = vand.u32 %v688, 4294901760
        %1039 = vmatpush.msra.mxu0 %v1038
        %v1040 = vand.u32 %v686, 4294901760
        %1041 = vmatpush.msra.mxu0 %v1040
        %v1042 = vand.u32 %v684, 4294901760
        %1043 = vmatpush.msra.mxu0 %v1042
        %v1044 = vand.u32 %v682, 4294901760
        %1045 = vmatpush.msra.mxu0 %v1044
        %v1046 = vand.u32 %v680, 4294901760
        %1047 = vmatpush.msra.mxu0 %v1046
        %v1048 = vand.u32 %v678, 4294901760
        %1049 = vmatpush.msra.mxu0 %v1048
        %v1050 = vand.u32 %v676, 4294901760
        %1051 = vmatpush.msra.mxu0 %v1050
        %v1052 = vand.u32 %v674, 4294901760
        %1053 = vmatpush.msra.mxu0 %v1052
        %v1054 = vand.u32 %v672, 4294901760
        %1055 = vmatpush.msra.mxu0 %v1054
        %v1056 = vand.u32 %v670, 4294901760
        %1057 = vmatpush.msra.mxu0 %v1056
        %v1058 = vand.u32 %v668, 4294901760
        %1059 = vmatpush.msra.mxu0 %v1058
        %v1060 = vand.u32 %v666, 4294901760
        %1061 = vmatpush.msra.mxu0 %v1060
        %v1062 = vand.u32 %v664, 4294901760
        %1063 = vmatpush.msra.mxu0 %v1062
        %v1064 = vand.u32 %v662, 4294901760
        %1065 = vmatmul.f32.gmra.mxu0 %v1064
        %v1066 = vpop.f32.mrf.mxu0
        %v1067 = vadd.f32 %v1030, %v1066
        %1068 = vdwg.mxu0
        %v1069 = vand.u32 %v726, 4294901760
        %1070 = vmatpush.msra.mxu0 %v1069
        %v1071 = vand.u32 %v724, 4294901760
        %1072 = vmatpush.msra.mxu0 %v1071
        %v1073 = vand.u32 %v722, 4294901760
        %1074 = vmatpush.msra.mxu0 %v1073
        %v1075 = vand.u32 %v720, 4294901760
        %1076 = vmatpush.msra.mxu0 %v1075
        %v1077 = vand.u32 %v718, 4294901760
        %1078 = vmatpush.msra.mxu0 %v1077
        %v1079 = vand.u32 %v716, 4294901760
        %1080 = vmatpush.msra.mxu0 %v1079
        %v1081 = vand.u32 %v714, 4294901760
        %1082 = vmatpush.msra.mxu0 %v1081
        %v1083 = vand.u32 %v712, 4294901760
        %1084 = vmatpush.msra.mxu0 %v1083
        %v1085 = vand.u32 %v710, 4294901760
        %1086 = vmatpush.msra.mxu0 %v1085
        %v1087 = vand.u32 %v708, 4294901760
        %1088 = vmatpush.msra.mxu0 %v1087
        %v1089 = vand.u32 %v706, 4294901760
        %1090 = vmatpush.msra.mxu0 %v1089
        %v1091 = vand.u32 %v704, 4294901760
        %1092 = vmatpush.msra.mxu0 %v1091
        %v1093 = vand.u32 %v702, 4294901760
        %1094 = vmatpush.msra.mxu0 %v1093
        %v1095 = vand.u32 %v700, 4294901760
        %1096 = vmatpush.msra.mxu0 %v1095
        %v1097 = vand.u32 %v698, 4294901760
        %1098 = vmatpush.msra.mxu0 %v1097
        %v1099 = vand.u32 %v696, 4294901760
        %1100 = vmatpush.msra.mxu0 %v1099
        %v1101 = vand.u32 %v663, 4294901760
        %v1102 = vsub.f32 %v663, %v1101
        %v1103 = vand.u32 %v1102, 4294901760
        %v1104 = vsub.f32 %v1102, %v1103
        %v1105 = vand.u32 %v1104, 4294901760
        %1106 = vmatmul.f32.gmra.mxu0 %v1105
        %v1107 = vpop.f32.mrf.mxu0
        %v1108 = vadd.f32 %v1067, %v1107
        %1109 = vdwg.mxu0
        %v1110 = vand.u32 %v726, 4294901760
        %v1111 = vsub.f32 %v726, %v1110
        %v1112 = vand.u32 %v1111, 4294901760
        %v1113 = vsub.f32 %v1111, %v1112
        %v1114 = vand.u32 %v1113, 4294901760
        %1115 = vmatpush.msra.mxu0 %v1114
        %v1116 = vand.u32 %v724, 4294901760
        %v1117 = vsub.f32 %v724, %v1116
        %v1118 = vand.u32 %v1117, 4294901760
        %v1119 = vsub.f32 %v1117, %v1118
        %v1120 = vand.u32 %v1119, 4294901760
        %1121 = vmatpush.msra.mxu0 %v1120
        %v1122 = vand.u32 %v722, 4294901760
        %v1123 = vsub.f32 %v722, %v1122
        %v1124 = vand.u32 %v1123, 4294901760
        %v1125 = vsub.f32 %v1123, %v1124
        %v1126 = vand.u32 %v1125, 4294901760
        %1127 = vmatpush.msra.mxu0 %v1126
        %v1128 = vand.u32 %v720, 4294901760
        %v1129 = vsub.f32 %v720, %v1128
        %v1130 = vand.u32 %v1129, 4294901760
        %v1131 = vsub.f32 %v1129, %v1130
        %v1132 = vand.u32 %v1131, 4294901760
        %1133 = vmatpush.msra.mxu0 %v1132
        %v1134 = vand.u32 %v718, 4294901760
        %v1135 = vsub.f32 %v718, %v1134
        %v1136 = vand.u32 %v1135, 4294901760
        %v1137 = vsub.f32 %v1135, %v1136
        %v1138 = vand.u32 %v1137, 4294901760
        %1139 = vmatpush.msra.mxu0 %v1138
        %v1140 = vand.u32 %v716, 4294901760
        %v1141 = vsub.f32 %v716, %v1140
        %v1142 = vand.u32 %v1141, 4294901760
        %v1143 = vsub.f32 %v1141, %v1142
        %v1144 = vand.u32 %v1143, 4294901760
        %1145 = vmatpush.msra.mxu0 %v1144
        %v1146 = vand.u32 %v714, 4294901760
        %v1147 = vsub.f32 %v714, %v1146
        %v1148 = vand.u32 %v1147, 4294901760
        %v1149 = vsub.f32 %v1147, %v1148
        %v1150 = vand.u32 %v1149, 4294901760
        %1151 = vmatpush.msra.mxu0 %v1150
        %v1152 = vand.u32 %v712, 4294901760
        %v1153 = vsub.f32 %v712, %v1152
        %v1154 = vand.u32 %v1153, 4294901760
        %v1155 = vsub.f32 %v1153, %v1154
        %v1156 = vand.u32 %v1155, 4294901760
        %1157 = vmatpush.msra.mxu0 %v1156
        %v1158 = vand.u32 %v710, 4294901760
        %v1159 = vsub.f32 %v710, %v1158
        %v1160 = vand.u32 %v1159, 4294901760
        %v1161 = vsub.f32 %v1159, %v1160
        %v1162 = vand.u32 %v1161, 4294901760
        %1163 = vmatpush.msra.mxu0 %v1162
        %v1164 = vand.u32 %v708, 4294901760
        %v1165 = vsub.f32 %v708, %v1164
        %v1166 = vand.u32 %v1165, 4294901760
        %v1167 = vsub.f32 %v1165, %v1166
        %v1168 = vand.u32 %v1167, 4294901760
        %1169 = vmatpush.msra.mxu0 %v1168
        %v1170 = vand.u32 %v706, 4294901760
        %v1171 = vsub.f32 %v706, %v1170
        %v1172 = vand.u32 %v1171, 4294901760
        %v1173 = vsub.f32 %v1171, %v1172
        %v1174 = vand.u32 %v1173, 4294901760
        %1175 = vmatpush.msra.mxu0 %v1174
        %v1176 = vand.u32 %v704, 4294901760
        %v1177 = vsub.f32 %v704, %v1176
        %v1178 = vand.u32 %v1177, 4294901760
        %v1179 = vsub.f32 %v1177, %v1178
        %v1180 = vand.u32 %v1179, 4294901760
        %1181 = vmatpush.msra.mxu0 %v1180
        %v1182 = vand.u32 %v702, 4294901760
        %v1183 = vsub.f32 %v702, %v1182
        %v1184 = vand.u32 %v1183, 4294901760
        %v1185 = vsub.f32 %v1183, %v1184
        %v1186 = vand.u32 %v1185, 4294901760
        %1187 = vmatpush.msra.mxu0 %v1186
        %v1188 = vand.u32 %v700, 4294901760
        %v1189 = vsub.f32 %v700, %v1188
        %v1190 = vand.u32 %v1189, 4294901760
        %v1191 = vsub.f32 %v1189, %v1190
        %v1192 = vand.u32 %v1191, 4294901760
        %1193 = vmatpush.msra.mxu0 %v1192
        %v1194 = vand.u32 %v698, 4294901760
        %v1195 = vsub.f32 %v698, %v1194
        %v1196 = vand.u32 %v1195, 4294901760
        %v1197 = vsub.f32 %v1195, %v1196
        %v1198 = vand.u32 %v1197, 4294901760
        %1199 = vmatpush.msra.mxu0 %v1198
        %v1200 = vand.u32 %v696, 4294901760
        %v1201 = vsub.f32 %v696, %v1200
        %v1202 = vand.u32 %v1201, 4294901760
        %v1203 = vsub.f32 %v1201, %v1202
        %v1204 = vand.u32 %v1203, 4294901760
        %1205 = vmatpush.msra.mxu0 %v1204
        %v1206 = vand.u32 %v663, 4294901760
        %1207 = vmatmul.f32.gmra.mxu0 %v1206
        %v1208 = vpop.f32.mrf.mxu0
        %v1209 = vadd.f32 %v1108, %v1208
        %1210 = vdwg.mxu0
        %v1211 = vand.u32 %v726, 4294901760
        %v1212 = vsub.f32 %v726, %v1211
        %1213 = vmatpush.msra.mxu0 %v1212
        %v1214 = vand.u32 %v724, 4294901760
        %v1215 = vsub.f32 %v724, %v1214
        %1216 = vmatpush.msra.mxu0 %v1215
        %v1217 = vand.u32 %v722, 4294901760
        %v1218 = vsub.f32 %v722, %v1217
        %1219 = vmatpush.msra.mxu0 %v1218
        %v1220 = vand.u32 %v720, 4294901760
        %v1221 = vsub.f32 %v720, %v1220
        %1222 = vmatpush.msra.mxu0 %v1221
        %v1223 = vand.u32 %v718, 4294901760
        %v1224 = vsub.f32 %v718, %v1223
        %1225 = vmatpush.msra.mxu0 %v1224
        %v1226 = vand.u32 %v716, 4294901760
        %v1227 = vsub.f32 %v716, %v1226
        %1228 = vmatpush.msra.mxu0 %v1227
        %v1229 = vand.u32 %v714, 4294901760
        %v1230 = vsub.f32 %v714, %v1229
        %1231 = vmatpush.msra.mxu0 %v1230
        %v1232 = vand.u32 %v712, 4294901760
        %v1233 = vsub.f32 %v712, %v1232
        %1234 = vmatpush.msra.mxu0 %v1233
        %v1235 = vand.u32 %v710, 4294901760
        %v1236 = vsub.f32 %v710, %v1235
        %1237 = vmatpush.msra.mxu0 %v1236
        %v1238 = vand.u32 %v708, 4294901760
        %v1239 = vsub.f32 %v708, %v1238
        %1240 = vmatpush.msra.mxu0 %v1239
        %v1241 = vand.u32 %v706, 4294901760
        %v1242 = vsub.f32 %v706, %v1241
        %1243 = vmatpush.msra.mxu0 %v1242
        %v1244 = vand.u32 %v704, 4294901760
        %v1245 = vsub.f32 %v704, %v1244
        %1246 = vmatpush.msra.mxu0 %v1245
        %v1247 = vand.u32 %v702, 4294901760
        %v1248 = vsub.f32 %v702, %v1247
        %1249 = vmatpush.msra.mxu0 %v1248
        %v1250 = vand.u32 %v700, 4294901760
        %v1251 = vsub.f32 %v700, %v1250
        %1252 = vmatpush.msra.mxu0 %v1251
        %v1253 = vand.u32 %v698, 4294901760
        %v1254 = vsub.f32 %v698, %v1253
        %1255 = vmatpush.msra.mxu0 %v1254
        %v1256 = vand.u32 %v696, 4294901760
        %v1257 = vsub.f32 %v696, %v1256
        %1258 = vmatpush.msra.mxu0 %v1257
        %v1259 = vand.u32 %v663, 4294901760
        %v1260 = vsub.f32 %v663, %v1259
        %1261 = vmatmul.f32.gmra.mxu0 %v1260
        %v1262 = vpop.f32.mrf.mxu0
        %v1263 = vadd.f32 %v1209, %v1262
        %1264 = vdwg.mxu0
        %v1265 = vand.u32 %v726, 4294901760
        %1266 = vmatpush.msra.mxu0 %v1265
        %v1267 = vand.u32 %v724, 4294901760
        %1268 = vmatpush.msra.mxu0 %v1267
        %v1269 = vand.u32 %v722, 4294901760
        %1270 = vmatpush.msra.mxu0 %v1269
        %v1271 = vand.u32 %v720, 4294901760
        %1272 = vmatpush.msra.mxu0 %v1271
        %v1273 = vand.u32 %v718, 4294901760
        %1274 = vmatpush.msra.mxu0 %v1273
        %v1275 = vand.u32 %v716, 4294901760
        %1276 = vmatpush.msra.mxu0 %v1275
        %v1277 = vand.u32 %v714, 4294901760
        %1278 = vmatpush.msra.mxu0 %v1277
        %v1279 = vand.u32 %v712, 4294901760
        %1280 = vmatpush.msra.mxu0 %v1279
        %v1281 = vand.u32 %v710, 4294901760
        %1282 = vmatpush.msra.mxu0 %v1281
        %v1283 = vand.u32 %v708, 4294901760
        %1284 = vmatpush.msra.mxu0 %v1283
        %v1285 = vand.u32 %v706, 4294901760
        %1286 = vmatpush.msra.mxu0 %v1285
        %v1287 = vand.u32 %v704, 4294901760
        %1288 = vmatpush.msra.mxu0 %v1287
        %v1289 = vand.u32 %v702, 4294901760
        %1290 = vmatpush.msra.mxu0 %v1289
        %v1291 = vand.u32 %v700, 4294901760
        %1292 = vmatpush.msra.mxu0 %v1291
        %v1293 = vand.u32 %v698, 4294901760
        %1294 = vmatpush.msra.mxu0 %v1293
        %v1295 = vand.u32 %v696, 4294901760
        %1296 = vmatpush.msra.mxu0 %v1295
        %v1297 = vand.u32 %v663, 4294901760
        %v1298 = vsub.f32 %v663, %v1297
        %v1299 = vand.u32 %v1298, 4294901760
        %1300 = vmatmul.f32.gmra.mxu0 %v1299
        %v1301 = vpop.f32.mrf.mxu0
        %v1302 = vadd.f32 %v1263, %v1301
        %1303 = vdwg.mxu0
        %v1304 = vand.u32 %v726, 4294901760
        %v1305 = vsub.f32 %v726, %v1304
        %v1306 = vand.u32 %v1305, 4294901760
        %1307 = vmatpush.msra.mxu0 %v1306
        %v1308 = vand.u32 %v724, 4294901760
        %v1309 = vsub.f32 %v724, %v1308
        %v1310 = vand.u32 %v1309, 4294901760
        %1311 = vmatpush.msra.mxu0 %v1310
        %v1312 = vand.u32 %v722, 4294901760
        %v1313 = vsub.f32 %v722, %v1312
        %v1314 = vand.u32 %v1313, 4294901760
        %1315 = vmatpush.msra.mxu0 %v1314
        %v1316 = vand.u32 %v720, 4294901760
        %v1317 = vsub.f32 %v720, %v1316
        %v1318 = vand.u32 %v1317, 4294901760
        %1319 = vmatpush.msra.mxu0 %v1318
        %v1320 = vand.u32 %v718, 4294901760
        %v1321 = vsub.f32 %v718, %v1320
        %v1322 = vand.u32 %v1321, 4294901760
        %1323 = vmatpush.msra.mxu0 %v1322
        %v1324 = vand.u32 %v716, 4294901760
        %v1325 = vsub.f32 %v716, %v1324
        %v1326 = vand.u32 %v1325, 4294901760
        %1327 = vmatpush.msra.mxu0 %v1326
        %v1328 = vand.u32 %v714, 4294901760
        %v1329 = vsub.f32 %v714, %v1328
        %v1330 = vand.u32 %v1329, 4294901760
        %1331 = vmatpush.msra.mxu0 %v1330
        %v1332 = vand.u32 %v712, 4294901760
        %v1333 = vsub.f32 %v712, %v1332
        %v1334 = vand.u32 %v1333, 4294901760
        %1335 = vmatpush.msra.mxu0 %v1334
        %v1336 = vand.u32 %v710, 4294901760
        %v1337 = vsub.f32 %v710, %v1336
        %v1338 = vand.u32 %v1337, 4294901760
        %1339 = vmatpush.msra.mxu0 %v1338
        %v1340 = vand.u32 %v708, 4294901760
        %v1341 = vsub.f32 %v708, %v1340
        %v1342 = vand.u32 %v1341, 4294901760
        %1343 = vmatpush.msra.mxu0 %v1342
        %v1344 = vand.u32 %v706, 4294901760
        %v1345 = vsub.f32 %v706, %v1344
        %v1346 = vand.u32 %v1345, 4294901760
        %1347 = vmatpush.msra.mxu0 %v1346
        %v1348 = vand.u32 %v704, 4294901760
        %v1349 = vsub.f32 %v704, %v1348
        %v1350 = vand.u32 %v1349, 4294901760
        %1351 = vmatpush.msra.mxu0 %v1350
        %v1352 = vand.u32 %v702, 4294901760
        %v1353 = vsub.f32 %v702, %v1352
        %v1354 = vand.u32 %v1353, 4294901760
        %1355 = vmatpush.msra.mxu0 %v1354
        %v1356 = vand.u32 %v700, 4294901760
        %v1357 = vsub.f32 %v700, %v1356
        %v1358 = vand.u32 %v1357, 4294901760
        %1359 = vmatpush.msra.mxu0 %v1358
        %v1360 = vand.u32 %v698, 4294901760
        %v1361 = vsub.f32 %v698, %v1360
        %v1362 = vand.u32 %v1361, 4294901760
        %1363 = vmatpush.msra.mxu0 %v1362
        %v1364 = vand.u32 %v696, 4294901760
        %v1365 = vsub.f32 %v696, %v1364
        %v1366 = vand.u32 %v1365, 4294901760
        %1367 = vmatpush.msra.mxu0 %v1366
        %v1368 = vand.u32 %v663, 4294901760
        %1369 = vmatmul.f32.gmra.mxu0 %v1368
        %v1370 = vpop.f32.mrf.mxu0
        %v1371 = vadd.f32 %v1302, %v1370
        %1372 = vdwg.mxu0
        %v1373 = vand.u32 %v726, 4294901760
        %1374 = vmatpush.msra.mxu0 %v1373
        %v1375 = vand.u32 %v724, 4294901760
        %1376 = vmatpush.msra.mxu0 %v1375
        %v1377 = vand.u32 %v722, 4294901760
        %1378 = vmatpush.msra.mxu0 %v1377
        %v1379 = vand.u32 %v720, 4294901760
        %1380 = vmatpush.msra.mxu0 %v1379
        %v1381 = vand.u32 %v718, 4294901760
        %1382 = vmatpush.msra.mxu0 %v1381
        %v1383 = vand.u32 %v716, 4294901760
        %1384 = vmatpush.msra.mxu0 %v1383
        %v1385 = vand.u32 %v714, 4294901760
        %1386 = vmatpush.msra.mxu0 %v1385
        %v1387 = vand.u32 %v712, 4294901760
        %1388 = vmatpush.msra.mxu0 %v1387
        %v1389 = vand.u32 %v710, 4294901760
        %1390 = vmatpush.msra.mxu0 %v1389
        %v1391 = vand.u32 %v708, 4294901760
        %1392 = vmatpush.msra.mxu0 %v1391
        %v1393 = vand.u32 %v706, 4294901760
        %1394 = vmatpush.msra.mxu0 %v1393
        %v1395 = vand.u32 %v704, 4294901760
        %1396 = vmatpush.msra.mxu0 %v1395
        %v1397 = vand.u32 %v702, 4294901760
        %1398 = vmatpush.msra.mxu0 %v1397
        %v1399 = vand.u32 %v700, 4294901760
        %1400 = vmatpush.msra.mxu0 %v1399
        %v1401 = vand.u32 %v698, 4294901760
        %1402 = vmatpush.msra.mxu0 %v1401
        %v1403 = vand.u32 %v696, 4294901760
        %1404 = vmatpush.msra.mxu0 %v1403
        %v1405 = vand.u32 %v663, 4294901760
        %1406 = vmatmul.f32.gmra.mxu0 %v1405
        %v1407 = vpop.f32.mrf.mxu0
        %v1408 = vadd.f32 %v1371, %v1407
        %1409 = vdwg.mxu0
        %v1410 = vand.u32 %v695, 4294901760
        %1411 = vmatpush.msra.mxu0 %v1410
        %v1412 = vand.u32 %v693, 4294901760
        %1413 = vmatpush.msra.mxu0 %v1412
        %v1414 = vand.u32 %v691, 4294901760
        %1415 = vmatpush.msra.mxu0 %v1414
        %v1416 = vand.u32 %v689, 4294901760
        %1417 = vmatpush.msra.mxu0 %v1416
        %v1418 = vand.u32 %v687, 4294901760
        %1419 = vmatpush.msra.mxu0 %v1418
        %v1420 = vand.u32 %v685, 4294901760
        %1421 = vmatpush.msra.mxu0 %v1420
        %v1422 = vand.u32 %v683, 4294901760
        %1423 = vmatpush.msra.mxu0 %v1422
        %v1424 = vand.u32 %v681, 4294901760
        %1425 = vmatpush.msra.mxu0 %v1424
        %v1426 = vand.u32 %v679, 4294901760
        %1427 = vmatpush.msra.mxu0 %v1426
        %v1428 = vand.u32 %v677, 4294901760
        %1429 = vmatpush.msra.mxu0 %v1428
        %v1430 = vand.u32 %v675, 4294901760
        %1431 = vmatpush.msra.mxu0 %v1430
        %v1432 = vand.u32 %v673, 4294901760
        %1433 = vmatpush.msra.mxu0 %v1432
        %v1434 = vand.u32 %v671, 4294901760
        %1435 = vmatpush.msra.mxu0 %v1434
        %v1436 = vand.u32 %v669, 4294901760
        %1437 = vmatpush.msra.mxu0 %v1436
        %v1438 = vand.u32 %v667, 4294901760
        %1439 = vmatpush.msra.mxu0 %v1438
        %v1440 = vand.u32 %v665, 4294901760
        %1441 = vmatpush.msra.mxu0 %v1440
        %v1442 = vand.u32 %v662, 4294901760
        %v1443 = vsub.f32 %v662, %v1442
        %v1444 = vand.u32 %v1443, 4294901760
        %v1445 = vsub.f32 %v1443, %v1444
        %v1446 = vand.u32 %v1445, 4294901760
        %1447 = vmatmul.f32.gmra.mxu0 %v1446
        %v1448 = vpop.f32.mrf.mxu0
        %v1449 = vadd.f32 0.0, %v1448
        %1450 = vdwg.mxu0
        %v1451 = vand.u32 %v695, 4294901760
        %v1452 = vsub.f32 %v695, %v1451
        %v1453 = vand.u32 %v1452, 4294901760
        %v1454 = vsub.f32 %v1452, %v1453
        %v1455 = vand.u32 %v1454, 4294901760
        %1456 = vmatpush.msra.mxu0 %v1455
        %v1457 = vand.u32 %v693, 4294901760
        %v1458 = vsub.f32 %v693, %v1457
        %v1459 = vand.u32 %v1458, 4294901760
        %v1460 = vsub.f32 %v1458, %v1459
        %v1461 = vand.u32 %v1460, 4294901760
        %1462 = vmatpush.msra.mxu0 %v1461
        %v1463 = vand.u32 %v691, 4294901760
        %v1464 = vsub.f32 %v691, %v1463
        %v1465 = vand.u32 %v1464, 4294901760
        %v1466 = vsub.f32 %v1464, %v1465
        %v1467 = vand.u32 %v1466, 4294901760
        %1468 = vmatpush.msra.mxu0 %v1467
        %v1469 = vand.u32 %v689, 4294901760
        %v1470 = vsub.f32 %v689, %v1469
        %v1471 = vand.u32 %v1470, 4294901760
        %v1472 = vsub.f32 %v1470, %v1471
        %v1473 = vand.u32 %v1472, 4294901760
        %1474 = vmatpush.msra.mxu0 %v1473
        %v1475 = vand.u32 %v687, 4294901760
        %v1476 = vsub.f32 %v687, %v1475
        %v1477 = vand.u32 %v1476, 4294901760
        %v1478 = vsub.f32 %v1476, %v1477
        %v1479 = vand.u32 %v1478, 4294901760
        %1480 = vmatpush.msra.mxu0 %v1479
        %v1481 = vand.u32 %v685, 4294901760
        %v1482 = vsub.f32 %v685, %v1481
        %v1483 = vand.u32 %v1482, 4294901760
        %v1484 = vsub.f32 %v1482, %v1483
        %v1485 = vand.u32 %v1484, 4294901760
        %1486 = vmatpush.msra.mxu0 %v1485
        %v1487 = vand.u32 %v683, 4294901760
        %v1488 = vsub.f32 %v683, %v1487
        %v1489 = vand.u32 %v1488, 4294901760
        %v1490 = vsub.f32 %v1488, %v1489
        %v1491 = vand.u32 %v1490, 4294901760
        %1492 = vmatpush.msra.mxu0 %v1491
        %v1493 = vand.u32 %v681, 4294901760
        %v1494 = vsub.f32 %v681, %v1493
        %v1495 = vand.u32 %v1494, 4294901760
        %v1496 = vsub.f32 %v1494, %v1495
        %v1497 = vand.u32 %v1496, 4294901760
        %1498 = vmatpush.msra.mxu0 %v1497
        %v1499 = vand.u32 %v679, 4294901760
        %v1500 = vsub.f32 %v679, %v1499
        %v1501 = vand.u32 %v1500, 4294901760
        %v1502 = vsub.f32 %v1500, %v1501
        %v1503 = vand.u32 %v1502, 4294901760
        %1504 = vmatpush.msra.mxu0 %v1503
        %v1505 = vand.u32 %v677, 4294901760
        %v1506 = vsub.f32 %v677, %v1505
        %v1507 = vand.u32 %v1506, 4294901760
        %v1508 = vsub.f32 %v1506, %v1507
        %v1509 = vand.u32 %v1508, 4294901760
        %1510 = vmatpush.msra.mxu0 %v1509
        %v1511 = vand.u32 %v675, 4294901760
        %v1512 = vsub.f32 %v675, %v1511
        %v1513 = vand.u32 %v1512, 4294901760
        %v1514 = vsub.f32 %v1512, %v1513
        %v1515 = vand.u32 %v1514, 4294901760
        %1516 = vmatpush.msra.mxu0 %v1515
        %v1517 = vand.u32 %v673, 4294901760
        %v1518 = vsub.f32 %v673, %v1517
        %v1519 = vand.u32 %v1518, 4294901760
        %v1520 = vsub.f32 %v1518, %v1519
        %v1521 = vand.u32 %v1520, 4294901760
        %1522 = vmatpush.msra.mxu0 %v1521
        %v1523 = vand.u32 %v671, 4294901760
        %v1524 = vsub.f32 %v671, %v1523
        %v1525 = vand.u32 %v1524, 4294901760
        %v1526 = vsub.f32 %v1524, %v1525
        %v1527 = vand.u32 %v1526, 4294901760
        %1528 = vmatpush.msra.mxu0 %v1527
        %v1529 = vand.u32 %v669, 4294901760
        %v1530 = vsub.f32 %v669, %v1529
        %v1531 = vand.u32 %v1530, 4294901760
        %v1532 = vsub.f32 %v1530, %v1531
        %v1533 = vand.u32 %v1532, 4294901760
        %1534 = vmatpush.msra.mxu0 %v1533
        %v1535 = vand.u32 %v667, 4294901760
        %v1536 = vsub.f32 %v667, %v1535
        %v1537 = vand.u32 %v1536, 4294901760
        %v1538 = vsub.f32 %v1536, %v1537
        %v1539 = vand.u32 %v1538, 4294901760
        %1540 = vmatpush.msra.mxu0 %v1539
        %v1541 = vand.u32 %v665, 4294901760
        %v1542 = vsub.f32 %v665, %v1541
        %v1543 = vand.u32 %v1542, 4294901760
        %v1544 = vsub.f32 %v1542, %v1543
        %v1545 = vand.u32 %v1544, 4294901760
        %1546 = vmatpush.msra.mxu0 %v1545
        %v1547 = vand.u32 %v662, 4294901760
        %1548 = vmatmul.f32.gmra.mxu0 %v1547
        %v1549 = vpop.f32.mrf.mxu0
        %v1550 = vadd.f32 %v1449, %v1549
        %1551 = vdwg.mxu0
        %v1552 = vand.u32 %v695, 4294901760
        %v1553 = vsub.f32 %v695, %v1552
        %1554 = vmatpush.msra.mxu0 %v1553
        %v1555 = vand.u32 %v693, 4294901760
        %v1556 = vsub.f32 %v693, %v1555
        %1557 = vmatpush.msra.mxu0 %v1556
        %v1558 = vand.u32 %v691, 4294901760
        %v1559 = vsub.f32 %v691, %v1558
        %1560 = vmatpush.msra.mxu0 %v1559
        %v1561 = vand.u32 %v689, 4294901760
        %v1562 = vsub.f32 %v689, %v1561
        %1563 = vmatpush.msra.mxu0 %v1562
        %v1564 = vand.u32 %v687, 4294901760
        %v1565 = vsub.f32 %v687, %v1564
        %1566 = vmatpush.msra.mxu0 %v1565
        %v1567 = vand.u32 %v685, 4294901760
        %v1568 = vsub.f32 %v685, %v1567
        %1569 = vmatpush.msra.mxu0 %v1568
        %v1570 = vand.u32 %v683, 4294901760
        %v1571 = vsub.f32 %v683, %v1570
        %1572 = vmatpush.msra.mxu0 %v1571
        %v1573 = vand.u32 %v681, 4294901760
        %v1574 = vsub.f32 %v681, %v1573
        %1575 = vmatpush.msra.mxu0 %v1574
        %v1576 = vand.u32 %v679, 4294901760
        %v1577 = vsub.f32 %v679, %v1576
        %1578 = vmatpush.msra.mxu0 %v1577
        %v1579 = vand.u32 %v677, 4294901760
        %v1580 = vsub.f32 %v677, %v1579
        %1581 = vmatpush.msra.mxu0 %v1580
        %v1582 = vand.u32 %v675, 4294901760
        %v1583 = vsub.f32 %v675, %v1582
        %1584 = vmatpush.msra.mxu0 %v1583
        %v1585 = vand.u32 %v673, 4294901760
        %v1586 = vsub.f32 %v673, %v1585
        %1587 = vmatpush.msra.mxu0 %v1586
        %v1588 = vand.u32 %v671, 4294901760
        %v1589 = vsub.f32 %v671, %v1588
        %1590 = vmatpush.msra.mxu0 %v1589
        %v1591 = vand.u32 %v669, 4294901760
        %v1592 = vsub.f32 %v669, %v1591
        %1593 = vmatpush.msra.mxu0 %v1592
        %v1594 = vand.u32 %v667, 4294901760
        %v1595 = vsub.f32 %v667, %v1594
        %1596 = vmatpush.msra.mxu0 %v1595
        %v1597 = vand.u32 %v665, 4294901760
        %v1598 = vsub.f32 %v665, %v1597
        %1599 = vmatpush.msra.mxu0 %v1598
        %v1600 = vand.u32 %v662, 4294901760
        %v1601 = vsub.f32 %v662, %v1600
        %1602 = vmatmul.f32.gmra.mxu0 %v1601
        %v1603 = vpop.f32.mrf.mxu0
        %v1604 = vadd.f32 %v1550, %v1603
        %1605 = vdwg.mxu0
        %v1606 = vand.u32 %v695, 4294901760
        %1607 = vmatpush.msra.mxu0 %v1606
        %v1608 = vand.u32 %v693, 4294901760
        %1609 = vmatpush.msra.mxu0 %v1608
        %v1610 = vand.u32 %v691, 4294901760
        %1611 = vmatpush.msra.mxu0 %v1610
        %v1612 = vand.u32 %v689, 4294901760
        %1613 = vmatpush.msra.mxu0 %v1612
        %v1614 = vand.u32 %v687, 4294901760
        %1615 = vmatpush.msra.mxu0 %v1614
        %v1616 = vand.u32 %v685, 4294901760
        %1617 = vmatpush.msra.mxu0 %v1616
        %v1618 = vand.u32 %v683, 4294901760
        %1619 = vmatpush.msra.mxu0 %v1618
        %v1620 = vand.u32 %v681, 4294901760
        %1621 = vmatpush.msra.mxu0 %v1620
        %v1622 = vand.u32 %v679, 4294901760
        %1623 = vmatpush.msra.mxu0 %v1622
        %v1624 = vand.u32 %v677, 4294901760
        %1625 = vmatpush.msra.mxu0 %v1624
        %v1626 = vand.u32 %v675, 4294901760
        %1627 = vmatpush.msra.mxu0 %v1626
        %v1628 = vand.u32 %v673, 4294901760
        %1629 = vmatpush.msra.mxu0 %v1628
        %v1630 = vand.u32 %v671, 4294901760
        %1631 = vmatpush.msra.mxu0 %v1630
        %v1632 = vand.u32 %v669, 4294901760
        %1633 = vmatpush.msra.mxu0 %v1632
        %v1634 = vand.u32 %v667, 4294901760
        %1635 = vmatpush.msra.mxu0 %v1634
        %v1636 = vand.u32 %v665, 4294901760
        %1637 = vmatpush.msra.mxu0 %v1636
        %v1638 = vand.u32 %v662, 4294901760
        %v1639 = vsub.f32 %v662, %v1638
        %v1640 = vand.u32 %v1639, 4294901760
        %1641 = vmatmul.f32.gmra.mxu0 %v1640
        %v1642 = vpop.f32.mrf.mxu0
        %v1643 = vadd.f32 %v1604, %v1642
        %1644 = vdwg.mxu0
        %v1645 = vand.u32 %v695, 4294901760
        %v1646 = vsub.f32 %v695, %v1645
        %v1647 = vand.u32 %v1646, 4294901760
        %1648 = vmatpush.msra.mxu0 %v1647
        %v1649 = vand.u32 %v693, 4294901760
        %v1650 = vsub.f32 %v693, %v1649
        %v1651 = vand.u32 %v1650, 4294901760
        %1652 = vmatpush.msra.mxu0 %v1651
        %v1653 = vand.u32 %v691, 4294901760
        %v1654 = vsub.f32 %v691, %v1653
        %v1655 = vand.u32 %v1654, 4294901760
        %1656 = vmatpush.msra.mxu0 %v1655
        %v1657 = vand.u32 %v689, 4294901760
        %v1658 = vsub.f32 %v689, %v1657
        %v1659 = vand.u32 %v1658, 4294901760
        %1660 = vmatpush.msra.mxu0 %v1659
        %v1661 = vand.u32 %v687, 4294901760
        %v1662 = vsub.f32 %v687, %v1661
        %v1663 = vand.u32 %v1662, 4294901760
        %1664 = vmatpush.msra.mxu0 %v1663
        %v1665 = vand.u32 %v685, 4294901760
        %v1666 = vsub.f32 %v685, %v1665
        %v1667 = vand.u32 %v1666, 4294901760
        %1668 = vmatpush.msra.mxu0 %v1667
        %v1669 = vand.u32 %v683, 4294901760
        %v1670 = vsub.f32 %v683, %v1669
        %v1671 = vand.u32 %v1670, 4294901760
        %1672 = vmatpush.msra.mxu0 %v1671
        %v1673 = vand.u32 %v681, 4294901760
        %v1674 = vsub.f32 %v681, %v1673
        %v1675 = vand.u32 %v1674, 4294901760
        %1676 = vmatpush.msra.mxu0 %v1675
        %v1677 = vand.u32 %v679, 4294901760
        %v1678 = vsub.f32 %v679, %v1677
        %v1679 = vand.u32 %v1678, 4294901760
        %1680 = vmatpush.msra.mxu0 %v1679
        %v1681 = vand.u32 %v677, 4294901760
        %v1682 = vsub.f32 %v677, %v1681
        %v1683 = vand.u32 %v1682, 4294901760
        %1684 = vmatpush.msra.mxu0 %v1683
        %v1685 = vand.u32 %v675, 4294901760
        %v1686 = vsub.f32 %v675, %v1685
        %v1687 = vand.u32 %v1686, 4294901760
        %1688 = vmatpush.msra.mxu0 %v1687
        %v1689 = vand.u32 %v673, 4294901760
        %v1690 = vsub.f32 %v673, %v1689
        %v1691 = vand.u32 %v1690, 4294901760
        %1692 = vmatpush.msra.mxu0 %v1691
        %v1693 = vand.u32 %v671, 4294901760
        %v1694 = vsub.f32 %v671, %v1693
        %v1695 = vand.u32 %v1694, 4294901760
        %1696 = vmatpush.msra.mxu0 %v1695
        %v1697 = vand.u32 %v669, 4294901760
        %v1698 = vsub.f32 %v669, %v1697
        %v1699 = vand.u32 %v1698, 4294901760
        %1700 = vmatpush.msra.mxu0 %v1699
        %v1701 = vand.u32 %v667, 4294901760
        %v1702 = vsub.f32 %v667, %v1701
        %v1703 = vand.u32 %v1702, 4294901760
        %1704 = vmatpush.msra.mxu0 %v1703
        %v1705 = vand.u32 %v665, 4294901760
        %v1706 = vsub.f32 %v665, %v1705
        %v1707 = vand.u32 %v1706, 4294901760
        %1708 = vmatpush.msra.mxu0 %v1707
        %v1709 = vand.u32 %v662, 4294901760
        %1710 = vmatmul.f32.gmra.mxu0 %v1709
        %v1711 = vpop.f32.mrf.mxu0
        %v1712 = vadd.f32 %v1643, %v1711
        %1713 = vdwg.mxu0
        %v1714 = vand.u32 %v695, 4294901760
        %1715 = vmatpush.msra.mxu0 %v1714
        %v1716 = vand.u32 %v693, 4294901760
        %1717 = vmatpush.msra.mxu0 %v1716
        %v1718 = vand.u32 %v691, 4294901760
        %1719 = vmatpush.msra.mxu0 %v1718
        %v1720 = vand.u32 %v689, 4294901760
        %1721 = vmatpush.msra.mxu0 %v1720
        %v1722 = vand.u32 %v687, 4294901760
        %1723 = vmatpush.msra.mxu0 %v1722
        %v1724 = vand.u32 %v685, 4294901760
        %1725 = vmatpush.msra.mxu0 %v1724
        %v1726 = vand.u32 %v683, 4294901760
        %1727 = vmatpush.msra.mxu0 %v1726
        %v1728 = vand.u32 %v681, 4294901760
        %1729 = vmatpush.msra.mxu0 %v1728
        %v1730 = vand.u32 %v679, 4294901760
        %1731 = vmatpush.msra.mxu0 %v1730
        %v1732 = vand.u32 %v677, 4294901760
        %1733 = vmatpush.msra.mxu0 %v1732
        %v1734 = vand.u32 %v675, 4294901760
        %1735 = vmatpush.msra.mxu0 %v1734
        %v1736 = vand.u32 %v673, 4294901760
        %1737 = vmatpush.msra.mxu0 %v1736
        %v1738 = vand.u32 %v671, 4294901760
        %1739 = vmatpush.msra.mxu0 %v1738
        %v1740 = vand.u32 %v669, 4294901760
        %1741 = vmatpush.msra.mxu0 %v1740
        %v1742 = vand.u32 %v667, 4294901760
        %1743 = vmatpush.msra.mxu0 %v1742
        %v1744 = vand.u32 %v665, 4294901760
        %1745 = vmatpush.msra.mxu0 %v1744
        %v1746 = vand.u32 %v662, 4294901760
        %1747 = vmatmul.f32.gmra.mxu0 %v1746
        %v1748 = vpop.f32.mrf.mxu0
        %v1749 = vadd.f32 %v1712, %v1748
        %1750 = vdwg.mxu0
        %v1751 = vand.u32 %v727, 4294901760
        %1752 = vmatpush.msra.mxu0 %v1751
        %v1753 = vand.u32 %v725, 4294901760
        %1754 = vmatpush.msra.mxu0 %v1753
        %v1755 = vand.u32 %v723, 4294901760
        %1756 = vmatpush.msra.mxu0 %v1755
        %v1757 = vand.u32 %v721, 4294901760
        %1758 = vmatpush.msra.mxu0 %v1757
        %v1759 = vand.u32 %v719, 4294901760
        %1760 = vmatpush.msra.mxu0 %v1759
        %v1761 = vand.u32 %v717, 4294901760
        %1762 = vmatpush.msra.mxu0 %v1761
        %v1763 = vand.u32 %v715, 4294901760
        %1764 = vmatpush.msra.mxu0 %v1763
        %v1765 = vand.u32 %v713, 4294901760
        %1766 = vmatpush.msra.mxu0 %v1765
        %v1767 = vand.u32 %v711, 4294901760
        %1768 = vmatpush.msra.mxu0 %v1767
        %v1769 = vand.u32 %v709, 4294901760
        %1770 = vmatpush.msra.mxu0 %v1769
        %v1771 = vand.u32 %v707, 4294901760
        %1772 = vmatpush.msra.mxu0 %v1771
        %v1773 = vand.u32 %v705, 4294901760
        %1774 = vmatpush.msra.mxu0 %v1773
        %v1775 = vand.u32 %v703, 4294901760
        %1776 = vmatpush.msra.mxu0 %v1775
        %v1777 = vand.u32 %v701, 4294901760
        %1778 = vmatpush.msra.mxu0 %v1777
        %v1779 = vand.u32 %v699, 4294901760
        %1780 = vmatpush.msra.mxu0 %v1779
        %v1781 = vand.u32 %v697, 4294901760
        %1782 = vmatpush.msra.mxu0 %v1781
        %v1783 = vand.u32 %v663, 4294901760
        %v1784 = vsub.f32 %v663, %v1783
        %v1785 = vand.u32 %v1784, 4294901760
        %v1786 = vsub.f32 %v1784, %v1785
        %v1787 = vand.u32 %v1786, 4294901760
        %1788 = vmatmul.f32.gmra.mxu0 %v1787
        %v1789 = vpop.f32.mrf.mxu0
        %v1790 = vadd.f32 %v1749, %v1789
        %1791 = vdwg.mxu0
        %v1792 = vand.u32 %v727, 4294901760
        %v1793 = vsub.f32 %v727, %v1792
        %v1794 = vand.u32 %v1793, 4294901760
        %v1795 = vsub.f32 %v1793, %v1794
        %v1796 = vand.u32 %v1795, 4294901760
        %1797 = vmatpush.msra.mxu0 %v1796
        %v1798 = vand.u32 %v725, 4294901760
        %v1799 = vsub.f32 %v725, %v1798
        %v1800 = vand.u32 %v1799, 4294901760
        %v1801 = vsub.f32 %v1799, %v1800
        %v1802 = vand.u32 %v1801, 4294901760
        %1803 = vmatpush.msra.mxu0 %v1802
        %v1804 = vand.u32 %v723, 4294901760
        %v1805 = vsub.f32 %v723, %v1804
        %v1806 = vand.u32 %v1805, 4294901760
        %v1807 = vsub.f32 %v1805, %v1806
        %v1808 = vand.u32 %v1807, 4294901760
        %1809 = vmatpush.msra.mxu0 %v1808
        %v1810 = vand.u32 %v721, 4294901760
        %v1811 = vsub.f32 %v721, %v1810
        %v1812 = vand.u32 %v1811, 4294901760
        %v1813 = vsub.f32 %v1811, %v1812
        %v1814 = vand.u32 %v1813, 4294901760
        %1815 = vmatpush.msra.mxu0 %v1814
        %v1816 = vand.u32 %v719, 4294901760
        %v1817 = vsub.f32 %v719, %v1816
        %v1818 = vand.u32 %v1817, 4294901760
        %v1819 = vsub.f32 %v1817, %v1818
        %v1820 = vand.u32 %v1819, 4294901760
        %1821 = vmatpush.msra.mxu0 %v1820
        %v1822 = vand.u32 %v717, 4294901760
        %v1823 = vsub.f32 %v717, %v1822
        %v1824 = vand.u32 %v1823, 4294901760
        %v1825 = vsub.f32 %v1823, %v1824
        %v1826 = vand.u32 %v1825, 4294901760
        %1827 = vmatpush.msra.mxu0 %v1826
        %v1828 = vand.u32 %v715, 4294901760
        %v1829 = vsub.f32 %v715, %v1828
        %v1830 = vand.u32 %v1829, 4294901760
        %v1831 = vsub.f32 %v1829, %v1830
        %v1832 = vand.u32 %v1831, 4294901760
        %1833 = vmatpush.msra.mxu0 %v1832
        %v1834 = vand.u32 %v713, 4294901760
        %v1835 = vsub.f32 %v713, %v1834
        %v1836 = vand.u32 %v1835, 4294901760
        %v1837 = vsub.f32 %v1835, %v1836
        %v1838 = vand.u32 %v1837, 4294901760
        %1839 = vmatpush.msra.mxu0 %v1838
        %v1840 = vand.u32 %v711, 4294901760
        %v1841 = vsub.f32 %v711, %v1840
        %v1842 = vand.u32 %v1841, 4294901760
        %v1843 = vsub.f32 %v1841, %v1842
        %v1844 = vand.u32 %v1843, 4294901760
        %1845 = vmatpush.msra.mxu0 %v1844
        %v1846 = vand.u32 %v709, 4294901760
        %v1847 = vsub.f32 %v709, %v1846
        %v1848 = vand.u32 %v1847, 4294901760
        %v1849 = vsub.f32 %v1847, %v1848
        %v1850 = vand.u32 %v1849, 4294901760
        %1851 = vmatpush.msra.mxu0 %v1850
        %v1852 = vand.u32 %v707, 4294901760
        %v1853 = vsub.f32 %v707, %v1852
        %v1854 = vand.u32 %v1853, 4294901760
        %v1855 = vsub.f32 %v1853, %v1854
        %v1856 = vand.u32 %v1855, 4294901760
        %1857 = vmatpush.msra.mxu0 %v1856
        %v1858 = vand.u32 %v705, 4294901760
        %v1859 = vsub.f32 %v705, %v1858
        %v1860 = vand.u32 %v1859, 4294901760
        %v1861 = vsub.f32 %v1859, %v1860
        %v1862 = vand.u32 %v1861, 4294901760
        %1863 = vmatpush.msra.mxu0 %v1862
        %v1864 = vand.u32 %v703, 4294901760
        %v1865 = vsub.f32 %v703, %v1864
        %v1866 = vand.u32 %v1865, 4294901760
        %v1867 = vsub.f32 %v1865, %v1866
        %v1868 = vand.u32 %v1867, 4294901760
        %1869 = vmatpush.msra.mxu0 %v1868
        %v1870 = vand.u32 %v701, 4294901760
        %v1871 = vsub.f32 %v701, %v1870
        %v1872 = vand.u32 %v1871, 4294901760
        %v1873 = vsub.f32 %v1871, %v1872
        %v1874 = vand.u32 %v1873, 4294901760
        %1875 = vmatpush.msra.mxu0 %v1874
        %v1876 = vand.u32 %v699, 4294901760
        %v1877 = vsub.f32 %v699, %v1876
        %v1878 = vand.u32 %v1877, 4294901760
        %v1879 = vsub.f32 %v1877, %v1878
        %v1880 = vand.u32 %v1879, 4294901760
        %1881 = vmatpush.msra.mxu0 %v1880
        %v1882 = vand.u32 %v697, 4294901760
        %v1883 = vsub.f32 %v697, %v1882
        %v1884 = vand.u32 %v1883, 4294901760
        %v1885 = vsub.f32 %v1883, %v1884
        %v1886 = vand.u32 %v1885, 4294901760
        %1887 = vmatpush.msra.mxu0 %v1886
        %v1888 = vand.u32 %v663, 4294901760
        %1889 = vmatmul.f32.gmra.mxu0 %v1888
        %v1890 = vpop.f32.mrf.mxu0
        %v1891 = vadd.f32 %v1790, %v1890
        %1892 = vdwg.mxu0
        %v1893 = vand.u32 %v727, 4294901760
        %v1894 = vsub.f32 %v727, %v1893
        %1895 = vmatpush.msra.mxu0 %v1894
        %v1896 = vand.u32 %v725, 4294901760
        %v1897 = vsub.f32 %v725, %v1896
        %1898 = vmatpush.msra.mxu0 %v1897
        %v1899 = vand.u32 %v723, 4294901760
        %v1900 = vsub.f32 %v723, %v1899
        %1901 = vmatpush.msra.mxu0 %v1900
        %v1902 = vand.u32 %v721, 4294901760
        %v1903 = vsub.f32 %v721, %v1902
        %1904 = vmatpush.msra.mxu0 %v1903
        %v1905 = vand.u32 %v719, 4294901760
        %v1906 = vsub.f32 %v719, %v1905
        %1907 = vmatpush.msra.mxu0 %v1906
        %v1908 = vand.u32 %v717, 4294901760
        %v1909 = vsub.f32 %v717, %v1908
        %1910 = vmatpush.msra.mxu0 %v1909
        %v1911 = vand.u32 %v715, 4294901760
        %v1912 = vsub.f32 %v715, %v1911
        %1913 = vmatpush.msra.mxu0 %v1912
        %v1914 = vand.u32 %v713, 4294901760
        %v1915 = vsub.f32 %v713, %v1914
        %1916 = vmatpush.msra.mxu0 %v1915
        %v1917 = vand.u32 %v711, 4294901760
        %v1918 = vsub.f32 %v711, %v1917
        %1919 = vmatpush.msra.mxu0 %v1918
        %v1920 = vand.u32 %v709, 4294901760
        %v1921 = vsub.f32 %v709, %v1920
        %1922 = vmatpush.msra.mxu0 %v1921
        %v1923 = vand.u32 %v707, 4294901760
        %v1924 = vsub.f32 %v707, %v1923
        %1925 = vmatpush.msra.mxu0 %v1924
        %v1926 = vand.u32 %v705, 4294901760
        %v1927 = vsub.f32 %v705, %v1926
        %1928 = vmatpush.msra.mxu0 %v1927
        %v1929 = vand.u32 %v703, 4294901760
        %v1930 = vsub.f32 %v703, %v1929
        %1931 = vmatpush.msra.mxu0 %v1930
        %v1932 = vand.u32 %v701, 4294901760
        %v1933 = vsub.f32 %v701, %v1932
        %1934 = vmatpush.msra.mxu0 %v1933
        %v1935 = vand.u32 %v699, 4294901760
        %v1936 = vsub.f32 %v699, %v1935
        %1937 = vmatpush.msra.mxu0 %v1936
        %v1938 = vand.u32 %v697, 4294901760
        %v1939 = vsub.f32 %v697, %v1938
        %1940 = vmatpush.msra.mxu0 %v1939
        %v1941 = vand.u32 %v663, 4294901760
        %v1942 = vsub.f32 %v663, %v1941
        %1943 = vmatmul.f32.gmra.mxu0 %v1942
        %v1944 = vpop.f32.mrf.mxu0
        %v1945 = vadd.f32 %v1891, %v1944
        %1946 = vdwg.mxu0
        %v1947 = vand.u32 %v727, 4294901760
        %1948 = vmatpush.msra.mxu0 %v1947
        %v1949 = vand.u32 %v725, 4294901760
        %1950 = vmatpush.msra.mxu0 %v1949
        %v1951 = vand.u32 %v723, 4294901760
        %1952 = vmatpush.msra.mxu0 %v1951
        %v1953 = vand.u32 %v721, 4294901760
        %1954 = vmatpush.msra.mxu0 %v1953
        %v1955 = vand.u32 %v719, 4294901760
        %1956 = vmatpush.msra.mxu0 %v1955
        %v1957 = vand.u32 %v717, 4294901760
        %1958 = vmatpush.msra.mxu0 %v1957
        %v1959 = vand.u32 %v715, 4294901760
        %1960 = vmatpush.msra.mxu0 %v1959
        %v1961 = vand.u32 %v713, 4294901760
        %1962 = vmatpush.msra.mxu0 %v1961
        %v1963 = vand.u32 %v711, 4294901760
        %1964 = vmatpush.msra.mxu0 %v1963
        %v1965 = vand.u32 %v709, 4294901760
        %1966 = vmatpush.msra.mxu0 %v1965
        %v1967 = vand.u32 %v707, 4294901760
        %1968 = vmatpush.msra.mxu0 %v1967
        %v1969 = vand.u32 %v705, 4294901760
        %1970 = vmatpush.msra.mxu0 %v1969
        %v1971 = vand.u32 %v703, 4294901760
        %1972 = vmatpush.msra.mxu0 %v1971
        %v1973 = vand.u32 %v701, 4294901760
        %1974 = vmatpush.msra.mxu0 %v1973
        %v1975 = vand.u32 %v699, 4294901760
        %1976 = vmatpush.msra.mxu0 %v1975
        %v1977 = vand.u32 %v697, 4294901760
        %1978 = vmatpush.msra.mxu0 %v1977
        %v1979 = vand.u32 %v663, 4294901760
        %v1980 = vsub.f32 %v663, %v1979
        %v1981 = vand.u32 %v1980, 4294901760
        %1982 = vmatmul.f32.gmra.mxu0 %v1981
        %v1983 = vpop.f32.mrf.mxu0
        %v1984 = vadd.f32 %v1945, %v1983
        %1985 = vdwg.mxu0
        %v1986 = vand.u32 %v727, 4294901760
        %v1987 = vsub.f32 %v727, %v1986
        %v1988 = vand.u32 %v1987, 4294901760
        %1989 = vmatpush.msra.mxu0 %v1988
        %v1990 = vand.u32 %v725, 4294901760
        %v1991 = vsub.f32 %v725, %v1990
        %v1992 = vand.u32 %v1991, 4294901760
        %1993 = vmatpush.msra.mxu0 %v1992
        %v1994 = vand.u32 %v723, 4294901760
        %v1995 = vsub.f32 %v723, %v1994
        %v1996 = vand.u32 %v1995, 4294901760
        %1997 = vmatpush.msra.mxu0 %v1996
        %v1998 = vand.u32 %v721, 4294901760
        %v1999 = vsub.f32 %v721, %v1998
        %v2000 = vand.u32 %v1999, 4294901760
        %2001 = vmatpush.msra.mxu0 %v2000
        %v2002 = vand.u32 %v719, 4294901760
        %v2003 = vsub.f32 %v719, %v2002
        %v2004 = vand.u32 %v2003, 4294901760
        %2005 = vmatpush.msra.mxu0 %v2004
        %v2006 = vand.u32 %v717, 4294901760
        %v2007 = vsub.f32 %v717, %v2006
        %v2008 = vand.u32 %v2007, 4294901760
        %2009 = vmatpush.msra.mxu0 %v2008
        %v2010 = vand.u32 %v715, 4294901760
        %v2011 = vsub.f32 %v715, %v2010
        %v2012 = vand.u32 %v2011, 4294901760
        %2013 = vmatpush.msra.mxu0 %v2012
        %v2014 = vand.u32 %v713, 4294901760
        %v2015 = vsub.f32 %v713, %v2014
        %v2016 = vand.u32 %v2015, 4294901760
        %2017 = vmatpush.msra.mxu0 %v2016
        %v2018 = vand.u32 %v711, 4294901760
        %v2019 = vsub.f32 %v711, %v2018
        %v2020 = vand.u32 %v2019, 4294901760
        %2021 = vmatpush.msra.mxu0 %v2020
        %v2022 = vand.u32 %v709, 4294901760
        %v2023 = vsub.f32 %v709, %v2022
        %v2024 = vand.u32 %v2023, 4294901760
        %2025 = vmatpush.msra.mxu0 %v2024
        %v2026 = vand.u32 %v707, 4294901760
        %v2027 = vsub.f32 %v707, %v2026
        %v2028 = vand.u32 %v2027, 4294901760
        %2029 = vmatpush.msra.mxu0 %v2028
        %v2030 = vand.u32 %v705, 4294901760
        %v2031 = vsub.f32 %v705, %v2030
        %v2032 = vand.u32 %v2031, 4294901760
        %2033 = vmatpush.msra.mxu0 %v2032
        %v2034 = vand.u32 %v703, 4294901760
        %v2035 = vsub.f32 %v703, %v2034
        %v2036 = vand.u32 %v2035, 4294901760
        %2037 = vmatpush.msra.mxu0 %v2036
        %v2038 = vand.u32 %v701, 4294901760
        %v2039 = vsub.f32 %v701, %v2038
        %v2040 = vand.u32 %v2039, 4294901760
        %2041 = vmatpush.msra.mxu0 %v2040
        %v2042 = vand.u32 %v699, 4294901760
        %v2043 = vsub.f32 %v699, %v2042
        %v2044 = vand.u32 %v2043, 4294901760
        %2045 = vmatpush.msra.mxu0 %v2044
        %v2046 = vand.u32 %v697, 4294901760
        %v2047 = vsub.f32 %v697, %v2046
        %v2048 = vand.u32 %v2047, 4294901760
        %2049 = vmatpush.msra.mxu0 %v2048
        %v2050 = vand.u32 %v663, 4294901760
        %2051 = vmatmul.f32.gmra.mxu0 %v2050
        %v2052 = vpop.f32.mrf.mxu0
        %v2053 = vadd.f32 %v1984, %v2052
        %2054 = vdwg.mxu0
        %v2055 = vand.u32 %v727, 4294901760
        %2056 = vmatpush.msra.mxu0 %v2055
        %v2057 = vand.u32 %v725, 4294901760
        %2058 = vmatpush.msra.mxu0 %v2057
        %v2059 = vand.u32 %v723, 4294901760
        %2060 = vmatpush.msra.mxu0 %v2059
        %v2061 = vand.u32 %v721, 4294901760
        %2062 = vmatpush.msra.mxu0 %v2061
        %v2063 = vand.u32 %v719, 4294901760
        %2064 = vmatpush.msra.mxu0 %v2063
        %v2065 = vand.u32 %v717, 4294901760
        %2066 = vmatpush.msra.mxu0 %v2065
        %v2067 = vand.u32 %v715, 4294901760
        %2068 = vmatpush.msra.mxu0 %v2067
        %v2069 = vand.u32 %v713, 4294901760
        %2070 = vmatpush.msra.mxu0 %v2069
        %v2071 = vand.u32 %v711, 4294901760
        %2072 = vmatpush.msra.mxu0 %v2071
        %v2073 = vand.u32 %v709, 4294901760
        %2074 = vmatpush.msra.mxu0 %v2073
        %v2075 = vand.u32 %v707, 4294901760
        %2076 = vmatpush.msra.mxu0 %v2075
        %v2077 = vand.u32 %v705, 4294901760
        %2078 = vmatpush.msra.mxu0 %v2077
        %v2079 = vand.u32 %v703, 4294901760
        %2080 = vmatpush.msra.mxu0 %v2079
        %v2081 = vand.u32 %v701, 4294901760
        %2082 = vmatpush.msra.mxu0 %v2081
        %v2083 = vand.u32 %v699, 4294901760
        %2084 = vmatpush.msra.mxu0 %v2083
        %v2085 = vand.u32 %v697, 4294901760
        %2086 = vmatpush.msra.mxu0 %v2085
        %v2087 = vand.u32 %v663, 4294901760
        %2088 = vmatmul.f32.gmra.mxu0 %v2087
        %v2089 = vpop.f32.mrf.mxu0
        %v2090 = vadd.f32 %v2053, %v2089
        %2091 = vdwg.mxu0
        %v2092 = vld [vmem:[#allocation10] sm:$0xff]
        %v2093 = vld [vmem:[#allocation10 + $0x8] sm:$0xff]
        %v2094 = vld [vmem:[#allocation10 + $0x10] sm:$0xff]
        %v2095 = vld [vmem:[#allocation10 + $0x18] sm:$0xff]
        %v2096 = vld [vmem:[#allocation10 + $0x20] sm:$0xff]
        %v2097 = vld [vmem:[#allocation10 + $0x28] sm:$0xff]
        %v2098 = vld [vmem:[#allocation10 + $0x30] sm:$0xff]
        %v2099 = vld [vmem:[#allocation10 + $0x38] sm:$0xff]
        %v2100 = vld [vmem:[#allocation10 + $0x40] sm:$0xff]
        %v2101 = vld [vmem:[#allocation10 + $0x48] sm:$0xff]
        %v2102 = vld [vmem:[#allocation10 + $0x50] sm:$0xff]
        %v2103 = vld [vmem:[#allocation10 + $0x58] sm:$0xff]
        %v2104 = vld [vmem:[#allocation10 + $0x60] sm:$0xff]
        %v2105 = vld [vmem:[#allocation10 + $0x68] sm:$0xff]
        %v2106 = vld [vmem:[#allocation10 + $0x70] sm:$0xff]
        %v2107 = vld [vmem:[#allocation10 + $0x78] sm:$0xff]
        %v2108 = vld [vmem:[#allocation10 + $0x80] sm:$0xff]
        %v2109 = vld [vmem:[#allocation10 + $0x88] sm:$0xff]
        %v2110 = vld [vmem:[#allocation10 + $0x90] sm:$0xff]
        %v2111 = vld [vmem:[#allocation10 + $0x98] sm:$0xff]
        %v2112 = vld [vmem:[#allocation10 + $0xa0] sm:$0xff]
        %v2113 = vld [vmem:[#allocation10 + $0xa8] sm:$0xff]
        %v2114 = vld [vmem:[#allocation10 + $0xb0] sm:$0xff]
        %v2115 = vld [vmem:[#allocation10 + $0xb8] sm:$0xff]
        %v2116 = vld [vmem:[#allocation10 + $0xc0] sm:$0xff]
        %v2117 = vld [vmem:[#allocation10 + $0xc8] sm:$0xff]
        %v2118 = vld [vmem:[#allocation10 + $0xd0] sm:$0xff]
        %v2119 = vld [vmem:[#allocation10 + $0xd8] sm:$0xff]
        %v2120 = vld [vmem:[#allocation10 + $0xe0] sm:$0xff]
        %v2121 = vld [vmem:[#allocation10 + $0xe8] sm:$0xff]
        %v2122 = vld [vmem:[#allocation10 + $0xf0] sm:$0xff]
        %v2123 = vld [vmem:[#allocation10 + $0xf8] sm:$0xff]
        %v2124 = vld [vmem:[#allocation10 + $0x100] sm:$0xff]
        %v2125 = vld [vmem:[#allocation10 + $0x108] sm:$0xff]
        %v2126 = vld [vmem:[#allocation10 + $0x110] sm:$0xff]
        %v2127 = vld [vmem:[#allocation10 + $0x118] sm:$0xff]
        %v2128 = vld [vmem:[#allocation10 + $0x120] sm:$0xff]
        %v2129 = vld [vmem:[#allocation10 + $0x128] sm:$0xff]
        %v2130 = vld [vmem:[#allocation10 + $0x130] sm:$0xff]
        %v2131 = vld [vmem:[#allocation10 + $0x138] sm:$0xff]
        %v2132 = vld [vmem:[#allocation10 + $0x140] sm:$0xff]
        %v2133 = vld [vmem:[#allocation10 + $0x148] sm:$0xff]
        %v2134 = vld [vmem:[#allocation10 + $0x150] sm:$0xff]
        %v2135 = vld [vmem:[#allocation10 + $0x158] sm:$0xff]
        %v2136 = vld [vmem:[#allocation10 + $0x160] sm:$0xff]
        %v2137 = vld [vmem:[#allocation10 + $0x168] sm:$0xff]
        %v2138 = vld [vmem:[#allocation10 + $0x170] sm:$0xff]
        %v2139 = vld [vmem:[#allocation10 + $0x178] sm:$0xff]
        %v2140 = vld [vmem:[#allocation10 + $0x180] sm:$0xff]
        %v2141 = vld [vmem:[#allocation10 + $0x188] sm:$0xff]
        %v2142 = vld [vmem:[#allocation10 + $0x190] sm:$0xff]
        %v2143 = vld [vmem:[#allocation10 + $0x198] sm:$0xff]
        %v2144 = vld [vmem:[#allocation10 + $0x1a0] sm:$0xff]
        %v2145 = vld [vmem:[#allocation10 + $0x1a8] sm:$0xff]
        %v2146 = vld [vmem:[#allocation10 + $0x1b0] sm:$0xff]
        %v2147 = vld [vmem:[#allocation10 + $0x1b8] sm:$0xff]
        %v2148 = vld [vmem:[#allocation10 + $0x1c0] sm:$0xff]
        %v2149 = vld [vmem:[#allocation10 + $0x1c8] sm:$0xff]
        %v2150 = vld [vmem:[#allocation10 + $0x1d0] sm:$0xff]
        %v2151 = vld [vmem:[#allocation10 + $0x1d8] sm:$0xff]
        %v2152 = vld [vmem:[#allocation10 + $0x1e0] sm:$0xff]
        %v2153 = vld [vmem:[#allocation10 + $0x1e8] sm:$0xff]
        %v2154 = vld [vmem:[#allocation10 + $0x1f0] sm:$0xff]
        %v2155 = vld [vmem:[#allocation10 + $0x1f8] sm:$0xff]
        %v2156 = vand.u32 %v2122, 4294901760
        %2157 = vmatpush.msra.mxu0 %v2156
        %v2158 = vand.u32 %v2120, 4294901760
        %2159 = vmatpush.msra.mxu0 %v2158
        %v2160 = vand.u32 %v2118, 4294901760
        %2161 = vmatpush.msra.mxu0 %v2160
        %v2162 = vand.u32 %v2116, 4294901760
        %2163 = vmatpush.msra.mxu0 %v2162
        %v2164 = vand.u32 %v2114, 4294901760
        %2165 = vmatpush.msra.mxu0 %v2164
        %v2166 = vand.u32 %v2112, 4294901760
        %2167 = vmatpush.msra.mxu0 %v2166
        %v2168 = vand.u32 %v2110, 4294901760
        %2169 = vmatpush.msra.mxu0 %v2168
        %v2170 = vand.u32 %v2108, 4294901760
        %2171 = vmatpush.msra.mxu0 %v2170
        %v2172 = vand.u32 %v2106, 4294901760
        %2173 = vmatpush.msra.mxu0 %v2172
        %v2174 = vand.u32 %v2104, 4294901760
        %2175 = vmatpush.msra.mxu0 %v2174
        %v2176 = vand.u32 %v2102, 4294901760
        %2177 = vmatpush.msra.mxu0 %v2176
        %v2178 = vand.u32 %v2100, 4294901760
        %2179 = vmatpush.msra.mxu0 %v2178
        %v2180 = vand.u32 %v2098, 4294901760
        %2181 = vmatpush.msra.mxu0 %v2180
        %v2182 = vand.u32 %v2096, 4294901760
        %2183 = vmatpush.msra.mxu0 %v2182
        %v2184 = vand.u32 %v2094, 4294901760
        %2185 = vmatpush.msra.mxu0 %v2184
        %v2186 = vand.u32 %v2092, 4294901760
        %2187 = vmatpush.msra.mxu0 %v2186
        %v2188 = vand.u32 %v662, 4294901760
        %v2189 = vsub.f32 %v662, %v2188
        %v2190 = vand.u32 %v2189, 4294901760
        %v2191 = vsub.f32 %v2189, %v2190
        %v2192 = vand.u32 %v2191, 4294901760
        %2193 = vmatmul.f32.gmra.mxu0 %v2192
        %v2194 = vpop.f32.mrf.mxu0
        %v2195 = vadd.f32 0.0, %v2194
        %2196 = vdwg.mxu0
        %v2197 = vand.u32 %v2122, 4294901760
        %v2198 = vsub.f32 %v2122, %v2197
        %v2199 = vand.u32 %v2198, 4294901760
        %v2200 = vsub.f32 %v2198, %v2199
        %v2201 = vand.u32 %v2200, 4294901760
        %2202 = vmatpush.msra.mxu0 %v2201
        %v2203 = vand.u32 %v2120, 4294901760
        %v2204 = vsub.f32 %v2120, %v2203
        %v2205 = vand.u32 %v2204, 4294901760
        %v2206 = vsub.f32 %v2204, %v2205
        %v2207 = vand.u32 %v2206, 4294901760
        %2208 = vmatpush.msra.mxu0 %v2207
        %v2209 = vand.u32 %v2118, 4294901760
        %v2210 = vsub.f32 %v2118, %v2209
        %v2211 = vand.u32 %v2210, 4294901760
        %v2212 = vsub.f32 %v2210, %v2211
        %v2213 = vand.u32 %v2212, 4294901760
        %2214 = vmatpush.msra.mxu0 %v2213
        %v2215 = vand.u32 %v2116, 4294901760
        %v2216 = vsub.f32 %v2116, %v2215
        %v2217 = vand.u32 %v2216, 4294901760
        %v2218 = vsub.f32 %v2216, %v2217
        %v2219 = vand.u32 %v2218, 4294901760
        %2220 = vmatpush.msra.mxu0 %v2219
        %v2221 = vand.u32 %v2114, 4294901760
        %v2222 = vsub.f32 %v2114, %v2221
        %v2223 = vand.u32 %v2222, 4294901760
        %v2224 = vsub.f32 %v2222, %v2223
        %v2225 = vand.u32 %v2224, 4294901760
        %2226 = vmatpush.msra.mxu0 %v2225
        %v2227 = vand.u32 %v2112, 4294901760
        %v2228 = vsub.f32 %v2112, %v2227
        %v2229 = vand.u32 %v2228, 4294901760
        %v2230 = vsub.f32 %v2228, %v2229
        %v2231 = vand.u32 %v2230, 4294901760
        %2232 = vmatpush.msra.mxu0 %v2231
        %v2233 = vand.u32 %v2110, 4294901760
        %v2234 = vsub.f32 %v2110, %v2233
        %v2235 = vand.u32 %v2234, 4294901760
        %v2236 = vsub.f32 %v2234, %v2235
        %v2237 = vand.u32 %v2236, 4294901760
        %2238 = vmatpush.msra.mxu0 %v2237
        %v2239 = vand.u32 %v2108, 4294901760
        %v2240 = vsub.f32 %v2108, %v2239
        %v2241 = vand.u32 %v2240, 4294901760
        %v2242 = vsub.f32 %v2240, %v2241
        %v2243 = vand.u32 %v2242, 4294901760
        %2244 = vmatpush.msra.mxu0 %v2243
        %v2245 = vand.u32 %v2106, 4294901760
        %v2246 = vsub.f32 %v2106, %v2245
        %v2247 = vand.u32 %v2246, 4294901760
        %v2248 = vsub.f32 %v2246, %v2247
        %v2249 = vand.u32 %v2248, 4294901760
        %2250 = vmatpush.msra.mxu0 %v2249
        %v2251 = vand.u32 %v2104, 4294901760
        %v2252 = vsub.f32 %v2104, %v2251
        %v2253 = vand.u32 %v2252, 4294901760
        %v2254 = vsub.f32 %v2252, %v2253
        %v2255 = vand.u32 %v2254, 4294901760
        %2256 = vmatpush.msra.mxu0 %v2255
        %v2257 = vand.u32 %v2102, 4294901760
        %v2258 = vsub.f32 %v2102, %v2257
        %v2259 = vand.u32 %v2258, 4294901760
        %v2260 = vsub.f32 %v2258, %v2259
        %v2261 = vand.u32 %v2260, 4294901760
        %2262 = vmatpush.msra.mxu0 %v2261
        %v2263 = vand.u32 %v2100, 4294901760
        %v2264 = vsub.f32 %v2100, %v2263
        %v2265 = vand.u32 %v2264, 4294901760
        %v2266 = vsub.f32 %v2264, %v2265
        %v2267 = vand.u32 %v2266, 4294901760
        %2268 = vmatpush.msra.mxu0 %v2267
        %v2269 = vand.u32 %v2098, 4294901760
        %v2270 = vsub.f32 %v2098, %v2269
        %v2271 = vand.u32 %v2270, 4294901760
        %v2272 = vsub.f32 %v2270, %v2271
        %v2273 = vand.u32 %v2272, 4294901760
        %2274 = vmatpush.msra.mxu0 %v2273
        %v2275 = vand.u32 %v2096, 4294901760
        %v2276 = vsub.f32 %v2096, %v2275
        %v2277 = vand.u32 %v2276, 4294901760
        %v2278 = vsub.f32 %v2276, %v2277
        %v2279 = vand.u32 %v2278, 4294901760
        %2280 = vmatpush.msra.mxu0 %v2279
        %v2281 = vand.u32 %v2094, 4294901760
        %v2282 = vsub.f32 %v2094, %v2281
        %v2283 = vand.u32 %v2282, 4294901760
        %v2284 = vsub.f32 %v2282, %v2283
        %v2285 = vand.u32 %v2284, 4294901760
        %2286 = vmatpush.msra.mxu0 %v2285
        %v2287 = vand.u32 %v2092, 4294901760
        %v2288 = vsub.f32 %v2092, %v2287
        %v2289 = vand.u32 %v2288, 4294901760
        %v2290 = vsub.f32 %v2288, %v2289
        %v2291 = vand.u32 %v2290, 4294901760
        %2292 = vmatpush.msra.mxu0 %v2291
        %v2293 = vand.u32 %v662, 4294901760
        %2294 = vmatmul.f32.gmra.mxu0 %v2293
        %v2295 = vpop.f32.mrf.mxu0
        %v2296 = vadd.f32 %v2195, %v2295
        %2297 = vdwg.mxu0
        %v2298 = vand.u32 %v2122, 4294901760
        %v2299 = vsub.f32 %v2122, %v2298
        %2300 = vmatpush.msra.mxu0 %v2299
        %v2301 = vand.u32 %v2120, 4294901760
        %v2302 = vsub.f32 %v2120, %v2301
        %2303 = vmatpush.msra.mxu0 %v2302
        %v2304 = vand.u32 %v2118, 4294901760
        %v2305 = vsub.f32 %v2118, %v2304
        %2306 = vmatpush.msra.mxu0 %v2305
        %v2307 = vand.u32 %v2116, 4294901760
        %v2308 = vsub.f32 %v2116, %v2307
        %2309 = vmatpush.msra.mxu0 %v2308
        %v2310 = vand.u32 %v2114, 4294901760
        %v2311 = vsub.f32 %v2114, %v2310
        %2312 = vmatpush.msra.mxu0 %v2311
        %v2313 = vand.u32 %v2112, 4294901760
        %v2314 = vsub.f32 %v2112, %v2313
        %2315 = vmatpush.msra.mxu0 %v2314
        %v2316 = vand.u32 %v2110, 4294901760
        %v2317 = vsub.f32 %v2110, %v2316
        %2318 = vmatpush.msra.mxu0 %v2317
        %v2319 = vand.u32 %v2108, 4294901760
        %v2320 = vsub.f32 %v2108, %v2319
        %2321 = vmatpush.msra.mxu0 %v2320
        %v2322 = vand.u32 %v2106, 4294901760
        %v2323 = vsub.f32 %v2106, %v2322
        %2324 = vmatpush.msra.mxu0 %v2323
        %v2325 = vand.u32 %v2104, 4294901760
        %v2326 = vsub.f32 %v2104, %v2325
        %2327 = vmatpush.msra.mxu0 %v2326
        %v2328 = vand.u32 %v2102, 4294901760
        %v2329 = vsub.f32 %v2102, %v2328
        %2330 = vmatpush.msra.mxu0 %v2329
        %v2331 = vand.u32 %v2100, 4294901760
        %v2332 = vsub.f32 %v2100, %v2331
        %2333 = vmatpush.msra.mxu0 %v2332
        %v2334 = vand.u32 %v2098, 4294901760
        %v2335 = vsub.f32 %v2098, %v2334
        %2336 = vmatpush.msra.mxu0 %v2335
        %v2337 = vand.u32 %v2096, 4294901760
        %v2338 = vsub.f32 %v2096, %v2337
        %2339 = vmatpush.msra.mxu0 %v2338
        %v2340 = vand.u32 %v2094, 4294901760
        %v2341 = vsub.f32 %v2094, %v2340
        %2342 = vmatpush.msra.mxu0 %v2341
        %v2343 = vand.u32 %v2092, 4294901760
        %v2344 = vsub.f32 %v2092, %v2343
        %2345 = vmatpush.msra.mxu0 %v2344
        %v2346 = vand.u32 %v662, 4294901760
        %v2347 = vsub.f32 %v662, %v2346
        %2348 = vmatmul.f32.gmra.mxu0 %v2347
        %v2349 = vpop.f32.mrf.mxu0
        %v2350 = vadd.f32 %v2296, %v2349
        %2351 = vdwg.mxu0
        %v2352 = vand.u32 %v2122, 4294901760
        %2353 = vmatpush.msra.mxu0 %v2352
        %v2354 = vand.u32 %v2120, 4294901760
        %2355 = vmatpush.msra.mxu0 %v2354
        %v2356 = vand.u32 %v2118, 4294901760
        %2357 = vmatpush.msra.mxu0 %v2356
        %v2358 = vand.u32 %v2116, 4294901760
        %2359 = vmatpush.msra.mxu0 %v2358
        %v2360 = vand.u32 %v2114, 4294901760
        %2361 = vmatpush.msra.mxu0 %v2360
        %v2362 = vand.u32 %v2112, 4294901760
        %2363 = vmatpush.msra.mxu0 %v2362
        %v2364 = vand.u32 %v2110, 4294901760
        %2365 = vmatpush.msra.mxu0 %v2364
        %v2366 = vand.u32 %v2108, 4294901760
        %2367 = vmatpush.msra.mxu0 %v2366
        %v2368 = vand.u32 %v2106, 4294901760
        %2369 = vmatpush.msra.mxu0 %v2368
        %v2370 = vand.u32 %v2104, 4294901760
        %2371 = vmatpush.msra.mxu0 %v2370
        %v2372 = vand.u32 %v2102, 4294901760
        %2373 = vmatpush.msra.mxu0 %v2372
        %v2374 = vand.u32 %v2100, 4294901760
        %2375 = vmatpush.msra.mxu0 %v2374
        %v2376 = vand.u32 %v2098, 4294901760
        %2377 = vmatpush.msra.mxu0 %v2376
        %v2378 = vand.u32 %v2096, 4294901760
        %2379 = vmatpush.msra.mxu0 %v2378
        %v2380 = vand.u32 %v2094, 4294901760
        %2381 = vmatpush.msra.mxu0 %v2380
        %v2382 = vand.u32 %v2092, 4294901760
        %2383 = vmatpush.msra.mxu0 %v2382
        %v2384 = vand.u32 %v662, 4294901760
        %v2385 = vsub.f32 %v662, %v2384
        %v2386 = vand.u32 %v2385, 4294901760
        %2387 = vmatmul.f32.gmra.mxu0 %v2386
        %v2388 = vpop.f32.mrf.mxu0
        %v2389 = vadd.f32 %v2350, %v2388
        %2390 = vdwg.mxu0
        %v2391 = vand.u32 %v2122, 4294901760
        %v2392 = vsub.f32 %v2122, %v2391
        %v2393 = vand.u32 %v2392, 4294901760
        %2394 = vmatpush.msra.mxu0 %v2393
        %v2395 = vand.u32 %v2120, 4294901760
        %v2396 = vsub.f32 %v2120, %v2395
        %v2397 = vand.u32 %v2396, 4294901760
        %2398 = vmatpush.msra.mxu0 %v2397
        %v2399 = vand.u32 %v2118, 4294901760
        %v2400 = vsub.f32 %v2118, %v2399
        %v2401 = vand.u32 %v2400, 4294901760
        %2402 = vmatpush.msra.mxu0 %v2401
        %v2403 = vand.u32 %v2116, 4294901760
        %v2404 = vsub.f32 %v2116, %v2403
        %v2405 = vand.u32 %v2404, 4294901760
        %2406 = vmatpush.msra.mxu0 %v2405
        %v2407 = vand.u32 %v2114, 4294901760
        %v2408 = vsub.f32 %v2114, %v2407
        %v2409 = vand.u32 %v2408, 4294901760
        %2410 = vmatpush.msra.mxu0 %v2409
        %v2411 = vand.u32 %v2112, 4294901760
        %v2412 = vsub.f32 %v2112, %v2411
        %v2413 = vand.u32 %v2412, 4294901760
        %2414 = vmatpush.msra.mxu0 %v2413
        %v2415 = vand.u32 %v2110, 4294901760
        %v2416 = vsub.f32 %v2110, %v2415
        %v2417 = vand.u32 %v2416, 4294901760
        %2418 = vmatpush.msra.mxu0 %v2417
        %v2419 = vand.u32 %v2108, 4294901760
        %v2420 = vsub.f32 %v2108, %v2419
        %v2421 = vand.u32 %v2420, 4294901760
        %2422 = vmatpush.msra.mxu0 %v2421
        %v2423 = vand.u32 %v2106, 4294901760
        %v2424 = vsub.f32 %v2106, %v2423
        %v2425 = vand.u32 %v2424, 4294901760
        %2426 = vmatpush.msra.mxu0 %v2425
        %v2427 = vand.u32 %v2104, 4294901760
        %v2428 = vsub.f32 %v2104, %v2427
        %v2429 = vand.u32 %v2428, 4294901760
        %2430 = vmatpush.msra.mxu0 %v2429
        %v2431 = vand.u32 %v2102, 4294901760
        %v2432 = vsub.f32 %v2102, %v2431
        %v2433 = vand.u32 %v2432, 4294901760
        %2434 = vmatpush.msra.mxu0 %v2433
        %v2435 = vand.u32 %v2100, 4294901760
        %v2436 = vsub.f32 %v2100, %v2435
        %v2437 = vand.u32 %v2436, 4294901760
        %2438 = vmatpush.msra.mxu0 %v2437
        %v2439 = vand.u32 %v2098, 4294901760
        %v2440 = vsub.f32 %v2098, %v2439
        %v2441 = vand.u32 %v2440, 4294901760
        %2442 = vmatpush.msra.mxu0 %v2441
        %v2443 = vand.u32 %v2096, 4294901760
        %v2444 = vsub.f32 %v2096, %v2443
        %v2445 = vand.u32 %v2444, 4294901760
        %2446 = vmatpush.msra.mxu0 %v2445
        %v2447 = vand.u32 %v2094, 4294901760
        %v2448 = vsub.f32 %v2094, %v2447
        %v2449 = vand.u32 %v2448, 4294901760
        %2450 = vmatpush.msra.mxu0 %v2449
        %v2451 = vand.u32 %v2092, 4294901760
        %v2452 = vsub.f32 %v2092, %v2451
        %v2453 = vand.u32 %v2452, 4294901760
        %2454 = vmatpush.msra.mxu0 %v2453
        %v2455 = vand.u32 %v662, 4294901760
        %2456 = vmatmul.f32.gmra.mxu0 %v2455
        %v2457 = vpop.f32.mrf.mxu0
        %v2458 = vadd.f32 %v2389, %v2457
        %2459 = vdwg.mxu0
        %v2460 = vand.u32 %v2122, 4294901760
        %2461 = vmatpush.msra.mxu0 %v2460
        %v2462 = vand.u32 %v2120, 4294901760
        %2463 = vmatpush.msra.mxu0 %v2462
        %v2464 = vand.u32 %v2118, 4294901760
        %2465 = vmatpush.msra.mxu0 %v2464
        %v2466 = vand.u32 %v2116, 4294901760
        %2467 = vmatpush.msra.mxu0 %v2466
        %v2468 = vand.u32 %v2114, 4294901760
        %2469 = vmatpush.msra.mxu0 %v2468
        %v2470 = vand.u32 %v2112, 4294901760
        %2471 = vmatpush.msra.mxu0 %v2470
        %v2472 = vand.u32 %v2110, 4294901760
        %2473 = vmatpush.msra.mxu0 %v2472
        %v2474 = vand.u32 %v2108, 4294901760
        %2475 = vmatpush.msra.mxu0 %v2474
        %v2476 = vand.u32 %v2106, 4294901760
        %2477 = vmatpush.msra.mxu0 %v2476
        %v2478 = vand.u32 %v2104, 4294901760
        %2479 = vmatpush.msra.mxu0 %v2478
        %v2480 = vand.u32 %v2102, 4294901760
        %2481 = vmatpush.msra.mxu0 %v2480
        %v2482 = vand.u32 %v2100, 4294901760
        %2483 = vmatpush.msra.mxu0 %v2482
        %v2484 = vand.u32 %v2098, 4294901760
        %2485 = vmatpush.msra.mxu0 %v2484
        %v2486 = vand.u32 %v2096, 4294901760
        %2487 = vmatpush.msra.mxu0 %v2486
        %v2488 = vand.u32 %v2094, 4294901760
        %2489 = vmatpush.msra.mxu0 %v2488
        %v2490 = vand.u32 %v2092, 4294901760
        %2491 = vmatpush.msra.mxu0 %v2490
        %v2492 = vand.u32 %v662, 4294901760
        %2493 = vmatmul.f32.gmra.mxu0 %v2492
        %v2494 = vpop.f32.mrf.mxu0
        %v2495 = vadd.f32 %v2458, %v2494
        %2496 = vdwg.mxu0
        %v2497 = vand.u32 %v2154, 4294901760
        %2498 = vmatpush.msra.mxu0 %v2497
        %v2499 = vand.u32 %v2152, 4294901760
        %2500 = vmatpush.msra.mxu0 %v2499
        %v2501 = vand.u32 %v2150, 4294901760
        %2502 = vmatpush.msra.mxu0 %v2501
        %v2503 = vand.u32 %v2148, 4294901760
        %2504 = vmatpush.msra.mxu0 %v2503
        %v2505 = vand.u32 %v2146, 4294901760
        %2506 = vmatpush.msra.mxu0 %v2505
        %v2507 = vand.u32 %v2144, 4294901760
        %2508 = vmatpush.msra.mxu0 %v2507
        %v2509 = vand.u32 %v2142, 4294901760
        %2510 = vmatpush.msra.mxu0 %v2509
        %v2511 = vand.u32 %v2140, 4294901760
        %2512 = vmatpush.msra.mxu0 %v2511
        %v2513 = vand.u32 %v2138, 4294901760
        %2514 = vmatpush.msra.mxu0 %v2513
        %v2515 = vand.u32 %v2136, 4294901760
        %2516 = vmatpush.msra.mxu0 %v2515
        %v2517 = vand.u32 %v2134, 4294901760
        %2518 = vmatpush.msra.mxu0 %v2517
        %v2519 = vand.u32 %v2132, 4294901760
        %2520 = vmatpush.msra.mxu0 %v2519
        %v2521 = vand.u32 %v2130, 4294901760
        %2522 = vmatpush.msra.mxu0 %v2521
        %v2523 = vand.u32 %v2128, 4294901760
        %2524 = vmatpush.msra.mxu0 %v2523
        %v2525 = vand.u32 %v2126, 4294901760
        %2526 = vmatpush.msra.mxu0 %v2525
        %v2527 = vand.u32 %v2124, 4294901760
        %2528 = vmatpush.msra.mxu0 %v2527
        %v2529 = vand.u32 %v663, 4294901760
        %v2530 = vsub.f32 %v663, %v2529
        %v2531 = vand.u32 %v2530, 4294901760
        %v2532 = vsub.f32 %v2530, %v2531
        %v2533 = vand.u32 %v2532, 4294901760
        %2534 = vmatmul.f32.gmra.mxu0 %v2533
        %v2535 = vpop.f32.mrf.mxu0
        %v2536 = vadd.f32 %v2495, %v2535
        %2537 = vdwg.mxu0
        %v2538 = vand.u32 %v2154, 4294901760
        %v2539 = vsub.f32 %v2154, %v2538
        %v2540 = vand.u32 %v2539, 4294901760
        %v2541 = vsub.f32 %v2539, %v2540
        %v2542 = vand.u32 %v2541, 4294901760
        %2543 = vmatpush.msra.mxu0 %v2542
        %v2544 = vand.u32 %v2152, 4294901760
        %v2545 = vsub.f32 %v2152, %v2544
        %v2546 = vand.u32 %v2545, 4294901760
        %v2547 = vsub.f32 %v2545, %v2546
        %v2548 = vand.u32 %v2547, 4294901760
        %2549 = vmatpush.msra.mxu0 %v2548
        %v2550 = vand.u32 %v2150, 4294901760
        %v2551 = vsub.f32 %v2150, %v2550
        %v2552 = vand.u32 %v2551, 4294901760
        %v2553 = vsub.f32 %v2551, %v2552
        %v2554 = vand.u32 %v2553, 4294901760
        %2555 = vmatpush.msra.mxu0 %v2554
        %v2556 = vand.u32 %v2148, 4294901760
        %v2557 = vsub.f32 %v2148, %v2556
        %v2558 = vand.u32 %v2557, 4294901760
        %v2559 = vsub.f32 %v2557, %v2558
        %v2560 = vand.u32 %v2559, 4294901760
        %2561 = vmatpush.msra.mxu0 %v2560
        %v2562 = vand.u32 %v2146, 4294901760
        %v2563 = vsub.f32 %v2146, %v2562
        %v2564 = vand.u32 %v2563, 4294901760
        %v2565 = vsub.f32 %v2563, %v2564
        %v2566 = vand.u32 %v2565, 4294901760
        %2567 = vmatpush.msra.mxu0 %v2566
        %v2568 = vand.u32 %v2144, 4294901760
        %v2569 = vsub.f32 %v2144, %v2568
        %v2570 = vand.u32 %v2569, 4294901760
        %v2571 = vsub.f32 %v2569, %v2570
        %v2572 = vand.u32 %v2571, 4294901760
        %2573 = vmatpush.msra.mxu0 %v2572
        %v2574 = vand.u32 %v2142, 4294901760
        %v2575 = vsub.f32 %v2142, %v2574
        %v2576 = vand.u32 %v2575, 4294901760
        %v2577 = vsub.f32 %v2575, %v2576
        %v2578 = vand.u32 %v2577, 4294901760
        %2579 = vmatpush.msra.mxu0 %v2578
        %v2580 = vand.u32 %v2140, 4294901760
        %v2581 = vsub.f32 %v2140, %v2580
        %v2582 = vand.u32 %v2581, 4294901760
        %v2583 = vsub.f32 %v2581, %v2582
        %v2584 = vand.u32 %v2583, 4294901760
        %2585 = vmatpush.msra.mxu0 %v2584
        %v2586 = vand.u32 %v2138, 4294901760
        %v2587 = vsub.f32 %v2138, %v2586
        %v2588 = vand.u32 %v2587, 4294901760
        %v2589 = vsub.f32 %v2587, %v2588
        %v2590 = vand.u32 %v2589, 4294901760
        %2591 = vmatpush.msra.mxu0 %v2590
        %v2592 = vand.u32 %v2136, 4294901760
        %v2593 = vsub.f32 %v2136, %v2592
        %v2594 = vand.u32 %v2593, 4294901760
        %v2595 = vsub.f32 %v2593, %v2594
        %v2596 = vand.u32 %v2595, 4294901760
        %2597 = vmatpush.msra.mxu0 %v2596
        %v2598 = vand.u32 %v2134, 4294901760
        %v2599 = vsub.f32 %v2134, %v2598
        %v2600 = vand.u32 %v2599, 4294901760
        %v2601 = vsub.f32 %v2599, %v2600
        %v2602 = vand.u32 %v2601, 4294901760
        %2603 = vmatpush.msra.mxu0 %v2602
        %v2604 = vand.u32 %v2132, 4294901760
        %v2605 = vsub.f32 %v2132, %v2604
        %v2606 = vand.u32 %v2605, 4294901760
        %v2607 = vsub.f32 %v2605, %v2606
        %v2608 = vand.u32 %v2607, 4294901760
        %2609 = vmatpush.msra.mxu0 %v2608
        %v2610 = vand.u32 %v2130, 4294901760
        %v2611 = vsub.f32 %v2130, %v2610
        %v2612 = vand.u32 %v2611, 4294901760
        %v2613 = vsub.f32 %v2611, %v2612
        %v2614 = vand.u32 %v2613, 4294901760
        %2615 = vmatpush.msra.mxu0 %v2614
        %v2616 = vand.u32 %v2128, 4294901760
        %v2617 = vsub.f32 %v2128, %v2616
        %v2618 = vand.u32 %v2617, 4294901760
        %v2619 = vsub.f32 %v2617, %v2618
        %v2620 = vand.u32 %v2619, 4294901760
        %2621 = vmatpush.msra.mxu0 %v2620
        %v2622 = vand.u32 %v2126, 4294901760
        %v2623 = vsub.f32 %v2126, %v2622
        %v2624 = vand.u32 %v2623, 4294901760
        %v2625 = vsub.f32 %v2623, %v2624
        %v2626 = vand.u32 %v2625, 4294901760
        %2627 = vmatpush.msra.mxu0 %v2626
        %v2628 = vand.u32 %v2124, 4294901760
        %v2629 = vsub.f32 %v2124, %v2628
        %v2630 = vand.u32 %v2629, 4294901760
        %v2631 = vsub.f32 %v2629, %v2630
        %v2632 = vand.u32 %v2631, 4294901760
        %2633 = vmatpush.msra.mxu0 %v2632
        %v2634 = vand.u32 %v663, 4294901760
        %2635 = vmatmul.f32.gmra.mxu0 %v2634
        %v2636 = vpop.f32.mrf.mxu0
        %v2637 = vadd.f32 %v2536, %v2636
        %2638 = vdwg.mxu0
        %v2639 = vand.u32 %v2154, 4294901760
        %v2640 = vsub.f32 %v2154, %v2639
        %2641 = vmatpush.msra.mxu0 %v2640
        %v2642 = vand.u32 %v2152, 4294901760
        %v2643 = vsub.f32 %v2152, %v2642
        %2644 = vmatpush.msra.mxu0 %v2643
        %v2645 = vand.u32 %v2150, 4294901760
        %v2646 = vsub.f32 %v2150, %v2645
        %2647 = vmatpush.msra.mxu0 %v2646
        %v2648 = vand.u32 %v2148, 4294901760
        %v2649 = vsub.f32 %v2148, %v2648
        %2650 = vmatpush.msra.mxu0 %v2649
        %v2651 = vand.u32 %v2146, 4294901760
        %v2652 = vsub.f32 %v2146, %v2651
        %2653 = vmatpush.msra.mxu0 %v2652
        %v2654 = vand.u32 %v2144, 4294901760
        %v2655 = vsub.f32 %v2144, %v2654
        %2656 = vmatpush.msra.mxu0 %v2655
        %v2657 = vand.u32 %v2142, 4294901760
        %v2658 = vsub.f32 %v2142, %v2657
        %2659 = vmatpush.msra.mxu0 %v2658
        %v2660 = vand.u32 %v2140, 4294901760
        %v2661 = vsub.f32 %v2140, %v2660
        %2662 = vmatpush.msra.mxu0 %v2661
        %v2663 = vand.u32 %v2138, 4294901760
        %v2664 = vsub.f32 %v2138, %v2663
        %2665 = vmatpush.msra.mxu0 %v2664
        %v2666 = vand.u32 %v2136, 4294901760
        %v2667 = vsub.f32 %v2136, %v2666
        %2668 = vmatpush.msra.mxu0 %v2667
        %v2669 = vand.u32 %v2134, 4294901760
        %v2670 = vsub.f32 %v2134, %v2669
        %2671 = vmatpush.msra.mxu0 %v2670
        %v2672 = vand.u32 %v2132, 4294901760
        %v2673 = vsub.f32 %v2132, %v2672
        %2674 = vmatpush.msra.mxu0 %v2673
        %v2675 = vand.u32 %v2130, 4294901760
        %v2676 = vsub.f32 %v2130, %v2675
        %2677 = vmatpush.msra.mxu0 %v2676
        %v2678 = vand.u32 %v2128, 4294901760
        %v2679 = vsub.f32 %v2128, %v2678
        %2680 = vmatpush.msra.mxu0 %v2679
        %v2681 = vand.u32 %v2126, 4294901760
        %v2682 = vsub.f32 %v2126, %v2681
        %2683 = vmatpush.msra.mxu0 %v2682
        %v2684 = vand.u32 %v2124, 4294901760
        %v2685 = vsub.f32 %v2124, %v2684
        %2686 = vmatpush.msra.mxu0 %v2685
        %v2687 = vand.u32 %v663, 4294901760
        %v2688 = vsub.f32 %v663, %v2687
        %2689 = vmatmul.f32.gmra.mxu0 %v2688
        %v2690 = vpop.f32.mrf.mxu0
        %v2691 = vadd.f32 %v2637, %v2690
        %2692 = vdwg.mxu0
        %v2693 = vand.u32 %v2154, 4294901760
        %2694 = vmatpush.msra.mxu0 %v2693
        %v2695 = vand.u32 %v2152, 4294901760
        %2696 = vmatpush.msra.mxu0 %v2695
        %v2697 = vand.u32 %v2150, 4294901760
        %2698 = vmatpush.msra.mxu0 %v2697
        %v2699 = vand.u32 %v2148, 4294901760
        %2700 = vmatpush.msra.mxu0 %v2699
        %v2701 = vand.u32 %v2146, 4294901760
        %2702 = vmatpush.msra.mxu0 %v2701
        %v2703 = vand.u32 %v2144, 4294901760
        %2704 = vmatpush.msra.mxu0 %v2703
        %v2705 = vand.u32 %v2142, 4294901760
        %2706 = vmatpush.msra.mxu0 %v2705
        %v2707 = vand.u32 %v2140, 4294901760
        %2708 = vmatpush.msra.mxu0 %v2707
        %v2709 = vand.u32 %v2138, 4294901760
        %2710 = vmatpush.msra.mxu0 %v2709
        %v2711 = vand.u32 %v2136, 4294901760
        %2712 = vmatpush.msra.mxu0 %v2711
        %v2713 = vand.u32 %v2134, 4294901760
        %2714 = vmatpush.msra.mxu0 %v2713
        %v2715 = vand.u32 %v2132, 4294901760
        %2716 = vmatpush.msra.mxu0 %v2715
        %v2717 = vand.u32 %v2130, 4294901760
        %2718 = vmatpush.msra.mxu0 %v2717
        %v2719 = vand.u32 %v2128, 4294901760
        %2720 = vmatpush.msra.mxu0 %v2719
        %v2721 = vand.u32 %v2126, 4294901760
        %2722 = vmatpush.msra.mxu0 %v2721
        %v2723 = vand.u32 %v2124, 4294901760
        %2724 = vmatpush.msra.mxu0 %v2723
        %v2725 = vand.u32 %v663, 4294901760
        %v2726 = vsub.f32 %v663, %v2725
        %v2727 = vand.u32 %v2726, 4294901760
        %2728 = vmatmul.f32.gmra.mxu0 %v2727
        %v2729 = vpop.f32.mrf.mxu0
        %v2730 = vadd.f32 %v2691, %v2729
        %2731 = vdwg.mxu0
        %v2732 = vand.u32 %v2154, 4294901760
        %v2733 = vsub.f32 %v2154, %v2732
        %v2734 = vand.u32 %v2733, 4294901760
        %2735 = vmatpush.msra.mxu0 %v2734
        %v2736 = vand.u32 %v2152, 4294901760
        %v2737 = vsub.f32 %v2152, %v2736
        %v2738 = vand.u32 %v2737, 4294901760
        %2739 = vmatpush.msra.mxu0 %v2738
        %v2740 = vand.u32 %v2150, 4294901760
        %v2741 = vsub.f32 %v2150, %v2740
        %v2742 = vand.u32 %v2741, 4294901760
        %2743 = vmatpush.msra.mxu0 %v2742
        %v2744 = vand.u32 %v2148, 4294901760
        %v2745 = vsub.f32 %v2148, %v2744
        %v2746 = vand.u32 %v2745, 4294901760
        %2747 = vmatpush.msra.mxu0 %v2746
        %v2748 = vand.u32 %v2146, 4294901760
        %v2749 = vsub.f32 %v2146, %v2748
        %v2750 = vand.u32 %v2749, 4294901760
        %2751 = vmatpush.msra.mxu0 %v2750
        %v2752 = vand.u32 %v2144, 4294901760
        %v2753 = vsub.f32 %v2144, %v2752
        %v2754 = vand.u32 %v2753, 4294901760
        %2755 = vmatpush.msra.mxu0 %v2754
        %v2756 = vand.u32 %v2142, 4294901760
        %v2757 = vsub.f32 %v2142, %v2756
        %v2758 = vand.u32 %v2757, 4294901760
        %2759 = vmatpush.msra.mxu0 %v2758
        %v2760 = vand.u32 %v2140, 4294901760
        %v2761 = vsub.f32 %v2140, %v2760
        %v2762 = vand.u32 %v2761, 4294901760
        %2763 = vmatpush.msra.mxu0 %v2762
        %v2764 = vand.u32 %v2138, 4294901760
        %v2765 = vsub.f32 %v2138, %v2764
        %v2766 = vand.u32 %v2765, 4294901760
        %2767 = vmatpush.msra.mxu0 %v2766
        %v2768 = vand.u32 %v2136, 4294901760
        %v2769 = vsub.f32 %v2136, %v2768
        %v2770 = vand.u32 %v2769, 4294901760
        %2771 = vmatpush.msra.mxu0 %v2770
        %v2772 = vand.u32 %v2134, 4294901760
        %v2773 = vsub.f32 %v2134, %v2772
        %v2774 = vand.u32 %v2773, 4294901760
        %2775 = vmatpush.msra.mxu0 %v2774
        %v2776 = vand.u32 %v2132, 4294901760
        %v2777 = vsub.f32 %v2132, %v2776
        %v2778 = vand.u32 %v2777, 4294901760
        %2779 = vmatpush.msra.mxu0 %v2778
        %v2780 = vand.u32 %v2130, 4294901760
        %v2781 = vsub.f32 %v2130, %v2780
        %v2782 = vand.u32 %v2781, 4294901760
        %2783 = vmatpush.msra.mxu0 %v2782
        %v2784 = vand.u32 %v2128, 4294901760
        %v2785 = vsub.f32 %v2128, %v2784
        %v2786 = vand.u32 %v2785, 4294901760
        %2787 = vmatpush.msra.mxu0 %v2786
        %v2788 = vand.u32 %v2126, 4294901760
        %v2789 = vsub.f32 %v2126, %v2788
        %v2790 = vand.u32 %v2789, 4294901760
        %2791 = vmatpush.msra.mxu0 %v2790
        %v2792 = vand.u32 %v2124, 4294901760
        %v2793 = vsub.f32 %v2124, %v2792
        %v2794 = vand.u32 %v2793, 4294901760
        %2795 = vmatpush.msra.mxu0 %v2794
        %v2796 = vand.u32 %v663, 4294901760
        %2797 = vmatmul.f32.gmra.mxu0 %v2796
        %v2798 = vpop.f32.mrf.mxu0
        %v2799 = vadd.f32 %v2730, %v2798
        %2800 = vdwg.mxu0
        %v2801 = vand.u32 %v2154, 4294901760
        %2802 = vmatpush.msra.mxu0 %v2801
        %v2803 = vand.u32 %v2152, 4294901760
        %2804 = vmatpush.msra.mxu0 %v2803
        %v2805 = vand.u32 %v2150, 4294901760
        %2806 = vmatpush.msra.mxu0 %v2805
        %v2807 = vand.u32 %v2148, 4294901760
        %2808 = vmatpush.msra.mxu0 %v2807
        %v2809 = vand.u32 %v2146, 4294901760
        %2810 = vmatpush.msra.mxu0 %v2809
        %v2811 = vand.u32 %v2144, 4294901760
        %2812 = vmatpush.msra.mxu0 %v2811
        %v2813 = vand.u32 %v2142, 4294901760
        %2814 = vmatpush.msra.mxu0 %v2813
        %v2815 = vand.u32 %v2140, 4294901760
        %2816 = vmatpush.msra.mxu0 %v2815
        %v2817 = vand.u32 %v2138, 4294901760
        %2818 = vmatpush.msra.mxu0 %v2817
        %v2819 = vand.u32 %v2136, 4294901760
        %2820 = vmatpush.msra.mxu0 %v2819
        %v2821 = vand.u32 %v2134, 4294901760
        %2822 = vmatpush.msra.mxu0 %v2821
        %v2823 = vand.u32 %v2132, 4294901760
        %2824 = vmatpush.msra.mxu0 %v2823
        %v2825 = vand.u32 %v2130, 4294901760
        %2826 = vmatpush.msra.mxu0 %v2825
        %v2827 = vand.u32 %v2128, 4294901760
        %2828 = vmatpush.msra.mxu0 %v2827
        %v2829 = vand.u32 %v2126, 4294901760
        %2830 = vmatpush.msra.mxu0 %v2829
        %v2831 = vand.u32 %v2124, 4294901760
        %2832 = vmatpush.msra.mxu0 %v2831
        %v2833 = vand.u32 %v663, 4294901760
        %2834 = vmatmul.f32.gmra.mxu0 %v2833
        %v2835 = vpop.f32.mrf.mxu0
        %v2836 = vadd.f32 %v2799, %v2835
        %2837 = vdwg.mxu0
        %v2838 = vand.u32 %v2123, 4294901760
        %2839 = vmatpush.msra.mxu0 %v2838
        %v2840 = vand.u32 %v2121, 4294901760
        %2841 = vmatpush.msra.mxu0 %v2840
        %v2842 = vand.u32 %v2119, 4294901760
        %2843 = vmatpush.msra.mxu0 %v2842
        %v2844 = vand.u32 %v2117, 4294901760
        %2845 = vmatpush.msra.mxu0 %v2844
        %v2846 = vand.u32 %v2115, 4294901760
        %2847 = vmatpush.msra.mxu0 %v2846
        %v2848 = vand.u32 %v2113, 4294901760
        %2849 = vmatpush.msra.mxu0 %v2848
        %v2850 = vand.u32 %v2111, 4294901760
        %2851 = vmatpush.msra.mxu0 %v2850
        %v2852 = vand.u32 %v2109, 4294901760
        %2853 = vmatpush.msra.mxu0 %v2852
        %v2854 = vand.u32 %v2107, 4294901760
        %2855 = vmatpush.msra.mxu0 %v2854
        %v2856 = vand.u32 %v2105, 4294901760
        %2857 = vmatpush.msra.mxu0 %v2856
        %v2858 = vand.u32 %v2103, 4294901760
        %2859 = vmatpush.msra.mxu0 %v2858
        %v2860 = vand.u32 %v2101, 4294901760
        %2861 = vmatpush.msra.mxu0 %v2860
        %v2862 = vand.u32 %v2099, 4294901760
        %2863 = vmatpush.msra.mxu0 %v2862
        %v2864 = vand.u32 %v2097, 4294901760
        %2865 = vmatpush.msra.mxu0 %v2864
        %v2866 = vand.u32 %v2095, 4294901760
        %2867 = vmatpush.msra.mxu0 %v2866
        %v2868 = vand.u32 %v2093, 4294901760
        %2869 = vmatpush.msra.mxu0 %v2868
        %v2870 = vand.u32 %v662, 4294901760
        %v2871 = vsub.f32 %v662, %v2870
        %v2872 = vand.u32 %v2871, 4294901760
        %v2873 = vsub.f32 %v2871, %v2872
        %v2874 = vand.u32 %v2873, 4294901760
        %2875 = vmatmul.f32.gmra.mxu0 %v2874
        %v2876 = vpop.f32.mrf.mxu0
        %v2877 = vadd.f32 0.0, %v2876
        %2878 = vdwg.mxu0
        %v2879 = vand.u32 %v2123, 4294901760
        %v2880 = vsub.f32 %v2123, %v2879
        %v2881 = vand.u32 %v2880, 4294901760
        %v2882 = vsub.f32 %v2880, %v2881
        %v2883 = vand.u32 %v2882, 4294901760
        %2884 = vmatpush.msra.mxu0 %v2883
        %v2885 = vand.u32 %v2121, 4294901760
        %v2886 = vsub.f32 %v2121, %v2885
        %v2887 = vand.u32 %v2886, 4294901760
        %v2888 = vsub.f32 %v2886, %v2887
        %v2889 = vand.u32 %v2888, 4294901760
        %2890 = vmatpush.msra.mxu0 %v2889
        %v2891 = vand.u32 %v2119, 4294901760
        %v2892 = vsub.f32 %v2119, %v2891
        %v2893 = vand.u32 %v2892, 4294901760
        %v2894 = vsub.f32 %v2892, %v2893
        %v2895 = vand.u32 %v2894, 4294901760
        %2896 = vmatpush.msra.mxu0 %v2895
        %v2897 = vand.u32 %v2117, 4294901760
        %v2898 = vsub.f32 %v2117, %v2897
        %v2899 = vand.u32 %v2898, 4294901760
        %v2900 = vsub.f32 %v2898, %v2899
        %v2901 = vand.u32 %v2900, 4294901760
        %2902 = vmatpush.msra.mxu0 %v2901
        %v2903 = vand.u32 %v2115, 4294901760
        %v2904 = vsub.f32 %v2115, %v2903
        %v2905 = vand.u32 %v2904, 4294901760
        %v2906 = vsub.f32 %v2904, %v2905
        %v2907 = vand.u32 %v2906, 4294901760
        %2908 = vmatpush.msra.mxu0 %v2907
        %v2909 = vand.u32 %v2113, 4294901760
        %v2910 = vsub.f32 %v2113, %v2909
        %v2911 = vand.u32 %v2910, 4294901760
        %v2912 = vsub.f32 %v2910, %v2911
        %v2913 = vand.u32 %v2912, 4294901760
        %2914 = vmatpush.msra.mxu0 %v2913
        %v2915 = vand.u32 %v2111, 4294901760
        %v2916 = vsub.f32 %v2111, %v2915
        %v2917 = vand.u32 %v2916, 4294901760
        %v2918 = vsub.f32 %v2916, %v2917
        %v2919 = vand.u32 %v2918, 4294901760
        %2920 = vmatpush.msra.mxu0 %v2919
        %v2921 = vand.u32 %v2109, 4294901760
        %v2922 = vsub.f32 %v2109, %v2921
        %v2923 = vand.u32 %v2922, 4294901760
        %v2924 = vsub.f32 %v2922, %v2923
        %v2925 = vand.u32 %v2924, 4294901760
        %2926 = vmatpush.msra.mxu0 %v2925
        %v2927 = vand.u32 %v2107, 4294901760
        %v2928 = vsub.f32 %v2107, %v2927
        %v2929 = vand.u32 %v2928, 4294901760
        %v2930 = vsub.f32 %v2928, %v2929
        %v2931 = vand.u32 %v2930, 4294901760
        %2932 = vmatpush.msra.mxu0 %v2931
        %v2933 = vand.u32 %v2105, 4294901760
        %v2934 = vsub.f32 %v2105, %v2933
        %v2935 = vand.u32 %v2934, 4294901760
        %v2936 = vsub.f32 %v2934, %v2935
        %v2937 = vand.u32 %v2936, 4294901760
        %2938 = vmatpush.msra.mxu0 %v2937
        %v2939 = vand.u32 %v2103, 4294901760
        %v2940 = vsub.f32 %v2103, %v2939
        %v2941 = vand.u32 %v2940, 4294901760
        %v2942 = vsub.f32 %v2940, %v2941
        %v2943 = vand.u32 %v2942, 4294901760
        %2944 = vmatpush.msra.mxu0 %v2943
        %v2945 = vand.u32 %v2101, 4294901760
        %v2946 = vsub.f32 %v2101, %v2945
        %v2947 = vand.u32 %v2946, 4294901760
        %v2948 = vsub.f32 %v2946, %v2947
        %v2949 = vand.u32 %v2948, 4294901760
        %2950 = vmatpush.msra.mxu0 %v2949
        %v2951 = vand.u32 %v2099, 4294901760
        %v2952 = vsub.f32 %v2099, %v2951
        %v2953 = vand.u32 %v2952, 4294901760
        %v2954 = vsub.f32 %v2952, %v2953
        %v2955 = vand.u32 %v2954, 4294901760
        %2956 = vmatpush.msra.mxu0 %v2955
        %v2957 = vand.u32 %v2097, 4294901760
        %v2958 = vsub.f32 %v2097, %v2957
        %v2959 = vand.u32 %v2958, 4294901760
        %v2960 = vsub.f32 %v2958, %v2959
        %v2961 = vand.u32 %v2960, 4294901760
        %2962 = vmatpush.msra.mxu0 %v2961
        %v2963 = vand.u32 %v2095, 4294901760
        %v2964 = vsub.f32 %v2095, %v2963
        %v2965 = vand.u32 %v2964, 4294901760
        %v2966 = vsub.f32 %v2964, %v2965
        %v2967 = vand.u32 %v2966, 4294901760
        %2968 = vmatpush.msra.mxu0 %v2967
        %v2969 = vand.u32 %v2093, 4294901760
        %v2970 = vsub.f32 %v2093, %v2969
        %v2971 = vand.u32 %v2970, 4294901760
        %v2972 = vsub.f32 %v2970, %v2971
        %v2973 = vand.u32 %v2972, 4294901760
        %2974 = vmatpush.msra.mxu0 %v2973
        %v2975 = vand.u32 %v662, 4294901760
        %2976 = vmatmul.f32.gmra.mxu0 %v2975
        %v2977 = vpop.f32.mrf.mxu0
        %v2978 = vadd.f32 %v2877, %v2977
        %2979 = vdwg.mxu0
        %v2980 = vand.u32 %v2123, 4294901760
        %v2981 = vsub.f32 %v2123, %v2980
        %2982 = vmatpush.msra.mxu0 %v2981
        %v2983 = vand.u32 %v2121, 4294901760
        %v2984 = vsub.f32 %v2121, %v2983
        %2985 = vmatpush.msra.mxu0 %v2984
        %v2986 = vand.u32 %v2119, 4294901760
        %v2987 = vsub.f32 %v2119, %v2986
        %2988 = vmatpush.msra.mxu0 %v2987
        %v2989 = vand.u32 %v2117, 4294901760
        %v2990 = vsub.f32 %v2117, %v2989
        %2991 = vmatpush.msra.mxu0 %v2990
        %v2992 = vand.u32 %v2115, 4294901760
        %v2993 = vsub.f32 %v2115, %v2992
        %2994 = vmatpush.msra.mxu0 %v2993
        %v2995 = vand.u32 %v2113, 4294901760
        %v2996 = vsub.f32 %v2113, %v2995
        %2997 = vmatpush.msra.mxu0 %v2996
        %v2998 = vand.u32 %v2111, 4294901760
        %v2999 = vsub.f32 %v2111, %v2998
        %3000 = vmatpush.msra.mxu0 %v2999
        %v3001 = vand.u32 %v2109, 4294901760
        %v3002 = vsub.f32 %v2109, %v3001
        %3003 = vmatpush.msra.mxu0 %v3002
        %v3004 = vand.u32 %v2107, 4294901760
        %v3005 = vsub.f32 %v2107, %v3004
        %3006 = vmatpush.msra.mxu0 %v3005
        %v3007 = vand.u32 %v2105, 4294901760
        %v3008 = vsub.f32 %v2105, %v3007
        %3009 = vmatpush.msra.mxu0 %v3008
        %v3010 = vand.u32 %v2103, 4294901760
        %v3011 = vsub.f32 %v2103, %v3010
        %3012 = vmatpush.msra.mxu0 %v3011
        %v3013 = vand.u32 %v2101, 4294901760
        %v3014 = vsub.f32 %v2101, %v3013
        %3015 = vmatpush.msra.mxu0 %v3014
        %v3016 = vand.u32 %v2099, 4294901760
        %v3017 = vsub.f32 %v2099, %v3016
        %3018 = vmatpush.msra.mxu0 %v3017
        %v3019 = vand.u32 %v2097, 4294901760
        %v3020 = vsub.f32 %v2097, %v3019
        %3021 = vmatpush.msra.mxu0 %v3020
        %v3022 = vand.u32 %v2095, 4294901760
        %v3023 = vsub.f32 %v2095, %v3022
        %3024 = vmatpush.msra.mxu0 %v3023
        %v3025 = vand.u32 %v2093, 4294901760
        %v3026 = vsub.f32 %v2093, %v3025
        %3027 = vmatpush.msra.mxu0 %v3026
        %v3028 = vand.u32 %v662, 4294901760
        %v3029 = vsub.f32 %v662, %v3028
        %3030 = vmatmul.f32.gmra.mxu0 %v3029
        %v3031 = vpop.f32.mrf.mxu0
        %v3032 = vadd.f32 %v2978, %v3031
        %3033 = vdwg.mxu0
        %v3034 = vand.u32 %v2123, 4294901760
        %3035 = vmatpush.msra.mxu0 %v3034
        %v3036 = vand.u32 %v2121, 4294901760
        %3037 = vmatpush.msra.mxu0 %v3036
        %v3038 = vand.u32 %v2119, 4294901760
        %3039 = vmatpush.msra.mxu0 %v3038
        %v3040 = vand.u32 %v2117, 4294901760
        %3041 = vmatpush.msra.mxu0 %v3040
        %v3042 = vand.u32 %v2115, 4294901760
        %3043 = vmatpush.msra.mxu0 %v3042
        %v3044 = vand.u32 %v2113, 4294901760
        %3045 = vmatpush.msra.mxu0 %v3044
        %v3046 = vand.u32 %v2111, 4294901760
        %3047 = vmatpush.msra.mxu0 %v3046
        %v3048 = vand.u32 %v2109, 4294901760
        %3049 = vmatpush.msra.mxu0 %v3048
        %v3050 = vand.u32 %v2107, 4294901760
        %3051 = vmatpush.msra.mxu0 %v3050
        %v3052 = vand.u32 %v2105, 4294901760
        %3053 = vmatpush.msra.mxu0 %v3052
        %v3054 = vand.u32 %v2103, 4294901760
        %3055 = vmatpush.msra.mxu0 %v3054
        %v3056 = vand.u32 %v2101, 4294901760
        %3057 = vmatpush.msra.mxu0 %v3056
        %v3058 = vand.u32 %v2099, 4294901760
        %3059 = vmatpush.msra.mxu0 %v3058
        %v3060 = vand.u32 %v2097, 4294901760
        %3061 = vmatpush.msra.mxu0 %v3060
        %v3062 = vand.u32 %v2095, 4294901760
        %3063 = vmatpush.msra.mxu0 %v3062
        %v3064 = vand.u32 %v2093, 4294901760
        %3065 = vmatpush.msra.mxu0 %v3064
        %v3066 = vand.u32 %v662, 4294901760
        %v3067 = vsub.f32 %v662, %v3066
        %v3068 = vand.u32 %v3067, 4294901760
        %3069 = vmatmul.f32.gmra.mxu0 %v3068
        %v3070 = vpop.f32.mrf.mxu0
        %v3071 = vadd.f32 %v3032, %v3070
        %3072 = vdwg.mxu0
        %v3073 = vand.u32 %v2123, 4294901760
        %v3074 = vsub.f32 %v2123, %v3073
        %v3075 = vand.u32 %v3074, 4294901760
        %3076 = vmatpush.msra.mxu0 %v3075
        %v3077 = vand.u32 %v2121, 4294901760
        %v3078 = vsub.f32 %v2121, %v3077
        %v3079 = vand.u32 %v3078, 4294901760
        %3080 = vmatpush.msra.mxu0 %v3079
        %v3081 = vand.u32 %v2119, 4294901760
        %v3082 = vsub.f32 %v2119, %v3081
        %v3083 = vand.u32 %v3082, 4294901760
        %3084 = vmatpush.msra.mxu0 %v3083
        %v3085 = vand.u32 %v2117, 4294901760
        %v3086 = vsub.f32 %v2117, %v3085
        %v3087 = vand.u32 %v3086, 4294901760
        %3088 = vmatpush.msra.mxu0 %v3087
        %v3089 = vand.u32 %v2115, 4294901760
        %v3090 = vsub.f32 %v2115, %v3089
        %v3091 = vand.u32 %v3090, 4294901760
        %3092 = vmatpush.msra.mxu0 %v3091
        %v3093 = vand.u32 %v2113, 4294901760
        %v3094 = vsub.f32 %v2113, %v3093
        %v3095 = vand.u32 %v3094, 4294901760
        %3096 = vmatpush.msra.mxu0 %v3095
        %v3097 = vand.u32 %v2111, 4294901760
        %v3098 = vsub.f32 %v2111, %v3097
        %v3099 = vand.u32 %v3098, 4294901760
        %3100 = vmatpush.msra.mxu0 %v3099
        %v3101 = vand.u32 %v2109, 4294901760
        %v3102 = vsub.f32 %v2109, %v3101
        %v3103 = vand.u32 %v3102, 4294901760
        %3104 = vmatpush.msra.mxu0 %v3103
        %v3105 = vand.u32 %v2107, 4294901760
        %v3106 = vsub.f32 %v2107, %v3105
        %v3107 = vand.u32 %v3106, 4294901760
        %3108 = vmatpush.msra.mxu0 %v3107
        %v3109 = vand.u32 %v2105, 4294901760
        %v3110 = vsub.f32 %v2105, %v3109
        %v3111 = vand.u32 %v3110, 4294901760
        %3112 = vmatpush.msra.mxu0 %v3111
        %v3113 = vand.u32 %v2103, 4294901760
        %v3114 = vsub.f32 %v2103, %v3113
        %v3115 = vand.u32 %v3114, 4294901760
        %3116 = vmatpush.msra.mxu0 %v3115
        %v3117 = vand.u32 %v2101, 4294901760
        %v3118 = vsub.f32 %v2101, %v3117
        %v3119 = vand.u32 %v3118, 4294901760
        %3120 = vmatpush.msra.mxu0 %v3119
        %v3121 = vand.u32 %v2099, 4294901760
        %v3122 = vsub.f32 %v2099, %v3121
        %v3123 = vand.u32 %v3122, 4294901760
        %3124 = vmatpush.msra.mxu0 %v3123
        %v3125 = vand.u32 %v2097, 4294901760
        %v3126 = vsub.f32 %v2097, %v3125
        %v3127 = vand.u32 %v3126, 4294901760
        %3128 = vmatpush.msra.mxu0 %v3127
        %v3129 = vand.u32 %v2095, 4294901760
        %v3130 = vsub.f32 %v2095, %v3129
        %v3131 = vand.u32 %v3130, 4294901760
        %3132 = vmatpush.msra.mxu0 %v3131
        %v3133 = vand.u32 %v2093, 4294901760
        %v3134 = vsub.f32 %v2093, %v3133
        %v3135 = vand.u32 %v3134, 4294901760
        %3136 = vmatpush.msra.mxu0 %v3135
        %v3137 = vand.u32 %v662, 4294901760
        %3138 = vmatmul.f32.gmra.mxu0 %v3137
        %v3139 = vpop.f32.mrf.mxu0
        %v3140 = vadd.f32 %v3071, %v3139
        %3141 = vdwg.mxu0
        %v3142 = vand.u32 %v2123, 4294901760
        %3143 = vmatpush.msra.mxu0 %v3142
        %v3144 = vand.u32 %v2121, 4294901760
        %3145 = vmatpush.msra.mxu0 %v3144
        %v3146 = vand.u32 %v2119, 4294901760
        %3147 = vmatpush.msra.mxu0 %v3146
        %v3148 = vand.u32 %v2117, 4294901760
        %3149 = vmatpush.msra.mxu0 %v3148
        %v3150 = vand.u32 %v2115, 4294901760
        %3151 = vmatpush.msra.mxu0 %v3150
        %v3152 = vand.u32 %v2113, 4294901760
        %3153 = vmatpush.msra.mxu0 %v3152
        %v3154 = vand.u32 %v2111, 4294901760
        %3155 = vmatpush.msra.mxu0 %v3154
        %v3156 = vand.u32 %v2109, 4294901760
        %3157 = vmatpush.msra.mxu0 %v3156
        %v3158 = vand.u32 %v2107, 4294901760
        %3159 = vmatpush.msra.mxu0 %v3158
        %v3160 = vand.u32 %v2105, 4294901760
        %3161 = vmatpush.msra.mxu0 %v3160
        %v3162 = vand.u32 %v2103, 4294901760
        %3163 = vmatpush.msra.mxu0 %v3162
        %v3164 = vand.u32 %v2101, 4294901760
        %3165 = vmatpush.msra.mxu0 %v3164
        %v3166 = vand.u32 %v2099, 4294901760
        %3167 = vmatpush.msra.mxu0 %v3166
        %v3168 = vand.u32 %v2097, 4294901760
        %3169 = vmatpush.msra.mxu0 %v3168
        %v3170 = vand.u32 %v2095, 4294901760
        %3171 = vmatpush.msra.mxu0 %v3170
        %v3172 = vand.u32 %v2093, 4294901760
        %3173 = vmatpush.msra.mxu0 %v3172
        %v3174 = vand.u32 %v662, 4294901760
        %3175 = vmatmul.f32.gmra.mxu0 %v3174
        %v3176 = vpop.f32.mrf.mxu0
        %v3177 = vadd.f32 %v3140, %v3176
        %3178 = vdwg.mxu0
        %v3179 = vand.u32 %v2155, 4294901760
        %3180 = vmatpush.msra.mxu0 %v3179
        %v3181 = vand.u32 %v2153, 4294901760
        %3182 = vmatpush.msra.mxu0 %v3181
        %v3183 = vand.u32 %v2151, 4294901760
        %3184 = vmatpush.msra.mxu0 %v3183
        %v3185 = vand.u32 %v2149, 4294901760
        %3186 = vmatpush.msra.mxu0 %v3185
        %v3187 = vand.u32 %v2147, 4294901760
        %3188 = vmatpush.msra.mxu0 %v3187
        %v3189 = vand.u32 %v2145, 4294901760
        %3190 = vmatpush.msra.mxu0 %v3189
        %v3191 = vand.u32 %v2143, 4294901760
        %3192 = vmatpush.msra.mxu0 %v3191
        %v3193 = vand.u32 %v2141, 4294901760
        %3194 = vmatpush.msra.mxu0 %v3193
        %v3195 = vand.u32 %v2139, 4294901760
        %3196 = vmatpush.msra.mxu0 %v3195
        %v3197 = vand.u32 %v2137, 4294901760
        %3198 = vmatpush.msra.mxu0 %v3197
        %v3199 = vand.u32 %v2135, 4294901760
        %3200 = vmatpush.msra.mxu0 %v3199
        %v3201 = vand.u32 %v2133, 4294901760
        %3202 = vmatpush.msra.mxu0 %v3201
        %v3203 = vand.u32 %v2131, 4294901760
        %3204 = vmatpush.msra.mxu0 %v3203
        %v3205 = vand.u32 %v2129, 4294901760
        %3206 = vmatpush.msra.mxu0 %v3205
        %v3207 = vand.u32 %v2127, 4294901760
        %3208 = vmatpush.msra.mxu0 %v3207
        %v3209 = vand.u32 %v2125, 4294901760
        %3210 = vmatpush.msra.mxu0 %v3209
        %v3211 = vand.u32 %v663, 4294901760
        %v3212 = vsub.f32 %v663, %v3211
        %v3213 = vand.u32 %v3212, 4294901760
        %v3214 = vsub.f32 %v3212, %v3213
        %v3215 = vand.u32 %v3214, 4294901760
        %3216 = vmatmul.f32.gmra.mxu0 %v3215
        %v3217 = vpop.f32.mrf.mxu0
        %v3218 = vadd.f32 %v3177, %v3217
        %3219 = vdwg.mxu0
        %v3220 = vand.u32 %v2155, 4294901760
        %v3221 = vsub.f32 %v2155, %v3220
        %v3222 = vand.u32 %v3221, 4294901760
        %v3223 = vsub.f32 %v3221, %v3222
        %v3224 = vand.u32 %v3223, 4294901760
        %3225 = vmatpush.msra.mxu0 %v3224
        %v3226 = vand.u32 %v2153, 4294901760
        %v3227 = vsub.f32 %v2153, %v3226
        %v3228 = vand.u32 %v3227, 4294901760
        %v3229 = vsub.f32 %v3227, %v3228
        %v3230 = vand.u32 %v3229, 4294901760
        %3231 = vmatpush.msra.mxu0 %v3230
        %v3232 = vand.u32 %v2151, 4294901760
        %v3233 = vsub.f32 %v2151, %v3232
        %v3234 = vand.u32 %v3233, 4294901760
        %v3235 = vsub.f32 %v3233, %v3234
        %v3236 = vand.u32 %v3235, 4294901760
        %3237 = vmatpush.msra.mxu0 %v3236
        %v3238 = vand.u32 %v2149, 4294901760
        %v3239 = vsub.f32 %v2149, %v3238
        %v3240 = vand.u32 %v3239, 4294901760
        %v3241 = vsub.f32 %v3239, %v3240
        %v3242 = vand.u32 %v3241, 4294901760
        %3243 = vmatpush.msra.mxu0 %v3242
        %v3244 = vand.u32 %v2147, 4294901760
        %v3245 = vsub.f32 %v2147, %v3244
        %v3246 = vand.u32 %v3245, 4294901760
        %v3247 = vsub.f32 %v3245, %v3246
        %v3248 = vand.u32 %v3247, 4294901760
        %3249 = vmatpush.msra.mxu0 %v3248
        %v3250 = vand.u32 %v2145, 4294901760
        %v3251 = vsub.f32 %v2145, %v3250
        %v3252 = vand.u32 %v3251, 4294901760
        %v3253 = vsub.f32 %v3251, %v3252
        %v3254 = vand.u32 %v3253, 4294901760
        %3255 = vmatpush.msra.mxu0 %v3254
        %v3256 = vand.u32 %v2143, 4294901760
        %v3257 = vsub.f32 %v2143, %v3256
        %v3258 = vand.u32 %v3257, 4294901760
        %v3259 = vsub.f32 %v3257, %v3258
        %v3260 = vand.u32 %v3259, 4294901760
        %3261 = vmatpush.msra.mxu0 %v3260
        %v3262 = vand.u32 %v2141, 4294901760
        %v3263 = vsub.f32 %v2141, %v3262
        %v3264 = vand.u32 %v3263, 4294901760
        %v3265 = vsub.f32 %v3263, %v3264
        %v3266 = vand.u32 %v3265, 4294901760
        %3267 = vmatpush.msra.mxu0 %v3266
        %v3268 = vand.u32 %v2139, 4294901760
        %v3269 = vsub.f32 %v2139, %v3268
        %v3270 = vand.u32 %v3269, 4294901760
        %v3271 = vsub.f32 %v3269, %v3270
        %v3272 = vand.u32 %v3271, 4294901760
        %3273 = vmatpush.msra.mxu0 %v3272
        %v3274 = vand.u32 %v2137, 4294901760
        %v3275 = vsub.f32 %v2137, %v3274
        %v3276 = vand.u32 %v3275, 4294901760
        %v3277 = vsub.f32 %v3275, %v3276
        %v3278 = vand.u32 %v3277, 4294901760
        %3279 = vmatpush.msra.mxu0 %v3278
        %v3280 = vand.u32 %v2135, 4294901760
        %v3281 = vsub.f32 %v2135, %v3280
        %v3282 = vand.u32 %v3281, 4294901760
        %v3283 = vsub.f32 %v3281, %v3282
        %v3284 = vand.u32 %v3283, 4294901760
        %3285 = vmatpush.msra.mxu0 %v3284
        %v3286 = vand.u32 %v2133, 4294901760
        %v3287 = vsub.f32 %v2133, %v3286
        %v3288 = vand.u32 %v3287, 4294901760
        %v3289 = vsub.f32 %v3287, %v3288
        %v3290 = vand.u32 %v3289, 4294901760
        %3291 = vmatpush.msra.mxu0 %v3290
        %v3292 = vand.u32 %v2131, 4294901760
        %v3293 = vsub.f32 %v2131, %v3292
        %v3294 = vand.u32 %v3293, 4294901760
        %v3295 = vsub.f32 %v3293, %v3294
        %v3296 = vand.u32 %v3295, 4294901760
        %3297 = vmatpush.msra.mxu0 %v3296
        %v3298 = vand.u32 %v2129, 4294901760
        %v3299 = vsub.f32 %v2129, %v3298
        %v3300 = vand.u32 %v3299, 4294901760
        %v3301 = vsub.f32 %v3299, %v3300
        %v3302 = vand.u32 %v3301, 4294901760
        %3303 = vmatpush.msra.mxu0 %v3302
        %v3304 = vand.u32 %v2127, 4294901760
        %v3305 = vsub.f32 %v2127, %v3304
        %v3306 = vand.u32 %v3305, 4294901760
        %v3307 = vsub.f32 %v3305, %v3306
        %v3308 = vand.u32 %v3307, 4294901760
        %3309 = vmatpush.msra.mxu0 %v3308
        %v3310 = vand.u32 %v2125, 4294901760
        %v3311 = vsub.f32 %v2125, %v3310
        %v3312 = vand.u32 %v3311, 4294901760
        %v3313 = vsub.f32 %v3311, %v3312
        %v3314 = vand.u32 %v3313, 4294901760
        %3315 = vmatpush.msra.mxu0 %v3314
        %v3316 = vand.u32 %v663, 4294901760
        %3317 = vmatmul.f32.gmra.mxu0 %v3316
        %v3318 = vpop.f32.mrf.mxu0
        %v3319 = vadd.f32 %v3218, %v3318
        %3320 = vdwg.mxu0
        %v3321 = vand.u32 %v2155, 4294901760
        %v3322 = vsub.f32 %v2155, %v3321
        %3323 = vmatpush.msra.mxu0 %v3322
        %v3324 = vand.u32 %v2153, 4294901760
        %v3325 = vsub.f32 %v2153, %v3324
        %3326 = vmatpush.msra.mxu0 %v3325
        %v3327 = vand.u32 %v2151, 4294901760
        %v3328 = vsub.f32 %v2151, %v3327
        %3329 = vmatpush.msra.mxu0 %v3328
        %v3330 = vand.u32 %v2149, 4294901760
        %v3331 = vsub.f32 %v2149, %v3330
        %3332 = vmatpush.msra.mxu0 %v3331
        %v3333 = vand.u32 %v2147, 4294901760
        %v3334 = vsub.f32 %v2147, %v3333
        %3335 = vmatpush.msra.mxu0 %v3334
        %v3336 = vand.u32 %v2145, 4294901760
        %v3337 = vsub.f32 %v2145, %v3336
        %3338 = vmatpush.msra.mxu0 %v3337
        %v3339 = vand.u32 %v2143, 4294901760
        %v3340 = vsub.f32 %v2143, %v3339
        %3341 = vmatpush.msra.mxu0 %v3340
        %v3342 = vand.u32 %v2141, 4294901760
        %v3343 = vsub.f32 %v2141, %v3342
        %3344 = vmatpush.msra.mxu0 %v3343
        %v3345 = vand.u32 %v2139, 4294901760
        %v3346 = vsub.f32 %v2139, %v3345
        %3347 = vmatpush.msra.mxu0 %v3346
        %v3348 = vand.u32 %v2137, 4294901760
        %v3349 = vsub.f32 %v2137, %v3348
        %3350 = vmatpush.msra.mxu0 %v3349
        %v3351 = vand.u32 %v2135, 4294901760
        %v3352 = vsub.f32 %v2135, %v3351
        %3353 = vmatpush.msra.mxu0 %v3352
        %v3354 = vand.u32 %v2133, 4294901760
        %v3355 = vsub.f32 %v2133, %v3354
        %3356 = vmatpush.msra.mxu0 %v3355
        %v3357 = vand.u32 %v2131, 4294901760
        %v3358 = vsub.f32 %v2131, %v3357
        %3359 = vmatpush.msra.mxu0 %v3358
        %v3360 = vand.u32 %v2129, 4294901760
        %v3361 = vsub.f32 %v2129, %v3360
        %3362 = vmatpush.msra.mxu0 %v3361
        %v3363 = vand.u32 %v2127, 4294901760
        %v3364 = vsub.f32 %v2127, %v3363
        %3365 = vmatpush.msra.mxu0 %v3364
        %v3366 = vand.u32 %v2125, 4294901760
        %v3367 = vsub.f32 %v2125, %v3366
        %3368 = vmatpush.msra.mxu0 %v3367
        %v3369 = vand.u32 %v663, 4294901760
        %v3370 = vsub.f32 %v663, %v3369
        %3371 = vmatmul.f32.gmra.mxu0 %v3370
        %v3372 = vpop.f32.mrf.mxu0
        %v3373 = vadd.f32 %v3319, %v3372
        %3374 = vdwg.mxu0
        %v3375 = vand.u32 %v2155, 4294901760
        %3376 = vmatpush.msra.mxu0 %v3375
        %v3377 = vand.u32 %v2153, 4294901760
        %3378 = vmatpush.msra.mxu0 %v3377
        %v3379 = vand.u32 %v2151, 4294901760
        %3380 = vmatpush.msra.mxu0 %v3379
        %v3381 = vand.u32 %v2149, 4294901760
        %3382 = vmatpush.msra.mxu0 %v3381
        %v3383 = vand.u32 %v2147, 4294901760
        %3384 = vmatpush.msra.mxu0 %v3383
        %v3385 = vand.u32 %v2145, 4294901760
        %3386 = vmatpush.msra.mxu0 %v3385
        %v3387 = vand.u32 %v2143, 4294901760
        %3388 = vmatpush.msra.mxu0 %v3387
        %v3389 = vand.u32 %v2141, 4294901760
        %3390 = vmatpush.msra.mxu0 %v3389
        %v3391 = vand.u32 %v2139, 4294901760
        %3392 = vmatpush.msra.mxu0 %v3391
        %v3393 = vand.u32 %v2137, 4294901760
        %3394 = vmatpush.msra.mxu0 %v3393
        %v3395 = vand.u32 %v2135, 4294901760
        %3396 = vmatpush.msra.mxu0 %v3395
        %v3397 = vand.u32 %v2133, 4294901760
        %3398 = vmatpush.msra.mxu0 %v3397
        %v3399 = vand.u32 %v2131, 4294901760
        %3400 = vmatpush.msra.mxu0 %v3399
        %v3401 = vand.u32 %v2129, 4294901760
        %3402 = vmatpush.msra.mxu0 %v3401
        %v3403 = vand.u32 %v2127, 4294901760
        %3404 = vmatpush.msra.mxu0 %v3403
        %v3405 = vand.u32 %v2125, 4294901760
        %3406 = vmatpush.msra.mxu0 %v3405
        %v3407 = vand.u32 %v663, 4294901760
        %v3408 = vsub.f32 %v663, %v3407
        %v3409 = vand.u32 %v3408, 4294901760
        %3410 = vmatmul.f32.gmra.mxu0 %v3409
        %v3411 = vpop.f32.mrf.mxu0
        %v3412 = vadd.f32 %v3373, %v3411
        %3413 = vdwg.mxu0
        %v3414 = vand.u32 %v2155, 4294901760
        %v3415 = vsub.f32 %v2155, %v3414
        %v3416 = vand.u32 %v3415, 4294901760
        %3417 = vmatpush.msra.mxu0 %v3416
        %v3418 = vand.u32 %v2153, 4294901760
        %v3419 = vsub.f32 %v2153, %v3418
        %v3420 = vand.u32 %v3419, 4294901760
        %3421 = vmatpush.msra.mxu0 %v3420
        %v3422 = vand.u32 %v2151, 4294901760
        %v3423 = vsub.f32 %v2151, %v3422
        %v3424 = vand.u32 %v3423, 4294901760
        %3425 = vmatpush.msra.mxu0 %v3424
        %v3426 = vand.u32 %v2149, 4294901760
        %v3427 = vsub.f32 %v2149, %v3426
        %v3428 = vand.u32 %v3427, 4294901760
        %3429 = vmatpush.msra.mxu0 %v3428
        %v3430 = vand.u32 %v2147, 4294901760
        %v3431 = vsub.f32 %v2147, %v3430
        %v3432 = vand.u32 %v3431, 4294901760
        %3433 = vmatpush.msra.mxu0 %v3432
        %v3434 = vand.u32 %v2145, 4294901760
        %v3435 = vsub.f32 %v2145, %v3434
        %v3436 = vand.u32 %v3435, 4294901760
        %3437 = vmatpush.msra.mxu0 %v3436
        %v3438 = vand.u32 %v2143, 4294901760
        %v3439 = vsub.f32 %v2143, %v3438
        %v3440 = vand.u32 %v3439, 4294901760
        %3441 = vmatpush.msra.mxu0 %v3440
        %v3442 = vand.u32 %v2141, 4294901760
        %v3443 = vsub.f32 %v2141, %v3442
        %v3444 = vand.u32 %v3443, 4294901760
        %3445 = vmatpush.msra.mxu0 %v3444
        %v3446 = vand.u32 %v2139, 4294901760
        %v3447 = vsub.f32 %v2139, %v3446
        %v3448 = vand.u32 %v3447, 4294901760
        %3449 = vmatpush.msra.mxu0 %v3448
        %v3450 = vand.u32 %v2137, 4294901760
        %v3451 = vsub.f32 %v2137, %v3450
        %v3452 = vand.u32 %v3451, 4294901760
        %3453 = vmatpush.msra.mxu0 %v3452
        %v3454 = vand.u32 %v2135, 4294901760
        %v3455 = vsub.f32 %v2135, %v3454
        %v3456 = vand.u32 %v3455, 4294901760
        %3457 = vmatpush.msra.mxu0 %v3456
        %v3458 = vand.u32 %v2133, 4294901760
        %v3459 = vsub.f32 %v2133, %v3458
        %v3460 = vand.u32 %v3459, 4294901760
        %3461 = vmatpush.msra.mxu0 %v3460
        %v3462 = vand.u32 %v2131, 4294901760
        %v3463 = vsub.f32 %v2131, %v3462
        %v3464 = vand.u32 %v3463, 4294901760
        %3465 = vmatpush.msra.mxu0 %v3464
        %v3466 = vand.u32 %v2129, 4294901760
        %v3467 = vsub.f32 %v2129, %v3466
        %v3468 = vand.u32 %v3467, 4294901760
        %3469 = vmatpush.msra.mxu0 %v3468
        %v3470 = vand.u32 %v2127, 4294901760
        %v3471 = vsub.f32 %v2127, %v3470
        %v3472 = vand.u32 %v3471, 4294901760
        %3473 = vmatpush.msra.mxu0 %v3472
        %v3474 = vand.u32 %v2125, 4294901760
        %v3475 = vsub.f32 %v2125, %v3474
        %v3476 = vand.u32 %v3475, 4294901760
        %3477 = vmatpush.msra.mxu0 %v3476
        %v3478 = vand.u32 %v663, 4294901760
        %3479 = vmatmul.f32.gmra.mxu0 %v3478
        %v3480 = vpop.f32.mrf.mxu0
        %v3481 = vadd.f32 %v3412, %v3480
        %3482 = vdwg.mxu0
        %v3483 = vand.u32 %v2155, 4294901760
        %3484 = vmatpush.msra.mxu0 %v3483
        %v3485 = vand.u32 %v2153, 4294901760
        %3486 = vmatpush.msra.mxu0 %v3485
        %v3487 = vand.u32 %v2151, 4294901760
        %3488 = vmatpush.msra.mxu0 %v3487
        %v3489 = vand.u32 %v2149, 4294901760
        %3490 = vmatpush.msra.mxu0 %v3489
        %v3491 = vand.u32 %v2147, 4294901760
        %3492 = vmatpush.msra.mxu0 %v3491
        %v3493 = vand.u32 %v2145, 4294901760
        %3494 = vmatpush.msra.mxu0 %v3493
        %v3495 = vand.u32 %v2143, 4294901760
        %3496 = vmatpush.msra.mxu0 %v3495
        %v3497 = vand.u32 %v2141, 4294901760
        %3498 = vmatpush.msra.mxu0 %v3497
        %v3499 = vand.u32 %v2139, 4294901760
        %3500 = vmatpush.msra.mxu0 %v3499
        %v3501 = vand.u32 %v2137, 4294901760
        %3502 = vmatpush.msra.mxu0 %v3501
        %v3503 = vand.u32 %v2135, 4294901760
        %3504 = vmatpush.msra.mxu0 %v3503
        %v3505 = vand.u32 %v2133, 4294901760
        %3506 = vmatpush.msra.mxu0 %v3505
        %v3507 = vand.u32 %v2131, 4294901760
        %3508 = vmatpush.msra.mxu0 %v3507
        %v3509 = vand.u32 %v2129, 4294901760
        %3510 = vmatpush.msra.mxu0 %v3509
        %v3511 = vand.u32 %v2127, 4294901760
        %3512 = vmatpush.msra.mxu0 %v3511
        %v3513 = vand.u32 %v2125, 4294901760
        %3514 = vmatpush.msra.mxu0 %v3513
        %v3515 = vand.u32 %v663, 4294901760
        %3516 = vmatmul.f32.gmra.mxu0 %v3515
        %v3517 = vpop.f32.mrf.mxu0
        %v3518 = vadd.f32 %v3481, %v3517
        %3519 = vdwg.mxu0
        %v3520 = vld [vmem:[#allocation11] sm:$0xff]
        %v3521 = vld [vmem:[#allocation11 + $0x8] sm:$0xff]
        %v3522 = vld [vmem:[#allocation11 + $0x10] sm:$0xff]
        %v3523 = vld [vmem:[#allocation11 + $0x18] sm:$0xff]
        %v3524 = vld [vmem:[#allocation11 + $0x20] sm:$0xff]
        %v3525 = vld [vmem:[#allocation11 + $0x28] sm:$0xff]
        %v3526 = vld [vmem:[#allocation11 + $0x30] sm:$0xff]
        %v3527 = vld [vmem:[#allocation11 + $0x38] sm:$0xff]
        %v3528 = vld [vmem:[#allocation11 + $0x40] sm:$0xff]
        %v3529 = vld [vmem:[#allocation11 + $0x48] sm:$0xff]
        %v3530 = vld [vmem:[#allocation11 + $0x50] sm:$0xff]
        %v3531 = vld [vmem:[#allocation11 + $0x58] sm:$0xff]
        %v3532 = vld [vmem:[#allocation11 + $0x60] sm:$0xff]
        %v3533 = vld [vmem:[#allocation11 + $0x68] sm:$0xff]
        %v3534 = vld [vmem:[#allocation11 + $0x70] sm:$0xff]
        %v3535 = vld [vmem:[#allocation11 + $0x78] sm:$0xff]
        %v3536 = vld [vmem:[#allocation11 + $0x80] sm:$0xff]
        %v3537 = vld [vmem:[#allocation11 + $0x88] sm:$0xff]
        %v3538 = vld [vmem:[#allocation11 + $0x90] sm:$0xff]
        %v3539 = vld [vmem:[#allocation11 + $0x98] sm:$0xff]
        %v3540 = vld [vmem:[#allocation11 + $0xa0] sm:$0xff]
        %v3541 = vld [vmem:[#allocation11 + $0xa8] sm:$0xff]
        %v3542 = vld [vmem:[#allocation11 + $0xb0] sm:$0xff]
        %v3543 = vld [vmem:[#allocation11 + $0xb8] sm:$0xff]
        %v3544 = vld [vmem:[#allocation11 + $0xc0] sm:$0xff]
        %v3545 = vld [vmem:[#allocation11 + $0xc8] sm:$0xff]
        %v3546 = vld [vmem:[#allocation11 + $0xd0] sm:$0xff]
        %v3547 = vld [vmem:[#allocation11 + $0xd8] sm:$0xff]
        %v3548 = vld [vmem:[#allocation11 + $0xe0] sm:$0xff]
        %v3549 = vld [vmem:[#allocation11 + $0xe8] sm:$0xff]
        %v3550 = vld [vmem:[#allocation11 + $0xf0] sm:$0xff]
        %v3551 = vld [vmem:[#allocation11 + $0xf8] sm:$0xff]
        %v3552 = vld [vmem:[#allocation11 + $0x100] sm:$0xff]
        %v3553 = vld [vmem:[#allocation11 + $0x108] sm:$0xff]
        %v3554 = vld [vmem:[#allocation11 + $0x110] sm:$0xff]
        %v3555 = vld [vmem:[#allocation11 + $0x118] sm:$0xff]
        %v3556 = vld [vmem:[#allocation11 + $0x120] sm:$0xff]
        %v3557 = vld [vmem:[#allocation11 + $0x128] sm:$0xff]
        %v3558 = vld [vmem:[#allocation11 + $0x130] sm:$0xff]
        %v3559 = vld [vmem:[#allocation11 + $0x138] sm:$0xff]
        %v3560 = vld [vmem:[#allocation11 + $0x140] sm:$0xff]
        %v3561 = vld [vmem:[#allocation11 + $0x148] sm:$0xff]
        %v3562 = vld [vmem:[#allocation11 + $0x150] sm:$0xff]
        %v3563 = vld [vmem:[#allocation11 + $0x158] sm:$0xff]
        %v3564 = vld [vmem:[#allocation11 + $0x160] sm:$0xff]
        %v3565 = vld [vmem:[#allocation11 + $0x168] sm:$0xff]
        %v3566 = vld [vmem:[#allocation11 + $0x170] sm:$0xff]
        %v3567 = vld [vmem:[#allocation11 + $0x178] sm:$0xff]
        %v3568 = vld [vmem:[#allocation11 + $0x180] sm:$0xff]
        %v3569 = vld [vmem:[#allocation11 + $0x188] sm:$0xff]
        %v3570 = vld [vmem:[#allocation11 + $0x190] sm:$0xff]
        %v3571 = vld [vmem:[#allocation11 + $0x198] sm:$0xff]
        %v3572 = vld [vmem:[#allocation11 + $0x1a0] sm:$0xff]
        %v3573 = vld [vmem:[#allocation11 + $0x1a8] sm:$0xff]
        %v3574 = vld [vmem:[#allocation11 + $0x1b0] sm:$0xff]
        %v3575 = vld [vmem:[#allocation11 + $0x1b8] sm:$0xff]
        %v3576 = vld [vmem:[#allocation11 + $0x1c0] sm:$0xff]
        %v3577 = vld [vmem:[#allocation11 + $0x1c8] sm:$0xff]
        %v3578 = vld [vmem:[#allocation11 + $0x1d0] sm:$0xff]
        %v3579 = vld [vmem:[#allocation11 + $0x1d8] sm:$0xff]
        %v3580 = vld [vmem:[#allocation11 + $0x1e0] sm:$0xff]
        %v3581 = vld [vmem:[#allocation11 + $0x1e8] sm:$0xff]
        %v3582 = vld [vmem:[#allocation11 + $0x1f0] sm:$0xff]
        %v3583 = vld [vmem:[#allocation11 + $0x1f8] sm:$0xff]
        %v3584 = vand.u32 %v3550, 4294901760
        %3585 = vmatpush.msra.mxu0 %v3584
        %v3586 = vand.u32 %v3548, 4294901760
        %3587 = vmatpush.msra.mxu0 %v3586
        %v3588 = vand.u32 %v3546, 4294901760
        %3589 = vmatpush.msra.mxu0 %v3588
        %v3590 = vand.u32 %v3544, 4294901760
        %3591 = vmatpush.msra.mxu0 %v3590
        %v3592 = vand.u32 %v3542, 4294901760
        %3593 = vmatpush.msra.mxu0 %v3592
        %v3594 = vand.u32 %v3540, 4294901760
        %3595 = vmatpush.msra.mxu0 %v3594
        %v3596 = vand.u32 %v3538, 4294901760
        %3597 = vmatpush.msra.mxu0 %v3596
        %v3598 = vand.u32 %v3536, 4294901760
        %3599 = vmatpush.msra.mxu0 %v3598
        %v3600 = vand.u32 %v3534, 4294901760
        %3601 = vmatpush.msra.mxu0 %v3600
        %v3602 = vand.u32 %v3532, 4294901760
        %3603 = vmatpush.msra.mxu0 %v3602
        %v3604 = vand.u32 %v3530, 4294901760
        %3605 = vmatpush.msra.mxu0 %v3604
        %v3606 = vand.u32 %v3528, 4294901760
        %3607 = vmatpush.msra.mxu0 %v3606
        %v3608 = vand.u32 %v3526, 4294901760
        %3609 = vmatpush.msra.mxu0 %v3608
        %v3610 = vand.u32 %v3524, 4294901760
        %3611 = vmatpush.msra.mxu0 %v3610
        %v3612 = vand.u32 %v3522, 4294901760
        %3613 = vmatpush.msra.mxu0 %v3612
        %v3614 = vand.u32 %v3520, 4294901760
        %3615 = vmatpush.msra.mxu0 %v3614
        %v3616 = vand.u32 %v662, 4294901760
        %v3617 = vsub.f32 %v662, %v3616
        %v3618 = vand.u32 %v3617, 4294901760
        %v3619 = vsub.f32 %v3617, %v3618
        %v3620 = vand.u32 %v3619, 4294901760
        %3621 = vmatmul.f32.gmra.mxu0 %v3620
        %v3622 = vpop.f32.mrf.mxu0
        %v3623 = vadd.f32 0.0, %v3622
        %3624 = vdwg.mxu0
        %v3625 = vand.u32 %v3550, 4294901760
        %v3626 = vsub.f32 %v3550, %v3625
        %v3627 = vand.u32 %v3626, 4294901760
        %v3628 = vsub.f32 %v3626, %v3627
        %v3629 = vand.u32 %v3628, 4294901760
        %3630 = vmatpush.msra.mxu0 %v3629
        %v3631 = vand.u32 %v3548, 4294901760
        %v3632 = vsub.f32 %v3548, %v3631
        %v3633 = vand.u32 %v3632, 4294901760
        %v3634 = vsub.f32 %v3632, %v3633
        %v3635 = vand.u32 %v3634, 4294901760
        %3636 = vmatpush.msra.mxu0 %v3635
        %v3637 = vand.u32 %v3546, 4294901760
        %v3638 = vsub.f32 %v3546, %v3637
        %v3639 = vand.u32 %v3638, 4294901760
        %v3640 = vsub.f32 %v3638, %v3639
        %v3641 = vand.u32 %v3640, 4294901760
        %3642 = vmatpush.msra.mxu0 %v3641
        %v3643 = vand.u32 %v3544, 4294901760
        %v3644 = vsub.f32 %v3544, %v3643
        %v3645 = vand.u32 %v3644, 4294901760
        %v3646 = vsub.f32 %v3644, %v3645
        %v3647 = vand.u32 %v3646, 4294901760
        %3648 = vmatpush.msra.mxu0 %v3647
        %v3649 = vand.u32 %v3542, 4294901760
        %v3650 = vsub.f32 %v3542, %v3649
        %v3651 = vand.u32 %v3650, 4294901760
        %v3652 = vsub.f32 %v3650, %v3651
        %v3653 = vand.u32 %v3652, 4294901760
        %3654 = vmatpush.msra.mxu0 %v3653
        %v3655 = vand.u32 %v3540, 4294901760
        %v3656 = vsub.f32 %v3540, %v3655
        %v3657 = vand.u32 %v3656, 4294901760
        %v3658 = vsub.f32 %v3656, %v3657
        %v3659 = vand.u32 %v3658, 4294901760
        %3660 = vmatpush.msra.mxu0 %v3659
        %v3661 = vand.u32 %v3538, 4294901760
        %v3662 = vsub.f32 %v3538, %v3661
        %v3663 = vand.u32 %v3662, 4294901760
        %v3664 = vsub.f32 %v3662, %v3663
        %v3665 = vand.u32 %v3664, 4294901760
        %3666 = vmatpush.msra.mxu0 %v3665
        %v3667 = vand.u32 %v3536, 4294901760
        %v3668 = vsub.f32 %v3536, %v3667
        %v3669 = vand.u32 %v3668, 4294901760
        %v3670 = vsub.f32 %v3668, %v3669
        %v3671 = vand.u32 %v3670, 4294901760
        %3672 = vmatpush.msra.mxu0 %v3671
        %v3673 = vand.u32 %v3534, 4294901760
        %v3674 = vsub.f32 %v3534, %v3673
        %v3675 = vand.u32 %v3674, 4294901760
        %v3676 = vsub.f32 %v3674, %v3675
        %v3677 = vand.u32 %v3676, 4294901760
        %3678 = vmatpush.msra.mxu0 %v3677
        %v3679 = vand.u32 %v3532, 4294901760
        %v3680 = vsub.f32 %v3532, %v3679
        %v3681 = vand.u32 %v3680, 4294901760
        %v3682 = vsub.f32 %v3680, %v3681
        %v3683 = vand.u32 %v3682, 4294901760
        %3684 = vmatpush.msra.mxu0 %v3683
        %v3685 = vand.u32 %v3530, 4294901760
        %v3686 = vsub.f32 %v3530, %v3685
        %v3687 = vand.u32 %v3686, 4294901760
        %v3688 = vsub.f32 %v3686, %v3687
        %v3689 = vand.u32 %v3688, 4294901760
        %3690 = vmatpush.msra.mxu0 %v3689
        %v3691 = vand.u32 %v3528, 4294901760
        %v3692 = vsub.f32 %v3528, %v3691
        %v3693 = vand.u32 %v3692, 4294901760
        %v3694 = vsub.f32 %v3692, %v3693
        %v3695 = vand.u32 %v3694, 4294901760
        %3696 = vmatpush.msra.mxu0 %v3695
        %v3697 = vand.u32 %v3526, 4294901760
        %v3698 = vsub.f32 %v3526, %v3697
        %v3699 = vand.u32 %v3698, 4294901760
        %v3700 = vsub.f32 %v3698, %v3699
        %v3701 = vand.u32 %v3700, 4294901760
        %3702 = vmatpush.msra.mxu0 %v3701
        %v3703 = vand.u32 %v3524, 4294901760
        %v3704 = vsub.f32 %v3524, %v3703
        %v3705 = vand.u32 %v3704, 4294901760
        %v3706 = vsub.f32 %v3704, %v3705
        %v3707 = vand.u32 %v3706, 4294901760
        %3708 = vmatpush.msra.mxu0 %v3707
        %v3709 = vand.u32 %v3522, 4294901760
        %v3710 = vsub.f32 %v3522, %v3709
        %v3711 = vand.u32 %v3710, 4294901760
        %v3712 = vsub.f32 %v3710, %v3711
        %v3713 = vand.u32 %v3712, 4294901760
        %3714 = vmatpush.msra.mxu0 %v3713
        %v3715 = vand.u32 %v3520, 4294901760
        %v3716 = vsub.f32 %v3520, %v3715
        %v3717 = vand.u32 %v3716, 4294901760
        %v3718 = vsub.f32 %v3716, %v3717
        %v3719 = vand.u32 %v3718, 4294901760
        %3720 = vmatpush.msra.mxu0 %v3719
        %v3721 = vand.u32 %v662, 4294901760
        %3722 = vmatmul.f32.gmra.mxu0 %v3721
        %v3723 = vpop.f32.mrf.mxu0
        %v3724 = vadd.f32 %v3623, %v3723
        %3725 = vdwg.mxu0
        %v3726 = vand.u32 %v3550, 4294901760
        %v3727 = vsub.f32 %v3550, %v3726
        %3728 = vmatpush.msra.mxu0 %v3727
        %v3729 = vand.u32 %v3548, 4294901760
        %v3730 = vsub.f32 %v3548, %v3729
        %3731 = vmatpush.msra.mxu0 %v3730
        %v3732 = vand.u32 %v3546, 4294901760
        %v3733 = vsub.f32 %v3546, %v3732
        %3734 = vmatpush.msra.mxu0 %v3733
        %v3735 = vand.u32 %v3544, 4294901760
        %v3736 = vsub.f32 %v3544, %v3735
        %3737 = vmatpush.msra.mxu0 %v3736
        %v3738 = vand.u32 %v3542, 4294901760
        %v3739 = vsub.f32 %v3542, %v3738
        %3740 = vmatpush.msra.mxu0 %v3739
        %v3741 = vand.u32 %v3540, 4294901760
        %v3742 = vsub.f32 %v3540, %v3741
        %3743 = vmatpush.msra.mxu0 %v3742
        %v3744 = vand.u32 %v3538, 4294901760
        %v3745 = vsub.f32 %v3538, %v3744
        %3746 = vmatpush.msra.mxu0 %v3745
        %v3747 = vand.u32 %v3536, 4294901760
        %v3748 = vsub.f32 %v3536, %v3747
        %3749 = vmatpush.msra.mxu0 %v3748
        %v3750 = vand.u32 %v3534, 4294901760
        %v3751 = vsub.f32 %v3534, %v3750
        %3752 = vmatpush.msra.mxu0 %v3751
        %v3753 = vand.u32 %v3532, 4294901760
        %v3754 = vsub.f32 %v3532, %v3753
        %3755 = vmatpush.msra.mxu0 %v3754
        %v3756 = vand.u32 %v3530, 4294901760
        %v3757 = vsub.f32 %v3530, %v3756
        %3758 = vmatpush.msra.mxu0 %v3757
        %v3759 = vand.u32 %v3528, 4294901760
        %v3760 = vsub.f32 %v3528, %v3759
        %3761 = vmatpush.msra.mxu0 %v3760
        %v3762 = vand.u32 %v3526, 4294901760
        %v3763 = vsub.f32 %v3526, %v3762
        %3764 = vmatpush.msra.mxu0 %v3763
        %v3765 = vand.u32 %v3524, 4294901760
        %v3766 = vsub.f32 %v3524, %v3765
        %3767 = vmatpush.msra.mxu0 %v3766
        %v3768 = vand.u32 %v3522, 4294901760
        %v3769 = vsub.f32 %v3522, %v3768
        %3770 = vmatpush.msra.mxu0 %v3769
        %v3771 = vand.u32 %v3520, 4294901760
        %v3772 = vsub.f32 %v3520, %v3771
        %3773 = vmatpush.msra.mxu0 %v3772
        %v3774 = vand.u32 %v662, 4294901760
        %v3775 = vsub.f32 %v662, %v3774
        %3776 = vmatmul.f32.gmra.mxu0 %v3775
        %v3777 = vpop.f32.mrf.mxu0
        %v3778 = vadd.f32 %v3724, %v3777
        %3779 = vdwg.mxu0
        %v3780 = vand.u32 %v3550, 4294901760
        %3781 = vmatpush.msra.mxu0 %v3780
        %v3782 = vand.u32 %v3548, 4294901760
        %3783 = vmatpush.msra.mxu0 %v3782
        %v3784 = vand.u32 %v3546, 4294901760
        %3785 = vmatpush.msra.mxu0 %v3784
        %v3786 = vand.u32 %v3544, 4294901760
        %3787 = vmatpush.msra.mxu0 %v3786
        %v3788 = vand.u32 %v3542, 4294901760
        %3789 = vmatpush.msra.mxu0 %v3788
        %v3790 = vand.u32 %v3540, 4294901760
        %3791 = vmatpush.msra.mxu0 %v3790
        %v3792 = vand.u32 %v3538, 4294901760
        %3793 = vmatpush.msra.mxu0 %v3792
        %v3794 = vand.u32 %v3536, 4294901760
        %3795 = vmatpush.msra.mxu0 %v3794
        %v3796 = vand.u32 %v3534, 4294901760
        %3797 = vmatpush.msra.mxu0 %v3796
        %v3798 = vand.u32 %v3532, 4294901760
        %3799 = vmatpush.msra.mxu0 %v3798
        %v3800 = vand.u32 %v3530, 4294901760
        %3801 = vmatpush.msra.mxu0 %v3800
        %v3802 = vand.u32 %v3528, 4294901760
        %3803 = vmatpush.msra.mxu0 %v3802
        %v3804 = vand.u32 %v3526, 4294901760
        %3805 = vmatpush.msra.mxu0 %v3804
        %v3806 = vand.u32 %v3524, 4294901760
        %3807 = vmatpush.msra.mxu0 %v3806
        %v3808 = vand.u32 %v3522, 4294901760
        %3809 = vmatpush.msra.mxu0 %v3808
        %v3810 = vand.u32 %v3520, 4294901760
        %3811 = vmatpush.msra.mxu0 %v3810
        %v3812 = vand.u32 %v662, 4294901760
        %v3813 = vsub.f32 %v662, %v3812
        %v3814 = vand.u32 %v3813, 4294901760
        %3815 = vmatmul.f32.gmra.mxu0 %v3814
        %v3816 = vpop.f32.mrf.mxu0
        %v3817 = vadd.f32 %v3778, %v3816
        %3818 = vdwg.mxu0
        %v3819 = vand.u32 %v3550, 4294901760
        %v3820 = vsub.f32 %v3550, %v3819
        %v3821 = vand.u32 %v3820, 4294901760
        %3822 = vmatpush.msra.mxu0 %v3821
        %v3823 = vand.u32 %v3548, 4294901760
        %v3824 = vsub.f32 %v3548, %v3823
        %v3825 = vand.u32 %v3824, 4294901760
        %3826 = vmatpush.msra.mxu0 %v3825
        %v3827 = vand.u32 %v3546, 4294901760
        %v3828 = vsub.f32 %v3546, %v3827
        %v3829 = vand.u32 %v3828, 4294901760
        %3830 = vmatpush.msra.mxu0 %v3829
        %v3831 = vand.u32 %v3544, 4294901760
        %v3832 = vsub.f32 %v3544, %v3831
        %v3833 = vand.u32 %v3832, 4294901760
        %3834 = vmatpush.msra.mxu0 %v3833
        %v3835 = vand.u32 %v3542, 4294901760
        %v3836 = vsub.f32 %v3542, %v3835
        %v3837 = vand.u32 %v3836, 4294901760
        %3838 = vmatpush.msra.mxu0 %v3837
        %v3839 = vand.u32 %v3540, 4294901760
        %v3840 = vsub.f32 %v3540, %v3839
        %v3841 = vand.u32 %v3840, 4294901760
        %3842 = vmatpush.msra.mxu0 %v3841
        %v3843 = vand.u32 %v3538, 4294901760
        %v3844 = vsub.f32 %v3538, %v3843
        %v3845 = vand.u32 %v3844, 4294901760
        %3846 = vmatpush.msra.mxu0 %v3845
        %v3847 = vand.u32 %v3536, 4294901760
        %v3848 = vsub.f32 %v3536, %v3847
        %v3849 = vand.u32 %v3848, 4294901760
        %3850 = vmatpush.msra.mxu0 %v3849
        %v3851 = vand.u32 %v3534, 4294901760
        %v3852 = vsub.f32 %v3534, %v3851
        %v3853 = vand.u32 %v3852, 4294901760
        %3854 = vmatpush.msra.mxu0 %v3853
        %v3855 = vand.u32 %v3532, 4294901760
        %v3856 = vsub.f32 %v3532, %v3855
        %v3857 = vand.u32 %v3856, 4294901760
        %3858 = vmatpush.msra.mxu0 %v3857
        %v3859 = vand.u32 %v3530, 4294901760
        %v3860 = vsub.f32 %v3530, %v3859
        %v3861 = vand.u32 %v3860, 4294901760
        %3862 = vmatpush.msra.mxu0 %v3861
        %v3863 = vand.u32 %v3528, 4294901760
        %v3864 = vsub.f32 %v3528, %v3863
        %v3865 = vand.u32 %v3864, 4294901760
        %3866 = vmatpush.msra.mxu0 %v3865
        %v3867 = vand.u32 %v3526, 4294901760
        %v3868 = vsub.f32 %v3526, %v3867
        %v3869 = vand.u32 %v3868, 4294901760
        %3870 = vmatpush.msra.mxu0 %v3869
        %v3871 = vand.u32 %v3524, 4294901760
        %v3872 = vsub.f32 %v3524, %v3871
        %v3873 = vand.u32 %v3872, 4294901760
        %3874 = vmatpush.msra.mxu0 %v3873
        %v3875 = vand.u32 %v3522, 4294901760
        %v3876 = vsub.f32 %v3522, %v3875
        %v3877 = vand.u32 %v3876, 4294901760
        %3878 = vmatpush.msra.mxu0 %v3877
        %v3879 = vand.u32 %v3520, 4294901760
        %v3880 = vsub.f32 %v3520, %v3879
        %v3881 = vand.u32 %v3880, 4294901760
        %3882 = vmatpush.msra.mxu0 %v3881
        %v3883 = vand.u32 %v662, 4294901760
        %3884 = vmatmul.f32.gmra.mxu0 %v3883
        %v3885 = vpop.f32.mrf.mxu0
        %v3886 = vadd.f32 %v3817, %v3885
        %3887 = vdwg.mxu0
        %v3888 = vand.u32 %v3550, 4294901760
        %3889 = vmatpush.msra.mxu0 %v3888
        %v3890 = vand.u32 %v3548, 4294901760
        %3891 = vmatpush.msra.mxu0 %v3890
        %v3892 = vand.u32 %v3546, 4294901760
        %3893 = vmatpush.msra.mxu0 %v3892
        %v3894 = vand.u32 %v3544, 4294901760
        %3895 = vmatpush.msra.mxu0 %v3894
        %v3896 = vand.u32 %v3542, 4294901760
        %3897 = vmatpush.msra.mxu0 %v3896
        %v3898 = vand.u32 %v3540, 4294901760
        %3899 = vmatpush.msra.mxu0 %v3898
        %v3900 = vand.u32 %v3538, 4294901760
        %3901 = vmatpush.msra.mxu0 %v3900
        %v3902 = vand.u32 %v3536, 4294901760
        %3903 = vmatpush.msra.mxu0 %v3902
        %v3904 = vand.u32 %v3534, 4294901760
        %3905 = vmatpush.msra.mxu0 %v3904
        %v3906 = vand.u32 %v3532, 4294901760
        %3907 = vmatpush.msra.mxu0 %v3906
        %v3908 = vand.u32 %v3530, 4294901760
        %3909 = vmatpush.msra.mxu0 %v3908
        %v3910 = vand.u32 %v3528, 4294901760
        %3911 = vmatpush.msra.mxu0 %v3910
        %v3912 = vand.u32 %v3526, 4294901760
        %3913 = vmatpush.msra.mxu0 %v3912
        %v3914 = vand.u32 %v3524, 4294901760
        %3915 = vmatpush.msra.mxu0 %v3914
        %v3916 = vand.u32 %v3522, 4294901760
        %3917 = vmatpush.msra.mxu0 %v3916
        %v3918 = vand.u32 %v3520, 4294901760
        %3919 = vmatpush.msra.mxu0 %v3918
        %v3920 = vand.u32 %v662, 4294901760
        %3921 = vmatmul.f32.gmra.mxu0 %v3920
        %v3922 = vpop.f32.mrf.mxu0
        %v3923 = vadd.f32 %v3886, %v3922
        %3924 = vdwg.mxu0
        %v3925 = vand.u32 %v3582, 4294901760
        %3926 = vmatpush.msra.mxu0 %v3925
        %v3927 = vand.u32 %v3580, 4294901760
        %3928 = vmatpush.msra.mxu0 %v3927
        %v3929 = vand.u32 %v3578, 4294901760
        %3930 = vmatpush.msra.mxu0 %v3929
        %v3931 = vand.u32 %v3576, 4294901760
        %3932 = vmatpush.msra.mxu0 %v3931
        %v3933 = vand.u32 %v3574, 4294901760
        %3934 = vmatpush.msra.mxu0 %v3933
        %v3935 = vand.u32 %v3572, 4294901760
        %3936 = vmatpush.msra.mxu0 %v3935
        %v3937 = vand.u32 %v3570, 4294901760
        %3938 = vmatpush.msra.mxu0 %v3937
        %v3939 = vand.u32 %v3568, 4294901760
        %3940 = vmatpush.msra.mxu0 %v3939
        %v3941 = vand.u32 %v3566, 4294901760
        %3942 = vmatpush.msra.mxu0 %v3941
        %v3943 = vand.u32 %v3564, 4294901760
        %3944 = vmatpush.msra.mxu0 %v3943
        %v3945 = vand.u32 %v3562, 4294901760
        %3946 = vmatpush.msra.mxu0 %v3945
        %v3947 = vand.u32 %v3560, 4294901760
        %3948 = vmatpush.msra.mxu0 %v3947
        %v3949 = vand.u32 %v3558, 4294901760
        %3950 = vmatpush.msra.mxu0 %v3949
        %v3951 = vand.u32 %v3556, 4294901760
        %3952 = vmatpush.msra.mxu0 %v3951
        %v3953 = vand.u32 %v3554, 4294901760
        %3954 = vmatpush.msra.mxu0 %v3953
        %v3955 = vand.u32 %v3552, 4294901760
        %3956 = vmatpush.msra.mxu0 %v3955
        %v3957 = vand.u32 %v663, 4294901760
        %v3958 = vsub.f32 %v663, %v3957
        %v3959 = vand.u32 %v3958, 4294901760
        %v3960 = vsub.f32 %v3958, %v3959
        %v3961 = vand.u32 %v3960, 4294901760
        %3962 = vmatmul.f32.gmra.mxu0 %v3961
        %v3963 = vpop.f32.mrf.mxu0
        %v3964 = vadd.f32 %v3923, %v3963
        %3965 = vdwg.mxu0
        %v3966 = vand.u32 %v3582, 4294901760
        %v3967 = vsub.f32 %v3582, %v3966
        %v3968 = vand.u32 %v3967, 4294901760
        %v3969 = vsub.f32 %v3967, %v3968
        %v3970 = vand.u32 %v3969, 4294901760
        %3971 = vmatpush.msra.mxu0 %v3970
        %v3972 = vand.u32 %v3580, 4294901760
        %v3973 = vsub.f32 %v3580, %v3972
        %v3974 = vand.u32 %v3973, 4294901760
        %v3975 = vsub.f32 %v3973, %v3974
        %v3976 = vand.u32 %v3975, 4294901760
        %3977 = vmatpush.msra.mxu0 %v3976
        %v3978 = vand.u32 %v3578, 4294901760
        %v3979 = vsub.f32 %v3578, %v3978
        %v3980 = vand.u32 %v3979, 4294901760
        %v3981 = vsub.f32 %v3979, %v3980
        %v3982 = vand.u32 %v3981, 4294901760
        %3983 = vmatpush.msra.mxu0 %v3982
        %v3984 = vand.u32 %v3576, 4294901760
        %v3985 = vsub.f32 %v3576, %v3984
        %v3986 = vand.u32 %v3985, 4294901760
        %v3987 = vsub.f32 %v3985, %v3986
        %v3988 = vand.u32 %v3987, 4294901760
        %3989 = vmatpush.msra.mxu0 %v3988
        %v3990 = vand.u32 %v3574, 4294901760
        %v3991 = vsub.f32 %v3574, %v3990
        %v3992 = vand.u32 %v3991, 4294901760
        %v3993 = vsub.f32 %v3991, %v3992
        %v3994 = vand.u32 %v3993, 4294901760
        %3995 = vmatpush.msra.mxu0 %v3994
        %v3996 = vand.u32 %v3572, 4294901760
        %v3997 = vsub.f32 %v3572, %v3996
        %v3998 = vand.u32 %v3997, 4294901760
        %v3999 = vsub.f32 %v3997, %v3998
        %v4000 = vand.u32 %v3999, 4294901760
        %4001 = vmatpush.msra.mxu0 %v4000
        %v4002 = vand.u32 %v3570, 4294901760
        %v4003 = vsub.f32 %v3570, %v4002
        %v4004 = vand.u32 %v4003, 4294901760
        %v4005 = vsub.f32 %v4003, %v4004
        %v4006 = vand.u32 %v4005, 4294901760
        %4007 = vmatpush.msra.mxu0 %v4006
        %v4008 = vand.u32 %v3568, 4294901760
        %v4009 = vsub.f32 %v3568, %v4008
        %v4010 = vand.u32 %v4009, 4294901760
        %v4011 = vsub.f32 %v4009, %v4010
        %v4012 = vand.u32 %v4011, 4294901760
        %4013 = vmatpush.msra.mxu0 %v4012
        %v4014 = vand.u32 %v3566, 4294901760
        %v4015 = vsub.f32 %v3566, %v4014
        %v4016 = vand.u32 %v4015, 4294901760
        %v4017 = vsub.f32 %v4015, %v4016
        %v4018 = vand.u32 %v4017, 4294901760
        %4019 = vmatpush.msra.mxu0 %v4018
        %v4020 = vand.u32 %v3564, 4294901760
        %v4021 = vsub.f32 %v3564, %v4020
        %v4022 = vand.u32 %v4021, 4294901760
        %v4023 = vsub.f32 %v4021, %v4022
        %v4024 = vand.u32 %v4023, 4294901760
        %4025 = vmatpush.msra.mxu0 %v4024
        %v4026 = vand.u32 %v3562, 4294901760
        %v4027 = vsub.f32 %v3562, %v4026
        %v4028 = vand.u32 %v4027, 4294901760
        %v4029 = vsub.f32 %v4027, %v4028
        %v4030 = vand.u32 %v4029, 4294901760
        %4031 = vmatpush.msra.mxu0 %v4030
        %v4032 = vand.u32 %v3560, 4294901760
        %v4033 = vsub.f32 %v3560, %v4032
        %v4034 = vand.u32 %v4033, 4294901760
        %v4035 = vsub.f32 %v4033, %v4034
        %v4036 = vand.u32 %v4035, 4294901760
        %4037 = vmatpush.msra.mxu0 %v4036
        %v4038 = vand.u32 %v3558, 4294901760
        %v4039 = vsub.f32 %v3558, %v4038
        %v4040 = vand.u32 %v4039, 4294901760
        %v4041 = vsub.f32 %v4039, %v4040
        %v4042 = vand.u32 %v4041, 4294901760
        %4043 = vmatpush.msra.mxu0 %v4042
        %v4044 = vand.u32 %v3556, 4294901760
        %v4045 = vsub.f32 %v3556, %v4044
        %v4046 = vand.u32 %v4045, 4294901760
        %v4047 = vsub.f32 %v4045, %v4046
        %v4048 = vand.u32 %v4047, 4294901760
        %4049 = vmatpush.msra.mxu0 %v4048
        %v4050 = vand.u32 %v3554, 4294901760
        %v4051 = vsub.f32 %v3554, %v4050
        %v4052 = vand.u32 %v4051, 4294901760
        %v4053 = vsub.f32 %v4051, %v4052
        %v4054 = vand.u32 %v4053, 4294901760
        %4055 = vmatpush.msra.mxu0 %v4054
        %v4056 = vand.u32 %v3552, 4294901760
        %v4057 = vsub.f32 %v3552, %v4056
        %v4058 = vand.u32 %v4057, 4294901760
        %v4059 = vsub.f32 %v4057, %v4058
        %v4060 = vand.u32 %v4059, 4294901760
        %4061 = vmatpush.msra.mxu0 %v4060
        %v4062 = vand.u32 %v663, 4294901760
        %4063 = vmatmul.f32.gmra.mxu0 %v4062
        %v4064 = vpop.f32.mrf.mxu0
        %v4065 = vadd.f32 %v3964, %v4064
        %4066 = vdwg.mxu0
        %v4067 = vand.u32 %v3582, 4294901760
        %v4068 = vsub.f32 %v3582, %v4067
        %4069 = vmatpush.msra.mxu0 %v4068
        %v4070 = vand.u32 %v3580, 4294901760
        %v4071 = vsub.f32 %v3580, %v4070
        %4072 = vmatpush.msra.mxu0 %v4071
        %v4073 = vand.u32 %v3578, 4294901760
        %v4074 = vsub.f32 %v3578, %v4073
        %4075 = vmatpush.msra.mxu0 %v4074
        %v4076 = vand.u32 %v3576, 4294901760
        %v4077 = vsub.f32 %v3576, %v4076
        %4078 = vmatpush.msra.mxu0 %v4077
        %v4079 = vand.u32 %v3574, 4294901760
        %v4080 = vsub.f32 %v3574, %v4079
        %4081 = vmatpush.msra.mxu0 %v4080
        %v4082 = vand.u32 %v3572, 4294901760
        %v4083 = vsub.f32 %v3572, %v4082
        %4084 = vmatpush.msra.mxu0 %v4083
        %v4085 = vand.u32 %v3570, 4294901760
        %v4086 = vsub.f32 %v3570, %v4085
        %4087 = vmatpush.msra.mxu0 %v4086
        %v4088 = vand.u32 %v3568, 4294901760
        %v4089 = vsub.f32 %v3568, %v4088
        %4090 = vmatpush.msra.mxu0 %v4089
        %v4091 = vand.u32 %v3566, 4294901760
        %v4092 = vsub.f32 %v3566, %v4091
        %4093 = vmatpush.msra.mxu0 %v4092
        %v4094 = vand.u32 %v3564, 4294901760
        %v4095 = vsub.f32 %v3564, %v4094
        %4096 = vmatpush.msra.mxu0 %v4095
        %v4097 = vand.u32 %v3562, 4294901760
        %v4098 = vsub.f32 %v3562, %v4097
        %4099 = vmatpush.msra.mxu0 %v4098
        %v4100 = vand.u32 %v3560, 4294901760
        %v4101 = vsub.f32 %v3560, %v4100
        %4102 = vmatpush.msra.mxu0 %v4101
        %v4103 = vand.u32 %v3558, 4294901760
        %v4104 = vsub.f32 %v3558, %v4103
        %4105 = vmatpush.msra.mxu0 %v4104
        %v4106 = vand.u32 %v3556, 4294901760
        %v4107 = vsub.f32 %v3556, %v4106
        %4108 = vmatpush.msra.mxu0 %v4107
        %v4109 = vand.u32 %v3554, 4294901760
        %v4110 = vsub.f32 %v3554, %v4109
        %4111 = vmatpush.msra.mxu0 %v4110
        %v4112 = vand.u32 %v3552, 4294901760
        %v4113 = vsub.f32 %v3552, %v4112
        %4114 = vmatpush.msra.mxu0 %v4113
        %v4115 = vand.u32 %v663, 4294901760
        %v4116 = vsub.f32 %v663, %v4115
        %4117 = vmatmul.f32.gmra.mxu0 %v4116
        %v4118 = vpop.f32.mrf.mxu0
        %v4119 = vadd.f32 %v4065, %v4118
        %4120 = vdwg.mxu0
        %v4121 = vand.u32 %v3582, 4294901760
        %4122 = vmatpush.msra.mxu0 %v4121
        %v4123 = vand.u32 %v3580, 4294901760
        %4124 = vmatpush.msra.mxu0 %v4123
        %v4125 = vand.u32 %v3578, 4294901760
        %4126 = vmatpush.msra.mxu0 %v4125
        %v4127 = vand.u32 %v3576, 4294901760
        %4128 = vmatpush.msra.mxu0 %v4127
        %v4129 = vand.u32 %v3574, 4294901760
        %4130 = vmatpush.msra.mxu0 %v4129
        %v4131 = vand.u32 %v3572, 4294901760
        %4132 = vmatpush.msra.mxu0 %v4131
        %v4133 = vand.u32 %v3570, 4294901760
        %4134 = vmatpush.msra.mxu0 %v4133
        %v4135 = vand.u32 %v3568, 4294901760
        %4136 = vmatpush.msra.mxu0 %v4135
        %v4137 = vand.u32 %v3566, 4294901760
        %4138 = vmatpush.msra.mxu0 %v4137
        %v4139 = vand.u32 %v3564, 4294901760
        %4140 = vmatpush.msra.mxu0 %v4139
        %v4141 = vand.u32 %v3562, 4294901760
        %4142 = vmatpush.msra.mxu0 %v4141
        %v4143 = vand.u32 %v3560, 4294901760
        %4144 = vmatpush.msra.mxu0 %v4143
        %v4145 = vand.u32 %v3558, 4294901760
        %4146 = vmatpush.msra.mxu0 %v4145
        %v4147 = vand.u32 %v3556, 4294901760
        %4148 = vmatpush.msra.mxu0 %v4147
        %v4149 = vand.u32 %v3554, 4294901760
        %4150 = vmatpush.msra.mxu0 %v4149
        %v4151 = vand.u32 %v3552, 4294901760
        %4152 = vmatpush.msra.mxu0 %v4151
        %v4153 = vand.u32 %v663, 4294901760
        %v4154 = vsub.f32 %v663, %v4153
        %v4155 = vand.u32 %v4154, 4294901760
        %4156 = vmatmul.f32.gmra.mxu0 %v4155
        %v4157 = vpop.f32.mrf.mxu0
        %v4158 = vadd.f32 %v4119, %v4157
        %4159 = vdwg.mxu0
        %v4160 = vand.u32 %v3582, 4294901760
        %v4161 = vsub.f32 %v3582, %v4160
        %v4162 = vand.u32 %v4161, 4294901760
        %4163 = vmatpush.msra.mxu0 %v4162
        %v4164 = vand.u32 %v3580, 4294901760
        %v4165 = vsub.f32 %v3580, %v4164
        %v4166 = vand.u32 %v4165, 4294901760
        %4167 = vmatpush.msra.mxu0 %v4166
        %v4168 = vand.u32 %v3578, 4294901760
        %v4169 = vsub.f32 %v3578, %v4168
        %v4170 = vand.u32 %v4169, 4294901760
        %4171 = vmatpush.msra.mxu0 %v4170
        %v4172 = vand.u32 %v3576, 4294901760
        %v4173 = vsub.f32 %v3576, %v4172
        %v4174 = vand.u32 %v4173, 4294901760
        %4175 = vmatpush.msra.mxu0 %v4174
        %v4176 = vand.u32 %v3574, 4294901760
        %v4177 = vsub.f32 %v3574, %v4176
        %v4178 = vand.u32 %v4177, 4294901760
        %4179 = vmatpush.msra.mxu0 %v4178
        %v4180 = vand.u32 %v3572, 4294901760
        %v4181 = vsub.f32 %v3572, %v4180
        %v4182 = vand.u32 %v4181, 4294901760
        %4183 = vmatpush.msra.mxu0 %v4182
        %v4184 = vand.u32 %v3570, 4294901760
        %v4185 = vsub.f32 %v3570, %v4184
        %v4186 = vand.u32 %v4185, 4294901760
        %4187 = vmatpush.msra.mxu0 %v4186
        %v4188 = vand.u32 %v3568, 4294901760
        %v4189 = vsub.f32 %v3568, %v4188
        %v4190 = vand.u32 %v4189, 4294901760
        %4191 = vmatpush.msra.mxu0 %v4190
        %v4192 = vand.u32 %v3566, 4294901760
        %v4193 = vsub.f32 %v3566, %v4192
        %v4194 = vand.u32 %v4193, 4294901760
        %4195 = vmatpush.msra.mxu0 %v4194
        %v4196 = vand.u32 %v3564, 4294901760
        %v4197 = vsub.f32 %v3564, %v4196
        %v4198 = vand.u32 %v4197, 4294901760
        %4199 = vmatpush.msra.mxu0 %v4198
        %v4200 = vand.u32 %v3562, 4294901760
        %v4201 = vsub.f32 %v3562, %v4200
        %v4202 = vand.u32 %v4201, 4294901760
        %4203 = vmatpush.msra.mxu0 %v4202
        %v4204 = vand.u32 %v3560, 4294901760
        %v4205 = vsub.f32 %v3560, %v4204
        %v4206 = vand.u32 %v4205, 4294901760
        %4207 = vmatpush.msra.mxu0 %v4206
        %v4208 = vand.u32 %v3558, 4294901760
        %v4209 = vsub.f32 %v3558, %v4208
        %v4210 = vand.u32 %v4209, 4294901760
        %4211 = vmatpush.msra.mxu0 %v4210
        %v4212 = vand.u32 %v3556, 4294901760
        %v4213 = vsub.f32 %v3556, %v4212
        %v4214 = vand.u32 %v4213, 4294901760
        %4215 = vmatpush.msra.mxu0 %v4214
        %v4216 = vand.u32 %v3554, 4294901760
        %v4217 = vsub.f32 %v3554, %v4216
        %v4218 = vand.u32 %v4217, 4294901760
        %4219 = vmatpush.msra.mxu0 %v4218
        %v4220 = vand.u32 %v3552, 4294901760
        %v4221 = vsub.f32 %v3552, %v4220
        %v4222 = vand.u32 %v4221, 4294901760
        %4223 = vmatpush.msra.mxu0 %v4222
        %v4224 = vand.u32 %v663, 4294901760
        %4225 = vmatmul.f32.gmra.mxu0 %v4224
        %v4226 = vpop.f32.mrf.mxu0
        %v4227 = vadd.f32 %v4158, %v4226
        %4228 = vdwg.mxu0
        %v4229 = vand.u32 %v3582, 4294901760
        %4230 = vmatpush.msra.mxu0 %v4229
        %v4231 = vand.u32 %v3580, 4294901760
        %4232 = vmatpush.msra.mxu0 %v4231
        %v4233 = vand.u32 %v3578, 4294901760
        %4234 = vmatpush.msra.mxu0 %v4233
        %v4235 = vand.u32 %v3576, 4294901760
        %4236 = vmatpush.msra.mxu0 %v4235
        %v4237 = vand.u32 %v3574, 4294901760
        %4238 = vmatpush.msra.mxu0 %v4237
        %v4239 = vand.u32 %v3572, 4294901760
        %4240 = vmatpush.msra.mxu0 %v4239
        %v4241 = vand.u32 %v3570, 4294901760
        %4242 = vmatpush.msra.mxu0 %v4241
        %v4243 = vand.u32 %v3568, 4294901760
        %4244 = vmatpush.msra.mxu0 %v4243
        %v4245 = vand.u32 %v3566, 4294901760
        %4246 = vmatpush.msra.mxu0 %v4245
        %v4247 = vand.u32 %v3564, 4294901760
        %4248 = vmatpush.msra.mxu0 %v4247
        %v4249 = vand.u32 %v3562, 4294901760
        %4250 = vmatpush.msra.mxu0 %v4249
        %v4251 = vand.u32 %v3560, 4294901760
        %4252 = vmatpush.msra.mxu0 %v4251
        %v4253 = vand.u32 %v3558, 4294901760
        %4254 = vmatpush.msra.mxu0 %v4253
        %v4255 = vand.u32 %v3556, 4294901760
        %4256 = vmatpush.msra.mxu0 %v4255
        %v4257 = vand.u32 %v3554, 4294901760
        %4258 = vmatpush.msra.mxu0 %v4257
        %v4259 = vand.u32 %v3552, 4294901760
        %4260 = vmatpush.msra.mxu0 %v4259
        %v4261 = vand.u32 %v663, 4294901760
        %4262 = vmatmul.f32.gmra.mxu0 %v4261
        %v4263 = vpop.f32.mrf.mxu0
        %v4264 = vadd.f32 %v4227, %v4263
        %4265 = vdwg.mxu0
        %v4266 = vand.u32 %v3551, 4294901760
        %4267 = vmatpush.msra.mxu0 %v4266
        %v4268 = vand.u32 %v3549, 4294901760
        %4269 = vmatpush.msra.mxu0 %v4268
        %v4270 = vand.u32 %v3547, 4294901760
        %4271 = vmatpush.msra.mxu0 %v4270
        %v4272 = vand.u32 %v3545, 4294901760
        %4273 = vmatpush.msra.mxu0 %v4272
        %v4274 = vand.u32 %v3543, 4294901760
        %4275 = vmatpush.msra.mxu0 %v4274
        %v4276 = vand.u32 %v3541, 4294901760
        %4277 = vmatpush.msra.mxu0 %v4276
        %v4278 = vand.u32 %v3539, 4294901760
        %4279 = vmatpush.msra.mxu0 %v4278
        %v4280 = vand.u32 %v3537, 4294901760
        %4281 = vmatpush.msra.mxu0 %v4280
        %v4282 = vand.u32 %v3535, 4294901760
        %4283 = vmatpush.msra.mxu0 %v4282
        %v4284 = vand.u32 %v3533, 4294901760
        %4285 = vmatpush.msra.mxu0 %v4284
        %v4286 = vand.u32 %v3531, 4294901760
        %4287 = vmatpush.msra.mxu0 %v4286
        %v4288 = vand.u32 %v3529, 4294901760
        %4289 = vmatpush.msra.mxu0 %v4288
        %v4290 = vand.u32 %v3527, 4294901760
        %4291 = vmatpush.msra.mxu0 %v4290
        %v4292 = vand.u32 %v3525, 4294901760
        %4293 = vmatpush.msra.mxu0 %v4292
        %v4294 = vand.u32 %v3523, 4294901760
        %4295 = vmatpush.msra.mxu0 %v4294
        %v4296 = vand.u32 %v3521, 4294901760
        %4297 = vmatpush.msra.mxu0 %v4296
        %v4298 = vand.u32 %v662, 4294901760
        %v4299 = vsub.f32 %v662, %v4298
        %v4300 = vand.u32 %v4299, 4294901760
        %v4301 = vsub.f32 %v4299, %v4300
        %v4302 = vand.u32 %v4301, 4294901760
        %4303 = vmatmul.f32.gmra.mxu0 %v4302
        %v4304 = vpop.f32.mrf.mxu0
        %v4305 = vadd.f32 0.0, %v4304
        %4306 = vdwg.mxu0
        %v4307 = vand.u32 %v3551, 4294901760
        %v4308 = vsub.f32 %v3551, %v4307
        %v4309 = vand.u32 %v4308, 4294901760
        %v4310 = vsub.f32 %v4308, %v4309
        %v4311 = vand.u32 %v4310, 4294901760
        %4312 = vmatpush.msra.mxu0 %v4311
        %v4313 = vand.u32 %v3549, 4294901760
        %v4314 = vsub.f32 %v3549, %v4313
        %v4315 = vand.u32 %v4314, 4294901760
        %v4316 = vsub.f32 %v4314, %v4315
        %v4317 = vand.u32 %v4316, 4294901760
        %4318 = vmatpush.msra.mxu0 %v4317
        %v4319 = vand.u32 %v3547, 4294901760
        %v4320 = vsub.f32 %v3547, %v4319
        %v4321 = vand.u32 %v4320, 4294901760
        %v4322 = vsub.f32 %v4320, %v4321
        %v4323 = vand.u32 %v4322, 4294901760
        %4324 = vmatpush.msra.mxu0 %v4323
        %v4325 = vand.u32 %v3545, 4294901760
        %v4326 = vsub.f32 %v3545, %v4325
        %v4327 = vand.u32 %v4326, 4294901760
        %v4328 = vsub.f32 %v4326, %v4327
        %v4329 = vand.u32 %v4328, 4294901760
        %4330 = vmatpush.msra.mxu0 %v4329
        %v4331 = vand.u32 %v3543, 4294901760
        %v4332 = vsub.f32 %v3543, %v4331
        %v4333 = vand.u32 %v4332, 4294901760
        %v4334 = vsub.f32 %v4332, %v4333
        %v4335 = vand.u32 %v4334, 4294901760
        %4336 = vmatpush.msra.mxu0 %v4335
        %v4337 = vand.u32 %v3541, 4294901760
        %v4338 = vsub.f32 %v3541, %v4337
        %v4339 = vand.u32 %v4338, 4294901760
        %v4340 = vsub.f32 %v4338, %v4339
        %v4341 = vand.u32 %v4340, 4294901760
        %4342 = vmatpush.msra.mxu0 %v4341
        %v4343 = vand.u32 %v3539, 4294901760
        %v4344 = vsub.f32 %v3539, %v4343
        %v4345 = vand.u32 %v4344, 4294901760
        %v4346 = vsub.f32 %v4344, %v4345
        %v4347 = vand.u32 %v4346, 4294901760
        %4348 = vmatpush.msra.mxu0 %v4347
        %v4349 = vand.u32 %v3537, 4294901760
        %v4350 = vsub.f32 %v3537, %v4349
        %v4351 = vand.u32 %v4350, 4294901760
        %v4352 = vsub.f32 %v4350, %v4351
        %v4353 = vand.u32 %v4352, 4294901760
        %4354 = vmatpush.msra.mxu0 %v4353
        %v4355 = vand.u32 %v3535, 4294901760
        %v4356 = vsub.f32 %v3535, %v4355
        %v4357 = vand.u32 %v4356, 4294901760
        %v4358 = vsub.f32 %v4356, %v4357
        %v4359 = vand.u32 %v4358, 4294901760
        %4360 = vmatpush.msra.mxu0 %v4359
        %v4361 = vand.u32 %v3533, 4294901760
        %v4362 = vsub.f32 %v3533, %v4361
        %v4363 = vand.u32 %v4362, 4294901760
        %v4364 = vsub.f32 %v4362, %v4363
        %v4365 = vand.u32 %v4364, 4294901760
        %4366 = vmatpush.msra.mxu0 %v4365
        %v4367 = vand.u32 %v3531, 4294901760
        %v4368 = vsub.f32 %v3531, %v4367
        %v4369 = vand.u32 %v4368, 4294901760
        %v4370 = vsub.f32 %v4368, %v4369
        %v4371 = vand.u32 %v4370, 4294901760
        %4372 = vmatpush.msra.mxu0 %v4371
        %v4373 = vand.u32 %v3529, 4294901760
        %v4374 = vsub.f32 %v3529, %v4373
        %v4375 = vand.u32 %v4374, 4294901760
        %v4376 = vsub.f32 %v4374, %v4375
        %v4377 = vand.u32 %v4376, 4294901760
        %4378 = vmatpush.msra.mxu0 %v4377
        %v4379 = vand.u32 %v3527, 4294901760
        %v4380 = vsub.f32 %v3527, %v4379
        %v4381 = vand.u32 %v4380, 4294901760
        %v4382 = vsub.f32 %v4380, %v4381
        %v4383 = vand.u32 %v4382, 4294901760
        %4384 = vmatpush.msra.mxu0 %v4383
        %v4385 = vand.u32 %v3525, 4294901760
        %v4386 = vsub.f32 %v3525, %v4385
        %v4387 = vand.u32 %v4386, 4294901760
        %v4388 = vsub.f32 %v4386, %v4387
        %v4389 = vand.u32 %v4388, 4294901760
        %4390 = vmatpush.msra.mxu0 %v4389
        %v4391 = vand.u32 %v3523, 4294901760
        %v4392 = vsub.f32 %v3523, %v4391
        %v4393 = vand.u32 %v4392, 4294901760
        %v4394 = vsub.f32 %v4392, %v4393
        %v4395 = vand.u32 %v4394, 4294901760
        %4396 = vmatpush.msra.mxu0 %v4395
        %v4397 = vand.u32 %v3521, 4294901760
        %v4398 = vsub.f32 %v3521, %v4397
        %v4399 = vand.u32 %v4398, 4294901760
        %v4400 = vsub.f32 %v4398, %v4399
        %v4401 = vand.u32 %v4400, 4294901760
        %4402 = vmatpush.msra.mxu0 %v4401
        %v4403 = vand.u32 %v662, 4294901760
        %4404 = vmatmul.f32.gmra.mxu0 %v4403
        %v4405 = vpop.f32.mrf.mxu0
        %v4406 = vadd.f32 %v4305, %v4405
        %4407 = vdwg.mxu0
        %v4408 = vand.u32 %v3551, 4294901760
        %v4409 = vsub.f32 %v3551, %v4408
        %4410 = vmatpush.msra.mxu0 %v4409
        %v4411 = vand.u32 %v3549, 4294901760
        %v4412 = vsub.f32 %v3549, %v4411
        %4413 = vmatpush.msra.mxu0 %v4412
        %v4414 = vand.u32 %v3547, 4294901760
        %v4415 = vsub.f32 %v3547, %v4414
        %4416 = vmatpush.msra.mxu0 %v4415
        %v4417 = vand.u32 %v3545, 4294901760
        %v4418 = vsub.f32 %v3545, %v4417
        %4419 = vmatpush.msra.mxu0 %v4418
        %v4420 = vand.u32 %v3543, 4294901760
        %v4421 = vsub.f32 %v3543, %v4420
        %4422 = vmatpush.msra.mxu0 %v4421
        %v4423 = vand.u32 %v3541, 4294901760
        %v4424 = vsub.f32 %v3541, %v4423
        %4425 = vmatpush.msra.mxu0 %v4424
        %v4426 = vand.u32 %v3539, 4294901760
        %v4427 = vsub.f32 %v3539, %v4426
        %4428 = vmatpush.msra.mxu0 %v4427
        %v4429 = vand.u32 %v3537, 4294901760
        %v4430 = vsub.f32 %v3537, %v4429
        %4431 = vmatpush.msra.mxu0 %v4430
        %v4432 = vand.u32 %v3535, 4294901760
        %v4433 = vsub.f32 %v3535, %v4432
        %4434 = vmatpush.msra.mxu0 %v4433
        %v4435 = vand.u32 %v3533, 4294901760
        %v4436 = vsub.f32 %v3533, %v4435
        %4437 = vmatpush.msra.mxu0 %v4436
        %v4438 = vand.u32 %v3531, 4294901760
        %v4439 = vsub.f32 %v3531, %v4438
        %4440 = vmatpush.msra.mxu0 %v4439
        %v4441 = vand.u32 %v3529, 4294901760
        %v4442 = vsub.f32 %v3529, %v4441
        %4443 = vmatpush.msra.mxu0 %v4442
        %v4444 = vand.u32 %v3527, 4294901760
        %v4445 = vsub.f32 %v3527, %v4444
        %4446 = vmatpush.msra.mxu0 %v4445
        %v4447 = vand.u32 %v3525, 4294901760
        %v4448 = vsub.f32 %v3525, %v4447
        %4449 = vmatpush.msra.mxu0 %v4448
        %v4450 = vand.u32 %v3523, 4294901760
        %v4451 = vsub.f32 %v3523, %v4450
        %4452 = vmatpush.msra.mxu0 %v4451
        %v4453 = vand.u32 %v3521, 4294901760
        %v4454 = vsub.f32 %v3521, %v4453
        %4455 = vmatpush.msra.mxu0 %v4454
        %v4456 = vand.u32 %v662, 4294901760
        %v4457 = vsub.f32 %v662, %v4456
        %4458 = vmatmul.f32.gmra.mxu0 %v4457
        %v4459 = vpop.f32.mrf.mxu0
        %v4460 = vadd.f32 %v4406, %v4459
        %4461 = vdwg.mxu0
        %v4462 = vand.u32 %v3551, 4294901760
        %4463 = vmatpush.msra.mxu0 %v4462
        %v4464 = vand.u32 %v3549, 4294901760
        %4465 = vmatpush.msra.mxu0 %v4464
        %v4466 = vand.u32 %v3547, 4294901760
        %4467 = vmatpush.msra.mxu0 %v4466
        %v4468 = vand.u32 %v3545, 4294901760
        %4469 = vmatpush.msra.mxu0 %v4468
        %v4470 = vand.u32 %v3543, 4294901760
        %4471 = vmatpush.msra.mxu0 %v4470
        %v4472 = vand.u32 %v3541, 4294901760
        %4473 = vmatpush.msra.mxu0 %v4472
        %v4474 = vand.u32 %v3539, 4294901760
        %4475 = vmatpush.msra.mxu0 %v4474
        %v4476 = vand.u32 %v3537, 4294901760
        %4477 = vmatpush.msra.mxu0 %v4476
        %v4478 = vand.u32 %v3535, 4294901760
        %4479 = vmatpush.msra.mxu0 %v4478
        %v4480 = vand.u32 %v3533, 4294901760
        %4481 = vmatpush.msra.mxu0 %v4480
        %v4482 = vand.u32 %v3531, 4294901760
        %4483 = vmatpush.msra.mxu0 %v4482
        %v4484 = vand.u32 %v3529, 4294901760
        %4485 = vmatpush.msra.mxu0 %v4484
        %v4486 = vand.u32 %v3527, 4294901760
        %4487 = vmatpush.msra.mxu0 %v4486
        %v4488 = vand.u32 %v3525, 4294901760
        %4489 = vmatpush.msra.mxu0 %v4488
        %v4490 = vand.u32 %v3523, 4294901760
        %4491 = vmatpush.msra.mxu0 %v4490
        %v4492 = vand.u32 %v3521, 4294901760
        %4493 = vmatpush.msra.mxu0 %v4492
        %v4494 = vand.u32 %v662, 4294901760
        %v4495 = vsub.f32 %v662, %v4494
        %v4496 = vand.u32 %v4495, 4294901760
        %4497 = vmatmul.f32.gmra.mxu0 %v4496
        %v4498 = vpop.f32.mrf.mxu0
        %v4499 = vadd.f32 %v4460, %v4498
        %4500 = vdwg.mxu0
        %v4501 = vand.u32 %v3551, 4294901760
        %v4502 = vsub.f32 %v3551, %v4501
        %v4503 = vand.u32 %v4502, 4294901760
        %4504 = vmatpush.msra.mxu0 %v4503
        %v4505 = vand.u32 %v3549, 4294901760
        %v4506 = vsub.f32 %v3549, %v4505
        %v4507 = vand.u32 %v4506, 4294901760
        %4508 = vmatpush.msra.mxu0 %v4507
        %v4509 = vand.u32 %v3547, 4294901760
        %v4510 = vsub.f32 %v3547, %v4509
        %v4511 = vand.u32 %v4510, 4294901760
        %4512 = vmatpush.msra.mxu0 %v4511
        %v4513 = vand.u32 %v3545, 4294901760
        %v4514 = vsub.f32 %v3545, %v4513
        %v4515 = vand.u32 %v4514, 4294901760
        %4516 = vmatpush.msra.mxu0 %v4515
        %v4517 = vand.u32 %v3543, 4294901760
        %v4518 = vsub.f32 %v3543, %v4517
        %v4519 = vand.u32 %v4518, 4294901760
        %4520 = vmatpush.msra.mxu0 %v4519
        %v4521 = vand.u32 %v3541, 4294901760
        %v4522 = vsub.f32 %v3541, %v4521
        %v4523 = vand.u32 %v4522, 4294901760
        %4524 = vmatpush.msra.mxu0 %v4523
        %v4525 = vand.u32 %v3539, 4294901760
        %v4526 = vsub.f32 %v3539, %v4525
        %v4527 = vand.u32 %v4526, 4294901760
        %4528 = vmatpush.msra.mxu0 %v4527
        %v4529 = vand.u32 %v3537, 4294901760
        %v4530 = vsub.f32 %v3537, %v4529
        %v4531 = vand.u32 %v4530, 4294901760
        %4532 = vmatpush.msra.mxu0 %v4531
        %v4533 = vand.u32 %v3535, 4294901760
        %v4534 = vsub.f32 %v3535, %v4533
        %v4535 = vand.u32 %v4534, 4294901760
        %4536 = vmatpush.msra.mxu0 %v4535
        %v4537 = vand.u32 %v3533, 4294901760
        %v4538 = vsub.f32 %v3533, %v4537
        %v4539 = vand.u32 %v4538, 4294901760
        %4540 = vmatpush.msra.mxu0 %v4539
        %v4541 = vand.u32 %v3531, 4294901760
        %v4542 = vsub.f32 %v3531, %v4541
        %v4543 = vand.u32 %v4542, 4294901760
        %4544 = vmatpush.msra.mxu0 %v4543
        %v4545 = vand.u32 %v3529, 4294901760
        %v4546 = vsub.f32 %v3529, %v4545
        %v4547 = vand.u32 %v4546, 4294901760
        %4548 = vmatpush.msra.mxu0 %v4547
        %v4549 = vand.u32 %v3527, 4294901760
        %v4550 = vsub.f32 %v3527, %v4549
        %v4551 = vand.u32 %v4550, 4294901760
        %4552 = vmatpush.msra.mxu0 %v4551
        %v4553 = vand.u32 %v3525, 4294901760
        %v4554 = vsub.f32 %v3525, %v4553
        %v4555 = vand.u32 %v4554, 4294901760
        %4556 = vmatpush.msra.mxu0 %v4555
        %v4557 = vand.u32 %v3523, 4294901760
        %v4558 = vsub.f32 %v3523, %v4557
        %v4559 = vand.u32 %v4558, 4294901760
        %4560 = vmatpush.msra.mxu0 %v4559
        %v4561 = vand.u32 %v3521, 4294901760
        %v4562 = vsub.f32 %v3521, %v4561
        %v4563 = vand.u32 %v4562, 4294901760
        %4564 = vmatpush.msra.mxu0 %v4563
        %v4565 = vand.u32 %v662, 4294901760
        %4566 = vmatmul.f32.gmra.mxu0 %v4565
        %v4567 = vpop.f32.mrf.mxu0
        %v4568 = vadd.f32 %v4499, %v4567
        %4569 = vdwg.mxu0
        %v4570 = vand.u32 %v3551, 4294901760
        %4571 = vmatpush.msra.mxu0 %v4570
        %v4572 = vand.u32 %v3549, 4294901760
        %4573 = vmatpush.msra.mxu0 %v4572
        %v4574 = vand.u32 %v3547, 4294901760
        %4575 = vmatpush.msra.mxu0 %v4574
        %v4576 = vand.u32 %v3545, 4294901760
        %4577 = vmatpush.msra.mxu0 %v4576
        %v4578 = vand.u32 %v3543, 4294901760
        %4579 = vmatpush.msra.mxu0 %v4578
        %v4580 = vand.u32 %v3541, 4294901760
        %4581 = vmatpush.msra.mxu0 %v4580
        %v4582 = vand.u32 %v3539, 4294901760
        %4583 = vmatpush.msra.mxu0 %v4582
        %v4584 = vand.u32 %v3537, 4294901760
        %4585 = vmatpush.msra.mxu0 %v4584
        %v4586 = vand.u32 %v3535, 4294901760
        %4587 = vmatpush.msra.mxu0 %v4586
        %v4588 = vand.u32 %v3533, 4294901760
        %4589 = vmatpush.msra.mxu0 %v4588
        %v4590 = vand.u32 %v3531, 4294901760
        %4591 = vmatpush.msra.mxu0 %v4590
        %v4592 = vand.u32 %v3529, 4294901760
        %4593 = vmatpush.msra.mxu0 %v4592
        %v4594 = vand.u32 %v3527, 4294901760
        %4595 = vmatpush.msra.mxu0 %v4594
        %v4596 = vand.u32 %v3525, 4294901760
        %4597 = vmatpush.msra.mxu0 %v4596
        %v4598 = vand.u32 %v3523, 4294901760
        %4599 = vmatpush.msra.mxu0 %v4598
        %v4600 = vand.u32 %v3521, 4294901760
        %4601 = vmatpush.msra.mxu0 %v4600
        %v4602 = vand.u32 %v662, 4294901760
        %4603 = vmatmul.f32.gmra.mxu0 %v4602
        %v4604 = vpop.f32.mrf.mxu0
        %v4605 = vadd.f32 %v4568, %v4604
        %4606 = vdwg.mxu0
        %v4607 = vand.u32 %v3583, 4294901760
        %4608 = vmatpush.msra.mxu0 %v4607
        %v4609 = vand.u32 %v3581, 4294901760
        %4610 = vmatpush.msra.mxu0 %v4609
        %v4611 = vand.u32 %v3579, 4294901760
        %4612 = vmatpush.msra.mxu0 %v4611
        %v4613 = vand.u32 %v3577, 4294901760
        %4614 = vmatpush.msra.mxu0 %v4613
        %v4615 = vand.u32 %v3575, 4294901760
        %4616 = vmatpush.msra.mxu0 %v4615
        %v4617 = vand.u32 %v3573, 4294901760
        %4618 = vmatpush.msra.mxu0 %v4617
        %v4619 = vand.u32 %v3571, 4294901760
        %4620 = vmatpush.msra.mxu0 %v4619
        %v4621 = vand.u32 %v3569, 4294901760
        %4622 = vmatpush.msra.mxu0 %v4621
        %v4623 = vand.u32 %v3567, 4294901760
        %4624 = vmatpush.msra.mxu0 %v4623
        %v4625 = vand.u32 %v3565, 4294901760
        %4626 = vmatpush.msra.mxu0 %v4625
        %v4627 = vand.u32 %v3563, 4294901760
        %4628 = vmatpush.msra.mxu0 %v4627
        %v4629 = vand.u32 %v3561, 4294901760
        %4630 = vmatpush.msra.mxu0 %v4629
        %v4631 = vand.u32 %v3559, 4294901760
        %4632 = vmatpush.msra.mxu0 %v4631
        %v4633 = vand.u32 %v3557, 4294901760
        %4634 = vmatpush.msra.mxu0 %v4633
        %v4635 = vand.u32 %v3555, 4294901760
        %4636 = vmatpush.msra.mxu0 %v4635
        %v4637 = vand.u32 %v3553, 4294901760
        %4638 = vmatpush.msra.mxu0 %v4637
        %v4639 = vand.u32 %v663, 4294901760
        %v4640 = vsub.f32 %v663, %v4639
        %v4641 = vand.u32 %v4640, 4294901760
        %v4642 = vsub.f32 %v4640, %v4641
        %v4643 = vand.u32 %v4642, 4294901760
        %4644 = vmatmul.f32.gmra.mxu0 %v4643
        %v4645 = vpop.f32.mrf.mxu0
        %v4646 = vadd.f32 %v4605, %v4645
        %4647 = vdwg.mxu0
        %v4648 = vand.u32 %v3583, 4294901760
        %v4649 = vsub.f32 %v3583, %v4648
        %v4650 = vand.u32 %v4649, 4294901760
        %v4651 = vsub.f32 %v4649, %v4650
        %v4652 = vand.u32 %v4651, 4294901760
        %4653 = vmatpush.msra.mxu0 %v4652
        %v4654 = vand.u32 %v3581, 4294901760
        %v4655 = vsub.f32 %v3581, %v4654
        %v4656 = vand.u32 %v4655, 4294901760
        %v4657 = vsub.f32 %v4655, %v4656
        %v4658 = vand.u32 %v4657, 4294901760
        %4659 = vmatpush.msra.mxu0 %v4658
        %v4660 = vand.u32 %v3579, 4294901760
        %v4661 = vsub.f32 %v3579, %v4660
        %v4662 = vand.u32 %v4661, 4294901760
        %v4663 = vsub.f32 %v4661, %v4662
        %v4664 = vand.u32 %v4663, 4294901760
        %4665 = vmatpush.msra.mxu0 %v4664
        %v4666 = vand.u32 %v3577, 4294901760
        %v4667 = vsub.f32 %v3577, %v4666
        %v4668 = vand.u32 %v4667, 4294901760
        %v4669 = vsub.f32 %v4667, %v4668
        %v4670 = vand.u32 %v4669, 4294901760
        %4671 = vmatpush.msra.mxu0 %v4670
        %v4672 = vand.u32 %v3575, 4294901760
        %v4673 = vsub.f32 %v3575, %v4672
        %v4674 = vand.u32 %v4673, 4294901760
        %v4675 = vsub.f32 %v4673, %v4674
        %v4676 = vand.u32 %v4675, 4294901760
        %4677 = vmatpush.msra.mxu0 %v4676
        %v4678 = vand.u32 %v3573, 4294901760
        %v4679 = vsub.f32 %v3573, %v4678
        %v4680 = vand.u32 %v4679, 4294901760
        %v4681 = vsub.f32 %v4679, %v4680
        %v4682 = vand.u32 %v4681, 4294901760
        %4683 = vmatpush.msra.mxu0 %v4682
        %v4684 = vand.u32 %v3571, 4294901760
        %v4685 = vsub.f32 %v3571, %v4684
        %v4686 = vand.u32 %v4685, 4294901760
        %v4687 = vsub.f32 %v4685, %v4686
        %v4688 = vand.u32 %v4687, 4294901760
        %4689 = vmatpush.msra.mxu0 %v4688
        %v4690 = vand.u32 %v3569, 4294901760
        %v4691 = vsub.f32 %v3569, %v4690
        %v4692 = vand.u32 %v4691, 4294901760
        %v4693 = vsub.f32 %v4691, %v4692
        %v4694 = vand.u32 %v4693, 4294901760
        %4695 = vmatpush.msra.mxu0 %v4694
        %v4696 = vand.u32 %v3567, 4294901760
        %v4697 = vsub.f32 %v3567, %v4696
        %v4698 = vand.u32 %v4697, 4294901760
        %v4699 = vsub.f32 %v4697, %v4698
        %v4700 = vand.u32 %v4699, 4294901760
        %4701 = vmatpush.msra.mxu0 %v4700
        %v4702 = vand.u32 %v3565, 4294901760
        %v4703 = vsub.f32 %v3565, %v4702
        %v4704 = vand.u32 %v4703, 4294901760
        %v4705 = vsub.f32 %v4703, %v4704
        %v4706 = vand.u32 %v4705, 4294901760
        %4707 = vmatpush.msra.mxu0 %v4706
        %v4708 = vand.u32 %v3563, 4294901760
        %v4709 = vsub.f32 %v3563, %v4708
        %v4710 = vand.u32 %v4709, 4294901760
        %v4711 = vsub.f32 %v4709, %v4710
        %v4712 = vand.u32 %v4711, 4294901760
        %4713 = vmatpush.msra.mxu0 %v4712
        %v4714 = vand.u32 %v3561, 4294901760
        %v4715 = vsub.f32 %v3561, %v4714
        %v4716 = vand.u32 %v4715, 4294901760
        %v4717 = vsub.f32 %v4715, %v4716
        %v4718 = vand.u32 %v4717, 4294901760
        %4719 = vmatpush.msra.mxu0 %v4718
        %v4720 = vand.u32 %v3559, 4294901760
        %v4721 = vsub.f32 %v3559, %v4720
        %v4722 = vand.u32 %v4721, 4294901760
        %v4723 = vsub.f32 %v4721, %v4722
        %v4724 = vand.u32 %v4723, 4294901760
        %4725 = vmatpush.msra.mxu0 %v4724
        %v4726 = vand.u32 %v3557, 4294901760
        %v4727 = vsub.f32 %v3557, %v4726
        %v4728 = vand.u32 %v4727, 4294901760
        %v4729 = vsub.f32 %v4727, %v4728
        %v4730 = vand.u32 %v4729, 4294901760
        %4731 = vmatpush.msra.mxu0 %v4730
        %v4732 = vand.u32 %v3555, 4294901760
        %v4733 = vsub.f32 %v3555, %v4732
        %v4734 = vand.u32 %v4733, 4294901760
        %v4735 = vsub.f32 %v4733, %v4734
        %v4736 = vand.u32 %v4735, 4294901760
        %4737 = vmatpush.msra.mxu0 %v4736
        %v4738 = vand.u32 %v3553, 4294901760
        %v4739 = vsub.f32 %v3553, %v4738
        %v4740 = vand.u32 %v4739, 4294901760
        %v4741 = vsub.f32 %v4739, %v4740
        %v4742 = vand.u32 %v4741, 4294901760
        %4743 = vmatpush.msra.mxu0 %v4742
        %v4744 = vand.u32 %v663, 4294901760
        %4745 = vmatmul.f32.gmra.mxu0 %v4744
        %v4746 = vpop.f32.mrf.mxu0
        %v4747 = vadd.f32 %v4646, %v4746
        %4748 = vdwg.mxu0
        %v4749 = vand.u32 %v3583, 4294901760
        %v4750 = vsub.f32 %v3583, %v4749
        %4751 = vmatpush.msra.mxu0 %v4750
        %v4752 = vand.u32 %v3581, 4294901760
        %v4753 = vsub.f32 %v3581, %v4752
        %4754 = vmatpush.msra.mxu0 %v4753
        %v4755 = vand.u32 %v3579, 4294901760
        %v4756 = vsub.f32 %v3579, %v4755
        %4757 = vmatpush.msra.mxu0 %v4756
        %v4758 = vand.u32 %v3577, 4294901760
        %v4759 = vsub.f32 %v3577, %v4758
        %4760 = vmatpush.msra.mxu0 %v4759
        %v4761 = vand.u32 %v3575, 4294901760
        %v4762 = vsub.f32 %v3575, %v4761
        %4763 = vmatpush.msra.mxu0 %v4762
        %v4764 = vand.u32 %v3573, 4294901760
        %v4765 = vsub.f32 %v3573, %v4764
        %4766 = vmatpush.msra.mxu0 %v4765
        %v4767 = vand.u32 %v3571, 4294901760
        %v4768 = vsub.f32 %v3571, %v4767
        %4769 = vmatpush.msra.mxu0 %v4768
        %v4770 = vand.u32 %v3569, 4294901760
        %v4771 = vsub.f32 %v3569, %v4770
        %4772 = vmatpush.msra.mxu0 %v4771
        %v4773 = vand.u32 %v3567, 4294901760
        %v4774 = vsub.f32 %v3567, %v4773
        %4775 = vmatpush.msra.mxu0 %v4774
        %v4776 = vand.u32 %v3565, 4294901760
        %v4777 = vsub.f32 %v3565, %v4776
        %4778 = vmatpush.msra.mxu0 %v4777
        %v4779 = vand.u32 %v3563, 4294901760
        %v4780 = vsub.f32 %v3563, %v4779
        %4781 = vmatpush.msra.mxu0 %v4780
        %v4782 = vand.u32 %v3561, 4294901760
        %v4783 = vsub.f32 %v3561, %v4782
        %4784 = vmatpush.msra.mxu0 %v4783
        %v4785 = vand.u32 %v3559, 4294901760
        %v4786 = vsub.f32 %v3559, %v4785
        %4787 = vmatpush.msra.mxu0 %v4786
        %v4788 = vand.u32 %v3557, 4294901760
        %v4789 = vsub.f32 %v3557, %v4788
        %4790 = vmatpush.msra.mxu0 %v4789
        %v4791 = vand.u32 %v3555, 4294901760
        %v4792 = vsub.f32 %v3555, %v4791
        %4793 = vmatpush.msra.mxu0 %v4792
        %v4794 = vand.u32 %v3553, 4294901760
        %v4795 = vsub.f32 %v3553, %v4794
        %4796 = vmatpush.msra.mxu0 %v4795
        %v4797 = vand.u32 %v663, 4294901760
        %v4798 = vsub.f32 %v663, %v4797
        %4799 = vmatmul.f32.gmra.mxu0 %v4798
        %v4800 = vpop.f32.mrf.mxu0
        %v4801 = vadd.f32 %v4747, %v4800
        %4802 = vdwg.mxu0
        %v4803 = vand.u32 %v3583, 4294901760
        %4804 = vmatpush.msra.mxu0 %v4803
        %v4805 = vand.u32 %v3581, 4294901760
        %4806 = vmatpush.msra.mxu0 %v4805
        %v4807 = vand.u32 %v3579, 4294901760
        %4808 = vmatpush.msra.mxu0 %v4807
        %v4809 = vand.u32 %v3577, 4294901760
        %4810 = vmatpush.msra.mxu0 %v4809
        %v4811 = vand.u32 %v3575, 4294901760
        %4812 = vmatpush.msra.mxu0 %v4811
        %v4813 = vand.u32 %v3573, 4294901760
        %4814 = vmatpush.msra.mxu0 %v4813
        %v4815 = vand.u32 %v3571, 4294901760
        %4816 = vmatpush.msra.mxu0 %v4815
        %v4817 = vand.u32 %v3569, 4294901760
        %4818 = vmatpush.msra.mxu0 %v4817
        %v4819 = vand.u32 %v3567, 4294901760
        %4820 = vmatpush.msra.mxu0 %v4819
        %v4821 = vand.u32 %v3565, 4294901760
        %4822 = vmatpush.msra.mxu0 %v4821
        %v4823 = vand.u32 %v3563, 4294901760
        %4824 = vmatpush.msra.mxu0 %v4823
        %v4825 = vand.u32 %v3561, 4294901760
        %4826 = vmatpush.msra.mxu0 %v4825
        %v4827 = vand.u32 %v3559, 4294901760
        %4828 = vmatpush.msra.mxu0 %v4827
        %v4829 = vand.u32 %v3557, 4294901760
        %4830 = vmatpush.msra.mxu0 %v4829
        %v4831 = vand.u32 %v3555, 4294901760
        %4832 = vmatpush.msra.mxu0 %v4831
        %v4833 = vand.u32 %v3553, 4294901760
        %4834 = vmatpush.msra.mxu0 %v4833
        %v4835 = vand.u32 %v663, 4294901760
        %v4836 = vsub.f32 %v663, %v4835
        %v4837 = vand.u32 %v4836, 4294901760
        %4838 = vmatmul.f32.gmra.mxu0 %v4837
        %v4839 = vpop.f32.mrf.mxu0
        %v4840 = vadd.f32 %v4801, %v4839
        %4841 = vdwg.mxu0
        %v4842 = vand.u32 %v3583, 4294901760
        %v4843 = vsub.f32 %v3583, %v4842
        %v4844 = vand.u32 %v4843, 4294901760
        %4845 = vmatpush.msra.mxu0 %v4844
        %v4846 = vand.u32 %v3581, 4294901760
        %v4847 = vsub.f32 %v3581, %v4846
        %v4848 = vand.u32 %v4847, 4294901760
        %4849 = vmatpush.msra.mxu0 %v4848
        %v4850 = vand.u32 %v3579, 4294901760
        %v4851 = vsub.f32 %v3579, %v4850
        %v4852 = vand.u32 %v4851, 4294901760
        %4853 = vmatpush.msra.mxu0 %v4852
        %v4854 = vand.u32 %v3577, 4294901760
        %v4855 = vsub.f32 %v3577, %v4854
        %v4856 = vand.u32 %v4855, 4294901760
        %4857 = vmatpush.msra.mxu0 %v4856
        %v4858 = vand.u32 %v3575, 4294901760
        %v4859 = vsub.f32 %v3575, %v4858
        %v4860 = vand.u32 %v4859, 4294901760
        %4861 = vmatpush.msra.mxu0 %v4860
        %v4862 = vand.u32 %v3573, 4294901760
        %v4863 = vsub.f32 %v3573, %v4862
        %v4864 = vand.u32 %v4863, 4294901760
        %4865 = vmatpush.msra.mxu0 %v4864
        %v4866 = vand.u32 %v3571, 4294901760
        %v4867 = vsub.f32 %v3571, %v4866
        %v4868 = vand.u32 %v4867, 4294901760
        %4869 = vmatpush.msra.mxu0 %v4868
        %v4870 = vand.u32 %v3569, 4294901760
        %v4871 = vsub.f32 %v3569, %v4870
        %v4872 = vand.u32 %v4871, 4294901760
        %4873 = vmatpush.msra.mxu0 %v4872
        %v4874 = vand.u32 %v3567, 4294901760
        %v4875 = vsub.f32 %v3567, %v4874
        %v4876 = vand.u32 %v4875, 4294901760
        %4877 = vmatpush.msra.mxu0 %v4876
        %v4878 = vand.u32 %v3565, 4294901760
        %v4879 = vsub.f32 %v3565, %v4878
        %v4880 = vand.u32 %v4879, 4294901760
        %4881 = vmatpush.msra.mxu0 %v4880
        %v4882 = vand.u32 %v3563, 4294901760
        %v4883 = vsub.f32 %v3563, %v4882
        %v4884 = vand.u32 %v4883, 4294901760
        %4885 = vmatpush.msra.mxu0 %v4884
        %v4886 = vand.u32 %v3561, 4294901760
        %v4887 = vsub.f32 %v3561, %v4886
        %v4888 = vand.u32 %v4887, 4294901760
        %4889 = vmatpush.msra.mxu0 %v4888
        %v4890 = vand.u32 %v3559, 4294901760
        %v4891 = vsub.f32 %v3559, %v4890
        %v4892 = vand.u32 %v4891, 4294901760
        %4893 = vmatpush.msra.mxu0 %v4892
        %v4894 = vand.u32 %v3557, 4294901760
        %v4895 = vsub.f32 %v3557, %v4894
        %v4896 = vand.u32 %v4895, 4294901760
        %4897 = vmatpush.msra.mxu0 %v4896
        %v4898 = vand.u32 %v3555, 4294901760
        %v4899 = vsub.f32 %v3555, %v4898
        %v4900 = vand.u32 %v4899, 4294901760
        %4901 = vmatpush.msra.mxu0 %v4900
        %v4902 = vand.u32 %v3553, 4294901760
        %v4903 = vsub.f32 %v3553, %v4902
        %v4904 = vand.u32 %v4903, 4294901760
        %4905 = vmatpush.msra.mxu0 %v4904
        %v4906 = vand.u32 %v663, 4294901760
        %4907 = vmatmul.f32.gmra.mxu0 %v4906
        %v4908 = vpop.f32.mrf.mxu0
        %v4909 = vadd.f32 %v4840, %v4908
        %4910 = vdwg.mxu0
        %v4911 = vand.u32 %v3583, 4294901760
        %4912 = vmatpush.msra.mxu0 %v4911
        %v4913 = vand.u32 %v3581, 4294901760
        %4914 = vmatpush.msra.mxu0 %v4913
        %v4915 = vand.u32 %v3579, 4294901760
        %4916 = vmatpush.msra.mxu0 %v4915
        %v4917 = vand.u32 %v3577, 4294901760
        %4918 = vmatpush.msra.mxu0 %v4917
        %v4919 = vand.u32 %v3575, 4294901760
        %4920 = vmatpush.msra.mxu0 %v4919
        %v4921 = vand.u32 %v3573, 4294901760
        %4922 = vmatpush.msra.mxu0 %v4921
        %v4923 = vand.u32 %v3571, 4294901760
        %4924 = vmatpush.msra.mxu0 %v4923
        %v4925 = vand.u32 %v3569, 4294901760
        %4926 = vmatpush.msra.mxu0 %v4925
        %v4927 = vand.u32 %v3567, 4294901760
        %4928 = vmatpush.msra.mxu0 %v4927
        %v4929 = vand.u32 %v3565, 4294901760
        %4930 = vmatpush.msra.mxu0 %v4929
        %v4931 = vand.u32 %v3563, 4294901760
        %4932 = vmatpush.msra.mxu0 %v4931
        %v4933 = vand.u32 %v3561, 4294901760
        %4934 = vmatpush.msra.mxu0 %v4933
        %v4935 = vand.u32 %v3559, 4294901760
        %4936 = vmatpush.msra.mxu0 %v4935
        %v4937 = vand.u32 %v3557, 4294901760
        %4938 = vmatpush.msra.mxu0 %v4937
        %v4939 = vand.u32 %v3555, 4294901760
        %4940 = vmatpush.msra.mxu0 %v4939
        %v4941 = vand.u32 %v3553, 4294901760
        %4942 = vmatpush.msra.mxu0 %v4941
        %v4943 = vand.u32 %v663, 4294901760
        %4944 = vmatmul.f32.gmra.mxu0 %v4943
        %v4945 = vpop.f32.mrf.mxu0
        %v4946 = vadd.f32 %v4909, %v4945
        %4947 = vdwg.mxu0
        %4948 = vmatpush.xpose.msra.mxu0 0.0
        %4949 = vmatpush.xpose.msra.mxu0 0.0
        %4950 = vmatpush.xpose.msra.mxu0 0.0
        %4951 = vmatpush.xpose.msra.mxu0 0.0
        %4952 = vmatpush.xpose.msra.mxu0 0.0
        %4953 = vmatpush.xpose.msra.mxu0 0.0
        %4954 = vmatpush.xpose.msra.mxu0 0.0
        %4955 = vmatpush.xpose.msra.mxu0 0.0
        %4956 = vmatpush.xpose.msra.mxu0 0.0
        %4957 = vmatpush.xpose.msra.mxu0 0.0
        %4958 = vmatpush.xpose.msra.mxu0 0.0
        %4959 = vmatpush.xpose.msra.mxu0 0.0
        %4960 = vmatpush.xpose.msra.mxu0 0.0
        %4961 = vmatpush.xpose.msra.mxu0 0.0
        %4962 = vmatpush.xpose.msra.mxu0 0.0
        %v4963 = vand.u32 %v2836, 4294901760
        %4964 = vmatpush.xpose.msra.mxu0 %v4963
        %v4965 = vand.u32 %v1408, 4294901760
        %v4966 = vsub.f32 %v1408, %v4965
        %v4967 = vand.u32 %v4966, 4294901760
        %v4968 = vsub.f32 %v4966, %v4967
        %v4969 = vand.u32 %v4968, 4294901760
        %4970 = vmatmul.f32.gmra.mxu0 %v4969
        %v4971 = vpop.f32.mrf.mxu0
        %v4972 = vadd.f32 0.0, %v4971
        %4973 = vdwg.mxu0
        %4974 = vmatpush.xpose.msra.mxu0 0.0
        %4975 = vmatpush.xpose.msra.mxu0 0.0
        %4976 = vmatpush.xpose.msra.mxu0 0.0
        %4977 = vmatpush.xpose.msra.mxu0 0.0
        %4978 = vmatpush.xpose.msra.mxu0 0.0
        %4979 = vmatpush.xpose.msra.mxu0 0.0
        %4980 = vmatpush.xpose.msra.mxu0 0.0
        %4981 = vmatpush.xpose.msra.mxu0 0.0
        %4982 = vmatpush.xpose.msra.mxu0 0.0
        %4983 = vmatpush.xpose.msra.mxu0 0.0
        %4984 = vmatpush.xpose.msra.mxu0 0.0
        %4985 = vmatpush.xpose.msra.mxu0 0.0
        %4986 = vmatpush.xpose.msra.mxu0 0.0
        %4987 = vmatpush.xpose.msra.mxu0 0.0
        %4988 = vmatpush.xpose.msra.mxu0 0.0
        %v4989 = vand.u32 %v2836, 4294901760
        %v4990 = vsub.f32 %v2836, %v4989
        %v4991 = vand.u32 %v4990, 4294901760
        %v4992 = vsub.f32 %v4990, %v4991
        %v4993 = vand.u32 %v4992, 4294901760
        %4994 = vmatpush.xpose.msra.mxu0 %v4993
        %v4995 = vand.u32 %v1408, 4294901760
        %4996 = vmatmul.f32.gmra.mxu0 %v4995
        %v4997 = vpop.f32.mrf.mxu0
        %v4998 = vadd.f32 %v4972, %v4997
        %4999 = vdwg.mxu0
        %5000 = vmatpush.xpose.msra.mxu0 0.0
        %5001 = vmatpush.xpose.msra.mxu0 0.0
        %5002 = vmatpush.xpose.msra.mxu0 0.0
        %5003 = vmatpush.xpose.msra.mxu0 0.0
        %5004 = vmatpush.xpose.msra.mxu0 0.0
        %5005 = vmatpush.xpose.msra.mxu0 0.0
        %5006 = vmatpush.xpose.msra.mxu0 0.0
        %5007 = vmatpush.xpose.msra.mxu0 0.0
        %5008 = vmatpush.xpose.msra.mxu0 0.0
        %5009 = vmatpush.xpose.msra.mxu0 0.0
        %5010 = vmatpush.xpose.msra.mxu0 0.0
        %5011 = vmatpush.xpose.msra.mxu0 0.0
        %5012 = vmatpush.xpose.msra.mxu0 0.0
        %5013 = vmatpush.xpose.msra.mxu0 0.0
        %5014 = vmatpush.xpose.msra.mxu0 0.0
        %v5015 = vand.u32 %v2836, 4294901760
        %v5016 = vsub.f32 %v2836, %v5015
        %5017 = vmatpush.xpose.msra.mxu0 %v5016
        %v5018 = vand.u32 %v1408, 4294901760
        %v5019 = vsub.f32 %v1408, %v5018
        %5020 = vmatmul.f32.gmra.mxu0 %v5019
        %v5021 = vpop.f32.mrf.mxu0
        %v5022 = vadd.f32 %v4998, %v5021
        %5023 = vdwg.mxu0
        %5024 = vmatpush.xpose.msra.mxu0 0.0
        %5025 = vmatpush.xpose.msra.mxu0 0.0
        %5026 = vmatpush.xpose.msra.mxu0 0.0
        %5027 = vmatpush.xpose.msra.mxu0 0.0
        %5028 = vmatpush.xpose.msra.mxu0 0.0
        %5029 = vmatpush.xpose.msra.mxu0 0.0
        %5030 = vmatpush.xpose.msra.mxu0 0.0
        %5031 = vmatpush.xpose.msra.mxu0 0.0
        %5032 = vmatpush.xpose.msra.mxu0 0.0
        %5033 = vmatpush.xpose.msra.mxu0 0.0
        %5034 = vmatpush.xpose.msra.mxu0 0.0
        %5035 = vmatpush.xpose.msra.mxu0 0.0
        %5036 = vmatpush.xpose.msra.mxu0 0.0
        %5037 = vmatpush.xpose.msra.mxu0 0.0
        %5038 = vmatpush.xpose.msra.mxu0 0.0
        %v5039 = vand.u32 %v2836, 4294901760
        %5040 = vmatpush.xpose.msra.mxu0 %v5039
        %v5041 = vand.u32 %v1408, 4294901760
        %v5042 = vsub.f32 %v1408, %v5041
        %v5043 = vand.u32 %v5042, 4294901760
        %5044 = vmatmul.f32.gmra.mxu0 %v5043
        %v5045 = vpop.f32.mrf.mxu0
        %v5046 = vadd.f32 %v5022, %v5045
        %5047 = vdwg.mxu0
        %5048 = vmatpush.xpose.msra.mxu0 0.0
        %5049 = vmatpush.xpose.msra.mxu0 0.0
        %5050 = vmatpush.xpose.msra.mxu0 0.0
        %5051 = vmatpush.xpose.msra.mxu0 0.0
        %5052 = vmatpush.xpose.msra.mxu0 0.0
        %5053 = vmatpush.xpose.msra.mxu0 0.0
        %5054 = vmatpush.xpose.msra.mxu0 0.0
        %5055 = vmatpush.xpose.msra.mxu0 0.0
        %5056 = vmatpush.xpose.msra.mxu0 0.0
        %5057 = vmatpush.xpose.msra.mxu0 0.0
        %5058 = vmatpush.xpose.msra.mxu0 0.0
        %5059 = vmatpush.xpose.msra.mxu0 0.0
        %5060 = vmatpush.xpose.msra.mxu0 0.0
        %5061 = vmatpush.xpose.msra.mxu0 0.0
        %5062 = vmatpush.xpose.msra.mxu0 0.0
        %v5063 = vand.u32 %v2836, 4294901760
        %v5064 = vsub.f32 %v2836, %v5063
        %v5065 = vand.u32 %v5064, 4294901760
        %5066 = vmatpush.xpose.msra.mxu0 %v5065
        %v5067 = vand.u32 %v1408, 4294901760
        %5068 = vmatmul.f32.gmra.mxu0 %v5067
        %v5069 = vpop.f32.mrf.mxu0
        %v5070 = vadd.f32 %v5046, %v5069
        %5071 = vdwg.mxu0
        %5072 = vmatpush.xpose.msra.mxu0 0.0
        %5073 = vmatpush.xpose.msra.mxu0 0.0
        %5074 = vmatpush.xpose.msra.mxu0 0.0
        %5075 = vmatpush.xpose.msra.mxu0 0.0
        %5076 = vmatpush.xpose.msra.mxu0 0.0
        %5077 = vmatpush.xpose.msra.mxu0 0.0
        %5078 = vmatpush.xpose.msra.mxu0 0.0
        %5079 = vmatpush.xpose.msra.mxu0 0.0
        %5080 = vmatpush.xpose.msra.mxu0 0.0
        %5081 = vmatpush.xpose.msra.mxu0 0.0
        %5082 = vmatpush.xpose.msra.mxu0 0.0
        %5083 = vmatpush.xpose.msra.mxu0 0.0
        %5084 = vmatpush.xpose.msra.mxu0 0.0
        %5085 = vmatpush.xpose.msra.mxu0 0.0
        %5086 = vmatpush.xpose.msra.mxu0 0.0
        %v5087 = vand.u32 %v2836, 4294901760
        %5088 = vmatpush.xpose.msra.mxu0 %v5087
        %v5089 = vand.u32 %v1408, 4294901760
        %5090 = vmatmul.f32.gmra.mxu0 %v5089
        %v5091 = vpop.f32.mrf.mxu0
        %v5092 = vadd.f32 %v5070, %v5091
        %5093 = vdwg.mxu0
        %v5094 = vmul.f32 %v5092, 0.088388346
        %vm5095 = vcmask 64512
        %v5096 = vsel %vm5095, %v5094, -inf
        %5097 = vmax.xlane.f32.xlu0 %v5096
        %v5098 = vpop.xlane.xlu0 %5097
        %v5099 = vsub.f32 %v5094, %v5098
        %v5100 = vmul.f32 %v5099, 1.442695
        %v5101 = vpow.pop %v5100
        %v5102 = vsel %vm5095, %v5101, 0.0
        %5103 = vadd.xlane.f32.xlu0 %v5102
        %v5104 = vpop.xlane.xlu0 %5103
        %v5105 = vrcp.pop %v5104
        %v5106 = vmul.f32 %v5104, %v5105
        %v5107 = vsub.f32 1.0, %v5106
        %v5108 = vmul.f32 %v5105, %v5107
        %v5109 = vadd.f32 %v5105, %v5108
        %vm5110 = vweird.f32 %v5104
        %vm5111 = vweird.f32 %v5105
        %vm5112 = vmor %vm5110, %vm5111
        %v5113 = vsel %vm5112, %v5105, %v5109
        %v5114 = vand.u32 2147483647, %v5104
        %vm5115 = vcmp.eq.f32.partialorder %v5114, 8.507059e+37
        %v5116 = vand.u32 %v5104, 2147483648
        %v5117 = vor.u32 1.1754944e-38, %v5116
        %v5118 = vsel %vm5115, %v5117, %v5113
        %v5119 = vmul.f32 %v5101, %v5118
        %v5121 = vsel %vm5095, %v5119, 0
        %5123 = vmatpush.msra.mxu0 0.0
        %5124 = vmatpush.msra.mxu0 0.0
        %5125 = vmatpush.msra.mxu0 0.0
        %5126 = vmatpush.msra.mxu0 0.0
        %5127 = vmatpush.msra.mxu0 0.0
        %5128 = vmatpush.msra.mxu0 0.0
        %5129 = vmatpush.msra.mxu0 0.0
        %5130 = vmatpush.msra.mxu0 0.0
        %5131 = vmatpush.msra.mxu0 0.0
        %5132 = vmatpush.msra.mxu0 0.0
        %5133 = vmatpush.msra.mxu0 0.0
        %5134 = vmatpush.msra.mxu0 0.0
        %5135 = vmatpush.msra.mxu0 0.0
        %5136 = vmatpush.msra.mxu0 0.0
        %5137 = vmatpush.msra.mxu0 0.0
        %v5138 = vand.u32 %v4264, 4294901760
        %5139 = vmatpush.msra.mxu0 %v5138
        %v5140 = vand.u32 %v5121, 4294901760
        %v5141 = vsub.f32 %v5121, %v5140
        %v5142 = vand.u32 %v5141, 4294901760
        %v5143 = vsub.f32 %v5141, %v5142
        %v5144 = vand.u32 %v5143, 4294901760
        %5145 = vmatmul.f32.gmra.mxu0 %v5144
        %v5146 = vpop.f32.mrf.mxu0
        %v5147 = vadd.f32 0.0, %v5146
        %5148 = vdwg.mxu0
        %5149 = vmatpush.msra.mxu0 0.0
        %5150 = vmatpush.msra.mxu0 0.0
        %5151 = vmatpush.msra.mxu0 0.0
        %5152 = vmatpush.msra.mxu0 0.0
        %5153 = vmatpush.msra.mxu0 0.0
        %5154 = vmatpush.msra.mxu0 0.0
        %5155 = vmatpush.msra.mxu0 0.0
        %5156 = vmatpush.msra.mxu0 0.0
        %5157 = vmatpush.msra.mxu0 0.0
        %5158 = vmatpush.msra.mxu0 0.0
        %5159 = vmatpush.msra.mxu0 0.0
        %5160 = vmatpush.msra.mxu0 0.0
        %5161 = vmatpush.msra.mxu0 0.0
        %5162 = vmatpush.msra.mxu0 0.0
        %5163 = vmatpush.msra.mxu0 0.0
        %v5164 = vand.u32 %v4264, 4294901760
        %v5165 = vsub.f32 %v4264, %v5164
        %v5166 = vand.u32 %v5165, 4294901760
        %v5167 = vsub.f32 %v5165, %v5166
        %v5168 = vand.u32 %v5167, 4294901760
        %5169 = vmatpush.msra.mxu0 %v5168
        %v5170 = vand.u32 %v5121, 4294901760
        %5171 = vmatmul.f32.gmra.mxu0 %v5170
        %v5172 = vpop.f32.mrf.mxu0
        %v5173 = vadd.f32 %v5147, %v5172
        %5174 = vdwg.mxu0
        %5175 = vmatpush.msra.mxu0 0.0
        %5176 = vmatpush.msra.mxu0 0.0
        %5177 = vmatpush.msra.mxu0 0.0
        %5178 = vmatpush.msra.mxu0 0.0
        %5179 = vmatpush.msra.mxu0 0.0
        %5180 = vmatpush.msra.mxu0 0.0
        %5181 = vmatpush.msra.mxu0 0.0
        %5182 = vmatpush.msra.mxu0 0.0
        %5183 = vmatpush.msra.mxu0 0.0
        %5184 = vmatpush.msra.mxu0 0.0
        %5185 = vmatpush.msra.mxu0 0.0
        %5186 = vmatpush.msra.mxu0 0.0
        %5187 = vmatpush.msra.mxu0 0.0
        %5188 = vmatpush.msra.mxu0 0.0
        %5189 = vmatpush.msra.mxu0 0.0
        %v5190 = vand.u32 %v4264, 4294901760
        %v5191 = vsub.f32 %v4264, %v5190
        %5192 = vmatpush.msra.mxu0 %v5191
        %v5193 = vand.u32 %v5121, 4294901760
        %v5194 = vsub.f32 %v5121, %v5193
        %5195 = vmatmul.f32.gmra.mxu0 %v5194
        %v5196 = vpop.f32.mrf.mxu0
        %v5197 = vadd.f32 %v5173, %v5196
        %5198 = vdwg.mxu0
        %5199 = vmatpush.msra.mxu0 0.0
        %5200 = vmatpush.msra.mxu0 0.0
        %5201 = vmatpush.msra.mxu0 0.0
        %5202 = vmatpush.msra.mxu0 0.0
        %5203 = vmatpush.msra.mxu0 0.0
        %5204 = vmatpush.msra.mxu0 0.0
        %5205 = vmatpush.msra.mxu0 0.0
        %5206 = vmatpush.msra.mxu0 0.0
        %5207 = vmatpush.msra.mxu0 0.0
        %5208 = vmatpush.msra.mxu0 0.0
        %5209 = vmatpush.msra.mxu0 0.0
        %5210 = vmatpush.msra.mxu0 0.0
        %5211 = vmatpush.msra.mxu0 0.0
        %5212 = vmatpush.msra.mxu0 0.0
        %5213 = vmatpush.msra.mxu0 0.0
        %v5214 = vand.u32 %v4264, 4294901760
        %5215 = vmatpush.msra.mxu0 %v5214
        %v5216 = vand.u32 %v5121, 4294901760
        %v5217 = vsub.f32 %v5121, %v5216
        %v5218 = vand.u32 %v5217, 4294901760
        %5219 = vmatmul.f32.gmra.mxu0 %v5218
        %v5220 = vpop.f32.mrf.mxu0
        %v5221 = vadd.f32 %v5197, %v5220
        %5222 = vdwg.mxu0
        %5223 = vmatpush.msra.mxu0 0.0
        %5224 = vmatpush.msra.mxu0 0.0
        %5225 = vmatpush.msra.mxu0 0.0
        %5226 = vmatpush.msra.mxu0 0.0
        %5227 = vmatpush.msra.mxu0 0.0
        %5228 = vmatpush.msra.mxu0 0.0
        %5229 = vmatpush.msra.mxu0 0.0
        %5230 = vmatpush.msra.mxu0 0.0
        %5231 = vmatpush.msra.mxu0 0.0
        %5232 = vmatpush.msra.mxu0 0.0
        %5233 = vmatpush.msra.mxu0 0.0
        %5234 = vmatpush.msra.mxu0 0.0
        %5235 = vmatpush.msra.mxu0 0.0
        %5236 = vmatpush.msra.mxu0 0.0
        %5237 = vmatpush.msra.mxu0 0.0
        %v5238 = vand.u32 %v4264, 4294901760
        %v5239 = vsub.f32 %v4264, %v5238
        %v5240 = vand.u32 %v5239, 4294901760
        %5241 = vmatpush.msra.mxu0 %v5240
        %v5242 = vand.u32 %v5121, 4294901760
        %5243 = vmatmul.f32.gmra.mxu0 %v5242
        %v5244 = vpop.f32.mrf.mxu0
        %v5245 = vadd.f32 %v5221, %v5244
        %5246 = vdwg.mxu0
        %5247 = vmatpush.msra.mxu0 0.0
        %5248 = vmatpush.msra.mxu0 0.0
        %5249 = vmatpush.msra.mxu0 0.0
        %5250 = vmatpush.msra.mxu0 0.0
        %5251 = vmatpush.msra.mxu0 0.0
        %5252 = vmatpush.msra.mxu0 0.0
        %5253 = vmatpush.msra.mxu0 0.0
        %5254 = vmatpush.msra.mxu0 0.0
        %5255 = vmatpush.msra.mxu0 0.0
        %5256 = vmatpush.msra.mxu0 0.0
        %5257 = vmatpush.msra.mxu0 0.0
        %5258 = vmatpush.msra.mxu0 0.0
        %5259 = vmatpush.msra.mxu0 0.0
        %5260 = vmatpush.msra.mxu0 0.0
        %5261 = vmatpush.msra.mxu0 0.0
        %v5262 = vand.u32 %v4264, 4294901760
        %5263 = vmatpush.msra.mxu0 %v5262
        %v5264 = vand.u32 %v5121, 4294901760
        %5265 = vmatmul.f32.gmra.mxu0 %v5264
        %v5266 = vpop.f32.mrf.mxu0
        %v5267 = vadd.f32 %v5245, %v5266
        %5268 = vdwg.mxu0
        %v5269 = vld [vmem:[#allocation13] sm:$0xff]
        %v5270 = vld [vmem:[#allocation13 + $0x8] sm:$0xff]
        %v5271 = vld [vmem:[#allocation13 + $0x10] sm:$0xff]
        %v5272 = vld [vmem:[#allocation13 + $0x18] sm:$0xff]
        %v5273 = vld [vmem:[#allocation13 + $0x20] sm:$0xff]
        %v5274 = vld [vmem:[#allocation13 + $0x28] sm:$0xff]
        %v5275 = vld [vmem:[#allocation13 + $0x30] sm:$0xff]
        %v5276 = vld [vmem:[#allocation13 + $0x38] sm:$0xff]
        %v5277 = vld [vmem:[#allocation13 + $0x40] sm:$0xff]
        %v5278 = vld [vmem:[#allocation13 + $0x48] sm:$0xff]
        %v5279 = vld [vmem:[#allocation13 + $0x50] sm:$0xff]
        %v5280 = vld [vmem:[#allocation13 + $0x58] sm:$0xff]
        %v5281 = vld [vmem:[#allocation13 + $0x60] sm:$0xff]
        %v5282 = vld [vmem:[#allocation13 + $0x68] sm:$0xff]
        %v5283 = vld [vmem:[#allocation13 + $0x70] sm:$0xff]
        %v5284 = vld [vmem:[#allocation13 + $0x78] sm:$0xff]
        %v5285 = vld [vmem:[#allocation13 + $0x80] sm:$0xff]
        %v5286 = vld [vmem:[#allocation13 + $0x88] sm:$0xff]
        %v5287 = vld [vmem:[#allocation13 + $0x90] sm:$0xff]
        %v5288 = vld [vmem:[#allocation13 + $0x98] sm:$0xff]
        %v5289 = vld [vmem:[#allocation13 + $0xa0] sm:$0xff]
        %v5290 = vld [vmem:[#allocation13 + $0xa8] sm:$0xff]
        %v5291 = vld [vmem:[#allocation13 + $0xb0] sm:$0xff]
        %v5292 = vld [vmem:[#allocation13 + $0xb8] sm:$0xff]
        %v5293 = vld [vmem:[#allocation13 + $0xc0] sm:$0xff]
        %v5294 = vld [vmem:[#allocation13 + $0xc8] sm:$0xff]
        %v5295 = vld [vmem:[#allocation13 + $0xd0] sm:$0xff]
        %v5296 = vld [vmem:[#allocation13 + $0xd8] sm:$0xff]
        %v5297 = vld [vmem:[#allocation13 + $0xe0] sm:$0xff]
        %v5298 = vld [vmem:[#allocation13 + $0xe8] sm:$0xff]
        %v5299 = vld [vmem:[#allocation13 + $0xf0] sm:$0xff]
        %v5300 = vld [vmem:[#allocation13 + $0xf8] sm:$0xff]
        %5301 = vmatpush.xpose.msra.mxu0 0.0
        %5302 = vmatpush.xpose.msra.mxu0 0.0
        %5303 = vmatpush.xpose.msra.mxu0 0.0
        %5304 = vmatpush.xpose.msra.mxu0 0.0
        %5305 = vmatpush.xpose.msra.mxu0 0.0
        %5306 = vmatpush.xpose.msra.mxu0 0.0
        %5307 = vmatpush.xpose.msra.mxu0 0.0
        %5308 = vmatpush.xpose.msra.mxu0 0.0
        %5309 = vmatpush.xpose.msra.mxu0 0.0
        %5310 = vmatpush.xpose.msra.mxu0 0.0
        %5311 = vmatpush.xpose.msra.mxu0 0.0
        %5312 = vmatpush.xpose.msra.mxu0 0.0
        %5313 = vmatpush.xpose.msra.mxu0 0.0
        %5314 = vmatpush.xpose.msra.mxu0 0.0
        %5315 = vmatpush.xpose.msra.mxu0 0.0
        %v5316 = vand.u32 %v3518, 4294901760
        %5317 = vmatpush.xpose.msra.mxu0 %v5316
        %v5318 = vand.u32 %v2090, 4294901760
        %v5319 = vsub.f32 %v2090, %v5318
        %v5320 = vand.u32 %v5319, 4294901760
        %v5321 = vsub.f32 %v5319, %v5320
        %v5322 = vand.u32 %v5321, 4294901760
        %5323 = vmatmul.f32.gmra.mxu0 %v5322
        %v5324 = vpop.f32.mrf.mxu0
        %v5325 = vadd.f32 0.0, %v5324
        %5326 = vdwg.mxu0
        %5327 = vmatpush.xpose.msra.mxu0 0.0
        %5328 = vmatpush.xpose.msra.mxu0 0.0
        %5329 = vmatpush.xpose.msra.mxu0 0.0
        %5330 = vmatpush.xpose.msra.mxu0 0.0
        %5331 = vmatpush.xpose.msra.mxu0 0.0
        %5332 = vmatpush.xpose.msra.mxu0 0.0
        %5333 = vmatpush.xpose.msra.mxu0 0.0
        %5334 = vmatpush.xpose.msra.mxu0 0.0
        %5335 = vmatpush.xpose.msra.mxu0 0.0
        %5336 = vmatpush.xpose.msra.mxu0 0.0
        %5337 = vmatpush.xpose.msra.mxu0 0.0
        %5338 = vmatpush.xpose.msra.mxu0 0.0
        %5339 = vmatpush.xpose.msra.mxu0 0.0
        %5340 = vmatpush.xpose.msra.mxu0 0.0
        %5341 = vmatpush.xpose.msra.mxu0 0.0
        %v5342 = vand.u32 %v3518, 4294901760
        %v5343 = vsub.f32 %v3518, %v5342
        %v5344 = vand.u32 %v5343, 4294901760
        %v5345 = vsub.f32 %v5343, %v5344
        %v5346 = vand.u32 %v5345, 4294901760
        %5347 = vmatpush.xpose.msra.mxu0 %v5346
        %v5348 = vand.u32 %v2090, 4294901760
        %5349 = vmatmul.f32.gmra.mxu0 %v5348
        %v5350 = vpop.f32.mrf.mxu0
        %v5351 = vadd.f32 %v5325, %v5350
        %5352 = vdwg.mxu0
        %5353 = vmatpush.xpose.msra.mxu0 0.0
        %5354 = vmatpush.xpose.msra.mxu0 0.0
        %5355 = vmatpush.xpose.msra.mxu0 0.0
        %5356 = vmatpush.xpose.msra.mxu0 0.0
        %5357 = vmatpush.xpose.msra.mxu0 0.0
        %5358 = vmatpush.xpose.msra.mxu0 0.0
        %5359 = vmatpush.xpose.msra.mxu0 0.0
        %5360 = vmatpush.xpose.msra.mxu0 0.0
        %5361 = vmatpush.xpose.msra.mxu0 0.0
        %5362 = vmatpush.xpose.msra.mxu0 0.0
        %5363 = vmatpush.xpose.msra.mxu0 0.0
        %5364 = vmatpush.xpose.msra.mxu0 0.0
        %5365 = vmatpush.xpose.msra.mxu0 0.0
        %5366 = vmatpush.xpose.msra.mxu0 0.0
        %5367 = vmatpush.xpose.msra.mxu0 0.0
        %v5368 = vand.u32 %v3518, 4294901760
        %v5369 = vsub.f32 %v3518, %v5368
        %5370 = vmatpush.xpose.msra.mxu0 %v5369
        %v5371 = vand.u32 %v2090, 4294901760
        %v5372 = vsub.f32 %v2090, %v5371
        %5373 = vmatmul.f32.gmra.mxu0 %v5372
        %v5374 = vpop.f32.mrf.mxu0
        %v5375 = vadd.f32 %v5351, %v5374
        %5376 = vdwg.mxu0
        %5377 = vmatpush.xpose.msra.mxu0 0.0
        %5378 = vmatpush.xpose.msra.mxu0 0.0
        %5379 = vmatpush.xpose.msra.mxu0 0.0
        %5380 = vmatpush.xpose.msra.mxu0 0.0
        %5381 = vmatpush.xpose.msra.mxu0 0.0
        %5382 = vmatpush.xpose.msra.mxu0 0.0
        %5383 = vmatpush.xpose.msra.mxu0 0.0
        %5384 = vmatpush.xpose.msra.mxu0 0.0
        %5385 = vmatpush.xpose.msra.mxu0 0.0
        %5386 = vmatpush.xpose.msra.mxu0 0.0
        %5387 = vmatpush.xpose.msra.mxu0 0.0
        %5388 = vmatpush.xpose.msra.mxu0 0.0
        %5389 = vmatpush.xpose.msra.mxu0 0.0
        %5390 = vmatpush.xpose.msra.mxu0 0.0
        %5391 = vmatpush.xpose.msra.mxu0 0.0
        %v5392 = vand.u32 %v3518, 4294901760
        %5393 = vmatpush.xpose.msra.mxu0 %v5392
        %v5394 = vand.u32 %v2090, 4294901760
        %v5395 = vsub.f32 %v2090, %v5394
        %v5396 = vand.u32 %v5395, 4294901760
        %5397 = vmatmul.f32.gmra.mxu0 %v5396
        %v5398 = vpop.f32.mrf.mxu0
        %v5399 = vadd.f32 %v5375, %v5398
        %5400 = vdwg.mxu0
        %5401 = vmatpush.xpose.msra.mxu0 0.0
        %5402 = vmatpush.xpose.msra.mxu0 0.0
        %5403 = vmatpush.xpose.msra.mxu0 0.0
        %5404 = vmatpush.xpose.msra.mxu0 0.0
        %5405 = vmatpush.xpose.msra.mxu0 0.0
        %5406 = vmatpush.xpose.msra.mxu0 0.0
        %5407 = vmatpush.xpose.msra.mxu0 0.0
        %5408 = vmatpush.xpose.msra.mxu0 0.0
        %5409 = vmatpush.xpose.msra.mxu0 0.0
        %5410 = vmatpush.xpose.msra.mxu0 0.0
        %5411 = vmatpush.xpose.msra.mxu0 0.0
        %5412 = vmatpush.xpose.msra.mxu0 0.0
        %5413 = vmatpush.xpose.msra.mxu0 0.0
        %5414 = vmatpush.xpose.msra.mxu0 0.0
        %5415 = vmatpush.xpose.msra.mxu0 0.0
        %v5416 = vand.u32 %v3518, 4294901760
        %v5417 = vsub.f32 %v3518, %v5416
        %v5418 = vand.u32 %v5417, 4294901760
        %5419 = vmatpush.xpose.msra.mxu0 %v5418
        %v5420 = vand.u32 %v2090, 4294901760
        %5421 = vmatmul.f32.gmra.mxu0 %v5420
        %v5422 = vpop.f32.mrf.mxu0
        %v5423 = vadd.f32 %v5399, %v5422
        %5424 = vdwg.mxu0
        %5425 = vmatpush.xpose.msra.mxu0 0.0
        %5426 = vmatpush.xpose.msra.mxu0 0.0
        %5427 = vmatpush.xpose.msra.mxu0 0.0
        %5428 = vmatpush.xpose.msra.mxu0 0.0
        %5429 = vmatpush.xpose.msra.mxu0 0.0
        %5430 = vmatpush.xpose.msra.mxu0 0.0
        %5431 = vmatpush.xpose.msra.mxu0 0.0
        %5432 = vmatpush.xpose.msra.mxu0 0.0
        %5433 = vmatpush.xpose.msra.mxu0 0.0
        %5434 = vmatpush.xpose.msra.mxu0 0.0
        %5435 = vmatpush.xpose.msra.mxu0 0.0
        %5436 = vmatpush.xpose.msra.mxu0 0.0
        %5437 = vmatpush.xpose.msra.mxu0 0.0
        %5438 = vmatpush.xpose.msra.mxu0 0.0
        %5439 = vmatpush.xpose.msra.mxu0 0.0
        %v5440 = vand.u32 %v3518, 4294901760
        %5441 = vmatpush.xpose.msra.mxu0 %v5440
        %v5442 = vand.u32 %v2090, 4294901760
        %5443 = vmatmul.f32.gmra.mxu0 %v5442
        %v5444 = vpop.f32.mrf.mxu0
        %v5445 = vadd.f32 %v5423, %v5444
        %5446 = vdwg.mxu0
        %v5447 = vmul.f32 %v5445, 0.088388346
        %v5448 = vsel %vm5095, %v5447, -inf
        %5449 = vmax.xlane.f32.xlu0 %v5448
        %v5450 = vpop.xlane.xlu0 %5449
        %v5451 = vsub.f32 %v5447, %v5450
        %v5452 = vmul.f32 %v5451, 1.442695
        %v5453 = vpow.pop %v5452
        %v5454 = vsel %vm5095, %v5453, 0.0
        %5455 = vadd.xlane.f32.xlu0 %v5454
        %v5456 = vpop.xlane.xlu0 %5455
        %v5457 = vrcp.pop %v5456
        %v5458 = vmul.f32 %v5456, %v5457
        %v5459 = vsub.f32 1.0, %v5458
        %v5460 = vmul.f32 %v5457, %v5459
        %v5461 = vadd.f32 %v5457, %v5460
        %vm5462 = vweird.f32 %v5456
        %vm5463 = vweird.f32 %v5457
        %vm5464 = vmor %vm5462, %vm5463
        %v5465 = vsel %vm5464, %v5457, %v5461
        %v5466 = vand.u32 2147483647, %v5456
        %vm5467 = vcmp.eq.f32.partialorder %v5466, 8.507059e+37
        %v5468 = vand.u32 %v5456, 2147483648
        %v5469 = vor.u32 1.1754944e-38, %v5468
        %v5470 = vsel %vm5467, %v5469, %v5465
        %v5471 = vmul.f32 %v5453, %v5470
        %v5473 = vsel %vm5095, %v5471, 0
        %5475 = vmatpush.msra.mxu0 0.0
        %5476 = vmatpush.msra.mxu0 0.0
        %5477 = vmatpush.msra.mxu0 0.0
        %5478 = vmatpush.msra.mxu0 0.0
        %5479 = vmatpush.msra.mxu0 0.0
        %5480 = vmatpush.msra.mxu0 0.0
        %5481 = vmatpush.msra.mxu0 0.0
        %5482 = vmatpush.msra.mxu0 0.0
        %5483 = vmatpush.msra.mxu0 0.0
        %5484 = vmatpush.msra.mxu0 0.0
        %5485 = vmatpush.msra.mxu0 0.0
        %5486 = vmatpush.msra.mxu0 0.0
        %5487 = vmatpush.msra.mxu0 0.0
        %5488 = vmatpush.msra.mxu0 0.0
        %5489 = vmatpush.msra.mxu0 0.0
        %v5490 = vand.u32 %v4946, 4294901760
        %5491 = vmatpush.msra.mxu0 %v5490
        %v5492 = vand.u32 %v5473, 4294901760
        %v5493 = vsub.f32 %v5473, %v5492
        %v5494 = vand.u32 %v5493, 4294901760
        %v5495 = vsub.f32 %v5493, %v5494
        %v5496 = vand.u32 %v5495, 4294901760
        %5497 = vmatmul.f32.gmra.mxu0 %v5496
        %v5498 = vpop.f32.mrf.mxu0
        %v5499 = vadd.f32 0.0, %v5498
        %5500 = vdwg.mxu0
        %5501 = vmatpush.msra.mxu0 0.0
        %5502 = vmatpush.msra.mxu0 0.0
        %5503 = vmatpush.msra.mxu0 0.0
        %5504 = vmatpush.msra.mxu0 0.0
        %5505 = vmatpush.msra.mxu0 0.0
        %5506 = vmatpush.msra.mxu0 0.0
        %5507 = vmatpush.msra.mxu0 0.0
        %5508 = vmatpush.msra.mxu0 0.0
        %5509 = vmatpush.msra.mxu0 0.0
        %5510 = vmatpush.msra.mxu0 0.0
        %5511 = vmatpush.msra.mxu0 0.0
        %5512 = vmatpush.msra.mxu0 0.0
        %5513 = vmatpush.msra.mxu0 0.0
        %5514 = vmatpush.msra.mxu0 0.0
        %5515 = vmatpush.msra.mxu0 0.0
        %v5516 = vand.u32 %v4946, 4294901760
        %v5517 = vsub.f32 %v4946, %v5516
        %v5518 = vand.u32 %v5517, 4294901760
        %v5519 = vsub.f32 %v5517, %v5518
        %v5520 = vand.u32 %v5519, 4294901760
        %5521 = vmatpush.msra.mxu0 %v5520
        %v5522 = vand.u32 %v5473, 4294901760
        %5523 = vmatmul.f32.gmra.mxu0 %v5522
        %v5524 = vpop.f32.mrf.mxu0
        %v5525 = vadd.f32 %v5499, %v5524
        %5526 = vdwg.mxu0
        %5527 = vmatpush.msra.mxu0 0.0
        %5528 = vmatpush.msra.mxu0 0.0
        %5529 = vmatpush.msra.mxu0 0.0
        %5530 = vmatpush.msra.mxu0 0.0
        %5531 = vmatpush.msra.mxu0 0.0
        %5532 = vmatpush.msra.mxu0 0.0
        %5533 = vmatpush.msra.mxu0 0.0
        %5534 = vmatpush.msra.mxu0 0.0
        %5535 = vmatpush.msra.mxu0 0.0
        %5536 = vmatpush.msra.mxu0 0.0
        %5537 = vmatpush.msra.mxu0 0.0
        %5538 = vmatpush.msra.mxu0 0.0
        %5539 = vmatpush.msra.mxu0 0.0
        %5540 = vmatpush.msra.mxu0 0.0
        %5541 = vmatpush.msra.mxu0 0.0
        %v5542 = vand.u32 %v4946, 4294901760
        %v5543 = vsub.f32 %v4946, %v5542
        %5544 = vmatpush.msra.mxu0 %v5543
        %v5545 = vand.u32 %v5473, 4294901760
        %v5546 = vsub.f32 %v5473, %v5545
        %5547 = vmatmul.f32.gmra.mxu0 %v5546
        %v5548 = vpop.f32.mrf.mxu0
        %v5549 = vadd.f32 %v5525, %v5548
        %5550 = vdwg.mxu0
        %5551 = vmatpush.msra.mxu0 0.0
        %5552 = vmatpush.msra.mxu0 0.0
        %5553 = vmatpush.msra.mxu0 0.0
        %5554 = vmatpush.msra.mxu0 0.0
        %5555 = vmatpush.msra.mxu0 0.0
        %5556 = vmatpush.msra.mxu0 0.0
        %5557 = vmatpush.msra.mxu0 0.0
        %5558 = vmatpush.msra.mxu0 0.0
        %5559 = vmatpush.msra.mxu0 0.0
        %5560 = vmatpush.msra.mxu0 0.0
        %5561 = vmatpush.msra.mxu0 0.0
        %5562 = vmatpush.msra.mxu0 0.0
        %5563 = vmatpush.msra.mxu0 0.0
        %5564 = vmatpush.msra.mxu0 0.0
        %5565 = vmatpush.msra.mxu0 0.0
        %v5566 = vand.u32 %v4946, 4294901760
        %5567 = vmatpush.msra.mxu0 %v5566
        %v5568 = vand.u32 %v5473, 4294901760
        %v5569 = vsub.f32 %v5473, %v5568
        %v5570 = vand.u32 %v5569, 4294901760
        %5571 = vmatmul.f32.gmra.mxu0 %v5570
        %v5572 = vpop.f32.mrf.mxu0
        %v5573 = vadd.f32 %v5549, %v5572
        %5574 = vdwg.mxu0
        %5575 = vmatpush.msra.mxu0 0.0
        %5576 = vmatpush.msra.mxu0 0.0
        %5577 = vmatpush.msra.mxu0 0.0
        %5578 = vmatpush.msra.mxu0 0.0
        %5579 = vmatpush.msra.mxu0 0.0
        %5580 = vmatpush.msra.mxu0 0.0
        %5581 = vmatpush.msra.mxu0 0.0
        %5582 = vmatpush.msra.mxu0 0.0
        %5583 = vmatpush.msra.mxu0 0.0
        %5584 = vmatpush.msra.mxu0 0.0
        %5585 = vmatpush.msra.mxu0 0.0
        %5586 = vmatpush.msra.mxu0 0.0
        %5587 = vmatpush.msra.mxu0 0.0
        %5588 = vmatpush.msra.mxu0 0.0
        %5589 = vmatpush.msra.mxu0 0.0
        %v5590 = vand.u32 %v4946, 4294901760
        %v5591 = vsub.f32 %v4946, %v5590
        %v5592 = vand.u32 %v5591, 4294901760
        %5593 = vmatpush.msra.mxu0 %v5592
        %v5594 = vand.u32 %v5473, 4294901760
        %5595 = vmatmul.f32.gmra.mxu0 %v5594
        %v5596 = vpop.f32.mrf.mxu0
        %v5597 = vadd.f32 %v5573, %v5596
        %5598 = vdwg.mxu0
        %5599 = vmatpush.msra.mxu0 0.0
        %5600 = vmatpush.msra.mxu0 0.0
        %5601 = vmatpush.msra.mxu0 0.0
        %5602 = vmatpush.msra.mxu0 0.0
        %5603 = vmatpush.msra.mxu0 0.0
        %5604 = vmatpush.msra.mxu0 0.0
        %5605 = vmatpush.msra.mxu0 0.0
        %5606 = vmatpush.msra.mxu0 0.0
        %5607 = vmatpush.msra.mxu0 0.0
        %5608 = vmatpush.msra.mxu0 0.0
        %5609 = vmatpush.msra.mxu0 0.0
        %5610 = vmatpush.msra.mxu0 0.0
        %5611 = vmatpush.msra.mxu0 0.0
        %5612 = vmatpush.msra.mxu0 0.0
        %5613 = vmatpush.msra.mxu0 0.0
        %v5614 = vand.u32 %v4946, 4294901760
        %5615 = vmatpush.msra.mxu0 %v5614
        %v5616 = vand.u32 %v5473, 4294901760
        %5617 = vmatmul.f32.gmra.mxu0 %v5616
        %v5618 = vpop.f32.mrf.mxu0
        %v5619 = vadd.f32 %v5597, %v5618
        %5620 = vdwg.mxu0
        %v5621 = vld [vmem:[#allocation13 + $0x100] sm:$0xff]
        %v5622 = vld [vmem:[#allocation13 + $0x108] sm:$0xff]
        %v5623 = vld [vmem:[#allocation13 + $0x110] sm:$0xff]
        %v5624 = vld [vmem:[#allocation13 + $0x118] sm:$0xff]
        %v5625 = vld [vmem:[#allocation13 + $0x120] sm:$0xff]
        %v5626 = vld [vmem:[#allocation13 + $0x128] sm:$0xff]
        %v5627 = vld [vmem:[#allocation13 + $0x130] sm:$0xff]
        %v5628 = vld [vmem:[#allocation13 + $0x138] sm:$0xff]
        %v5629 = vld [vmem:[#allocation13 + $0x140] sm:$0xff]
        %v5630 = vld [vmem:[#allocation13 + $0x148] sm:$0xff]
        %v5631 = vld [vmem:[#allocation13 + $0x150] sm:$0xff]
        %v5632 = vld [vmem:[#allocation13 + $0x158] sm:$0xff]
        %v5633 = vld [vmem:[#allocation13 + $0x160] sm:$0xff]
        %v5634 = vld [vmem:[#allocation13 + $0x168] sm:$0xff]
        %v5635 = vld [vmem:[#allocation13 + $0x170] sm:$0xff]
        %v5636 = vld [vmem:[#allocation13 + $0x178] sm:$0xff]
        %v5637 = vld [vmem:[#allocation13 + $0x180] sm:$0xff]
        %v5638 = vld [vmem:[#allocation13 + $0x188] sm:$0xff]
        %v5639 = vld [vmem:[#allocation13 + $0x190] sm:$0xff]
        %v5640 = vld [vmem:[#allocation13 + $0x198] sm:$0xff]
        %v5641 = vld [vmem:[#allocation13 + $0x1a0] sm:$0xff]
        %v5642 = vld [vmem:[#allocation13 + $0x1a8] sm:$0xff]
        %v5643 = vld [vmem:[#allocation13 + $0x1b0] sm:$0xff]
        %v5644 = vld [vmem:[#allocation13 + $0x1b8] sm:$0xff]
        %v5645 = vld [vmem:[#allocation13 + $0x1c0] sm:$0xff]
        %v5646 = vld [vmem:[#allocation13 + $0x1c8] sm:$0xff]
        %v5647 = vld [vmem:[#allocation13 + $0x1d0] sm:$0xff]
        %v5648 = vld [vmem:[#allocation13 + $0x1d8] sm:$0xff]
        %v5649 = vld [vmem:[#allocation13 + $0x1e0] sm:$0xff]
        %v5650 = vld [vmem:[#allocation13 + $0x1e8] sm:$0xff]
        %v5651 = vld [vmem:[#allocation13 + $0x1f0] sm:$0xff]
        %v5652 = vld [vmem:[#allocation13 + $0x1f8] sm:$0xff]
        %v5653 = vand.u32 %v5651, 4294901760
        %5654 = vmatpush.msra.mxu0 %v5653
        %v5655 = vand.u32 %v5649, 4294901760
        %5656 = vmatpush.msra.mxu0 %v5655
        %v5657 = vand.u32 %v5647, 4294901760
        %5658 = vmatpush.msra.mxu0 %v5657
        %v5659 = vand.u32 %v5645, 4294901760
        %5660 = vmatpush.msra.mxu0 %v5659
        %v5661 = vand.u32 %v5643, 4294901760
        %5662 = vmatpush.msra.mxu0 %v5661
        %v5663 = vand.u32 %v5641, 4294901760
        %5664 = vmatpush.msra.mxu0 %v5663
        %v5665 = vand.u32 %v5639, 4294901760
        %5666 = vmatpush.msra.mxu0 %v5665
        %v5667 = vand.u32 %v5637, 4294901760
        %5668 = vmatpush.msra.mxu0 %v5667
        %v5669 = vand.u32 %v5635, 4294901760
        %5670 = vmatpush.msra.mxu0 %v5669
        %v5671 = vand.u32 %v5633, 4294901760
        %5672 = vmatpush.msra.mxu0 %v5671
        %v5673 = vand.u32 %v5631, 4294901760
        %5674 = vmatpush.msra.mxu0 %v5673
        %v5675 = vand.u32 %v5629, 4294901760
        %5676 = vmatpush.msra.mxu0 %v5675
        %v5677 = vand.u32 %v5627, 4294901760
        %5678 = vmatpush.msra.mxu0 %v5677
        %v5679 = vand.u32 %v5625, 4294901760
        %5680 = vmatpush.msra.mxu0 %v5679
        %v5681 = vand.u32 %v5623, 4294901760
        %5682 = vmatpush.msra.mxu0 %v5681
        %v5683 = vand.u32 %v5621, 4294901760
        %5684 = vmatpush.msra.mxu0 %v5683
        %v5685 = vand.u32 %v5619, 4294901760
        %v5686 = vsub.f32 %v5619, %v5685
        %v5687 = vand.u32 %v5686, 4294901760
        %v5688 = vsub.f32 %v5686, %v5687
        %v5689 = vand.u32 %v5688, 4294901760
        %5690 = vmatmul.f32.gmra.mxu0 %v5689
        %v5691 = vpop.f32.mrf.mxu0
        %v5692 = vadd.f32 0.0, %v5691
        %5693 = vdwg.mxu0
        %v5694 = vand.u32 %v5651, 4294901760
        %v5695 = vsub.f32 %v5651, %v5694
        %v5696 = vand.u32 %v5695, 4294901760
        %v5697 = vsub.f32 %v5695, %v5696
        %v5698 = vand.u32 %v5697, 4294901760
        %5699 = vmatpush.msra.mxu0 %v5698
        %v5700 = vand.u32 %v5649, 4294901760
        %v5701 = vsub.f32 %v5649, %v5700
        %v5702 = vand.u32 %v5701, 4294901760
        %v5703 = vsub.f32 %v5701, %v5702
        %v5704 = vand.u32 %v5703, 4294901760
        %5705 = vmatpush.msra.mxu0 %v5704
        %v5706 = vand.u32 %v5647, 4294901760
        %v5707 = vsub.f32 %v5647, %v5706
        %v5708 = vand.u32 %v5707, 4294901760
        %v5709 = vsub.f32 %v5707, %v5708
        %v5710 = vand.u32 %v5709, 4294901760
        %5711 = vmatpush.msra.mxu0 %v5710
        %v5712 = vand.u32 %v5645, 4294901760
        %v5713 = vsub.f32 %v5645, %v5712
        %v5714 = vand.u32 %v5713, 4294901760
        %v5715 = vsub.f32 %v5713, %v5714
        %v5716 = vand.u32 %v5715, 4294901760
        %5717 = vmatpush.msra.mxu0 %v5716
        %v5718 = vand.u32 %v5643, 4294901760
        %v5719 = vsub.f32 %v5643, %v5718
        %v5720 = vand.u32 %v5719, 4294901760
        %v5721 = vsub.f32 %v5719, %v5720
        %v5722 = vand.u32 %v5721, 4294901760
        %5723 = vmatpush.msra.mxu0 %v5722
        %v5724 = vand.u32 %v5641, 4294901760
        %v5725 = vsub.f32 %v5641, %v5724
        %v5726 = vand.u32 %v5725, 4294901760
        %v5727 = vsub.f32 %v5725, %v5726
        %v5728 = vand.u32 %v5727, 4294901760
        %5729 = vmatpush.msra.mxu0 %v5728
        %v5730 = vand.u32 %v5639, 4294901760
        %v5731 = vsub.f32 %v5639, %v5730
        %v5732 = vand.u32 %v5731, 4294901760
        %v5733 = vsub.f32 %v5731, %v5732
        %v5734 = vand.u32 %v5733, 4294901760
        %5735 = vmatpush.msra.mxu0 %v5734
        %v5736 = vand.u32 %v5637, 4294901760
        %v5737 = vsub.f32 %v5637, %v5736
        %v5738 = vand.u32 %v5737, 4294901760
        %v5739 = vsub.f32 %v5737, %v5738
        %v5740 = vand.u32 %v5739, 4294901760
        %5741 = vmatpush.msra.mxu0 %v5740
        %v5742 = vand.u32 %v5635, 4294901760
        %v5743 = vsub.f32 %v5635, %v5742
        %v5744 = vand.u32 %v5743, 4294901760
        %v5745 = vsub.f32 %v5743, %v5744
        %v5746 = vand.u32 %v5745, 4294901760
        %5747 = vmatpush.msra.mxu0 %v5746
        %v5748 = vand.u32 %v5633, 4294901760
        %v5749 = vsub.f32 %v5633, %v5748
        %v5750 = vand.u32 %v5749, 4294901760
        %v5751 = vsub.f32 %v5749, %v5750
        %v5752 = vand.u32 %v5751, 4294901760
        %5753 = vmatpush.msra.mxu0 %v5752
        %v5754 = vand.u32 %v5631, 4294901760
        %v5755 = vsub.f32 %v5631, %v5754
        %v5756 = vand.u32 %v5755, 4294901760
        %v5757 = vsub.f32 %v5755, %v5756
        %v5758 = vand.u32 %v5757, 4294901760
        %5759 = vmatpush.msra.mxu0 %v5758
        %v5760 = vand.u32 %v5629, 4294901760
        %v5761 = vsub.f32 %v5629, %v5760
        %v5762 = vand.u32 %v5761, 4294901760
        %v5763 = vsub.f32 %v5761, %v5762
        %v5764 = vand.u32 %v5763, 4294901760
        %5765 = vmatpush.msra.mxu0 %v5764
        %v5766 = vand.u32 %v5627, 4294901760
        %v5767 = vsub.f32 %v5627, %v5766
        %v5768 = vand.u32 %v5767, 4294901760
        %v5769 = vsub.f32 %v5767, %v5768
        %v5770 = vand.u32 %v5769, 4294901760
        %5771 = vmatpush.msra.mxu0 %v5770
        %v5772 = vand.u32 %v5625, 4294901760
        %v5773 = vsub.f32 %v5625, %v5772
        %v5774 = vand.u32 %v5773, 4294901760
        %v5775 = vsub.f32 %v5773, %v5774
        %v5776 = vand.u32 %v5775, 4294901760
        %5777 = vmatpush.msra.mxu0 %v5776
        %v5778 = vand.u32 %v5623, 4294901760
        %v5779 = vsub.f32 %v5623, %v5778
        %v5780 = vand.u32 %v5779, 4294901760
        %v5781 = vsub.f32 %v5779, %v5780
        %v5782 = vand.u32 %v5781, 4294901760
        %5783 = vmatpush.msra.mxu0 %v5782
        %v5784 = vand.u32 %v5621, 4294901760
        %v5785 = vsub.f32 %v5621, %v5784
        %v5786 = vand.u32 %v5785, 4294901760
        %v5787 = vsub.f32 %v5785, %v5786
        %v5788 = vand.u32 %v5787, 4294901760
        %5789 = vmatpush.msra.mxu0 %v5788
        %v5790 = vand.u32 %v5619, 4294901760
        %5791 = vmatmul.f32.gmra.mxu0 %v5790
        %v5792 = vpop.f32.mrf.mxu0
        %v5793 = vadd.f32 %v5692, %v5792
        %5794 = vdwg.mxu0
        %v5795 = vand.u32 %v5651, 4294901760
        %v5796 = vsub.f32 %v5651, %v5795
        %5797 = vmatpush.msra.mxu0 %v5796
        %v5798 = vand.u32 %v5649, 4294901760
        %v5799 = vsub.f32 %v5649, %v5798
        %5800 = vmatpush.msra.mxu0 %v5799
        %v5801 = vand.u32 %v5647, 4294901760
        %v5802 = vsub.f32 %v5647, %v5801
        %5803 = vmatpush.msra.mxu0 %v5802
        %v5804 = vand.u32 %v5645, 4294901760
        %v5805 = vsub.f32 %v5645, %v5804
        %5806 = vmatpush.msra.mxu0 %v5805
        %v5807 = vand.u32 %v5643, 4294901760
        %v5808 = vsub.f32 %v5643, %v5807
        %5809 = vmatpush.msra.mxu0 %v5808
        %v5810 = vand.u32 %v5641, 4294901760
        %v5811 = vsub.f32 %v5641, %v5810
        %5812 = vmatpush.msra.mxu0 %v5811
        %v5813 = vand.u32 %v5639, 4294901760
        %v5814 = vsub.f32 %v5639, %v5813
        %5815 = vmatpush.msra.mxu0 %v5814
        %v5816 = vand.u32 %v5637, 4294901760
        %v5817 = vsub.f32 %v5637, %v5816
        %5818 = vmatpush.msra.mxu0 %v5817
        %v5819 = vand.u32 %v5635, 4294901760
        %v5820 = vsub.f32 %v5635, %v5819
        %5821 = vmatpush.msra.mxu0 %v5820
        %v5822 = vand.u32 %v5633, 4294901760
        %v5823 = vsub.f32 %v5633, %v5822
        %5824 = vmatpush.msra.mxu0 %v5823
        %v5825 = vand.u32 %v5631, 4294901760
        %v5826 = vsub.f32 %v5631, %v5825
        %5827 = vmatpush.msra.mxu0 %v5826
        %v5828 = vand.u32 %v5629, 4294901760
        %v5829 = vsub.f32 %v5629, %v5828
        %5830 = vmatpush.msra.mxu0 %v5829
        %v5831 = vand.u32 %v5627, 4294901760
        %v5832 = vsub.f32 %v5627, %v5831
        %5833 = vmatpush.msra.mxu0 %v5832
        %v5834 = vand.u32 %v5625, 4294901760
        %v5835 = vsub.f32 %v5625, %v5834
        %5836 = vmatpush.msra.mxu0 %v5835
        %v5837 = vand.u32 %v5623, 4294901760
        %v5838 = vsub.f32 %v5623, %v5837
        %5839 = vmatpush.msra.mxu0 %v5838
        %v5840 = vand.u32 %v5621, 4294901760
        %v5841 = vsub.f32 %v5621, %v5840
        %5842 = vmatpush.msra.mxu0 %v5841
        %v5843 = vand.u32 %v5619, 4294901760
        %v5844 = vsub.f32 %v5619, %v5843
        %5845 = vmatmul.f32.gmra.mxu0 %v5844
        %v5846 = vpop.f32.mrf.mxu0
        %v5847 = vadd.f32 %v5793, %v5846
        %5848 = vdwg.mxu0
        %v5849 = vand.u32 %v5651, 4294901760
        %5850 = vmatpush.msra.mxu0 %v5849
        %v5851 = vand.u32 %v5649, 4294901760
        %5852 = vmatpush.msra.mxu0 %v5851
        %v5853 = vand.u32 %v5647, 4294901760
        %5854 = vmatpush.msra.mxu0 %v5853
        %v5855 = vand.u32 %v5645, 4294901760
        %5856 = vmatpush.msra.mxu0 %v5855
        %v5857 = vand.u32 %v5643, 4294901760
        %5858 = vmatpush.msra.mxu0 %v5857
        %v5859 = vand.u32 %v5641, 4294901760
        %5860 = vmatpush.msra.mxu0 %v5859
        %v5861 = vand.u32 %v5639, 4294901760
        %5862 = vmatpush.msra.mxu0 %v5861
        %v5863 = vand.u32 %v5637, 4294901760
        %5864 = vmatpush.msra.mxu0 %v5863
        %v5865 = vand.u32 %v5635, 4294901760
        %5866 = vmatpush.msra.mxu0 %v5865
        %v5867 = vand.u32 %v5633, 4294901760
        %5868 = vmatpush.msra.mxu0 %v5867
        %v5869 = vand.u32 %v5631, 4294901760
        %5870 = vmatpush.msra.mxu0 %v5869
        %v5871 = vand.u32 %v5629, 4294901760
        %5872 = vmatpush.msra.mxu0 %v5871
        %v5873 = vand.u32 %v5627, 4294901760
        %5874 = vmatpush.msra.mxu0 %v5873
        %v5875 = vand.u32 %v5625, 4294901760
        %5876 = vmatpush.msra.mxu0 %v5875
        %v5877 = vand.u32 %v5623, 4294901760
        %5878 = vmatpush.msra.mxu0 %v5877
        %v5879 = vand.u32 %v5621, 4294901760
        %5880 = vmatpush.msra.mxu0 %v5879
        %v5881 = vand.u32 %v5619, 4294901760
        %v5882 = vsub.f32 %v5619, %v5881
        %v5883 = vand.u32 %v5882, 4294901760
        %5884 = vmatmul.f32.gmra.mxu0 %v5883
        %v5885 = vpop.f32.mrf.mxu0
        %v5886 = vadd.f32 %v5847, %v5885
        %5887 = vdwg.mxu0
        %v5888 = vand.u32 %v5651, 4294901760
        %v5889 = vsub.f32 %v5651, %v5888
        %v5890 = vand.u32 %v5889, 4294901760
        %5891 = vmatpush.msra.mxu0 %v5890
        %v5892 = vand.u32 %v5649, 4294901760
        %v5893 = vsub.f32 %v5649, %v5892
        %v5894 = vand.u32 %v5893, 4294901760
        %5895 = vmatpush.msra.mxu0 %v5894
        %v5896 = vand.u32 %v5647, 4294901760
        %v5897 = vsub.f32 %v5647, %v5896
        %v5898 = vand.u32 %v5897, 4294901760
        %5899 = vmatpush.msra.mxu0 %v5898
        %v5900 = vand.u32 %v5645, 4294901760
        %v5901 = vsub.f32 %v5645, %v5900
        %v5902 = vand.u32 %v5901, 4294901760
        %5903 = vmatpush.msra.mxu0 %v5902
        %v5904 = vand.u32 %v5643, 4294901760
        %v5905 = vsub.f32 %v5643, %v5904
        %v5906 = vand.u32 %v5905, 4294901760
        %5907 = vmatpush.msra.mxu0 %v5906
        %v5908 = vand.u32 %v5641, 4294901760
        %v5909 = vsub.f32 %v5641, %v5908
        %v5910 = vand.u32 %v5909, 4294901760
        %5911 = vmatpush.msra.mxu0 %v5910
        %v5912 = vand.u32 %v5639, 4294901760
        %v5913 = vsub.f32 %v5639, %v5912
        %v5914 = vand.u32 %v5913, 4294901760
        %5915 = vmatpush.msra.mxu0 %v5914
        %v5916 = vand.u32 %v5637, 4294901760
        %v5917 = vsub.f32 %v5637, %v5916
        %v5918 = vand.u32 %v5917, 4294901760
        %5919 = vmatpush.msra.mxu0 %v5918
        %v5920 = vand.u32 %v5635, 4294901760
        %v5921 = vsub.f32 %v5635, %v5920
        %v5922 = vand.u32 %v5921, 4294901760
        %5923 = vmatpush.msra.mxu0 %v5922
        %v5924 = vand.u32 %v5633, 4294901760
        %v5925 = vsub.f32 %v5633, %v5924
        %v5926 = vand.u32 %v5925, 4294901760
        %5927 = vmatpush.msra.mxu0 %v5926
        %v5928 = vand.u32 %v5631, 4294901760
        %v5929 = vsub.f32 %v5631, %v5928
        %v5930 = vand.u32 %v5929, 4294901760
        %5931 = vmatpush.msra.mxu0 %v5930
        %v5932 = vand.u32 %v5629, 4294901760
        %v5933 = vsub.f32 %v5629, %v5932
        %v5934 = vand.u32 %v5933, 4294901760
        %5935 = vmatpush.msra.mxu0 %v5934
        %v5936 = vand.u32 %v5627, 4294901760
        %v5937 = vsub.f32 %v5627, %v5936
        %v5938 = vand.u32 %v5937, 4294901760
        %5939 = vmatpush.msra.mxu0 %v5938
        %v5940 = vand.u32 %v5625, 4294901760
        %v5941 = vsub.f32 %v5625, %v5940
        %v5942 = vand.u32 %v5941, 4294901760
        %5943 = vmatpush.msra.mxu0 %v5942
        %v5944 = vand.u32 %v5623, 4294901760
        %v5945 = vsub.f32 %v5623, %v5944
        %v5946 = vand.u32 %v5945, 4294901760
        %5947 = vmatpush.msra.mxu0 %v5946
        %v5948 = vand.u32 %v5621, 4294901760
        %v5949 = vsub.f32 %v5621, %v5948
        %v5950 = vand.u32 %v5949, 4294901760
        %5951 = vmatpush.msra.mxu0 %v5950
        %v5952 = vand.u32 %v5619, 4294901760
        %5953 = vmatmul.f32.gmra.mxu0 %v5952
        %v5954 = vpop.f32.mrf.mxu0
        %v5955 = vadd.f32 %v5886, %v5954
        %5956 = vdwg.mxu0
        %v5957 = vand.u32 %v5651, 4294901760
        %5958 = vmatpush.msra.mxu0 %v5957
        %v5959 = vand.u32 %v5649, 4294901760
        %5960 = vmatpush.msra.mxu0 %v5959
        %v5961 = vand.u32 %v5647, 4294901760
        %5962 = vmatpush.msra.mxu0 %v5961
        %v5963 = vand.u32 %v5645, 4294901760
        %5964 = vmatpush.msra.mxu0 %v5963
        %v5965 = vand.u32 %v5643, 4294901760
        %5966 = vmatpush.msra.mxu0 %v5965
        %v5967 = vand.u32 %v5641, 4294901760
        %5968 = vmatpush.msra.mxu0 %v5967
        %v5969 = vand.u32 %v5639, 4294901760
        %5970 = vmatpush.msra.mxu0 %v5969
        %v5971 = vand.u32 %v5637, 4294901760
        %5972 = vmatpush.msra.mxu0 %v5971
        %v5973 = vand.u32 %v5635, 4294901760
        %5974 = vmatpush.msra.mxu0 %v5973
        %v5975 = vand.u32 %v5633, 4294901760
        %5976 = vmatpush.msra.mxu0 %v5975
        %v5977 = vand.u32 %v5631, 4294901760
        %5978 = vmatpush.msra.mxu0 %v5977
        %v5979 = vand.u32 %v5629, 4294901760
        %5980 = vmatpush.msra.mxu0 %v5979
        %v5981 = vand.u32 %v5627, 4294901760
        %5982 = vmatpush.msra.mxu0 %v5981
        %v5983 = vand.u32 %v5625, 4294901760
        %5984 = vmatpush.msra.mxu0 %v5983
        %v5985 = vand.u32 %v5623, 4294901760
        %5986 = vmatpush.msra.mxu0 %v5985
        %v5987 = vand.u32 %v5621, 4294901760
        %5988 = vmatpush.msra.mxu0 %v5987
        %v5989 = vand.u32 %v5619, 4294901760
        %5990 = vmatmul.f32.gmra.mxu0 %v5989
        %v5991 = vpop.f32.mrf.mxu0
        %v5992 = vadd.f32 %v5955, %v5991
        %5993 = vdwg.mxu0
        %v5994 = vand.u32 %v5652, 4294901760
        %5995 = vmatpush.msra.mxu0 %v5994
        %v5996 = vand.u32 %v5650, 4294901760
        %5997 = vmatpush.msra.mxu0 %v5996
        %v5998 = vand.u32 %v5648, 4294901760
        %5999 = vmatpush.msra.mxu0 %v5998
        %v6000 = vand.u32 %v5646, 4294901760
        %6001 = vmatpush.msra.mxu0 %v6000
        %v6002 = vand.u32 %v5644, 4294901760
        %6003 = vmatpush.msra.mxu0 %v6002
        %v6004 = vand.u32 %v5642, 4294901760
        %6005 = vmatpush.msra.mxu0 %v6004
        %v6006 = vand.u32 %v5640, 4294901760
        %6007 = vmatpush.msra.mxu0 %v6006
        %v6008 = vand.u32 %v5638, 4294901760
        %6009 = vmatpush.msra.mxu0 %v6008
        %v6010 = vand.u32 %v5636, 4294901760
        %6011 = vmatpush.msra.mxu0 %v6010
        %v6012 = vand.u32 %v5634, 4294901760
        %6013 = vmatpush.msra.mxu0 %v6012
        %v6014 = vand.u32 %v5632, 4294901760
        %6015 = vmatpush.msra.mxu0 %v6014
        %v6016 = vand.u32 %v5630, 4294901760
        %6017 = vmatpush.msra.mxu0 %v6016
        %v6018 = vand.u32 %v5628, 4294901760
        %6019 = vmatpush.msra.mxu0 %v6018
        %v6020 = vand.u32 %v5626, 4294901760
        %6021 = vmatpush.msra.mxu0 %v6020
        %v6022 = vand.u32 %v5624, 4294901760
        %6023 = vmatpush.msra.mxu0 %v6022
        %v6024 = vand.u32 %v5622, 4294901760
        %6025 = vmatpush.msra.mxu0 %v6024
        %v6026 = vand.u32 %v5619, 4294901760
        %v6027 = vsub.f32 %v5619, %v6026
        %v6028 = vand.u32 %v6027, 4294901760
        %v6029 = vsub.f32 %v6027, %v6028
        %v6030 = vand.u32 %v6029, 4294901760
        %6031 = vmatmul.f32.gmra.mxu0 %v6030
        %v6032 = vpop.f32.mrf.mxu0
        %v6033 = vadd.f32 0.0, %v6032
        %6034 = vdwg.mxu0
        %v6035 = vand.u32 %v5652, 4294901760
        %v6036 = vsub.f32 %v5652, %v6035
        %v6037 = vand.u32 %v6036, 4294901760
        %v6038 = vsub.f32 %v6036, %v6037
        %v6039 = vand.u32 %v6038, 4294901760
        %6040 = vmatpush.msra.mxu0 %v6039
        %v6041 = vand.u32 %v5650, 4294901760
        %v6042 = vsub.f32 %v5650, %v6041
        %v6043 = vand.u32 %v6042, 4294901760
        %v6044 = vsub.f32 %v6042, %v6043
        %v6045 = vand.u32 %v6044, 4294901760
        %6046 = vmatpush.msra.mxu0 %v6045
        %v6047 = vand.u32 %v5648, 4294901760
        %v6048 = vsub.f32 %v5648, %v6047
        %v6049 = vand.u32 %v6048, 4294901760
        %v6050 = vsub.f32 %v6048, %v6049
        %v6051 = vand.u32 %v6050, 4294901760
        %6052 = vmatpush.msra.mxu0 %v6051
        %v6053 = vand.u32 %v5646, 4294901760
        %v6054 = vsub.f32 %v5646, %v6053
        %v6055 = vand.u32 %v6054, 4294901760
        %v6056 = vsub.f32 %v6054, %v6055
        %v6057 = vand.u32 %v6056, 4294901760
        %6058 = vmatpush.msra.mxu0 %v6057
        %v6059 = vand.u32 %v5644, 4294901760
        %v6060 = vsub.f32 %v5644, %v6059
        %v6061 = vand.u32 %v6060, 4294901760
        %v6062 = vsub.f32 %v6060, %v6061
        %v6063 = vand.u32 %v6062, 4294901760
        %6064 = vmatpush.msra.mxu0 %v6063
        %v6065 = vand.u32 %v5642, 4294901760
        %v6066 = vsub.f32 %v5642, %v6065
        %v6067 = vand.u32 %v6066, 4294901760
        %v6068 = vsub.f32 %v6066, %v6067
        %v6069 = vand.u32 %v6068, 4294901760
        %6070 = vmatpush.msra.mxu0 %v6069
        %v6071 = vand.u32 %v5640, 4294901760
        %v6072 = vsub.f32 %v5640, %v6071
        %v6073 = vand.u32 %v6072, 4294901760
        %v6074 = vsub.f32 %v6072, %v6073
        %v6075 = vand.u32 %v6074, 4294901760
        %6076 = vmatpush.msra.mxu0 %v6075
        %v6077 = vand.u32 %v5638, 4294901760
        %v6078 = vsub.f32 %v5638, %v6077
        %v6079 = vand.u32 %v6078, 4294901760
        %v6080 = vsub.f32 %v6078, %v6079
        %v6081 = vand.u32 %v6080, 4294901760
        %6082 = vmatpush.msra.mxu0 %v6081
        %v6083 = vand.u32 %v5636, 4294901760
        %v6084 = vsub.f32 %v5636, %v6083
        %v6085 = vand.u32 %v6084, 4294901760
        %v6086 = vsub.f32 %v6084, %v6085
        %v6087 = vand.u32 %v6086, 4294901760
        %6088 = vmatpush.msra.mxu0 %v6087
        %v6089 = vand.u32 %v5634, 4294901760
        %v6090 = vsub.f32 %v5634, %v6089
        %v6091 = vand.u32 %v6090, 4294901760
        %v6092 = vsub.f32 %v6090, %v6091
        %v6093 = vand.u32 %v6092, 4294901760
        %6094 = vmatpush.msra.mxu0 %v6093
        %v6095 = vand.u32 %v5632, 4294901760
        %v6096 = vsub.f32 %v5632, %v6095
        %v6097 = vand.u32 %v6096, 4294901760
        %v6098 = vsub.f32 %v6096, %v6097
        %v6099 = vand.u32 %v6098, 4294901760
        %6100 = vmatpush.msra.mxu0 %v6099
        %v6101 = vand.u32 %v5630, 4294901760
        %v6102 = vsub.f32 %v5630, %v6101
        %v6103 = vand.u32 %v6102, 4294901760
        %v6104 = vsub.f32 %v6102, %v6103
        %v6105 = vand.u32 %v6104, 4294901760
        %6106 = vmatpush.msra.mxu0 %v6105
        %v6107 = vand.u32 %v5628, 4294901760
        %v6108 = vsub.f32 %v5628, %v6107
        %v6109 = vand.u32 %v6108, 4294901760
        %v6110 = vsub.f32 %v6108, %v6109
        %v6111 = vand.u32 %v6110, 4294901760
        %6112 = vmatpush.msra.mxu0 %v6111
        %v6113 = vand.u32 %v5626, 4294901760
        %v6114 = vsub.f32 %v5626, %v6113
        %v6115 = vand.u32 %v6114, 4294901760
        %v6116 = vsub.f32 %v6114, %v6115
        %v6117 = vand.u32 %v6116, 4294901760
        %6118 = vmatpush.msra.mxu0 %v6117
        %v6119 = vand.u32 %v5624, 4294901760
        %v6120 = vsub.f32 %v5624, %v6119
        %v6121 = vand.u32 %v6120, 4294901760
        %v6122 = vsub.f32 %v6120, %v6121
        %v6123 = vand.u32 %v6122, 4294901760
        %6124 = vmatpush.msra.mxu0 %v6123
        %v6125 = vand.u32 %v5622, 4294901760
        %v6126 = vsub.f32 %v5622, %v6125
        %v6127 = vand.u32 %v6126, 4294901760
        %v6128 = vsub.f32 %v6126, %v6127
        %v6129 = vand.u32 %v6128, 4294901760
        %6130 = vmatpush.msra.mxu0 %v6129
        %v6131 = vand.u32 %v5619, 4294901760
        %6132 = vmatmul.f32.gmra.mxu0 %v6131
        %v6133 = vpop.f32.mrf.mxu0
        %v6134 = vadd.f32 %v6033, %v6133
        %6135 = vdwg.mxu0
        %v6136 = vand.u32 %v5652, 4294901760
        %v6137 = vsub.f32 %v5652, %v6136
        %6138 = vmatpush.msra.mxu0 %v6137
        %v6139 = vand.u32 %v5650, 4294901760
        %v6140 = vsub.f32 %v5650, %v6139
        %6141 = vmatpush.msra.mxu0 %v6140
        %v6142 = vand.u32 %v5648, 4294901760
        %v6143 = vsub.f32 %v5648, %v6142
        %6144 = vmatpush.msra.mxu0 %v6143
        %v6145 = vand.u32 %v5646, 4294901760
        %v6146 = vsub.f32 %v5646, %v6145
        %6147 = vmatpush.msra.mxu0 %v6146
        %v6148 = vand.u32 %v5644, 4294901760
        %v6149 = vsub.f32 %v5644, %v6148
        %6150 = vmatpush.msra.mxu0 %v6149
        %v6151 = vand.u32 %v5642, 4294901760
        %v6152 = vsub.f32 %v5642, %v6151
        %6153 = vmatpush.msra.mxu0 %v6152
        %v6154 = vand.u32 %v5640, 4294901760
        %v6155 = vsub.f32 %v5640, %v6154
        %6156 = vmatpush.msra.mxu0 %v6155
        %v6157 = vand.u32 %v5638, 4294901760
        %v6158 = vsub.f32 %v5638, %v6157
        %6159 = vmatpush.msra.mxu0 %v6158
        %v6160 = vand.u32 %v5636, 4294901760
        %v6161 = vsub.f32 %v5636, %v6160
        %6162 = vmatpush.msra.mxu0 %v6161
        %v6163 = vand.u32 %v5634, 4294901760
        %v6164 = vsub.f32 %v5634, %v6163
        %6165 = vmatpush.msra.mxu0 %v6164
        %v6166 = vand.u32 %v5632, 4294901760
        %v6167 = vsub.f32 %v5632, %v6166
        %6168 = vmatpush.msra.mxu0 %v6167
        %v6169 = vand.u32 %v5630, 4294901760
        %v6170 = vsub.f32 %v5630, %v6169
        %6171 = vmatpush.msra.mxu0 %v6170
        %v6172 = vand.u32 %v5628, 4294901760
        %v6173 = vsub.f32 %v5628, %v6172
        %6174 = vmatpush.msra.mxu0 %v6173
        %v6175 = vand.u32 %v5626, 4294901760
        %v6176 = vsub.f32 %v5626, %v6175
        %6177 = vmatpush.msra.mxu0 %v6176
        %v6178 = vand.u32 %v5624, 4294901760
        %v6179 = vsub.f32 %v5624, %v6178
        %6180 = vmatpush.msra.mxu0 %v6179
        %v6181 = vand.u32 %v5622, 4294901760
        %v6182 = vsub.f32 %v5622, %v6181
        %6183 = vmatpush.msra.mxu0 %v6182
        %v6184 = vand.u32 %v5619, 4294901760
        %v6185 = vsub.f32 %v5619, %v6184
        %6186 = vmatmul.f32.gmra.mxu0 %v6185
        %v6187 = vpop.f32.mrf.mxu0
        %v6188 = vadd.f32 %v6134, %v6187
        %6189 = vdwg.mxu0
        %v6190 = vand.u32 %v5652, 4294901760
        %6191 = vmatpush.msra.mxu0 %v6190
        %v6192 = vand.u32 %v5650, 4294901760
        %6193 = vmatpush.msra.mxu0 %v6192
        %v6194 = vand.u32 %v5648, 4294901760
        %6195 = vmatpush.msra.mxu0 %v6194
        %v6196 = vand.u32 %v5646, 4294901760
        %6197 = vmatpush.msra.mxu0 %v6196
        %v6198 = vand.u32 %v5644, 4294901760
        %6199 = vmatpush.msra.mxu0 %v6198
        %v6200 = vand.u32 %v5642, 4294901760
        %6201 = vmatpush.msra.mxu0 %v6200
        %v6202 = vand.u32 %v5640, 4294901760
        %6203 = vmatpush.msra.mxu0 %v6202
        %v6204 = vand.u32 %v5638, 4294901760
        %6205 = vmatpush.msra.mxu0 %v6204
        %v6206 = vand.u32 %v5636, 4294901760
        %6207 = vmatpush.msra.mxu0 %v6206
        %v6208 = vand.u32 %v5634, 4294901760
        %6209 = vmatpush.msra.mxu0 %v6208
        %v6210 = vand.u32 %v5632, 4294901760
        %6211 = vmatpush.msra.mxu0 %v6210
        %v6212 = vand.u32 %v5630, 4294901760
        %6213 = vmatpush.msra.mxu0 %v6212
        %v6214 = vand.u32 %v5628, 4294901760
        %6215 = vmatpush.msra.mxu0 %v6214
        %v6216 = vand.u32 %v5626, 4294901760
        %6217 = vmatpush.msra.mxu0 %v6216
        %v6218 = vand.u32 %v5624, 4294901760
        %6219 = vmatpush.msra.mxu0 %v6218
        %v6220 = vand.u32 %v5622, 4294901760
        %6221 = vmatpush.msra.mxu0 %v6220
        %v6222 = vand.u32 %v5619, 4294901760
        %v6223 = vsub.f32 %v5619, %v6222
        %v6224 = vand.u32 %v6223, 4294901760
        %6225 = vmatmul.f32.gmra.mxu0 %v6224
        %v6226 = vpop.f32.mrf.mxu0
        %v6227 = vadd.f32 %v6188, %v6226
        %6228 = vdwg.mxu0
        %v6229 = vand.u32 %v5652, 4294901760
        %v6230 = vsub.f32 %v5652, %v6229
        %v6231 = vand.u32 %v6230, 4294901760
        %6232 = vmatpush.msra.mxu0 %v6231
        %v6233 = vand.u32 %v5650, 4294901760
        %v6234 = vsub.f32 %v5650, %v6233
        %v6235 = vand.u32 %v6234, 4294901760
        %6236 = vmatpush.msra.mxu0 %v6235
        %v6237 = vand.u32 %v5648, 4294901760
        %v6238 = vsub.f32 %v5648, %v6237
        %v6239 = vand.u32 %v6238, 4294901760
        %6240 = vmatpush.msra.mxu0 %v6239
        %v6241 = vand.u32 %v5646, 4294901760
        %v6242 = vsub.f32 %v5646, %v6241
        %v6243 = vand.u32 %v6242, 4294901760
        %6244 = vmatpush.msra.mxu0 %v6243
        %v6245 = vand.u32 %v5644, 4294901760
        %v6246 = vsub.f32 %v5644, %v6245
        %v6247 = vand.u32 %v6246, 4294901760
        %6248 = vmatpush.msra.mxu0 %v6247
        %v6249 = vand.u32 %v5642, 4294901760
        %v6250 = vsub.f32 %v5642, %v6249
        %v6251 = vand.u32 %v6250, 4294901760
        %6252 = vmatpush.msra.mxu0 %v6251
        %v6253 = vand.u32 %v5640, 4294901760
        %v6254 = vsub.f32 %v5640, %v6253
        %v6255 = vand.u32 %v6254, 4294901760
        %6256 = vmatpush.msra.mxu0 %v6255
        %v6257 = vand.u32 %v5638, 4294901760
        %v6258 = vsub.f32 %v5638, %v6257
        %v6259 = vand.u32 %v6258, 4294901760
        %6260 = vmatpush.msra.mxu0 %v6259
        %v6261 = vand.u32 %v5636, 4294901760
        %v6262 = vsub.f32 %v5636, %v6261
        %v6263 = vand.u32 %v6262, 4294901760
        %6264 = vmatpush.msra.mxu0 %v6263
        %v6265 = vand.u32 %v5634, 4294901760
        %v6266 = vsub.f32 %v5634, %v6265
        %v6267 = vand.u32 %v6266, 4294901760
        %6268 = vmatpush.msra.mxu0 %v6267
        %v6269 = vand.u32 %v5632, 4294901760
        %v6270 = vsub.f32 %v5632, %v6269
        %v6271 = vand.u32 %v6270, 4294901760
        %6272 = vmatpush.msra.mxu0 %v6271
        %v6273 = vand.u32 %v5630, 4294901760
        %v6274 = vsub.f32 %v5630, %v6273
        %v6275 = vand.u32 %v6274, 4294901760
        %6276 = vmatpush.msra.mxu0 %v6275
        %v6277 = vand.u32 %v5628, 4294901760
        %v6278 = vsub.f32 %v5628, %v6277
        %v6279 = vand.u32 %v6278, 4294901760
        %6280 = vmatpush.msra.mxu0 %v6279
        %v6281 = vand.u32 %v5626, 4294901760
        %v6282 = vsub.f32 %v5626, %v6281
        %v6283 = vand.u32 %v6282, 4294901760
        %6284 = vmatpush.msra.mxu0 %v6283
        %v6285 = vand.u32 %v5624, 4294901760
        %v6286 = vsub.f32 %v5624, %v6285
        %v6287 = vand.u32 %v6286, 4294901760
        %6288 = vmatpush.msra.mxu0 %v6287
        %v6289 = vand.u32 %v5622, 4294901760
        %v6290 = vsub.f32 %v5622, %v6289
        %v6291 = vand.u32 %v6290, 4294901760
        %6292 = vmatpush.msra.mxu0 %v6291
        %v6293 = vand.u32 %v5619, 4294901760
        %6294 = vmatmul.f32.gmra.mxu0 %v6293
        %v6295 = vpop.f32.mrf.mxu0
        %v6296 = vadd.f32 %v6227, %v6295
        %6297 = vdwg.mxu0
        %v6298 = vand.u32 %v5652, 4294901760
        %6299 = vmatpush.msra.mxu0 %v6298
        %v6300 = vand.u32 %v5650, 4294901760
        %6301 = vmatpush.msra.mxu0 %v6300
        %v6302 = vand.u32 %v5648, 4294901760
        %6303 = vmatpush.msra.mxu0 %v6302
        %v6304 = vand.u32 %v5646, 4294901760
        %6305 = vmatpush.msra.mxu0 %v6304
        %v6306 = vand.u32 %v5644, 4294901760
        %6307 = vmatpush.msra.mxu0 %v6306
        %v6308 = vand.u32 %v5642, 4294901760
        %6309 = vmatpush.msra.mxu0 %v6308
        %v6310 = vand.u32 %v5640, 4294901760
        %6311 = vmatpush.msra.mxu0 %v6310
        %v6312 = vand.u32 %v5638, 4294901760
        %6313 = vmatpush.msra.mxu0 %v6312
        %v6314 = vand.u32 %v5636, 4294901760
        %6315 = vmatpush.msra.mxu0 %v6314
        %v6316 = vand.u32 %v5634, 4294901760
        %6317 = vmatpush.msra.mxu0 %v6316
        %v6318 = vand.u32 %v5632, 4294901760
        %6319 = vmatpush.msra.mxu0 %v6318
        %v6320 = vand.u32 %v5630, 4294901760
        %6321 = vmatpush.msra.mxu0 %v6320
        %v6322 = vand.u32 %v5628, 4294901760
        %6323 = vmatpush.msra.mxu0 %v6322
        %v6324 = vand.u32 %v5626, 4294901760
        %6325 = vmatpush.msra.mxu0 %v6324
        %v6326 = vand.u32 %v5624, 4294901760
        %6327 = vmatpush.msra.mxu0 %v6326
        %v6328 = vand.u32 %v5622, 4294901760
        %6329 = vmatpush.msra.mxu0 %v6328
        %v6330 = vand.u32 %v5619, 4294901760
        %6331 = vmatmul.f32.gmra.mxu0 %v6330
        %v6332 = vpop.f32.mrf.mxu0
        %v6333 = vadd.f32 %v6296, %v6332
        %6334 = vdwg.mxu0
        %v6335 = vand.u32 %v5299, 4294901760
        %6336 = vmatpush.msra.mxu0 %v6335
        %v6337 = vand.u32 %v5297, 4294901760
        %6338 = vmatpush.msra.mxu0 %v6337
        %v6339 = vand.u32 %v5295, 4294901760
        %6340 = vmatpush.msra.mxu0 %v6339
        %v6341 = vand.u32 %v5293, 4294901760
        %6342 = vmatpush.msra.mxu0 %v6341
        %v6343 = vand.u32 %v5291, 4294901760
        %6344 = vmatpush.msra.mxu0 %v6343
        %v6345 = vand.u32 %v5289, 4294901760
        %6346 = vmatpush.msra.mxu0 %v6345
        %v6347 = vand.u32 %v5287, 4294901760
        %6348 = vmatpush.msra.mxu0 %v6347
        %v6349 = vand.u32 %v5285, 4294901760
        %6350 = vmatpush.msra.mxu0 %v6349
        %v6351 = vand.u32 %v5283, 4294901760
        %6352 = vmatpush.msra.mxu0 %v6351
        %v6353 = vand.u32 %v5281, 4294901760
        %6354 = vmatpush.msra.mxu0 %v6353
        %v6355 = vand.u32 %v5279, 4294901760
        %6356 = vmatpush.msra.mxu0 %v6355
        %v6357 = vand.u32 %v5277, 4294901760
        %6358 = vmatpush.msra.mxu0 %v6357
        %v6359 = vand.u32 %v5275, 4294901760
        %6360 = vmatpush.msra.mxu0 %v6359
        %v6361 = vand.u32 %v5273, 4294901760
        %6362 = vmatpush.msra.mxu0 %v6361
        %v6363 = vand.u32 %v5271, 4294901760
        %6364 = vmatpush.msra.mxu0 %v6363
        %v6365 = vand.u32 %v5269, 4294901760
        %6366 = vmatpush.msra.mxu0 %v6365
        %v6367 = vand.u32 %v5267, 4294901760
        %v6368 = vsub.f32 %v5267, %v6367
        %v6369 = vand.u32 %v6368, 4294901760
        %v6370 = vsub.f32 %v6368, %v6369
        %v6371 = vand.u32 %v6370, 4294901760
        %6372 = vmatmul.f32.gmra.mxu0 %v6371
        %v6373 = vpop.f32.mrf.mxu0
        %v6374 = vadd.f32 %v5992, %v6373
        %6375 = vdwg.mxu0
        %v6376 = vand.u32 %v5299, 4294901760
        %v6377 = vsub.f32 %v5299, %v6376
        %v6378 = vand.u32 %v6377, 4294901760
        %v6379 = vsub.f32 %v6377, %v6378
        %v6380 = vand.u32 %v6379, 4294901760
        %6381 = vmatpush.msra.mxu0 %v6380
        %v6382 = vand.u32 %v5297, 4294901760
        %v6383 = vsub.f32 %v5297, %v6382
        %v6384 = vand.u32 %v6383, 4294901760
        %v6385 = vsub.f32 %v6383, %v6384
        %v6386 = vand.u32 %v6385, 4294901760
        %6387 = vmatpush.msra.mxu0 %v6386
        %v6388 = vand.u32 %v5295, 4294901760
        %v6389 = vsub.f32 %v5295, %v6388
        %v6390 = vand.u32 %v6389, 4294901760
        %v6391 = vsub.f32 %v6389, %v6390
        %v6392 = vand.u32 %v6391, 4294901760
        %6393 = vmatpush.msra.mxu0 %v6392
        %v6394 = vand.u32 %v5293, 4294901760
        %v6395 = vsub.f32 %v5293, %v6394
        %v6396 = vand.u32 %v6395, 4294901760
        %v6397 = vsub.f32 %v6395, %v6396
        %v6398 = vand.u32 %v6397, 4294901760
        %6399 = vmatpush.msra.mxu0 %v6398
        %v6400 = vand.u32 %v5291, 4294901760
        %v6401 = vsub.f32 %v5291, %v6400
        %v6402 = vand.u32 %v6401, 4294901760
        %v6403 = vsub.f32 %v6401, %v6402
        %v6404 = vand.u32 %v6403, 4294901760
        %6405 = vmatpush.msra.mxu0 %v6404
        %v6406 = vand.u32 %v5289, 4294901760
        %v6407 = vsub.f32 %v5289, %v6406
        %v6408 = vand.u32 %v6407, 4294901760
        %v6409 = vsub.f32 %v6407, %v6408
        %v6410 = vand.u32 %v6409, 4294901760
        %6411 = vmatpush.msra.mxu0 %v6410
        %v6412 = vand.u32 %v5287, 4294901760
        %v6413 = vsub.f32 %v5287, %v6412
        %v6414 = vand.u32 %v6413, 4294901760
        %v6415 = vsub.f32 %v6413, %v6414
        %v6416 = vand.u32 %v6415, 4294901760
        %6417 = vmatpush.msra.mxu0 %v6416
        %v6418 = vand.u32 %v5285, 4294901760
        %v6419 = vsub.f32 %v5285, %v6418
        %v6420 = vand.u32 %v6419, 4294901760
        %v6421 = vsub.f32 %v6419, %v6420
        %v6422 = vand.u32 %v6421, 4294901760
        %6423 = vmatpush.msra.mxu0 %v6422
        %v6424 = vand.u32 %v5283, 4294901760
        %v6425 = vsub.f32 %v5283, %v6424
        %v6426 = vand.u32 %v6425, 4294901760
        %v6427 = vsub.f32 %v6425, %v6426
        %v6428 = vand.u32 %v6427, 4294901760
        %6429 = vmatpush.msra.mxu0 %v6428
        %v6430 = vand.u32 %v5281, 4294901760
        %v6431 = vsub.f32 %v5281, %v6430
        %v6432 = vand.u32 %v6431, 4294901760
        %v6433 = vsub.f32 %v6431, %v6432
        %v6434 = vand.u32 %v6433, 4294901760
        %6435 = vmatpush.msra.mxu0 %v6434
        %v6436 = vand.u32 %v5279, 4294901760
        %v6437 = vsub.f32 %v5279, %v6436
        %v6438 = vand.u32 %v6437, 4294901760
        %v6439 = vsub.f32 %v6437, %v6438
        %v6440 = vand.u32 %v6439, 4294901760
        %6441 = vmatpush.msra.mxu0 %v6440
        %v6442 = vand.u32 %v5277, 4294901760
        %v6443 = vsub.f32 %v5277, %v6442
        %v6444 = vand.u32 %v6443, 4294901760
        %v6445 = vsub.f32 %v6443, %v6444
        %v6446 = vand.u32 %v6445, 4294901760
        %6447 = vmatpush.msra.mxu0 %v6446
        %v6448 = vand.u32 %v5275, 4294901760
        %v6449 = vsub.f32 %v5275, %v6448
        %v6450 = vand.u32 %v6449, 4294901760
        %v6451 = vsub.f32 %v6449, %v6450
        %v6452 = vand.u32 %v6451, 4294901760
        %6453 = vmatpush.msra.mxu0 %v6452
        %v6454 = vand.u32 %v5273, 4294901760
        %v6455 = vsub.f32 %v5273, %v6454
        %v6456 = vand.u32 %v6455, 4294901760
        %v6457 = vsub.f32 %v6455, %v6456
        %v6458 = vand.u32 %v6457, 4294901760
        %6459 = vmatpush.msra.mxu0 %v6458
        %v6460 = vand.u32 %v5271, 4294901760
        %v6461 = vsub.f32 %v5271, %v6460
        %v6462 = vand.u32 %v6461, 4294901760
        %v6463 = vsub.f32 %v6461, %v6462
        %v6464 = vand.u32 %v6463, 4294901760
        %6465 = vmatpush.msra.mxu0 %v6464
        %v6466 = vand.u32 %v5269, 4294901760
        %v6467 = vsub.f32 %v5269, %v6466
        %v6468 = vand.u32 %v6467, 4294901760
        %v6469 = vsub.f32 %v6467, %v6468
        %v6470 = vand.u32 %v6469, 4294901760
        %6471 = vmatpush.msra.mxu0 %v6470
        %v6472 = vand.u32 %v5267, 4294901760
        %6473 = vmatmul.f32.gmra.mxu0 %v6472
        %v6474 = vpop.f32.mrf.mxu0
        %v6475 = vadd.f32 %v6374, %v6474
        %6476 = vdwg.mxu0
        %v6477 = vand.u32 %v5299, 4294901760
        %v6478 = vsub.f32 %v5299, %v6477
        %6479 = vmatpush.msra.mxu0 %v6478
        %v6480 = vand.u32 %v5297, 4294901760
        %v6481 = vsub.f32 %v5297, %v6480
        %6482 = vmatpush.msra.mxu0 %v6481
        %v6483 = vand.u32 %v5295, 4294901760
        %v6484 = vsub.f32 %v5295, %v6483
        %6485 = vmatpush.msra.mxu0 %v6484
        %v6486 = vand.u32 %v5293, 4294901760
        %v6487 = vsub.f32 %v5293, %v6486
        %6488 = vmatpush.msra.mxu0 %v6487
        %v6489 = vand.u32 %v5291, 4294901760
        %v6490 = vsub.f32 %v5291, %v6489
        %6491 = vmatpush.msra.mxu0 %v6490
        %v6492 = vand.u32 %v5289, 4294901760
        %v6493 = vsub.f32 %v5289, %v6492
        %6494 = vmatpush.msra.mxu0 %v6493
        %v6495 = vand.u32 %v5287, 4294901760
        %v6496 = vsub.f32 %v5287, %v6495
        %6497 = vmatpush.msra.mxu0 %v6496
        %v6498 = vand.u32 %v5285, 4294901760
        %v6499 = vsub.f32 %v5285, %v6498
        %6500 = vmatpush.msra.mxu0 %v6499
        %v6501 = vand.u32 %v5283, 4294901760
        %v6502 = vsub.f32 %v5283, %v6501
        %6503 = vmatpush.msra.mxu0 %v6502
        %v6504 = vand.u32 %v5281, 4294901760
        %v6505 = vsub.f32 %v5281, %v6504
        %6506 = vmatpush.msra.mxu0 %v6505
        %v6507 = vand.u32 %v5279, 4294901760
        %v6508 = vsub.f32 %v5279, %v6507
        %6509 = vmatpush.msra.mxu0 %v6508
        %v6510 = vand.u32 %v5277, 4294901760
        %v6511 = vsub.f32 %v5277, %v6510
        %6512 = vmatpush.msra.mxu0 %v6511
        %v6513 = vand.u32 %v5275, 4294901760
        %v6514 = vsub.f32 %v5275, %v6513
        %6515 = vmatpush.msra.mxu0 %v6514
        %v6516 = vand.u32 %v5273, 4294901760
        %v6517 = vsub.f32 %v5273, %v6516
        %6518 = vmatpush.msra.mxu0 %v6517
        %v6519 = vand.u32 %v5271, 4294901760
        %v6520 = vsub.f32 %v5271, %v6519
        %6521 = vmatpush.msra.mxu0 %v6520
        %v6522 = vand.u32 %v5269, 4294901760
        %v6523 = vsub.f32 %v5269, %v6522
        %6524 = vmatpush.msra.mxu0 %v6523
        %v6525 = vand.u32 %v5267, 4294901760
        %v6526 = vsub.f32 %v5267, %v6525
        %6527 = vmatmul.f32.gmra.mxu0 %v6526
        %v6528 = vpop.f32.mrf.mxu0
        %v6529 = vadd.f32 %v6475, %v6528
        %6530 = vdwg.mxu0
        %v6531 = vand.u32 %v5299, 4294901760
        %6532 = vmatpush.msra.mxu0 %v6531
        %v6533 = vand.u32 %v5297, 4294901760
        %6534 = vmatpush.msra.mxu0 %v6533
        %v6535 = vand.u32 %v5295, 4294901760
        %6536 = vmatpush.msra.mxu0 %v6535
        %v6537 = vand.u32 %v5293, 4294901760
        %6538 = vmatpush.msra.mxu0 %v6537
        %v6539 = vand.u32 %v5291, 4294901760
        %6540 = vmatpush.msra.mxu0 %v6539
        %v6541 = vand.u32 %v5289, 4294901760
        %6542 = vmatpush.msra.mxu0 %v6541
        %v6543 = vand.u32 %v5287, 4294901760
        %6544 = vmatpush.msra.mxu0 %v6543
        %v6545 = vand.u32 %v5285, 4294901760
        %6546 = vmatpush.msra.mxu0 %v6545
        %v6547 = vand.u32 %v5283, 4294901760
        %6548 = vmatpush.msra.mxu0 %v6547
        %v6549 = vand.u32 %v5281, 4294901760
        %6550 = vmatpush.msra.mxu0 %v6549
        %v6551 = vand.u32 %v5279, 4294901760
        %6552 = vmatpush.msra.mxu0 %v6551
        %v6553 = vand.u32 %v5277, 4294901760
        %6554 = vmatpush.msra.mxu0 %v6553
        %v6555 = vand.u32 %v5275, 4294901760
        %6556 = vmatpush.msra.mxu0 %v6555
        %v6557 = vand.u32 %v5273, 4294901760
        %6558 = vmatpush.msra.mxu0 %v6557
        %v6559 = vand.u32 %v5271, 4294901760
        %6560 = vmatpush.msra.mxu0 %v6559
        %v6561 = vand.u32 %v5269, 4294901760
        %6562 = vmatpush.msra.mxu0 %v6561
        %v6563 = vand.u32 %v5267, 4294901760
        %v6564 = vsub.f32 %v5267, %v6563
        %v6565 = vand.u32 %v6564, 4294901760
        %6566 = vmatmul.f32.gmra.mxu0 %v6565
        %v6567 = vpop.f32.mrf.mxu0
        %v6568 = vadd.f32 %v6529, %v6567
        %6569 = vdwg.mxu0
        %v6570 = vand.u32 %v5299, 4294901760
        %v6571 = vsub.f32 %v5299, %v6570
        %v6572 = vand.u32 %v6571, 4294901760
        %6573 = vmatpush.msra.mxu0 %v6572
        %v6574 = vand.u32 %v5297, 4294901760
        %v6575 = vsub.f32 %v5297, %v6574
        %v6576 = vand.u32 %v6575, 4294901760
        %6577 = vmatpush.msra.mxu0 %v6576
        %v6578 = vand.u32 %v5295, 4294901760
        %v6579 = vsub.f32 %v5295, %v6578
        %v6580 = vand.u32 %v6579, 4294901760
        %6581 = vmatpush.msra.mxu0 %v6580
        %v6582 = vand.u32 %v5293, 4294901760
        %v6583 = vsub.f32 %v5293, %v6582
        %v6584 = vand.u32 %v6583, 4294901760
        %6585 = vmatpush.msra.mxu0 %v6584
        %v6586 = vand.u32 %v5291, 4294901760
        %v6587 = vsub.f32 %v5291, %v6586
        %v6588 = vand.u32 %v6587, 4294901760
        %6589 = vmatpush.msra.mxu0 %v6588
        %v6590 = vand.u32 %v5289, 4294901760
        %v6591 = vsub.f32 %v5289, %v6590
        %v6592 = vand.u32 %v6591, 4294901760
        %6593 = vmatpush.msra.mxu0 %v6592
        %v6594 = vand.u32 %v5287, 4294901760
        %v6595 = vsub.f32 %v5287, %v6594
        %v6596 = vand.u32 %v6595, 4294901760
        %6597 = vmatpush.msra.mxu0 %v6596
        %v6598 = vand.u32 %v5285, 4294901760
        %v6599 = vsub.f32 %v5285, %v6598
        %v6600 = vand.u32 %v6599, 4294901760
        %6601 = vmatpush.msra.mxu0 %v6600
        %v6602 = vand.u32 %v5283, 4294901760
        %v6603 = vsub.f32 %v5283, %v6602
        %v6604 = vand.u32 %v6603, 4294901760
        %6605 = vmatpush.msra.mxu0 %v6604
        %v6606 = vand.u32 %v5281, 4294901760
        %v6607 = vsub.f32 %v5281, %v6606
        %v6608 = vand.u32 %v6607, 4294901760
        %6609 = vmatpush.msra.mxu0 %v6608
        %v6610 = vand.u32 %v5279, 4294901760
        %v6611 = vsub.f32 %v5279, %v6610
        %v6612 = vand.u32 %v6611, 4294901760
        %6613 = vmatpush.msra.mxu0 %v6612
        %v6614 = vand.u32 %v5277, 4294901760
        %v6615 = vsub.f32 %v5277, %v6614
        %v6616 = vand.u32 %v6615, 4294901760
        %6617 = vmatpush.msra.mxu0 %v6616
        %v6618 = vand.u32 %v5275, 4294901760
        %v6619 = vsub.f32 %v5275, %v6618
        %v6620 = vand.u32 %v6619, 4294901760
        %6621 = vmatpush.msra.mxu0 %v6620
        %v6622 = vand.u32 %v5273, 4294901760
        %v6623 = vsub.f32 %v5273, %v6622
        %v6624 = vand.u32 %v6623, 4294901760
        %6625 = vmatpush.msra.mxu0 %v6624
        %v6626 = vand.u32 %v5271, 4294901760
        %v6627 = vsub.f32 %v5271, %v6626
        %v6628 = vand.u32 %v6627, 4294901760
        %6629 = vmatpush.msra.mxu0 %v6628
        %v6630 = vand.u32 %v5269, 4294901760
        %v6631 = vsub.f32 %v5269, %v6630
        %v6632 = vand.u32 %v6631, 4294901760
        %6633 = vmatpush.msra.mxu0 %v6632
        %v6634 = vand.u32 %v5267, 4294901760
        %6635 = vmatmul.f32.gmra.mxu0 %v6634
        %v6636 = vpop.f32.mrf.mxu0
        %v6637 = vadd.f32 %v6568, %v6636
        %6638 = vdwg.mxu0
        %v6639 = vand.u32 %v5299, 4294901760
        %6640 = vmatpush.msra.mxu0 %v6639
        %v6641 = vand.u32 %v5297, 4294901760
        %6642 = vmatpush.msra.mxu0 %v6641
        %v6643 = vand.u32 %v5295, 4294901760
        %6644 = vmatpush.msra.mxu0 %v6643
        %v6645 = vand.u32 %v5293, 4294901760
        %6646 = vmatpush.msra.mxu0 %v6645
        %v6647 = vand.u32 %v5291, 4294901760
        %6648 = vmatpush.msra.mxu0 %v6647
        %v6649 = vand.u32 %v5289, 4294901760
        %6650 = vmatpush.msra.mxu0 %v6649
        %v6651 = vand.u32 %v5287, 4294901760
        %6652 = vmatpush.msra.mxu0 %v6651
        %v6653 = vand.u32 %v5285, 4294901760
        %6654 = vmatpush.msra.mxu0 %v6653
        %v6655 = vand.u32 %v5283, 4294901760
        %6656 = vmatpush.msra.mxu0 %v6655
        %v6657 = vand.u32 %v5281, 4294901760
        %6658 = vmatpush.msra.mxu0 %v6657
        %v6659 = vand.u32 %v5279, 4294901760
        %6660 = vmatpush.msra.mxu0 %v6659
        %v6661 = vand.u32 %v5277, 4294901760
        %6662 = vmatpush.msra.mxu0 %v6661
        %v6663 = vand.u32 %v5275, 4294901760
        %6664 = vmatpush.msra.mxu0 %v6663
        %v6665 = vand.u32 %v5273, 4294901760
        %6666 = vmatpush.msra.mxu0 %v6665
        %v6667 = vand.u32 %v5271, 4294901760
        %6668 = vmatpush.msra.mxu0 %v6667
        %v6669 = vand.u32 %v5269, 4294901760
        %6670 = vmatpush.msra.mxu0 %v6669
        %v6671 = vand.u32 %v5267, 4294901760
        %6672 = vmatmul.f32.gmra.mxu0 %v6671
        %v6673 = vpop.f32.mrf.mxu0
        %v6674 = vadd.f32 %v6637, %v6673
        %6675 = vdwg.mxu0
        %v6676 = vand.u32 %v5300, 4294901760
        %6677 = vmatpush.msra.mxu0 %v6676
        %v6678 = vand.u32 %v5298, 4294901760
        %6679 = vmatpush.msra.mxu0 %v6678
        %v6680 = vand.u32 %v5296, 4294901760
        %6681 = vmatpush.msra.mxu0 %v6680
        %v6682 = vand.u32 %v5294, 4294901760
        %6683 = vmatpush.msra.mxu0 %v6682
        %v6684 = vand.u32 %v5292, 4294901760
        %6685 = vmatpush.msra.mxu0 %v6684
        %v6686 = vand.u32 %v5290, 4294901760
        %6687 = vmatpush.msra.mxu0 %v6686
        %v6688 = vand.u32 %v5288, 4294901760
        %6689 = vmatpush.msra.mxu0 %v6688
        %v6690 = vand.u32 %v5286, 4294901760
        %6691 = vmatpush.msra.mxu0 %v6690
        %v6692 = vand.u32 %v5284, 4294901760
        %6693 = vmatpush.msra.mxu0 %v6692
        %v6694 = vand.u32 %v5282, 4294901760
        %6695 = vmatpush.msra.mxu0 %v6694
        %v6696 = vand.u32 %v5280, 4294901760
        %6697 = vmatpush.msra.mxu0 %v6696
        %v6698 = vand.u32 %v5278, 4294901760
        %6699 = vmatpush.msra.mxu0 %v6698
        %v6700 = vand.u32 %v5276, 4294901760
        %6701 = vmatpush.msra.mxu0 %v6700
        %v6702 = vand.u32 %v5274, 4294901760
        %6703 = vmatpush.msra.mxu0 %v6702
        %v6704 = vand.u32 %v5272, 4294901760
        %6705 = vmatpush.msra.mxu0 %v6704
        %v6706 = vand.u32 %v5270, 4294901760
        %6707 = vmatpush.msra.mxu0 %v6706
        %v6708 = vand.u32 %v5267, 4294901760
        %v6709 = vsub.f32 %v5267, %v6708
        %v6710 = vand.u32 %v6709, 4294901760
        %v6711 = vsub.f32 %v6709, %v6710
        %v6712 = vand.u32 %v6711, 4294901760
        %6713 = vmatmul.f32.gmra.mxu0 %v6712
        %v6714 = vpop.f32.mrf.mxu0
        %v6715 = vadd.f32 %v6333, %v6714
        %6716 = vdwg.mxu0
        %v6717 = vand.u32 %v5300, 4294901760
        %v6718 = vsub.f32 %v5300, %v6717
        %v6719 = vand.u32 %v6718, 4294901760
        %v6720 = vsub.f32 %v6718, %v6719
        %v6721 = vand.u32 %v6720, 4294901760
        %6722 = vmatpush.msra.mxu0 %v6721
        %v6723 = vand.u32 %v5298, 4294901760
        %v6724 = vsub.f32 %v5298, %v6723
        %v6725 = vand.u32 %v6724, 4294901760
        %v6726 = vsub.f32 %v6724, %v6725
        %v6727 = vand.u32 %v6726, 4294901760
        %6728 = vmatpush.msra.mxu0 %v6727
        %v6729 = vand.u32 %v5296, 4294901760
        %v6730 = vsub.f32 %v5296, %v6729
        %v6731 = vand.u32 %v6730, 4294901760
        %v6732 = vsub.f32 %v6730, %v6731
        %v6733 = vand.u32 %v6732, 4294901760
        %6734 = vmatpush.msra.mxu0 %v6733
        %v6735 = vand.u32 %v5294, 4294901760
        %v6736 = vsub.f32 %v5294, %v6735
        %v6737 = vand.u32 %v6736, 4294901760
        %v6738 = vsub.f32 %v6736, %v6737
        %v6739 = vand.u32 %v6738, 4294901760
        %6740 = vmatpush.msra.mxu0 %v6739
        %v6741 = vand.u32 %v5292, 4294901760
        %v6742 = vsub.f32 %v5292, %v6741
        %v6743 = vand.u32 %v6742, 4294901760
        %v6744 = vsub.f32 %v6742, %v6743
        %v6745 = vand.u32 %v6744, 4294901760
        %6746 = vmatpush.msra.mxu0 %v6745
        %v6747 = vand.u32 %v5290, 4294901760
        %v6748 = vsub.f32 %v5290, %v6747
        %v6749 = vand.u32 %v6748, 4294901760
        %v6750 = vsub.f32 %v6748, %v6749
        %v6751 = vand.u32 %v6750, 4294901760
        %6752 = vmatpush.msra.mxu0 %v6751
        %v6753 = vand.u32 %v5288, 4294901760
        %v6754 = vsub.f32 %v5288, %v6753
        %v6755 = vand.u32 %v6754, 4294901760
        %v6756 = vsub.f32 %v6754, %v6755
        %v6757 = vand.u32 %v6756, 4294901760
        %6758 = vmatpush.msra.mxu0 %v6757
        %v6759 = vand.u32 %v5286, 4294901760
        %v6760 = vsub.f32 %v5286, %v6759
        %v6761 = vand.u32 %v6760, 4294901760
        %v6762 = vsub.f32 %v6760, %v6761
        %v6763 = vand.u32 %v6762, 4294901760
        %6764 = vmatpush.msra.mxu0 %v6763
        %v6765 = vand.u32 %v5284, 4294901760
        %v6766 = vsub.f32 %v5284, %v6765
        %v6767 = vand.u32 %v6766, 4294901760
        %v6768 = vsub.f32 %v6766, %v6767
        %v6769 = vand.u32 %v6768, 4294901760
        %6770 = vmatpush.msra.mxu0 %v6769
        %v6771 = vand.u32 %v5282, 4294901760
        %v6772 = vsub.f32 %v5282, %v6771
        %v6773 = vand.u32 %v6772, 4294901760
        %v6774 = vsub.f32 %v6772, %v6773
        %v6775 = vand.u32 %v6774, 4294901760
        %6776 = vmatpush.msra.mxu0 %v6775
        %v6777 = vand.u32 %v5280, 4294901760
        %v6778 = vsub.f32 %v5280, %v6777
        %v6779 = vand.u32 %v6778, 4294901760
        %v6780 = vsub.f32 %v6778, %v6779
        %v6781 = vand.u32 %v6780, 4294901760
        %6782 = vmatpush.msra.mxu0 %v6781
        %v6783 = vand.u32 %v5278, 4294901760
        %v6784 = vsub.f32 %v5278, %v6783
        %v6785 = vand.u32 %v6784, 4294901760
        %v6786 = vsub.f32 %v6784, %v6785
        %v6787 = vand.u32 %v6786, 4294901760
        %6788 = vmatpush.msra.mxu0 %v6787
        %v6789 = vand.u32 %v5276, 4294901760
        %v6790 = vsub.f32 %v5276, %v6789
        %v6791 = vand.u32 %v6790, 4294901760
        %v6792 = vsub.f32 %v6790, %v6791
        %v6793 = vand.u32 %v6792, 4294901760
        %6794 = vmatpush.msra.mxu0 %v6793
        %v6795 = vand.u32 %v5274, 4294901760
        %v6796 = vsub.f32 %v5274, %v6795
        %v6797 = vand.u32 %v6796, 4294901760
        %v6798 = vsub.f32 %v6796, %v6797
        %v6799 = vand.u32 %v6798, 4294901760
        %6800 = vmatpush.msra.mxu0 %v6799
        %v6801 = vand.u32 %v5272, 4294901760
        %v6802 = vsub.f32 %v5272, %v6801
        %v6803 = vand.u32 %v6802, 4294901760
        %v6804 = vsub.f32 %v6802, %v6803
        %v6805 = vand.u32 %v6804, 4294901760
        %6806 = vmatpush.msra.mxu0 %v6805
        %v6807 = vand.u32 %v5270, 4294901760
        %v6808 = vsub.f32 %v5270, %v6807
        %v6809 = vand.u32 %v6808, 4294901760
        %v6810 = vsub.f32 %v6808, %v6809
        %v6811 = vand.u32 %v6810, 4294901760
        %6812 = vmatpush.msra.mxu0 %v6811
        %v6813 = vand.u32 %v5267, 4294901760
        %6814 = vmatmul.f32.gmra.mxu0 %v6813
        %v6815 = vpop.f32.mrf.mxu0
        %v6816 = vadd.f32 %v6715, %v6815
        %6817 = vdwg.mxu0
        %v6818 = vand.u32 %v5300, 4294901760
        %v6819 = vsub.f32 %v5300, %v6818
        %6820 = vmatpush.msra.mxu0 %v6819
        %v6821 = vand.u32 %v5298, 4294901760
        %v6822 = vsub.f32 %v5298, %v6821
        %6823 = vmatpush.msra.mxu0 %v6822
        %v6824 = vand.u32 %v5296, 4294901760
        %v6825 = vsub.f32 %v5296, %v6824
        %6826 = vmatpush.msra.mxu0 %v6825
        %v6827 = vand.u32 %v5294, 4294901760
        %v6828 = vsub.f32 %v5294, %v6827
        %6829 = vmatpush.msra.mxu0 %v6828
        %v6830 = vand.u32 %v5292, 4294901760
        %v6831 = vsub.f32 %v5292, %v6830
        %6832 = vmatpush.msra.mxu0 %v6831
        %v6833 = vand.u32 %v5290, 4294901760
        %v6834 = vsub.f32 %v5290, %v6833
        %6835 = vmatpush.msra.mxu0 %v6834
        %v6836 = vand.u32 %v5288, 4294901760
        %v6837 = vsub.f32 %v5288, %v6836
        %6838 = vmatpush.msra.mxu0 %v6837
        %v6839 = vand.u32 %v5286, 4294901760
        %v6840 = vsub.f32 %v5286, %v6839
        %6841 = vmatpush.msra.mxu0 %v6840
        %v6842 = vand.u32 %v5284, 4294901760
        %v6843 = vsub.f32 %v5284, %v6842
        %6844 = vmatpush.msra.mxu0 %v6843
        %v6845 = vand.u32 %v5282, 4294901760
        %v6846 = vsub.f32 %v5282, %v6845
        %6847 = vmatpush.msra.mxu0 %v6846
        %v6848 = vand.u32 %v5280, 4294901760
        %v6849 = vsub.f32 %v5280, %v6848
        %6850 = vmatpush.msra.mxu0 %v6849
        %v6851 = vand.u32 %v5278, 4294901760
        %v6852 = vsub.f32 %v5278, %v6851
        %6853 = vmatpush.msra.mxu0 %v6852
        %v6854 = vand.u32 %v5276, 4294901760
        %v6855 = vsub.f32 %v5276, %v6854
        %6856 = vmatpush.msra.mxu0 %v6855
        %v6857 = vand.u32 %v5274, 4294901760
        %v6858 = vsub.f32 %v5274, %v6857
        %6859 = vmatpush.msra.mxu0 %v6858
        %v6860 = vand.u32 %v5272, 4294901760
        %v6861 = vsub.f32 %v5272, %v6860
        %6862 = vmatpush.msra.mxu0 %v6861
        %v6863 = vand.u32 %v5270, 4294901760
        %v6864 = vsub.f32 %v5270, %v6863
        %6865 = vmatpush.msra.mxu0 %v6864
        %v6866 = vand.u32 %v5267, 4294901760
        %v6867 = vsub.f32 %v5267, %v6866
        %6868 = vmatmul.f32.gmra.mxu0 %v6867
        %v6869 = vpop.f32.mrf.mxu0
        %v6870 = vadd.f32 %v6816, %v6869
        %6871 = vdwg.mxu0
        %v6872 = vand.u32 %v5300, 4294901760
        %6873 = vmatpush.msra.mxu0 %v6872
        %v6874 = vand.u32 %v5298, 4294901760
        %6875 = vmatpush.msra.mxu0 %v6874
        %v6876 = vand.u32 %v5296, 4294901760
        %6877 = vmatpush.msra.mxu0 %v6876
        %v6878 = vand.u32 %v5294, 4294901760
        %6879 = vmatpush.msra.mxu0 %v6878
        %v6880 = vand.u32 %v5292, 4294901760
        %6881 = vmatpush.msra.mxu0 %v6880
        %v6882 = vand.u32 %v5290, 4294901760
        %6883 = vmatpush.msra.mxu0 %v6882
        %v6884 = vand.u32 %v5288, 4294901760
        %6885 = vmatpush.msra.mxu0 %v6884
        %v6886 = vand.u32 %v5286, 4294901760
        %6887 = vmatpush.msra.mxu0 %v6886
        %v6888 = vand.u32 %v5284, 4294901760
        %6889 = vmatpush.msra.mxu0 %v6888
        %v6890 = vand.u32 %v5282, 4294901760
        %6891 = vmatpush.msra.mxu0 %v6890
        %v6892 = vand.u32 %v5280, 4294901760
        %6893 = vmatpush.msra.mxu0 %v6892
        %v6894 = vand.u32 %v5278, 4294901760
        %6895 = vmatpush.msra.mxu0 %v6894
        %v6896 = vand.u32 %v5276, 4294901760
        %6897 = vmatpush.msra.mxu0 %v6896
        %v6898 = vand.u32 %v5274, 4294901760
        %6899 = vmatpush.msra.mxu0 %v6898
        %v6900 = vand.u32 %v5272, 4294901760
        %6901 = vmatpush.msra.mxu0 %v6900
        %v6902 = vand.u32 %v5270, 4294901760
        %6903 = vmatpush.msra.mxu0 %v6902
        %v6904 = vand.u32 %v5267, 4294901760
        %v6905 = vsub.f32 %v5267, %v6904
        %v6906 = vand.u32 %v6905, 4294901760
        %6907 = vmatmul.f32.gmra.mxu0 %v6906
        %v6908 = vpop.f32.mrf.mxu0
        %v6909 = vadd.f32 %v6870, %v6908
        %6910 = vdwg.mxu0
        %v6911 = vand.u32 %v5300, 4294901760
        %v6912 = vsub.f32 %v5300, %v6911
        %v6913 = vand.u32 %v6912, 4294901760
        %6914 = vmatpush.msra.mxu0 %v6913
        %v6915 = vand.u32 %v5298, 4294901760
        %v6916 = vsub.f32 %v5298, %v6915
        %v6917 = vand.u32 %v6916, 4294901760
        %6918 = vmatpush.msra.mxu0 %v6917
        %v6919 = vand.u32 %v5296, 4294901760
        %v6920 = vsub.f32 %v5296, %v6919
        %v6921 = vand.u32 %v6920, 4294901760
        %6922 = vmatpush.msra.mxu0 %v6921
        %v6923 = vand.u32 %v5294, 4294901760
        %v6924 = vsub.f32 %v5294, %v6923
        %v6925 = vand.u32 %v6924, 4294901760
        %6926 = vmatpush.msra.mxu0 %v6925
        %v6927 = vand.u32 %v5292, 4294901760
        %v6928 = vsub.f32 %v5292, %v6927
        %v6929 = vand.u32 %v6928, 4294901760
        %6930 = vmatpush.msra.mxu0 %v6929
        %v6931 = vand.u32 %v5290, 4294901760
        %v6932 = vsub.f32 %v5290, %v6931
        %v6933 = vand.u32 %v6932, 4294901760
        %6934 = vmatpush.msra.mxu0 %v6933
        %v6935 = vand.u32 %v5288, 4294901760
        %v6936 = vsub.f32 %v5288, %v6935
        %v6937 = vand.u32 %v6936, 4294901760
        %6938 = vmatpush.msra.mxu0 %v6937
        %v6939 = vand.u32 %v5286, 4294901760
        %v6940 = vsub.f32 %v5286, %v6939
        %v6941 = vand.u32 %v6940, 4294901760
        %6942 = vmatpush.msra.mxu0 %v6941
        %v6943 = vand.u32 %v5284, 4294901760
        %v6944 = vsub.f32 %v5284, %v6943
        %v6945 = vand.u32 %v6944, 4294901760
        %6946 = vmatpush.msra.mxu0 %v6945
        %v6947 = vand.u32 %v5282, 4294901760
        %v6948 = vsub.f32 %v5282, %v6947
        %v6949 = vand.u32 %v6948, 4294901760
        %6950 = vmatpush.msra.mxu0 %v6949
        %v6951 = vand.u32 %v5280, 4294901760
        %v6952 = vsub.f32 %v5280, %v6951
        %v6953 = vand.u32 %v6952, 4294901760
        %6954 = vmatpush.msra.mxu0 %v6953
        %v6955 = vand.u32 %v5278, 4294901760
        %v6956 = vsub.f32 %v5278, %v6955
        %v6957 = vand.u32 %v6956, 4294901760
        %6958 = vmatpush.msra.mxu0 %v6957
        %v6959 = vand.u32 %v5276, 4294901760
        %v6960 = vsub.f32 %v5276, %v6959
        %v6961 = vand.u32 %v6960, 4294901760
        %6962 = vmatpush.msra.mxu0 %v6961
        %v6963 = vand.u32 %v5274, 4294901760
        %v6964 = vsub.f32 %v5274, %v6963
        %v6965 = vand.u32 %v6964, 4294901760
        %6966 = vmatpush.msra.mxu0 %v6965
        %v6967 = vand.u32 %v5272, 4294901760
        %v6968 = vsub.f32 %v5272, %v6967
        %v6969 = vand.u32 %v6968, 4294901760
        %6970 = vmatpush.msra.mxu0 %v6969
        %v6971 = vand.u32 %v5270, 4294901760
        %v6972 = vsub.f32 %v5270, %v6971
        %v6973 = vand.u32 %v6972, 4294901760
        %6974 = vmatpush.msra.mxu0 %v6973
        %v6975 = vand.u32 %v5267, 4294901760
        %6976 = vmatmul.f32.gmra.mxu0 %v6975
        %v6977 = vpop.f32.mrf.mxu0
        %v6978 = vadd.f32 %v6909, %v6977
        %6979 = vdwg.mxu0
        %v6980 = vand.u32 %v5300, 4294901760
        %6981 = vmatpush.msra.mxu0 %v6980
        %v6982 = vand.u32 %v5298, 4294901760
        %6983 = vmatpush.msra.mxu0 %v6982
        %v6984 = vand.u32 %v5296, 4294901760
        %6985 = vmatpush.msra.mxu0 %v6984
        %v6986 = vand.u32 %v5294, 4294901760
        %6987 = vmatpush.msra.mxu0 %v6986
        %v6988 = vand.u32 %v5292, 4294901760
        %6989 = vmatpush.msra.mxu0 %v6988
        %v6990 = vand.u32 %v5290, 4294901760
        %6991 = vmatpush.msra.mxu0 %v6990
        %v6992 = vand.u32 %v5288, 4294901760
        %6993 = vmatpush.msra.mxu0 %v6992
        %v6994 = vand.u32 %v5286, 4294901760
        %6995 = vmatpush.msra.mxu0 %v6994
        %v6996 = vand.u32 %v5284, 4294901760
        %6997 = vmatpush.msra.mxu0 %v6996
        %v6998 = vand.u32 %v5282, 4294901760
        %6999 = vmatpush.msra.mxu0 %v6998
        %v7000 = vand.u32 %v5280, 4294901760
        %7001 = vmatpush.msra.mxu0 %v7000
        %v7002 = vand.u32 %v5278, 4294901760
        %7003 = vmatpush.msra.mxu0 %v7002
        %v7004 = vand.u32 %v5276, 4294901760
        %7005 = vmatpush.msra.mxu0 %v7004
        %v7006 = vand.u32 %v5274, 4294901760
        %7007 = vmatpush.msra.mxu0 %v7006
        %v7008 = vand.u32 %v5272, 4294901760
        %7009 = vmatpush.msra.mxu0 %v7008
        %v7010 = vand.u32 %v5270, 4294901760
        %7011 = vmatpush.msra.mxu0 %v7010
        %v7012 = vand.u32 %v5267, 4294901760
        %7013 = vmatmul.f32.gmra.mxu0 %v7012
        %v7014 = vpop.f32.mrf.mxu0
        %v7015 = vadd.f32 %v6978, %v7014
        %7016 = vdwg.mxu0
        %v7017 = vld [vmem:[%s7] sm:$0x3]
        %v7019 = vperm.slane %v7017, 0
        %v7020 = vperm.slane %v7017, 1
        %v7023 = vadd.f32 %v6674, %v7019
        %v7024 = vadd.f32 %v7015, %v7020
        %v7025 = vadd.f32 %v614, %v7023
        %v7026 = vadd.f32 %v615, %v7024
        %v7027 = vld [vmem:[%s8] sm:$0x3]
        %v7028 = vld [vmem:[%s9] sm:$0x3]
        %v7029 = vadd.f32 %v7025, %v7026
        %7030 = vadd.xlane.f32.xlu0 %v7029
        %v7031 = vpop.xlane.xlu0 %7030
        %v7032 = vmul.f32 %v7031, %v627
        %v7033 = vsub.f32 %v7025, %v7032
        %v7034 = vsub.f32 %v7026, %v7032
        %v7035 = vmul.f32 %v7033, %v7033
        %v7036 = vmul.f32 %v7034, %v7034
        %v7037 = vadd.f32 %v7035, %v7036
        %7038 = vadd.xlane.f32.xlu0 %v7037
        %v7039 = vpop.xlane.xlu0 %7038
        %v7040 = vmul.f32 %v7039, %v627
        %v7041 = vadd.f32 %v7040, 1e-05
        %v7042 = vrsqrt.pop %v7041
        %v7043 = vmul.f32 %v7042, %v7041
        %v7044 = vmul.f32 %v7043, %v7042
        %v7045 = vmul.f32 0.5, %v7044
        %v7046 = vsub.f32 1.5, %v7045
        %v7047 = vmul.f32 %v7042, %v7046
        %vm7048 = vweird.f32 %v7041
        %vm7049 = vweird.f32 %v7042
        %vm7050 = vmor %vm7048, %vm7049
        %v7051 = vsel %vm7050, %v7042, %v7047
        %v7052 = vmul.f32 %v7033, %v7051
        %v7053 = vmul.f32 %v7034, %v7051
        %v7055 = vperm.slane %v7027, 0
        %v7056 = vperm.slane %v7027, 1
        %v7059 = vmul.f32 %v7052, %v7055
        %v7060 = vmul.f32 %v7053, %v7056
        %v7062 = vperm.slane %v7028, 0
        %v7063 = vperm.slane %v7028, 1
        %v7066 = vadd.f32 %v7059, %v7062
        %v7067 = vadd.f32 %v7060, %v7063
        %v7068 = vld [vmem:[#allocation14] sm:$0xff]
        %v7069 = vld [vmem:[#allocation14 + $0x8] sm:$0xff]
        %v7070 = vld [vmem:[#allocation14 + $0x10] sm:$0xff]
        %v7071 = vld [vmem:[#allocation14 + $0x18] sm:$0xff]
        %v7072 = vld [vmem:[#allocation14 + $0x20] sm:$0xff]
        %v7073 = vld [vmem:[#allocation14 + $0x28] sm:$0xff]
        %v7074 = vld [vmem:[#allocation14 + $0x30] sm:$0xff]
        %v7075 = vld [vmem:[#allocation14 + $0x38] sm:$0xff]
        %v7076 = vld [vmem:[#allocation14 + $0x40] sm:$0xff]
        %v7077 = vld [vmem:[#allocation14 + $0x48] sm:$0xff]
        %v7078 = vld [vmem:[#allocation14 + $0x50] sm:$0xff]
        %v7079 = vld [vmem:[#allocation14 + $0x58] sm:$0xff]
        %v7080 = vld [vmem:[#allocation14 + $0x60] sm:$0xff]
        %v7081 = vld [vmem:[#allocation14 + $0x68] sm:$0xff]
        %v7082 = vld [vmem:[#allocation14 + $0x70] sm:$0xff]
        %v7083 = vld [vmem:[#allocation14 + $0x78] sm:$0xff]
        %v7084 = vld [vmem:[#allocation14 + $0x80] sm:$0xff]
        %v7085 = vld [vmem:[#allocation14 + $0x88] sm:$0xff]
        %v7086 = vld [vmem:[#allocation14 + $0x90] sm:$0xff]
        %v7087 = vld [vmem:[#allocation14 + $0x98] sm:$0xff]
        %v7088 = vld [vmem:[#allocation14 + $0xa0] sm:$0xff]
        %v7089 = vld [vmem:[#allocation14 + $0xa8] sm:$0xff]
        %v7090 = vld [vmem:[#allocation14 + $0xb0] sm:$0xff]
        %v7091 = vld [vmem:[#allocation14 + $0xb8] sm:$0xff]
        %v7092 = vld [vmem:[#allocation14 + $0xc0] sm:$0xff]
        %v7093 = vld [vmem:[#allocation14 + $0xc8] sm:$0xff]
        %v7094 = vld [vmem:[#allocation14 + $0xd0] sm:$0xff]
        %v7095 = vld [vmem:[#allocation14 + $0xd8] sm:$0xff]
        %v7096 = vld [vmem:[#allocation14 + $0xe0] sm:$0xff]
        %v7097 = vld [vmem:[#allocation14 + $0xe8] sm:$0xff]
        %v7098 = vld [vmem:[#allocation14 + $0xf0] sm:$0xff]
        %v7099 = vld [vmem:[#allocation14 + $0xf8] sm:$0xff]
        %v7100 = vld [vmem:[#allocation14 + $0x100] sm:$0xff]
        %v7101 = vld [vmem:[#allocation14 + $0x108] sm:$0xff]
        %v7102 = vld [vmem:[#allocation14 + $0x110] sm:$0xff]
        %v7103 = vld [vmem:[#allocation14 + $0x118] sm:$0xff]
        %v7104 = vld [vmem:[#allocation14 + $0x120] sm:$0xff]
        %v7105 = vld [vmem:[#allocation14 + $0x128] sm:$0xff]
        %v7106 = vld [vmem:[#allocation14 + $0x130] sm:$0xff]
        %v7107 = vld [vmem:[#allocation14 + $0x138] sm:$0xff]
        %v7108 = vld [vmem:[#allocation14 + $0x140] sm:$0xff]
        %v7109 = vld [vmem:[#allocation14 + $0x148] sm:$0xff]
        %v7110 = vld [vmem:[#allocation14 + $0x150] sm:$0xff]
        %v7111 = vld [vmem:[#allocation14 + $0x158] sm:$0xff]
        %v7112 = vld [vmem:[#allocation14 + $0x160] sm:$0xff]
        %v7113 = vld [vmem:[#allocation14 + $0x168] sm:$0xff]
        %v7114 = vld [vmem:[#allocation14 + $0x170] sm:$0xff]
        %v7115 = vld [vmem:[#allocation14 + $0x178] sm:$0xff]
        %v7116 = vld [vmem:[#allocation14 + $0x180] sm:$0xff]
        %v7117 = vld [vmem:[#allocation14 + $0x188] sm:$0xff]
        %v7118 = vld [vmem:[#allocation14 + $0x190] sm:$0xff]
        %v7119 = vld [vmem:[#allocation14 + $0x198] sm:$0xff]
        %v7120 = vld [vmem:[#allocation14 + $0x1a0] sm:$0xff]
        %v7121 = vld [vmem:[#allocation14 + $0x1a8] sm:$0xff]
        %v7122 = vld [vmem:[#allocation14 + $0x1b0] sm:$0xff]
        %v7123 = vld [vmem:[#allocation14 + $0x1b8] sm:$0xff]
        %v7124 = vld [vmem:[#allocation14 + $0x1c0] sm:$0xff]
        %v7125 = vld [vmem:[#allocation14 + $0x1c8] sm:$0xff]
        %v7126 = vld [vmem:[#allocation14 + $0x1d0] sm:$0xff]
        %v7127 = vld [vmem:[#allocation14 + $0x1d8] sm:$0xff]
        %v7128 = vld [vmem:[#allocation14 + $0x1e0] sm:$0xff]
        %v7129 = vld [vmem:[#allocation14 + $0x1e8] sm:$0xff]
        %v7130 = vld [vmem:[#allocation14 + $0x1f0] sm:$0xff]
        %v7131 = vld [vmem:[#allocation14 + $0x1f8] sm:$0xff]
        %v7132 = vld [vmem:[%s11] sm:$0x3]
        %v7134 = vperm.slane %v7132, 0
        %v7135 = vperm.slane %v7132, 1
        %v7138 = vand.u32 %v7098, 4294901760
        %7139 = vmatpush.msra.mxu0 %v7138
        %v7140 = vand.u32 %v7096, 4294901760
        %7141 = vmatpush.msra.mxu0 %v7140
        %v7142 = vand.u32 %v7094, 4294901760
        %7143 = vmatpush.msra.mxu0 %v7142
        %v7144 = vand.u32 %v7092, 4294901760
        %7145 = vmatpush.msra.mxu0 %v7144
        %v7146 = vand.u32 %v7090, 4294901760
        %7147 = vmatpush.msra.mxu0 %v7146
        %v7148 = vand.u32 %v7088, 4294901760
        %7149 = vmatpush.msra.mxu0 %v7148
        %v7150 = vand.u32 %v7086, 4294901760
        %7151 = vmatpush.msra.mxu0 %v7150
        %v7152 = vand.u32 %v7084, 4294901760
        %7153 = vmatpush.msra.mxu0 %v7152
        %v7154 = vand.u32 %v7082, 4294901760
        %7155 = vmatpush.msra.mxu0 %v7154
        %v7156 = vand.u32 %v7080, 4294901760
        %7157 = vmatpush.msra.mxu0 %v7156
        %v7158 = vand.u32 %v7078, 4294901760
        %7159 = vmatpush.msra.mxu0 %v7158
        %v7160 = vand.u32 %v7076, 4294901760
        %7161 = vmatpush.msra.mxu0 %v7160
        %v7162 = vand.u32 %v7074, 4294901760
        %7163 = vmatpush.msra.mxu0 %v7162
        %v7164 = vand.u32 %v7072, 4294901760
        %7165 = vmatpush.msra.mxu0 %v7164
        %v7166 = vand.u32 %v7070, 4294901760
        %7167 = vmatpush.msra.mxu0 %v7166
        %v7168 = vand.u32 %v7068, 4294901760
        %7169 = vmatpush.msra.mxu0 %v7168
        %v7170 = vand.u32 %v7066, 4294901760
        %v7171 = vsub.f32 %v7066, %v7170
        %v7172 = vand.u32 %v7171, 4294901760
        %v7173 = vsub.f32 %v7171, %v7172
        %v7174 = vand.u32 %v7173, 4294901760
        %7175 = vmatmul.f32.gmra.mxu0 %v7174
        %v7176 = vpop.f32.mrf.mxu0
        %v7177 = vadd.f32 %v7134, %v7176
        %7178 = vdwg.mxu0
        %v7179 = vand.u32 %v7098, 4294901760
        %v7180 = vsub.f32 %v7098, %v7179
        %v7181 = vand.u32 %v7180, 4294901760
        %v7182 = vsub.f32 %v7180, %v7181
        %v7183 = vand.u32 %v7182, 4294901760
        %7184 = vmatpush.msra.mxu0 %v7183
        %v7185 = vand.u32 %v7096, 4294901760
        %v7186 = vsub.f32 %v7096, %v7185
        %v7187 = vand.u32 %v7186, 4294901760
        %v7188 = vsub.f32 %v7186, %v7187
        %v7189 = vand.u32 %v7188, 4294901760
        %7190 = vmatpush.msra.mxu0 %v7189
        %v7191 = vand.u32 %v7094, 4294901760
        %v7192 = vsub.f32 %v7094, %v7191
        %v7193 = vand.u32 %v7192, 4294901760
        %v7194 = vsub.f32 %v7192, %v7193
        %v7195 = vand.u32 %v7194, 4294901760
        %7196 = vmatpush.msra.mxu0 %v7195
        %v7197 = vand.u32 %v7092, 4294901760
        %v7198 = vsub.f32 %v7092, %v7197
        %v7199 = vand.u32 %v7198, 4294901760
        %v7200 = vsub.f32 %v7198, %v7199
        %v7201 = vand.u32 %v7200, 4294901760
        %7202 = vmatpush.msra.mxu0 %v7201
        %v7203 = vand.u32 %v7090, 4294901760
        %v7204 = vsub.f32 %v7090, %v7203
        %v7205 = vand.u32 %v7204, 4294901760
        %v7206 = vsub.f32 %v7204, %v7205
        %v7207 = vand.u32 %v7206, 4294901760
        %7208 = vmatpush.msra.mxu0 %v7207
        %v7209 = vand.u32 %v7088, 4294901760
        %v7210 = vsub.f32 %v7088, %v7209
        %v7211 = vand.u32 %v7210, 4294901760
        %v7212 = vsub.f32 %v7210, %v7211
        %v7213 = vand.u32 %v7212, 4294901760
        %7214 = vmatpush.msra.mxu0 %v7213
        %v7215 = vand.u32 %v7086, 4294901760
        %v7216 = vsub.f32 %v7086, %v7215
        %v7217 = vand.u32 %v7216, 4294901760
        %v7218 = vsub.f32 %v7216, %v7217
        %v7219 = vand.u32 %v7218, 4294901760
        %7220 = vmatpush.msra.mxu0 %v7219
        %v7221 = vand.u32 %v7084, 4294901760
        %v7222 = vsub.f32 %v7084, %v7221
        %v7223 = vand.u32 %v7222, 4294901760
        %v7224 = vsub.f32 %v7222, %v7223
        %v7225 = vand.u32 %v7224, 4294901760
        %7226 = vmatpush.msra.mxu0 %v7225
        %v7227 = vand.u32 %v7082, 4294901760
        %v7228 = vsub.f32 %v7082, %v7227
        %v7229 = vand.u32 %v7228, 4294901760
        %v7230 = vsub.f32 %v7228, %v7229
        %v7231 = vand.u32 %v7230, 4294901760
        %7232 = vmatpush.msra.mxu0 %v7231
        %v7233 = vand.u32 %v7080, 4294901760
        %v7234 = vsub.f32 %v7080, %v7233
        %v7235 = vand.u32 %v7234, 4294901760
        %v7236 = vsub.f32 %v7234, %v7235
        %v7237 = vand.u32 %v7236, 4294901760
        %7238 = vmatpush.msra.mxu0 %v7237
        %v7239 = vand.u32 %v7078, 4294901760
        %v7240 = vsub.f32 %v7078, %v7239
        %v7241 = vand.u32 %v7240, 4294901760
        %v7242 = vsub.f32 %v7240, %v7241
        %v7243 = vand.u32 %v7242, 4294901760
        %7244 = vmatpush.msra.mxu0 %v7243
        %v7245 = vand.u32 %v7076, 4294901760
        %v7246 = vsub.f32 %v7076, %v7245
        %v7247 = vand.u32 %v7246, 4294901760
        %v7248 = vsub.f32 %v7246, %v7247
        %v7249 = vand.u32 %v7248, 4294901760
        %7250 = vmatpush.msra.mxu0 %v7249
        %v7251 = vand.u32 %v7074, 4294901760
        %v7252 = vsub.f32 %v7074, %v7251
        %v7253 = vand.u32 %v7252, 4294901760
        %v7254 = vsub.f32 %v7252, %v7253
        %v7255 = vand.u32 %v7254, 4294901760
        %7256 = vmatpush.msra.mxu0 %v7255
        %v7257 = vand.u32 %v7072, 4294901760
        %v7258 = vsub.f32 %v7072, %v7257
        %v7259 = vand.u32 %v7258, 4294901760
        %v7260 = vsub.f32 %v7258, %v7259
        %v7261 = vand.u32 %v7260, 4294901760
        %7262 = vmatpush.msra.mxu0 %v7261
        %v7263 = vand.u32 %v7070, 4294901760
        %v7264 = vsub.f32 %v7070, %v7263
        %v7265 = vand.u32 %v7264, 4294901760
        %v7266 = vsub.f32 %v7264, %v7265
        %v7267 = vand.u32 %v7266, 4294901760
        %7268 = vmatpush.msra.mxu0 %v7267
        %v7269 = vand.u32 %v7068, 4294901760
        %v7270 = vsub.f32 %v7068, %v7269
        %v7271 = vand.u32 %v7270, 4294901760
        %v7272 = vsub.f32 %v7270, %v7271
        %v7273 = vand.u32 %v7272, 4294901760
        %7274 = vmatpush.msra.mxu0 %v7273
        %v7275 = vand.u32 %v7066, 4294901760
        %7276 = vmatmul.f32.gmra.mxu0 %v7275
        %v7277 = vpop.f32.mrf.mxu0
        %v7278 = vadd.f32 %v7177, %v7277
        %7279 = vdwg.mxu0
        %v7280 = vand.u32 %v7098, 4294901760
        %v7281 = vsub.f32 %v7098, %v7280
        %7282 = vmatpush.msra.mxu0 %v7281
        %v7283 = vand.u32 %v7096, 4294901760
        %v7284 = vsub.f32 %v7096, %v7283
        %7285 = vmatpush.msra.mxu0 %v7284
        %v7286 = vand.u32 %v7094, 4294901760
        %v7287 = vsub.f32 %v7094, %v7286
        %7288 = vmatpush.msra.mxu0 %v7287
        %v7289 = vand.u32 %v7092, 4294901760
        %v7290 = vsub.f32 %v7092, %v7289
        %7291 = vmatpush.msra.mxu0 %v7290
        %v7292 = vand.u32 %v7090, 4294901760
        %v7293 = vsub.f32 %v7090, %v7292
        %7294 = vmatpush.msra.mxu0 %v7293
        %v7295 = vand.u32 %v7088, 4294901760
        %v7296 = vsub.f32 %v7088, %v7295
        %7297 = vmatpush.msra.mxu0 %v7296
        %v7298 = vand.u32 %v7086, 4294901760
        %v7299 = vsub.f32 %v7086, %v7298
        %7300 = vmatpush.msra.mxu0 %v7299
        %v7301 = vand.u32 %v7084, 4294901760
        %v7302 = vsub.f32 %v7084, %v7301
        %7303 = vmatpush.msra.mxu0 %v7302
        %v7304 = vand.u32 %v7082, 4294901760
        %v7305 = vsub.f32 %v7082, %v7304
        %7306 = vmatpush.msra.mxu0 %v7305
        %v7307 = vand.u32 %v7080, 4294901760
        %v7308 = vsub.f32 %v7080, %v7307
        %7309 = vmatpush.msra.mxu0 %v7308
        %v7310 = vand.u32 %v7078, 4294901760
        %v7311 = vsub.f32 %v7078, %v7310
        %7312 = vmatpush.msra.mxu0 %v7311
        %v7313 = vand.u32 %v7076, 4294901760
        %v7314 = vsub.f32 %v7076, %v7313
        %7315 = vmatpush.msra.mxu0 %v7314
        %v7316 = vand.u32 %v7074, 4294901760
        %v7317 = vsub.f32 %v7074, %v7316
        %7318 = vmatpush.msra.mxu0 %v7317
        %v7319 = vand.u32 %v7072, 4294901760
        %v7320 = vsub.f32 %v7072, %v7319
        %7321 = vmatpush.msra.mxu0 %v7320
        %v7322 = vand.u32 %v7070, 4294901760
        %v7323 = vsub.f32 %v7070, %v7322
        %7324 = vmatpush.msra.mxu0 %v7323
        %v7325 = vand.u32 %v7068, 4294901760
        %v7326 = vsub.f32 %v7068, %v7325
        %7327 = vmatpush.msra.mxu0 %v7326
        %v7328 = vand.u32 %v7066, 4294901760
        %v7329 = vsub.f32 %v7066, %v7328
        %7330 = vmatmul.f32.gmra.mxu0 %v7329
        %v7331 = vpop.f32.mrf.mxu0
        %v7332 = vadd.f32 %v7278, %v7331
        %7333 = vdwg.mxu0
        %v7334 = vand.u32 %v7098, 4294901760
        %7335 = vmatpush.msra.mxu0 %v7334
        %v7336 = vand.u32 %v7096, 4294901760
        %7337 = vmatpush.msra.mxu0 %v7336
        %v7338 = vand.u32 %v7094, 4294901760
        %7339 = vmatpush.msra.mxu0 %v7338
        %v7340 = vand.u32 %v7092, 4294901760
        %7341 = vmatpush.msra.mxu0 %v7340
        %v7342 = vand.u32 %v7090, 4294901760
        %7343 = vmatpush.msra.mxu0 %v7342
        %v7344 = vand.u32 %v7088, 4294901760
        %7345 = vmatpush.msra.mxu0 %v7344
        %v7346 = vand.u32 %v7086, 4294901760
        %7347 = vmatpush.msra.mxu0 %v7346
        %v7348 = vand.u32 %v7084, 4294901760
        %7349 = vmatpush.msra.mxu0 %v7348
        %v7350 = vand.u32 %v7082, 4294901760
        %7351 = vmatpush.msra.mxu0 %v7350
        %v7352 = vand.u32 %v7080, 4294901760
        %7353 = vmatpush.msra.mxu0 %v7352
        %v7354 = vand.u32 %v7078, 4294901760
        %7355 = vmatpush.msra.mxu0 %v7354
        %v7356 = vand.u32 %v7076, 4294901760
        %7357 = vmatpush.msra.mxu0 %v7356
        %v7358 = vand.u32 %v7074, 4294901760
        %7359 = vmatpush.msra.mxu0 %v7358
        %v7360 = vand.u32 %v7072, 4294901760
        %7361 = vmatpush.msra.mxu0 %v7360
        %v7362 = vand.u32 %v7070, 4294901760
        %7363 = vmatpush.msra.mxu0 %v7362
        %v7364 = vand.u32 %v7068, 4294901760
        %7365 = vmatpush.msra.mxu0 %v7364
        %v7366 = vand.u32 %v7066, 4294901760
        %v7367 = vsub.f32 %v7066, %v7366
        %v7368 = vand.u32 %v7367, 4294901760
        %7369 = vmatmul.f32.gmra.mxu0 %v7368
        %v7370 = vpop.f32.mrf.mxu0
        %v7371 = vadd.f32 %v7332, %v7370
        %7372 = vdwg.mxu0
        %v7373 = vand.u32 %v7098, 4294901760
        %v7374 = vsub.f32 %v7098, %v7373
        %v7375 = vand.u32 %v7374, 4294901760
        %7376 = vmatpush.msra.mxu0 %v7375
        %v7377 = vand.u32 %v7096, 4294901760
        %v7378 = vsub.f32 %v7096, %v7377
        %v7379 = vand.u32 %v7378, 4294901760
        %7380 = vmatpush.msra.mxu0 %v7379
        %v7381 = vand.u32 %v7094, 4294901760
        %v7382 = vsub.f32 %v7094, %v7381
        %v7383 = vand.u32 %v7382, 4294901760
        %7384 = vmatpush.msra.mxu0 %v7383
        %v7385 = vand.u32 %v7092, 4294901760
        %v7386 = vsub.f32 %v7092, %v7385
        %v7387 = vand.u32 %v7386, 4294901760
        %7388 = vmatpush.msra.mxu0 %v7387
        %v7389 = vand.u32 %v7090, 4294901760
        %v7390 = vsub.f32 %v7090, %v7389
        %v7391 = vand.u32 %v7390, 4294901760
        %7392 = vmatpush.msra.mxu0 %v7391
        %v7393 = vand.u32 %v7088, 4294901760
        %v7394 = vsub.f32 %v7088, %v7393
        %v7395 = vand.u32 %v7394, 4294901760
        %7396 = vmatpush.msra.mxu0 %v7395
        %v7397 = vand.u32 %v7086, 4294901760
        %v7398 = vsub.f32 %v7086, %v7397
        %v7399 = vand.u32 %v7398, 4294901760
        %7400 = vmatpush.msra.mxu0 %v7399
        %v7401 = vand.u32 %v7084, 4294901760
        %v7402 = vsub.f32 %v7084, %v7401
        %v7403 = vand.u32 %v7402, 4294901760
        %7404 = vmatpush.msra.mxu0 %v7403
        %v7405 = vand.u32 %v7082, 4294901760
        %v7406 = vsub.f32 %v7082, %v7405
        %v7407 = vand.u32 %v7406, 4294901760
        %7408 = vmatpush.msra.mxu0 %v7407
        %v7409 = vand.u32 %v7080, 4294901760
        %v7410 = vsub.f32 %v7080, %v7409
        %v7411 = vand.u32 %v7410, 4294901760
        %7412 = vmatpush.msra.mxu0 %v7411
        %v7413 = vand.u32 %v7078, 4294901760
        %v7414 = vsub.f32 %v7078, %v7413
        %v7415 = vand.u32 %v7414, 4294901760
        %7416 = vmatpush.msra.mxu0 %v7415
        %v7417 = vand.u32 %v7076, 4294901760
        %v7418 = vsub.f32 %v7076, %v7417
        %v7419 = vand.u32 %v7418, 4294901760
        %7420 = vmatpush.msra.mxu0 %v7419
        %v7421 = vand.u32 %v7074, 4294901760
        %v7422 = vsub.f32 %v7074, %v7421
        %v7423 = vand.u32 %v7422, 4294901760
        %7424 = vmatpush.msra.mxu0 %v7423
        %v7425 = vand.u32 %v7072, 4294901760
        %v7426 = vsub.f32 %v7072, %v7425
        %v7427 = vand.u32 %v7426, 4294901760
        %7428 = vmatpush.msra.mxu0 %v7427
        %v7429 = vand.u32 %v7070, 4294901760
        %v7430 = vsub.f32 %v7070, %v7429
        %v7431 = vand.u32 %v7430, 4294901760
        %7432 = vmatpush.msra.mxu0 %v7431
        %v7433 = vand.u32 %v7068, 4294901760
        %v7434 = vsub.f32 %v7068, %v7433
        %v7435 = vand.u32 %v7434, 4294901760
        %7436 = vmatpush.msra.mxu0 %v7435
        %v7437 = vand.u32 %v7066, 4294901760
        %7438 = vmatmul.f32.gmra.mxu0 %v7437
        %v7439 = vpop.f32.mrf.mxu0
        %v7440 = vadd.f32 %v7371, %v7439
        %7441 = vdwg.mxu0
        %v7442 = vand.u32 %v7098, 4294901760
        %7443 = vmatpush.msra.mxu0 %v7442
        %v7444 = vand.u32 %v7096, 4294901760
        %7445 = vmatpush.msra.mxu0 %v7444
        %v7446 = vand.u32 %v7094, 4294901760
        %7447 = vmatpush.msra.mxu0 %v7446
        %v7448 = vand.u32 %v7092, 4294901760
        %7449 = vmatpush.msra.mxu0 %v7448
        %v7450 = vand.u32 %v7090, 4294901760
        %7451 = vmatpush.msra.mxu0 %v7450
        %v7452 = vand.u32 %v7088, 4294901760
        %7453 = vmatpush.msra.mxu0 %v7452
        %v7454 = vand.u32 %v7086, 4294901760
        %7455 = vmatpush.msra.mxu0 %v7454
        %v7456 = vand.u32 %v7084, 4294901760
        %7457 = vmatpush.msra.mxu0 %v7456
        %v7458 = vand.u32 %v7082, 4294901760
        %7459 = vmatpush.msra.mxu0 %v7458
        %v7460 = vand.u32 %v7080, 4294901760
        %7461 = vmatpush.msra.mxu0 %v7460
        %v7462 = vand.u32 %v7078, 4294901760
        %7463 = vmatpush.msra.mxu0 %v7462
        %v7464 = vand.u32 %v7076, 4294901760
        %7465 = vmatpush.msra.mxu0 %v7464
        %v7466 = vand.u32 %v7074, 4294901760
        %7467 = vmatpush.msra.mxu0 %v7466
        %v7468 = vand.u32 %v7072, 4294901760
        %7469 = vmatpush.msra.mxu0 %v7468
        %v7470 = vand.u32 %v7070, 4294901760
        %7471 = vmatpush.msra.mxu0 %v7470
        %v7472 = vand.u32 %v7068, 4294901760
        %7473 = vmatpush.msra.mxu0 %v7472
        %v7474 = vand.u32 %v7066, 4294901760
        %7475 = vmatmul.f32.gmra.mxu0 %v7474
        %v7476 = vpop.f32.mrf.mxu0
        %v7477 = vadd.f32 %v7440, %v7476
        %7478 = vdwg.mxu0
        %v7479 = vand.u32 %v7130, 4294901760
        %7480 = vmatpush.msra.mxu0 %v7479
        %v7481 = vand.u32 %v7128, 4294901760
        %7482 = vmatpush.msra.mxu0 %v7481
        %v7483 = vand.u32 %v7126, 4294901760
        %7484 = vmatpush.msra.mxu0 %v7483
        %v7485 = vand.u32 %v7124, 4294901760
        %7486 = vmatpush.msra.mxu0 %v7485
        %v7487 = vand.u32 %v7122, 4294901760
        %7488 = vmatpush.msra.mxu0 %v7487
        %v7489 = vand.u32 %v7120, 4294901760
        %7490 = vmatpush.msra.mxu0 %v7489
        %v7491 = vand.u32 %v7118, 4294901760
        %7492 = vmatpush.msra.mxu0 %v7491
        %v7493 = vand.u32 %v7116, 4294901760
        %7494 = vmatpush.msra.mxu0 %v7493
        %v7495 = vand.u32 %v7114, 4294901760
        %7496 = vmatpush.msra.mxu0 %v7495
        %v7497 = vand.u32 %v7112, 4294901760
        %7498 = vmatpush.msra.mxu0 %v7497
        %v7499 = vand.u32 %v7110, 4294901760
        %7500 = vmatpush.msra.mxu0 %v7499
        %v7501 = vand.u32 %v7108, 4294901760
        %7502 = vmatpush.msra.mxu0 %v7501
        %v7503 = vand.u32 %v7106, 4294901760
        %7504 = vmatpush.msra.mxu0 %v7503
        %v7505 = vand.u32 %v7104, 4294901760
        %7506 = vmatpush.msra.mxu0 %v7505
        %v7507 = vand.u32 %v7102, 4294901760
        %7508 = vmatpush.msra.mxu0 %v7507
        %v7509 = vand.u32 %v7100, 4294901760
        %7510 = vmatpush.msra.mxu0 %v7509
        %v7511 = vand.u32 %v7067, 4294901760
        %v7512 = vsub.f32 %v7067, %v7511
        %v7513 = vand.u32 %v7512, 4294901760
        %v7514 = vsub.f32 %v7512, %v7513
        %v7515 = vand.u32 %v7514, 4294901760
        %7516 = vmatmul.f32.gmra.mxu0 %v7515
        %v7517 = vpop.f32.mrf.mxu0
        %v7518 = vadd.f32 %v7477, %v7517
        %7519 = vdwg.mxu0
        %v7520 = vand.u32 %v7130, 4294901760
        %v7521 = vsub.f32 %v7130, %v7520
        %v7522 = vand.u32 %v7521, 4294901760
        %v7523 = vsub.f32 %v7521, %v7522
        %v7524 = vand.u32 %v7523, 4294901760
        %7525 = vmatpush.msra.mxu0 %v7524
        %v7526 = vand.u32 %v7128, 4294901760
        %v7527 = vsub.f32 %v7128, %v7526
        %v7528 = vand.u32 %v7527, 4294901760
        %v7529 = vsub.f32 %v7527, %v7528
        %v7530 = vand.u32 %v7529, 4294901760
        %7531 = vmatpush.msra.mxu0 %v7530
        %v7532 = vand.u32 %v7126, 4294901760
        %v7533 = vsub.f32 %v7126, %v7532
        %v7534 = vand.u32 %v7533, 4294901760
        %v7535 = vsub.f32 %v7533, %v7534
        %v7536 = vand.u32 %v7535, 4294901760
        %7537 = vmatpush.msra.mxu0 %v7536
        %v7538 = vand.u32 %v7124, 4294901760
        %v7539 = vsub.f32 %v7124, %v7538
        %v7540 = vand.u32 %v7539, 4294901760
        %v7541 = vsub.f32 %v7539, %v7540
        %v7542 = vand.u32 %v7541, 4294901760
        %7543 = vmatpush.msra.mxu0 %v7542
        %v7544 = vand.u32 %v7122, 4294901760
        %v7545 = vsub.f32 %v7122, %v7544
        %v7546 = vand.u32 %v7545, 4294901760
        %v7547 = vsub.f32 %v7545, %v7546
        %v7548 = vand.u32 %v7547, 4294901760
        %7549 = vmatpush.msra.mxu0 %v7548
        %v7550 = vand.u32 %v7120, 4294901760
        %v7551 = vsub.f32 %v7120, %v7550
        %v7552 = vand.u32 %v7551, 4294901760
        %v7553 = vsub.f32 %v7551, %v7552
        %v7554 = vand.u32 %v7553, 4294901760
        %7555 = vmatpush.msra.mxu0 %v7554
        %v7556 = vand.u32 %v7118, 4294901760
        %v7557 = vsub.f32 %v7118, %v7556
        %v7558 = vand.u32 %v7557, 4294901760
        %v7559 = vsub.f32 %v7557, %v7558
        %v7560 = vand.u32 %v7559, 4294901760
        %7561 = vmatpush.msra.mxu0 %v7560
        %v7562 = vand.u32 %v7116, 4294901760
        %v7563 = vsub.f32 %v7116, %v7562
        %v7564 = vand.u32 %v7563, 4294901760
        %v7565 = vsub.f32 %v7563, %v7564
        %v7566 = vand.u32 %v7565, 4294901760
        %7567 = vmatpush.msra.mxu0 %v7566
        %v7568 = vand.u32 %v7114, 4294901760
        %v7569 = vsub.f32 %v7114, %v7568
        %v7570 = vand.u32 %v7569, 4294901760
        %v7571 = vsub.f32 %v7569, %v7570
        %v7572 = vand.u32 %v7571, 4294901760
        %7573 = vmatpush.msra.mxu0 %v7572
        %v7574 = vand.u32 %v7112, 4294901760
        %v7575 = vsub.f32 %v7112, %v7574
        %v7576 = vand.u32 %v7575, 4294901760
        %v7577 = vsub.f32 %v7575, %v7576
        %v7578 = vand.u32 %v7577, 4294901760
        %7579 = vmatpush.msra.mxu0 %v7578
        %v7580 = vand.u32 %v7110, 4294901760
        %v7581 = vsub.f32 %v7110, %v7580
        %v7582 = vand.u32 %v7581, 4294901760
        %v7583 = vsub.f32 %v7581, %v7582
        %v7584 = vand.u32 %v7583, 4294901760
        %7585 = vmatpush.msra.mxu0 %v7584
        %v7586 = vand.u32 %v7108, 4294901760
        %v7587 = vsub.f32 %v7108, %v7586
        %v7588 = vand.u32 %v7587, 4294901760
        %v7589 = vsub.f32 %v7587, %v7588
        %v7590 = vand.u32 %v7589, 4294901760
        %7591 = vmatpush.msra.mxu0 %v7590
        %v7592 = vand.u32 %v7106, 4294901760
        %v7593 = vsub.f32 %v7106, %v7592
        %v7594 = vand.u32 %v7593, 4294901760
        %v7595 = vsub.f32 %v7593, %v7594
        %v7596 = vand.u32 %v7595, 4294901760
        %7597 = vmatpush.msra.mxu0 %v7596
        %v7598 = vand.u32 %v7104, 4294901760
        %v7599 = vsub.f32 %v7104, %v7598
        %v7600 = vand.u32 %v7599, 4294901760
        %v7601 = vsub.f32 %v7599, %v7600
        %v7602 = vand.u32 %v7601, 4294901760
        %7603 = vmatpush.msra.mxu0 %v7602
        %v7604 = vand.u32 %v7102, 4294901760
        %v7605 = vsub.f32 %v7102, %v7604
        %v7606 = vand.u32 %v7605, 4294901760
        %v7607 = vsub.f32 %v7605, %v7606
        %v7608 = vand.u32 %v7607, 4294901760
        %7609 = vmatpush.msra.mxu0 %v7608
        %v7610 = vand.u32 %v7100, 4294901760
        %v7611 = vsub.f32 %v7100, %v7610
        %v7612 = vand.u32 %v7611, 4294901760
        %v7613 = vsub.f32 %v7611, %v7612
        %v7614 = vand.u32 %v7613, 4294901760
        %7615 = vmatpush.msra.mxu0 %v7614
        %v7616 = vand.u32 %v7067, 4294901760
        %7617 = vmatmul.f32.gmra.mxu0 %v7616
        %v7618 = vpop.f32.mrf.mxu0
        %v7619 = vadd.f32 %v7518, %v7618
        %7620 = vdwg.mxu0
        %v7621 = vand.u32 %v7130, 4294901760
        %v7622 = vsub.f32 %v7130, %v7621
        %7623 = vmatpush.msra.mxu0 %v7622
        %v7624 = vand.u32 %v7128, 4294901760
        %v7625 = vsub.f32 %v7128, %v7624
        %7626 = vmatpush.msra.mxu0 %v7625
        %v7627 = vand.u32 %v7126, 4294901760
        %v7628 = vsub.f32 %v7126, %v7627
        %7629 = vmatpush.msra.mxu0 %v7628
        %v7630 = vand.u32 %v7124, 4294901760
        %v7631 = vsub.f32 %v7124, %v7630
        %7632 = vmatpush.msra.mxu0 %v7631
        %v7633 = vand.u32 %v7122, 4294901760
        %v7634 = vsub.f32 %v7122, %v7633
        %7635 = vmatpush.msra.mxu0 %v7634
        %v7636 = vand.u32 %v7120, 4294901760
        %v7637 = vsub.f32 %v7120, %v7636
        %7638 = vmatpush.msra.mxu0 %v7637
        %v7639 = vand.u32 %v7118, 4294901760
        %v7640 = vsub.f32 %v7118, %v7639
        %7641 = vmatpush.msra.mxu0 %v7640
        %v7642 = vand.u32 %v7116, 4294901760
        %v7643 = vsub.f32 %v7116, %v7642
        %7644 = vmatpush.msra.mxu0 %v7643
        %v7645 = vand.u32 %v7114, 4294901760
        %v7646 = vsub.f32 %v7114, %v7645
        %7647 = vmatpush.msra.mxu0 %v7646
        %v7648 = vand.u32 %v7112, 4294901760
        %v7649 = vsub.f32 %v7112, %v7648
        %7650 = vmatpush.msra.mxu0 %v7649
        %v7651 = vand.u32 %v7110, 4294901760
        %v7652 = vsub.f32 %v7110, %v7651
        %7653 = vmatpush.msra.mxu0 %v7652
        %v7654 = vand.u32 %v7108, 4294901760
        %v7655 = vsub.f32 %v7108, %v7654
        %7656 = vmatpush.msra.mxu0 %v7655
        %v7657 = vand.u32 %v7106, 4294901760
        %v7658 = vsub.f32 %v7106, %v7657
        %7659 = vmatpush.msra.mxu0 %v7658
        %v7660 = vand.u32 %v7104, 4294901760
        %v7661 = vsub.f32 %v7104, %v7660
        %7662 = vmatpush.msra.mxu0 %v7661
        %v7663 = vand.u32 %v7102, 4294901760
        %v7664 = vsub.f32 %v7102, %v7663
        %7665 = vmatpush.msra.mxu0 %v7664
        %v7666 = vand.u32 %v7100, 4294901760
        %v7667 = vsub.f32 %v7100, %v7666
        %7668 = vmatpush.msra.mxu0 %v7667
        %v7669 = vand.u32 %v7067, 4294901760
        %v7670 = vsub.f32 %v7067, %v7669
        %7671 = vmatmul.f32.gmra.mxu0 %v7670
        %v7672 = vpop.f32.mrf.mxu0
        %v7673 = vadd.f32 %v7619, %v7672
        %7674 = vdwg.mxu0
        %v7675 = vand.u32 %v7130, 4294901760
        %7676 = vmatpush.msra.mxu0 %v7675
        %v7677 = vand.u32 %v7128, 4294901760
        %7678 = vmatpush.msra.mxu0 %v7677
        %v7679 = vand.u32 %v7126, 4294901760
        %7680 = vmatpush.msra.mxu0 %v7679
        %v7681 = vand.u32 %v7124, 4294901760
        %7682 = vmatpush.msra.mxu0 %v7681
        %v7683 = vand.u32 %v7122, 4294901760
        %7684 = vmatpush.msra.mxu0 %v7683
        %v7685 = vand.u32 %v7120, 4294901760
        %7686 = vmatpush.msra.mxu0 %v7685
        %v7687 = vand.u32 %v7118, 4294901760
        %7688 = vmatpush.msra.mxu0 %v7687
        %v7689 = vand.u32 %v7116, 4294901760
        %7690 = vmatpush.msra.mxu0 %v7689
        %v7691 = vand.u32 %v7114, 4294901760
        %7692 = vmatpush.msra.mxu0 %v7691
        %v7693 = vand.u32 %v7112, 4294901760
        %7694 = vmatpush.msra.mxu0 %v7693
        %v7695 = vand.u32 %v7110, 4294901760
        %7696 = vmatpush.msra.mxu0 %v7695
        %v7697 = vand.u32 %v7108, 4294901760
        %7698 = vmatpush.msra.mxu0 %v7697
        %v7699 = vand.u32 %v7106, 4294901760
        %7700 = vmatpush.msra.mxu0 %v7699
        %v7701 = vand.u32 %v7104, 4294901760
        %7702 = vmatpush.msra.mxu0 %v7701
        %v7703 = vand.u32 %v7102, 4294901760
        %7704 = vmatpush.msra.mxu0 %v7703
        %v7705 = vand.u32 %v7100, 4294901760
        %7706 = vmatpush.msra.mxu0 %v7705
        %v7707 = vand.u32 %v7067, 4294901760
        %v7708 = vsub.f32 %v7067, %v7707
        %v7709 = vand.u32 %v7708, 4294901760
        %7710 = vmatmul.f32.gmra.mxu0 %v7709
        %v7711 = vpop.f32.mrf.mxu0
        %v7712 = vadd.f32 %v7673, %v7711
        %7713 = vdwg.mxu0
        %v7714 = vand.u32 %v7130, 4294901760
        %v7715 = vsub.f32 %v7130, %v7714
        %v7716 = vand.u32 %v7715, 4294901760
        %7717 = vmatpush.msra.mxu0 %v7716
        %v7718 = vand.u32 %v7128, 4294901760
        %v7719 = vsub.f32 %v7128, %v7718
        %v7720 = vand.u32 %v7719, 4294901760
        %7721 = vmatpush.msra.mxu0 %v7720
        %v7722 = vand.u32 %v7126, 4294901760
        %v7723 = vsub.f32 %v7126, %v7722
        %v7724 = vand.u32 %v7723, 4294901760
        %7725 = vmatpush.msra.mxu0 %v7724
        %v7726 = vand.u32 %v7124, 4294901760
        %v7727 = vsub.f32 %v7124, %v7726
        %v7728 = vand.u32 %v7727, 4294901760
        %7729 = vmatpush.msra.mxu0 %v7728
        %v7730 = vand.u32 %v7122, 4294901760
        %v7731 = vsub.f32 %v7122, %v7730
        %v7732 = vand.u32 %v7731, 4294901760
        %7733 = vmatpush.msra.mxu0 %v7732
        %v7734 = vand.u32 %v7120, 4294901760
        %v7735 = vsub.f32 %v7120, %v7734
        %v7736 = vand.u32 %v7735, 4294901760
        %7737 = vmatpush.msra.mxu0 %v7736
        %v7738 = vand.u32 %v7118, 4294901760
        %v7739 = vsub.f32 %v7118, %v7738
        %v7740 = vand.u32 %v7739, 4294901760
        %7741 = vmatpush.msra.mxu0 %v7740
        %v7742 = vand.u32 %v7116, 4294901760
        %v7743 = vsub.f32 %v7116, %v7742
        %v7744 = vand.u32 %v7743, 4294901760
        %7745 = vmatpush.msra.mxu0 %v7744
        %v7746 = vand.u32 %v7114, 4294901760
        %v7747 = vsub.f32 %v7114, %v7746
        %v7748 = vand.u32 %v7747, 4294901760
        %7749 = vmatpush.msra.mxu0 %v7748
        %v7750 = vand.u32 %v7112, 4294901760
        %v7751 = vsub.f32 %v7112, %v7750
        %v7752 = vand.u32 %v7751, 4294901760
        %7753 = vmatpush.msra.mxu0 %v7752
        %v7754 = vand.u32 %v7110, 4294901760
        %v7755 = vsub.f32 %v7110, %v7754
        %v7756 = vand.u32 %v7755, 4294901760
        %7757 = vmatpush.msra.mxu0 %v7756
        %v7758 = vand.u32 %v7108, 4294901760
        %v7759 = vsub.f32 %v7108, %v7758
        %v7760 = vand.u32 %v7759, 4294901760
        %7761 = vmatpush.msra.mxu0 %v7760
        %v7762 = vand.u32 %v7106, 4294901760
        %v7763 = vsub.f32 %v7106, %v7762
        %v7764 = vand.u32 %v7763, 4294901760
        %7765 = vmatpush.msra.mxu0 %v7764
        %v7766 = vand.u32 %v7104, 4294901760
        %v7767 = vsub.f32 %v7104, %v7766
        %v7768 = vand.u32 %v7767, 4294901760
        %7769 = vmatpush.msra.mxu0 %v7768
        %v7770 = vand.u32 %v7102, 4294901760
        %v7771 = vsub.f32 %v7102, %v7770
        %v7772 = vand.u32 %v7771, 4294901760
        %7773 = vmatpush.msra.mxu0 %v7772
        %v7774 = vand.u32 %v7100, 4294901760
        %v7775 = vsub.f32 %v7100, %v7774
        %v7776 = vand.u32 %v7775, 4294901760
        %7777 = vmatpush.msra.mxu0 %v7776
        %v7778 = vand.u32 %v7067, 4294901760
        %7779 = vmatmul.f32.gmra.mxu0 %v7778
        %v7780 = vpop.f32.mrf.mxu0
        %v7781 = vadd.f32 %v7712, %v7780
        %7782 = vdwg.mxu0
        %v7783 = vand.u32 %v7130, 4294901760
        %7784 = vmatpush.msra.mxu0 %v7783
        %v7785 = vand.u32 %v7128, 4294901760
        %7786 = vmatpush.msra.mxu0 %v7785
        %v7787 = vand.u32 %v7126, 4294901760
        %7788 = vmatpush.msra.mxu0 %v7787
        %v7789 = vand.u32 %v7124, 4294901760
        %7790 = vmatpush.msra.mxu0 %v7789
        %v7791 = vand.u32 %v7122, 4294901760
        %7792 = vmatpush.msra.mxu0 %v7791
        %v7793 = vand.u32 %v7120, 4294901760
        %7794 = vmatpush.msra.mxu0 %v7793
        %v7795 = vand.u32 %v7118, 4294901760
        %7796 = vmatpush.msra.mxu0 %v7795
        %v7797 = vand.u32 %v7116, 4294901760
        %7798 = vmatpush.msra.mxu0 %v7797
        %v7799 = vand.u32 %v7114, 4294901760
        %7800 = vmatpush.msra.mxu0 %v7799
        %v7801 = vand.u32 %v7112, 4294901760
        %7802 = vmatpush.msra.mxu0 %v7801
        %v7803 = vand.u32 %v7110, 4294901760
        %7804 = vmatpush.msra.mxu0 %v7803
        %v7805 = vand.u32 %v7108, 4294901760
        %7806 = vmatpush.msra.mxu0 %v7805
        %v7807 = vand.u32 %v7106, 4294901760
        %7808 = vmatpush.msra.mxu0 %v7807
        %v7809 = vand.u32 %v7104, 4294901760
        %7810 = vmatpush.msra.mxu0 %v7809
        %v7811 = vand.u32 %v7102, 4294901760
        %7812 = vmatpush.msra.mxu0 %v7811
        %v7813 = vand.u32 %v7100, 4294901760
        %7814 = vmatpush.msra.mxu0 %v7813
        %v7815 = vand.u32 %v7067, 4294901760
        %7816 = vmatmul.f32.gmra.mxu0 %v7815
        %v7817 = vpop.f32.mrf.mxu0
        %v7818 = vadd.f32 %v7781, %v7817
        %7819 = vdwg.mxu0
        %v7820 = vand.u32 %v7099, 4294901760
        %7821 = vmatpush.msra.mxu0 %v7820
        %v7822 = vand.u32 %v7097, 4294901760
        %7823 = vmatpush.msra.mxu0 %v7822
        %v7824 = vand.u32 %v7095, 4294901760
        %7825 = vmatpush.msra.mxu0 %v7824
        %v7826 = vand.u32 %v7093, 4294901760
        %7827 = vmatpush.msra.mxu0 %v7826
        %v7828 = vand.u32 %v7091, 4294901760
        %7829 = vmatpush.msra.mxu0 %v7828
        %v7830 = vand.u32 %v7089, 4294901760
        %7831 = vmatpush.msra.mxu0 %v7830
        %v7832 = vand.u32 %v7087, 4294901760
        %7833 = vmatpush.msra.mxu0 %v7832
        %v7834 = vand.u32 %v7085, 4294901760
        %7835 = vmatpush.msra.mxu0 %v7834
        %v7836 = vand.u32 %v7083, 4294901760
        %7837 = vmatpush.msra.mxu0 %v7836
        %v7838 = vand.u32 %v7081, 4294901760
        %7839 = vmatpush.msra.mxu0 %v7838
        %v7840 = vand.u32 %v7079, 4294901760
        %7841 = vmatpush.msra.mxu0 %v7840
        %v7842 = vand.u32 %v7077, 4294901760
        %7843 = vmatpush.msra.mxu0 %v7842
        %v7844 = vand.u32 %v7075, 4294901760
        %7845 = vmatpush.msra.mxu0 %v7844
        %v7846 = vand.u32 %v7073, 4294901760
        %7847 = vmatpush.msra.mxu0 %v7846
        %v7848 = vand.u32 %v7071, 4294901760
        %7849 = vmatpush.msra.mxu0 %v7848
        %v7850 = vand.u32 %v7069, 4294901760
        %7851 = vmatpush.msra.mxu0 %v7850
        %v7852 = vand.u32 %v7066, 4294901760
        %v7853 = vsub.f32 %v7066, %v7852
        %v7854 = vand.u32 %v7853, 4294901760
        %v7855 = vsub.f32 %v7853, %v7854
        %v7856 = vand.u32 %v7855, 4294901760
        %7857 = vmatmul.f32.gmra.mxu0 %v7856
        %v7858 = vpop.f32.mrf.mxu0
        %v7859 = vadd.f32 %v7135, %v7858
        %7860 = vdwg.mxu0
        %v7861 = vand.u32 %v7099, 4294901760
        %v7862 = vsub.f32 %v7099, %v7861
        %v7863 = vand.u32 %v7862, 4294901760
        %v7864 = vsub.f32 %v7862, %v7863
        %v7865 = vand.u32 %v7864, 4294901760
        %7866 = vmatpush.msra.mxu0 %v7865
        %v7867 = vand.u32 %v7097, 4294901760
        %v7868 = vsub.f32 %v7097, %v7867
        %v7869 = vand.u32 %v7868, 4294901760
        %v7870 = vsub.f32 %v7868, %v7869
        %v7871 = vand.u32 %v7870, 4294901760
        %7872 = vmatpush.msra.mxu0 %v7871
        %v7873 = vand.u32 %v7095, 4294901760
        %v7874 = vsub.f32 %v7095, %v7873
        %v7875 = vand.u32 %v7874, 4294901760
        %v7876 = vsub.f32 %v7874, %v7875
        %v7877 = vand.u32 %v7876, 4294901760
        %7878 = vmatpush.msra.mxu0 %v7877
        %v7879 = vand.u32 %v7093, 4294901760
        %v7880 = vsub.f32 %v7093, %v7879
        %v7881 = vand.u32 %v7880, 4294901760
        %v7882 = vsub.f32 %v7880, %v7881
        %v7883 = vand.u32 %v7882, 4294901760
        %7884 = vmatpush.msra.mxu0 %v7883
        %v7885 = vand.u32 %v7091, 4294901760
        %v7886 = vsub.f32 %v7091, %v7885
        %v7887 = vand.u32 %v7886, 4294901760
        %v7888 = vsub.f32 %v7886, %v7887
        %v7889 = vand.u32 %v7888, 4294901760
        %7890 = vmatpush.msra.mxu0 %v7889
        %v7891 = vand.u32 %v7089, 4294901760
        %v7892 = vsub.f32 %v7089, %v7891
        %v7893 = vand.u32 %v7892, 4294901760
        %v7894 = vsub.f32 %v7892, %v7893
        %v7895 = vand.u32 %v7894, 4294901760
        %7896 = vmatpush.msra.mxu0 %v7895
        %v7897 = vand.u32 %v7087, 4294901760
        %v7898 = vsub.f32 %v7087, %v7897
        %v7899 = vand.u32 %v7898, 4294901760
        %v7900 = vsub.f32 %v7898, %v7899
        %v7901 = vand.u32 %v7900, 4294901760
        %7902 = vmatpush.msra.mxu0 %v7901
        %v7903 = vand.u32 %v7085, 4294901760
        %v7904 = vsub.f32 %v7085, %v7903
        %v7905 = vand.u32 %v7904, 4294901760
        %v7906 = vsub.f32 %v7904, %v7905
        %v7907 = vand.u32 %v7906, 4294901760
        %7908 = vmatpush.msra.mxu0 %v7907
        %v7909 = vand.u32 %v7083, 4294901760
        %v7910 = vsub.f32 %v7083, %v7909
        %v7911 = vand.u32 %v7910, 4294901760
        %v7912 = vsub.f32 %v7910, %v7911
        %v7913 = vand.u32 %v7912, 4294901760
        %7914 = vmatpush.msra.mxu0 %v7913
        %v7915 = vand.u32 %v7081, 4294901760
        %v7916 = vsub.f32 %v7081, %v7915
        %v7917 = vand.u32 %v7916, 4294901760
        %v7918 = vsub.f32 %v7916, %v7917
        %v7919 = vand.u32 %v7918, 4294901760
        %7920 = vmatpush.msra.mxu0 %v7919
        %v7921 = vand.u32 %v7079, 4294901760
        %v7922 = vsub.f32 %v7079, %v7921
        %v7923 = vand.u32 %v7922, 4294901760
        %v7924 = vsub.f32 %v7922, %v7923
        %v7925 = vand.u32 %v7924, 4294901760
        %7926 = vmatpush.msra.mxu0 %v7925
        %v7927 = vand.u32 %v7077, 4294901760
        %v7928 = vsub.f32 %v7077, %v7927
        %v7929 = vand.u32 %v7928, 4294901760
        %v7930 = vsub.f32 %v7928, %v7929
        %v7931 = vand.u32 %v7930, 4294901760
        %7932 = vmatpush.msra.mxu0 %v7931
        %v7933 = vand.u32 %v7075, 4294901760
        %v7934 = vsub.f32 %v7075, %v7933
        %v7935 = vand.u32 %v7934, 4294901760
        %v7936 = vsub.f32 %v7934, %v7935
        %v7937 = vand.u32 %v7936, 4294901760
        %7938 = vmatpush.msra.mxu0 %v7937
        %v7939 = vand.u32 %v7073, 4294901760
        %v7940 = vsub.f32 %v7073, %v7939
        %v7941 = vand.u32 %v7940, 4294901760
        %v7942 = vsub.f32 %v7940, %v7941
        %v7943 = vand.u32 %v7942, 4294901760
        %7944 = vmatpush.msra.mxu0 %v7943
        %v7945 = vand.u32 %v7071, 4294901760
        %v7946 = vsub.f32 %v7071, %v7945
        %v7947 = vand.u32 %v7946, 4294901760
        %v7948 = vsub.f32 %v7946, %v7947
        %v7949 = vand.u32 %v7948, 4294901760
        %7950 = vmatpush.msra.mxu0 %v7949
        %v7951 = vand.u32 %v7069, 4294901760
        %v7952 = vsub.f32 %v7069, %v7951
        %v7953 = vand.u32 %v7952, 4294901760
        %v7954 = vsub.f32 %v7952, %v7953
        %v7955 = vand.u32 %v7954, 4294901760
        %7956 = vmatpush.msra.mxu0 %v7955
        %v7957 = vand.u32 %v7066, 4294901760
        %7958 = vmatmul.f32.gmra.mxu0 %v7957
        %v7959 = vpop.f32.mrf.mxu0
        %v7960 = vadd.f32 %v7859, %v7959
        %7961 = vdwg.mxu0
        %v7962 = vand.u32 %v7099, 4294901760
        %v7963 = vsub.f32 %v7099, %v7962
        %7964 = vmatpush.msra.mxu0 %v7963
        %v7965 = vand.u32 %v7097, 4294901760
        %v7966 = vsub.f32 %v7097, %v7965
        %7967 = vmatpush.msra.mxu0 %v7966
        %v7968 = vand.u32 %v7095, 4294901760
        %v7969 = vsub.f32 %v7095, %v7968
        %7970 = vmatpush.msra.mxu0 %v7969
        %v7971 = vand.u32 %v7093, 4294901760
        %v7972 = vsub.f32 %v7093, %v7971
        %7973 = vmatpush.msra.mxu0 %v7972
        %v7974 = vand.u32 %v7091, 4294901760
        %v7975 = vsub.f32 %v7091, %v7974
        %7976 = vmatpush.msra.mxu0 %v7975
        %v7977 = vand.u32 %v7089, 4294901760
        %v7978 = vsub.f32 %v7089, %v7977
        %7979 = vmatpush.msra.mxu0 %v7978
        %v7980 = vand.u32 %v7087, 4294901760
        %v7981 = vsub.f32 %v7087, %v7980
        %7982 = vmatpush.msra.mxu0 %v7981
        %v7983 = vand.u32 %v7085, 4294901760
        %v7984 = vsub.f32 %v7085, %v7983
        %7985 = vmatpush.msra.mxu0 %v7984
        %v7986 = vand.u32 %v7083, 4294901760
        %v7987 = vsub.f32 %v7083, %v7986
        %7988 = vmatpush.msra.mxu0 %v7987
        %v7989 = vand.u32 %v7081, 4294901760
        %v7990 = vsub.f32 %v7081, %v7989
        %7991 = vmatpush.msra.mxu0 %v7990
        %v7992 = vand.u32 %v7079, 4294901760
        %v7993 = vsub.f32 %v7079, %v7992
        %7994 = vmatpush.msra.mxu0 %v7993
        %v7995 = vand.u32 %v7077, 4294901760
        %v7996 = vsub.f32 %v7077, %v7995
        %7997 = vmatpush.msra.mxu0 %v7996
        %v7998 = vand.u32 %v7075, 4294901760
        %v7999 = vsub.f32 %v7075, %v7998
        %8000 = vmatpush.msra.mxu0 %v7999
        %v8001 = vand.u32 %v7073, 4294901760
        %v8002 = vsub.f32 %v7073, %v8001
        %8003 = vmatpush.msra.mxu0 %v8002
        %v8004 = vand.u32 %v7071, 4294901760
        %v8005 = vsub.f32 %v7071, %v8004
        %8006 = vmatpush.msra.mxu0 %v8005
        %v8007 = vand.u32 %v7069, 4294901760
        %v8008 = vsub.f32 %v7069, %v8007
        %8009 = vmatpush.msra.mxu0 %v8008
        %v8010 = vand.u32 %v7066, 4294901760
        %v8011 = vsub.f32 %v7066, %v8010
        %8012 = vmatmul.f32.gmra.mxu0 %v8011
        %v8013 = vpop.f32.mrf.mxu0
        %v8014 = vadd.f32 %v7960, %v8013
        %8015 = vdwg.mxu0
        %v8016 = vand.u32 %v7099, 4294901760
        %8017 = vmatpush.msra.mxu0 %v8016
        %v8018 = vand.u32 %v7097, 4294901760
        %8019 = vmatpush.msra.mxu0 %v8018
        %v8020 = vand.u32 %v7095, 4294901760
        %8021 = vmatpush.msra.mxu0 %v8020
        %v8022 = vand.u32 %v7093, 4294901760
        %8023 = vmatpush.msra.mxu0 %v8022
        %v8024 = vand.u32 %v7091, 4294901760
        %8025 = vmatpush.msra.mxu0 %v8024
        %v8026 = vand.u32 %v7089, 4294901760
        %8027 = vmatpush.msra.mxu0 %v8026
        %v8028 = vand.u32 %v7087, 4294901760
        %8029 = vmatpush.msra.mxu0 %v8028
        %v8030 = vand.u32 %v7085, 4294901760
        %8031 = vmatpush.msra.mxu0 %v8030
        %v8032 = vand.u32 %v7083, 4294901760
        %8033 = vmatpush.msra.mxu0 %v8032
        %v8034 = vand.u32 %v7081, 4294901760
        %8035 = vmatpush.msra.mxu0 %v8034
        %v8036 = vand.u32 %v7079, 4294901760
        %8037 = vmatpush.msra.mxu0 %v8036
        %v8038 = vand.u32 %v7077, 4294901760
        %8039 = vmatpush.msra.mxu0 %v8038
        %v8040 = vand.u32 %v7075, 4294901760
        %8041 = vmatpush.msra.mxu0 %v8040
        %v8042 = vand.u32 %v7073, 4294901760
        %8043 = vmatpush.msra.mxu0 %v8042
        %v8044 = vand.u32 %v7071, 4294901760
        %8045 = vmatpush.msra.mxu0 %v8044
        %v8046 = vand.u32 %v7069, 4294901760
        %8047 = vmatpush.msra.mxu0 %v8046
        %v8048 = vand.u32 %v7066, 4294901760
        %v8049 = vsub.f32 %v7066, %v8048
        %v8050 = vand.u32 %v8049, 4294901760
        %8051 = vmatmul.f32.gmra.mxu0 %v8050
        %v8052 = vpop.f32.mrf.mxu0
        %v8053 = vadd.f32 %v8014, %v8052
        %8054 = vdwg.mxu0
        %v8055 = vand.u32 %v7099, 4294901760
        %v8056 = vsub.f32 %v7099, %v8055
        %v8057 = vand.u32 %v8056, 4294901760
        %8058 = vmatpush.msra.mxu0 %v8057
        %v8059 = vand.u32 %v7097, 4294901760
        %v8060 = vsub.f32 %v7097, %v8059
        %v8061 = vand.u32 %v8060, 4294901760
        %8062 = vmatpush.msra.mxu0 %v8061
        %v8063 = vand.u32 %v7095, 4294901760
        %v8064 = vsub.f32 %v7095, %v8063
        %v8065 = vand.u32 %v8064, 4294901760
        %8066 = vmatpush.msra.mxu0 %v8065
        %v8067 = vand.u32 %v7093, 4294901760
        %v8068 = vsub.f32 %v7093, %v8067
        %v8069 = vand.u32 %v8068, 4294901760
        %8070 = vmatpush.msra.mxu0 %v8069
        %v8071 = vand.u32 %v7091, 4294901760
        %v8072 = vsub.f32 %v7091, %v8071
        %v8073 = vand.u32 %v8072, 4294901760
        %8074 = vmatpush.msra.mxu0 %v8073
        %v8075 = vand.u32 %v7089, 4294901760
        %v8076 = vsub.f32 %v7089, %v8075
        %v8077 = vand.u32 %v8076, 4294901760
        %8078 = vmatpush.msra.mxu0 %v8077
        %v8079 = vand.u32 %v7087, 4294901760
        %v8080 = vsub.f32 %v7087, %v8079
        %v8081 = vand.u32 %v8080, 4294901760
        %8082 = vmatpush.msra.mxu0 %v8081
        %v8083 = vand.u32 %v7085, 4294901760
        %v8084 = vsub.f32 %v7085, %v8083
        %v8085 = vand.u32 %v8084, 4294901760
        %8086 = vmatpush.msra.mxu0 %v8085
        %v8087 = vand.u32 %v7083, 4294901760
        %v8088 = vsub.f32 %v7083, %v8087
        %v8089 = vand.u32 %v8088, 4294901760
        %8090 = vmatpush.msra.mxu0 %v8089
        %v8091 = vand.u32 %v7081, 4294901760
        %v8092 = vsub.f32 %v7081, %v8091
        %v8093 = vand.u32 %v8092, 4294901760
        %8094 = vmatpush.msra.mxu0 %v8093
        %v8095 = vand.u32 %v7079, 4294901760
        %v8096 = vsub.f32 %v7079, %v8095
        %v8097 = vand.u32 %v8096, 4294901760
        %8098 = vmatpush.msra.mxu0 %v8097
        %v8099 = vand.u32 %v7077, 4294901760
        %v8100 = vsub.f32 %v7077, %v8099
        %v8101 = vand.u32 %v8100, 4294901760
        %8102 = vmatpush.msra.mxu0 %v8101
        %v8103 = vand.u32 %v7075, 4294901760
        %v8104 = vsub.f32 %v7075, %v8103
        %v8105 = vand.u32 %v8104, 4294901760
        %8106 = vmatpush.msra.mxu0 %v8105
        %v8107 = vand.u32 %v7073, 4294901760
        %v8108 = vsub.f32 %v7073, %v8107
        %v8109 = vand.u32 %v8108, 4294901760
        %8110 = vmatpush.msra.mxu0 %v8109
        %v8111 = vand.u32 %v7071, 4294901760
        %v8112 = vsub.f32 %v7071, %v8111
        %v8113 = vand.u32 %v8112, 4294901760
        %8114 = vmatpush.msra.mxu0 %v8113
        %v8115 = vand.u32 %v7069, 4294901760
        %v8116 = vsub.f32 %v7069, %v8115
        %v8117 = vand.u32 %v8116, 4294901760
        %8118 = vmatpush.msra.mxu0 %v8117
        %v8119 = vand.u32 %v7066, 4294901760
        %8120 = vmatmul.f32.gmra.mxu0 %v8119
        %v8121 = vpop.f32.mrf.mxu0
        %v8122 = vadd.f32 %v8053, %v8121
        %8123 = vdwg.mxu0
        %v8124 = vand.u32 %v7099, 4294901760
        %8125 = vmatpush.msra.mxu0 %v8124
        %v8126 = vand.u32 %v7097, 4294901760
        %8127 = vmatpush.msra.mxu0 %v8126
        %v8128 = vand.u32 %v7095, 4294901760
        %8129 = vmatpush.msra.mxu0 %v8128
        %v8130 = vand.u32 %v7093, 4294901760
        %8131 = vmatpush.msra.mxu0 %v8130
        %v8132 = vand.u32 %v7091, 4294901760
        %8133 = vmatpush.msra.mxu0 %v8132
        %v8134 = vand.u32 %v7089, 4294901760
        %8135 = vmatpush.msra.mxu0 %v8134
        %v8136 = vand.u32 %v7087, 4294901760
        %8137 = vmatpush.msra.mxu0 %v8136
        %v8138 = vand.u32 %v7085, 4294901760
        %8139 = vmatpush.msra.mxu0 %v8138
        %v8140 = vand.u32 %v7083, 4294901760
        %8141 = vmatpush.msra.mxu0 %v8140
        %v8142 = vand.u32 %v7081, 4294901760
        %8143 = vmatpush.msra.mxu0 %v8142
        %v8144 = vand.u32 %v7079, 4294901760
        %8145 = vmatpush.msra.mxu0 %v8144
        %v8146 = vand.u32 %v7077, 4294901760
        %8147 = vmatpush.msra.mxu0 %v8146
        %v8148 = vand.u32 %v7075, 4294901760
        %8149 = vmatpush.msra.mxu0 %v8148
        %v8150 = vand.u32 %v7073, 4294901760
        %8151 = vmatpush.msra.mxu0 %v8150
        %v8152 = vand.u32 %v7071, 4294901760
        %8153 = vmatpush.msra.mxu0 %v8152
        %v8154 = vand.u32 %v7069, 4294901760
        %8155 = vmatpush.msra.mxu0 %v8154
        %v8156 = vand.u32 %v7066, 4294901760
        %8157 = vmatmul.f32.gmra.mxu0 %v8156
        %v8158 = vpop.f32.mrf.mxu0
        %v8159 = vadd.f32 %v8122, %v8158
        %8160 = vdwg.mxu0
        %v8161 = vand.u32 %v7131, 4294901760
        %8162 = vmatpush.msra.mxu0 %v8161
        %v8163 = vand.u32 %v7129, 4294901760
        %8164 = vmatpush.msra.mxu0 %v8163
        %v8165 = vand.u32 %v7127, 4294901760
        %8166 = vmatpush.msra.mxu0 %v8165
        %v8167 = vand.u32 %v7125, 4294901760
        %8168 = vmatpush.msra.mxu0 %v8167
        %v8169 = vand.u32 %v7123, 4294901760
        %8170 = vmatpush.msra.mxu0 %v8169
        %v8171 = vand.u32 %v7121, 4294901760
        %8172 = vmatpush.msra.mxu0 %v8171
        %v8173 = vand.u32 %v7119, 4294901760
        %8174 = vmatpush.msra.mxu0 %v8173
        %v8175 = vand.u32 %v7117, 4294901760
        %8176 = vmatpush.msra.mxu0 %v8175
        %v8177 = vand.u32 %v7115, 4294901760
        %8178 = vmatpush.msra.mxu0 %v8177
        %v8179 = vand.u32 %v7113, 4294901760
        %8180 = vmatpush.msra.mxu0 %v8179
        %v8181 = vand.u32 %v7111, 4294901760
        %8182 = vmatpush.msra.mxu0 %v8181
        %v8183 = vand.u32 %v7109, 4294901760
        %8184 = vmatpush.msra.mxu0 %v8183
        %v8185 = vand.u32 %v7107, 4294901760
        %8186 = vmatpush.msra.mxu0 %v8185
        %v8187 = vand.u32 %v7105, 4294901760
        %8188 = vmatpush.msra.mxu0 %v8187
        %v8189 = vand.u32 %v7103, 4294901760
        %8190 = vmatpush.msra.mxu0 %v8189
        %v8191 = vand.u32 %v7101, 4294901760
        %8192 = vmatpush.msra.mxu0 %v8191
        %v8193 = vand.u32 %v7067, 4294901760
        %v8194 = vsub.f32 %v7067, %v8193
        %v8195 = vand.u32 %v8194, 4294901760
        %v8196 = vsub.f32 %v8194, %v8195
        %v8197 = vand.u32 %v8196, 4294901760
        %8198 = vmatmul.f32.gmra.mxu0 %v8197
        %v8199 = vpop.f32.mrf.mxu0
        %v8200 = vadd.f32 %v8159, %v8199
        %8201 = vdwg.mxu0
        %v8202 = vand.u32 %v7131, 4294901760
        %v8203 = vsub.f32 %v7131, %v8202
        %v8204 = vand.u32 %v8203, 4294901760
        %v8205 = vsub.f32 %v8203, %v8204
        %v8206 = vand.u32 %v8205, 4294901760
        %8207 = vmatpush.msra.mxu0 %v8206
        %v8208 = vand.u32 %v7129, 4294901760
        %v8209 = vsub.f32 %v7129, %v8208
        %v8210 = vand.u32 %v8209, 4294901760
        %v8211 = vsub.f32 %v8209, %v8210
        %v8212 = vand.u32 %v8211, 4294901760
        %8213 = vmatpush.msra.mxu0 %v8212
        %v8214 = vand.u32 %v7127, 4294901760
        %v8215 = vsub.f32 %v7127, %v8214
        %v8216 = vand.u32 %v8215, 4294901760
        %v8217 = vsub.f32 %v8215, %v8216
        %v8218 = vand.u32 %v8217, 4294901760
        %8219 = vmatpush.msra.mxu0 %v8218
        %v8220 = vand.u32 %v7125, 4294901760
        %v8221 = vsub.f32 %v7125, %v8220
        %v8222 = vand.u32 %v8221, 4294901760
        %v8223 = vsub.f32 %v8221, %v8222
        %v8224 = vand.u32 %v8223, 4294901760
        %8225 = vmatpush.msra.mxu0 %v8224
        %v8226 = vand.u32 %v7123, 4294901760
        %v8227 = vsub.f32 %v7123, %v8226
        %v8228 = vand.u32 %v8227, 4294901760
        %v8229 = vsub.f32 %v8227, %v8228
        %v8230 = vand.u32 %v8229, 4294901760
        %8231 = vmatpush.msra.mxu0 %v8230
        %v8232 = vand.u32 %v7121, 4294901760
        %v8233 = vsub.f32 %v7121, %v8232
        %v8234 = vand.u32 %v8233, 4294901760
        %v8235 = vsub.f32 %v8233, %v8234
        %v8236 = vand.u32 %v8235, 4294901760
        %8237 = vmatpush.msra.mxu0 %v8236
        %v8238 = vand.u32 %v7119, 4294901760
        %v8239 = vsub.f32 %v7119, %v8238
        %v8240 = vand.u32 %v8239, 4294901760
        %v8241 = vsub.f32 %v8239, %v8240
        %v8242 = vand.u32 %v8241, 4294901760
        %8243 = vmatpush.msra.mxu0 %v8242
        %v8244 = vand.u32 %v7117, 4294901760
        %v8245 = vsub.f32 %v7117, %v8244
        %v8246 = vand.u32 %v8245, 4294901760
        %v8247 = vsub.f32 %v8245, %v8246
        %v8248 = vand.u32 %v8247, 4294901760
        %8249 = vmatpush.msra.mxu0 %v8248
        %v8250 = vand.u32 %v7115, 4294901760
        %v8251 = vsub.f32 %v7115, %v8250
        %v8252 = vand.u32 %v8251, 4294901760
        %v8253 = vsub.f32 %v8251, %v8252
        %v8254 = vand.u32 %v8253, 4294901760
        %8255 = vmatpush.msra.mxu0 %v8254
        %v8256 = vand.u32 %v7113, 4294901760
        %v8257 = vsub.f32 %v7113, %v8256
        %v8258 = vand.u32 %v8257, 4294901760
        %v8259 = vsub.f32 %v8257, %v8258
        %v8260 = vand.u32 %v8259, 4294901760
        %8261 = vmatpush.msra.mxu0 %v8260
        %v8262 = vand.u32 %v7111, 4294901760
        %v8263 = vsub.f32 %v7111, %v8262
        %v8264 = vand.u32 %v8263, 4294901760
        %v8265 = vsub.f32 %v8263, %v8264
        %v8266 = vand.u32 %v8265, 4294901760
        %8267 = vmatpush.msra.mxu0 %v8266
        %v8268 = vand.u32 %v7109, 4294901760
        %v8269 = vsub.f32 %v7109, %v8268
        %v8270 = vand.u32 %v8269, 4294901760
        %v8271 = vsub.f32 %v8269, %v8270
        %v8272 = vand.u32 %v8271, 4294901760
        %8273 = vmatpush.msra.mxu0 %v8272
        %v8274 = vand.u32 %v7107, 4294901760
        %v8275 = vsub.f32 %v7107, %v8274
        %v8276 = vand.u32 %v8275, 4294901760
        %v8277 = vsub.f32 %v8275, %v8276
        %v8278 = vand.u32 %v8277, 4294901760
        %8279 = vmatpush.msra.mxu0 %v8278
        %v8280 = vand.u32 %v7105, 4294901760
        %v8281 = vsub.f32 %v7105, %v8280
        %v8282 = vand.u32 %v8281, 4294901760
        %v8283 = vsub.f32 %v8281, %v8282
        %v8284 = vand.u32 %v8283, 4294901760
        %8285 = vmatpush.msra.mxu0 %v8284
        %v8286 = vand.u32 %v7103, 4294901760
        %v8287 = vsub.f32 %v7103, %v8286
        %v8288 = vand.u32 %v8287, 4294901760
        %v8289 = vsub.f32 %v8287, %v8288
        %v8290 = vand.u32 %v8289, 4294901760
        %8291 = vmatpush.msra.mxu0 %v8290
        %v8292 = vand.u32 %v7101, 4294901760
        %v8293 = vsub.f32 %v7101, %v8292
        %v8294 = vand.u32 %v8293, 4294901760
        %v8295 = vsub.f32 %v8293, %v8294
        %v8296 = vand.u32 %v8295, 4294901760
        %8297 = vmatpush.msra.mxu0 %v8296
        %v8298 = vand.u32 %v7067, 4294901760
        %8299 = vmatmul.f32.gmra.mxu0 %v8298
        %v8300 = vpop.f32.mrf.mxu0
        %v8301 = vadd.f32 %v8200, %v8300
        %8302 = vdwg.mxu0
        %v8303 = vand.u32 %v7131, 4294901760
        %v8304 = vsub.f32 %v7131, %v8303
        %8305 = vmatpush.msra.mxu0 %v8304
        %v8306 = vand.u32 %v7129, 4294901760
        %v8307 = vsub.f32 %v7129, %v8306
        %8308 = vmatpush.msra.mxu0 %v8307
        %v8309 = vand.u32 %v7127, 4294901760
        %v8310 = vsub.f32 %v7127, %v8309
        %8311 = vmatpush.msra.mxu0 %v8310
        %v8312 = vand.u32 %v7125, 4294901760
        %v8313 = vsub.f32 %v7125, %v8312
        %8314 = vmatpush.msra.mxu0 %v8313
        %v8315 = vand.u32 %v7123, 4294901760
        %v8316 = vsub.f32 %v7123, %v8315
        %8317 = vmatpush.msra.mxu0 %v8316
        %v8318 = vand.u32 %v7121, 4294901760
        %v8319 = vsub.f32 %v7121, %v8318
        %8320 = vmatpush.msra.mxu0 %v8319
        %v8321 = vand.u32 %v7119, 4294901760
        %v8322 = vsub.f32 %v7119, %v8321
        %8323 = vmatpush.msra.mxu0 %v8322
        %v8324 = vand.u32 %v7117, 4294901760
        %v8325 = vsub.f32 %v7117, %v8324
        %8326 = vmatpush.msra.mxu0 %v8325
        %v8327 = vand.u32 %v7115, 4294901760
        %v8328 = vsub.f32 %v7115, %v8327
        %8329 = vmatpush.msra.mxu0 %v8328
        %v8330 = vand.u32 %v7113, 4294901760
        %v8331 = vsub.f32 %v7113, %v8330
        %8332 = vmatpush.msra.mxu0 %v8331
        %v8333 = vand.u32 %v7111, 4294901760
        %v8334 = vsub.f32 %v7111, %v8333
        %8335 = vmatpush.msra.mxu0 %v8334
        %v8336 = vand.u32 %v7109, 4294901760
        %v8337 = vsub.f32 %v7109, %v8336
        %8338 = vmatpush.msra.mxu0 %v8337
        %v8339 = vand.u32 %v7107, 4294901760
        %v8340 = vsub.f32 %v7107, %v8339
        %8341 = vmatpush.msra.mxu0 %v8340
        %v8342 = vand.u32 %v7105, 4294901760
        %v8343 = vsub.f32 %v7105, %v8342
        %8344 = vmatpush.msra.mxu0 %v8343
        %v8345 = vand.u32 %v7103, 4294901760
        %v8346 = vsub.f32 %v7103, %v8345
        %8347 = vmatpush.msra.mxu0 %v8346
        %v8348 = vand.u32 %v7101, 4294901760
        %v8349 = vsub.f32 %v7101, %v8348
        %8350 = vmatpush.msra.mxu0 %v8349
        %v8351 = vand.u32 %v7067, 4294901760
        %v8352 = vsub.f32 %v7067, %v8351
        %8353 = vmatmul.f32.gmra.mxu0 %v8352
        %v8354 = vpop.f32.mrf.mxu0
        %v8355 = vadd.f32 %v8301, %v8354
        %8356 = vdwg.mxu0
        %v8357 = vand.u32 %v7131, 4294901760
        %8358 = vmatpush.msra.mxu0 %v8357
        %v8359 = vand.u32 %v7129, 4294901760
        %8360 = vmatpush.msra.mxu0 %v8359
        %v8361 = vand.u32 %v7127, 4294901760
        %8362 = vmatpush.msra.mxu0 %v8361
        %v8363 = vand.u32 %v7125, 4294901760
        %8364 = vmatpush.msra.mxu0 %v8363
        %v8365 = vand.u32 %v7123, 4294901760
        %8366 = vmatpush.msra.mxu0 %v8365
        %v8367 = vand.u32 %v7121, 4294901760
        %8368 = vmatpush.msra.mxu0 %v8367
        %v8369 = vand.u32 %v7119, 4294901760
        %8370 = vmatpush.msra.mxu0 %v8369
        %v8371 = vand.u32 %v7117, 4294901760
        %8372 = vmatpush.msra.mxu0 %v8371
        %v8373 = vand.u32 %v7115, 4294901760
        %8374 = vmatpush.msra.mxu0 %v8373
        %v8375 = vand.u32 %v7113, 4294901760
        %8376 = vmatpush.msra.mxu0 %v8375
        %v8377 = vand.u32 %v7111, 4294901760
        %8378 = vmatpush.msra.mxu0 %v8377
        %v8379 = vand.u32 %v7109, 4294901760
        %8380 = vmatpush.msra.mxu0 %v8379
        %v8381 = vand.u32 %v7107, 4294901760
        %8382 = vmatpush.msra.mxu0 %v8381
        %v8383 = vand.u32 %v7105, 4294901760
        %8384 = vmatpush.msra.mxu0 %v8383
        %v8385 = vand.u32 %v7103, 4294901760
        %8386 = vmatpush.msra.mxu0 %v8385
        %v8387 = vand.u32 %v7101, 4294901760
        %8388 = vmatpush.msra.mxu0 %v8387
        %v8389 = vand.u32 %v7067, 4294901760
        %v8390 = vsub.f32 %v7067, %v8389
        %v8391 = vand.u32 %v8390, 4294901760
        %8392 = vmatmul.f32.gmra.mxu0 %v8391
        %v8393 = vpop.f32.mrf.mxu0
        %v8394 = vadd.f32 %v8355, %v8393
        %8395 = vdwg.mxu0
        %v8396 = vand.u32 %v7131, 4294901760
        %v8397 = vsub.f32 %v7131, %v8396
        %v8398 = vand.u32 %v8397, 4294901760
        %8399 = vmatpush.msra.mxu0 %v8398
        %v8400 = vand.u32 %v7129, 4294901760
        %v8401 = vsub.f32 %v7129, %v8400
        %v8402 = vand.u32 %v8401, 4294901760
        %8403 = vmatpush.msra.mxu0 %v8402
        %v8404 = vand.u32 %v7127, 4294901760
        %v8405 = vsub.f32 %v7127, %v8404
        %v8406 = vand.u32 %v8405, 4294901760
        %8407 = vmatpush.msra.mxu0 %v8406
        %v8408 = vand.u32 %v7125, 4294901760
        %v8409 = vsub.f32 %v7125, %v8408
        %v8410 = vand.u32 %v8409, 4294901760
        %8411 = vmatpush.msra.mxu0 %v8410
        %v8412 = vand.u32 %v7123, 4294901760
        %v8413 = vsub.f32 %v7123, %v8412
        %v8414 = vand.u32 %v8413, 4294901760
        %8415 = vmatpush.msra.mxu0 %v8414
        %v8416 = vand.u32 %v7121, 4294901760
        %v8417 = vsub.f32 %v7121, %v8416
        %v8418 = vand.u32 %v8417, 4294901760
        %8419 = vmatpush.msra.mxu0 %v8418
        %v8420 = vand.u32 %v7119, 4294901760
        %v8421 = vsub.f32 %v7119, %v8420
        %v8422 = vand.u32 %v8421, 4294901760
        %8423 = vmatpush.msra.mxu0 %v8422
        %v8424 = vand.u32 %v7117, 4294901760
        %v8425 = vsub.f32 %v7117, %v8424
        %v8426 = vand.u32 %v8425, 4294901760
        %8427 = vmatpush.msra.mxu0 %v8426
        %v8428 = vand.u32 %v7115, 4294901760
        %v8429 = vsub.f32 %v7115, %v8428
        %v8430 = vand.u32 %v8429, 4294901760
        %8431 = vmatpush.msra.mxu0 %v8430
        %v8432 = vand.u32 %v7113, 4294901760
        %v8433 = vsub.f32 %v7113, %v8432
        %v8434 = vand.u32 %v8433, 4294901760
        %8435 = vmatpush.msra.mxu0 %v8434
        %v8436 = vand.u32 %v7111, 4294901760
        %v8437 = vsub.f32 %v7111, %v8436
        %v8438 = vand.u32 %v8437, 4294901760
        %8439 = vmatpush.msra.mxu0 %v8438
        %v8440 = vand.u32 %v7109, 4294901760
        %v8441 = vsub.f32 %v7109, %v8440
        %v8442 = vand.u32 %v8441, 4294901760
        %8443 = vmatpush.msra.mxu0 %v8442
        %v8444 = vand.u32 %v7107, 4294901760
        %v8445 = vsub.f32 %v7107, %v8444
        %v8446 = vand.u32 %v8445, 4294901760
        %8447 = vmatpush.msra.mxu0 %v8446
        %v8448 = vand.u32 %v7105, 4294901760
        %v8449 = vsub.f32 %v7105, %v8448
        %v8450 = vand.u32 %v8449, 4294901760
        %8451 = vmatpush.msra.mxu0 %v8450
        %v8452 = vand.u32 %v7103, 4294901760
        %v8453 = vsub.f32 %v7103, %v8452
        %v8454 = vand.u32 %v8453, 4294901760
        %8455 = vmatpush.msra.mxu0 %v8454
        %v8456 = vand.u32 %v7101, 4294901760
        %v8457 = vsub.f32 %v7101, %v8456
        %v8458 = vand.u32 %v8457, 4294901760
        %8459 = vmatpush.msra.mxu0 %v8458
        %v8460 = vand.u32 %v7067, 4294901760
        %8461 = vmatmul.f32.gmra.mxu0 %v8460
        %v8462 = vpop.f32.mrf.mxu0
        %v8463 = vadd.f32 %v8394, %v8462
        %8464 = vdwg.mxu0
        %v8465 = vand.u32 %v7131, 4294901760
        %8466 = vmatpush.msra.mxu0 %v8465
        %v8467 = vand.u32 %v7129, 4294901760
        %8468 = vmatpush.msra.mxu0 %v8467
        %v8469 = vand.u32 %v7127, 4294901760
        %8470 = vmatpush.msra.mxu0 %v8469
        %v8471 = vand.u32 %v7125, 4294901760
        %8472 = vmatpush.msra.mxu0 %v8471
        %v8473 = vand.u32 %v7123, 4294901760
        %8474 = vmatpush.msra.mxu0 %v8473
        %v8475 = vand.u32 %v7121, 4294901760
        %8476 = vmatpush.msra.mxu0 %v8475
        %v8477 = vand.u32 %v7119, 4294901760
        %8478 = vmatpush.msra.mxu0 %v8477
        %v8479 = vand.u32 %v7117, 4294901760
        %8480 = vmatpush.msra.mxu0 %v8479
        %v8481 = vand.u32 %v7115, 4294901760
        %8482 = vmatpush.msra.mxu0 %v8481
        %v8483 = vand.u32 %v7113, 4294901760
        %8484 = vmatpush.msra.mxu0 %v8483
        %v8485 = vand.u32 %v7111, 4294901760
        %8486 = vmatpush.msra.mxu0 %v8485
        %v8487 = vand.u32 %v7109, 4294901760
        %8488 = vmatpush.msra.mxu0 %v8487
        %v8489 = vand.u32 %v7107, 4294901760
        %8490 = vmatpush.msra.mxu0 %v8489
        %v8491 = vand.u32 %v7105, 4294901760
        %8492 = vmatpush.msra.mxu0 %v8491
        %v8493 = vand.u32 %v7103, 4294901760
        %8494 = vmatpush.msra.mxu0 %v8493
        %v8495 = vand.u32 %v7101, 4294901760
        %8496 = vmatpush.msra.mxu0 %v8495
        %v8497 = vand.u32 %v7067, 4294901760
        %8498 = vmatmul.f32.gmra.mxu0 %v8497
        %v8499 = vpop.f32.mrf.mxu0
        %v8500 = vadd.f32 %v8463, %v8499
        %8501 = vdwg.mxu0
        %v8502 = vmul.f32 %v7818, 0.5
        %v8503 = vmul.f32 %v8500, 0.5
        %v8504 = vmul.f32 %v7818, 0.044715
        %v8505 = vmul.f32 %v8500, 0.044715
        %v8506 = vmul.f32 %v8504, %v7818
        %v8507 = vmul.f32 %v8505, %v8500
        %v8508 = vmul.f32 %v8506, %v7818
        %v8509 = vmul.f32 %v8507, %v8500
        %v8510 = vadd.f32 %v7818, %v8508
        %v8511 = vadd.f32 %v8500, %v8509
        %v8512 = vmul.f32 %v8510, 0.7978846
        %v8513 = vmul.f32 %v8511, 0.7978846
        %v8514 = vtanh.pop %v8512
        %v8515 = vtanh.pop %v8513
        %v8516 = vadd.f32 %v8514, 1.0
        %v8517 = vadd.f32 %v8515, 1.0
        %v8518 = vmul.f32 %v8502, %v8516
        %v8519 = vmul.f32 %v8503, %v8517
        %v8520 = vld [vmem:[#allocation16] sm:$0xff]
        %v8521 = vld [vmem:[#allocation16 + $0x8] sm:$0xff]
        %v8522 = vld [vmem:[#allocation16 + $0x10] sm:$0xff]
        %v8523 = vld [vmem:[#allocation16 + $0x18] sm:$0xff]
        %v8524 = vld [vmem:[#allocation16 + $0x20] sm:$0xff]
        %v8525 = vld [vmem:[#allocation16 + $0x28] sm:$0xff]
        %v8526 = vld [vmem:[#allocation16 + $0x30] sm:$0xff]
        %v8527 = vld [vmem:[#allocation16 + $0x38] sm:$0xff]
        %v8528 = vld [vmem:[#allocation16 + $0x40] sm:$0xff]
        %v8529 = vld [vmem:[#allocation16 + $0x48] sm:$0xff]
        %v8530 = vld [vmem:[#allocation16 + $0x50] sm:$0xff]
        %v8531 = vld [vmem:[#allocation16 + $0x58] sm:$0xff]
        %v8532 = vld [vmem:[#allocation16 + $0x60] sm:$0xff]
        %v8533 = vld [vmem:[#allocation16 + $0x68] sm:$0xff]
        %v8534 = vld [vmem:[#allocation16 + $0x70] sm:$0xff]
        %v8535 = vld [vmem:[#allocation16 + $0x78] sm:$0xff]
        %v8536 = vld [vmem:[#allocation16 + $0x80] sm:$0xff]
        %v8537 = vld [vmem:[#allocation16 + $0x88] sm:$0xff]
        %v8538 = vld [vmem:[#allocation16 + $0x90] sm:$0xff]
        %v8539 = vld [vmem:[#allocation16 + $0x98] sm:$0xff]
        %v8540 = vld [vmem:[#allocation16 + $0xa0] sm:$0xff]
        %v8541 = vld [vmem:[#allocation16 + $0xa8] sm:$0xff]
        %v8542 = vld [vmem:[#allocation16 + $0xb0] sm:$0xff]
        %v8543 = vld [vmem:[#allocation16 + $0xb8] sm:$0xff]
        %v8544 = vld [vmem:[#allocation16 + $0xc0] sm:$0xff]
        %v8545 = vld [vmem:[#allocation16 + $0xc8] sm:$0xff]
        %v8546 = vld [vmem:[#allocation16 + $0xd0] sm:$0xff]
        %v8547 = vld [vmem:[#allocation16 + $0xd8] sm:$0xff]
        %v8548 = vld [vmem:[#allocation16 + $0xe0] sm:$0xff]
        %v8549 = vld [vmem:[#allocation16 + $0xe8] sm:$0xff]
        %v8550 = vld [vmem:[#allocation16 + $0xf0] sm:$0xff]
        %v8551 = vld [vmem:[#allocation16 + $0xf8] sm:$0xff]
        %v8552 = vld [vmem:[#allocation16 + $0x100] sm:$0xff]
        %v8553 = vld [vmem:[#allocation16 + $0x108] sm:$0xff]
        %v8554 = vld [vmem:[#allocation16 + $0x110] sm:$0xff]
        %v8555 = vld [vmem:[#allocation16 + $0x118] sm:$0xff]
        %v8556 = vld [vmem:[#allocation16 + $0x120] sm:$0xff]
        %v8557 = vld [vmem:[#allocation16 + $0x128] sm:$0xff]
        %v8558 = vld [vmem:[#allocation16 + $0x130] sm:$0xff]
        %v8559 = vld [vmem:[#allocation16 + $0x138] sm:$0xff]
        %v8560 = vld [vmem:[#allocation16 + $0x140] sm:$0xff]
        %v8561 = vld [vmem:[#allocation16 + $0x148] sm:$0xff]
        %v8562 = vld [vmem:[#allocation16 + $0x150] sm:$0xff]
        %v8563 = vld [vmem:[#allocation16 + $0x158] sm:$0xff]
        %v8564 = vld [vmem:[#allocation16 + $0x160] sm:$0xff]
        %v8565 = vld [vmem:[#allocation16 + $0x168] sm:$0xff]
        %v8566 = vld [vmem:[#allocation16 + $0x170] sm:$0xff]
        %v8567 = vld [vmem:[#allocation16 + $0x178] sm:$0xff]
        %v8568 = vld [vmem:[#allocation16 + $0x180] sm:$0xff]
        %v8569 = vld [vmem:[#allocation16 + $0x188] sm:$0xff]
        %v8570 = vld [vmem:[#allocation16 + $0x190] sm:$0xff]
        %v8571 = vld [vmem:[#allocation16 + $0x198] sm:$0xff]
        %v8572 = vld [vmem:[#allocation16 + $0x1a0] sm:$0xff]
        %v8573 = vld [vmem:[#allocation16 + $0x1a8] sm:$0xff]
        %v8574 = vld [vmem:[#allocation16 + $0x1b0] sm:$0xff]
        %v8575 = vld [vmem:[#allocation16 + $0x1b8] sm:$0xff]
        %v8576 = vld [vmem:[#allocation16 + $0x1c0] sm:$0xff]
        %v8577 = vld [vmem:[#allocation16 + $0x1c8] sm:$0xff]
        %v8578 = vld [vmem:[#allocation16 + $0x1d0] sm:$0xff]
        %v8579 = vld [vmem:[#allocation16 + $0x1d8] sm:$0xff]
        %v8580 = vld [vmem:[#allocation16 + $0x1e0] sm:$0xff]
        %v8581 = vld [vmem:[#allocation16 + $0x1e8] sm:$0xff]
        %v8582 = vld [vmem:[#allocation16 + $0x1f0] sm:$0xff]
        %v8583 = vld [vmem:[#allocation16 + $0x1f8] sm:$0xff]
        %v8584 = vld [vmem:[%s13] sm:$0x3]
        %v8586 = vperm.slane %v8584, 0
        %v8587 = vperm.slane %v8584, 1
        %v8590 = vand.u32 %v8550, 4294901760
        %8591 = vmatpush.msra.mxu0 %v8590
        %v8592 = vand.u32 %v8548, 4294901760
        %8593 = vmatpush.msra.mxu0 %v8592
        %v8594 = vand.u32 %v8546, 4294901760
        %8595 = vmatpush.msra.mxu0 %v8594
        %v8596 = vand.u32 %v8544, 4294901760
        %8597 = vmatpush.msra.mxu0 %v8596
        %v8598 = vand.u32 %v8542, 4294901760
        %8599 = vmatpush.msra.mxu0 %v8598
        %v8600 = vand.u32 %v8540, 4294901760
        %8601 = vmatpush.msra.mxu0 %v8600
        %v8602 = vand.u32 %v8538, 4294901760
        %8603 = vmatpush.msra.mxu0 %v8602
        %v8604 = vand.u32 %v8536, 4294901760
        %8605 = vmatpush.msra.mxu0 %v8604
        %v8606 = vand.u32 %v8534, 4294901760
        %8607 = vmatpush.msra.mxu0 %v8606
        %v8608 = vand.u32 %v8532, 4294901760
        %8609 = vmatpush.msra.mxu0 %v8608
        %v8610 = vand.u32 %v8530, 4294901760
        %8611 = vmatpush.msra.mxu0 %v8610
        %v8612 = vand.u32 %v8528, 4294901760
        %8613 = vmatpush.msra.mxu0 %v8612
        %v8614 = vand.u32 %v8526, 4294901760
        %8615 = vmatpush.msra.mxu0 %v8614
        %v8616 = vand.u32 %v8524, 4294901760
        %8617 = vmatpush.msra.mxu0 %v8616
        %v8618 = vand.u32 %v8522, 4294901760
        %8619 = vmatpush.msra.mxu0 %v8618
        %v8620 = vand.u32 %v8520, 4294901760
        %8621 = vmatpush.msra.mxu0 %v8620
        %v8622 = vand.u32 %v8518, 4294901760
        %v8623 = vsub.f32 %v8518, %v8622
        %v8624 = vand.u32 %v8623, 4294901760
        %v8625 = vsub.f32 %v8623, %v8624
        %v8626 = vand.u32 %v8625, 4294901760
        %8627 = vmatmul.f32.gmra.mxu0 %v8626
        %v8628 = vpop.f32.mrf.mxu0
        %v8629 = vadd.f32 %v8586, %v8628
        %8630 = vdwg.mxu0
        %v8631 = vand.u32 %v8550, 4294901760
        %v8632 = vsub.f32 %v8550, %v8631
        %v8633 = vand.u32 %v8632, 4294901760
        %v8634 = vsub.f32 %v8632, %v8633
        %v8635 = vand.u32 %v8634, 4294901760
        %8636 = vmatpush.msra.mxu0 %v8635
        %v8637 = vand.u32 %v8548, 4294901760
        %v8638 = vsub.f32 %v8548, %v8637
        %v8639 = vand.u32 %v8638, 4294901760
        %v8640 = vsub.f32 %v8638, %v8639
        %v8641 = vand.u32 %v8640, 4294901760
        %8642 = vmatpush.msra.mxu0 %v8641
        %v8643 = vand.u32 %v8546, 4294901760
        %v8644 = vsub.f32 %v8546, %v8643
        %v8645 = vand.u32 %v8644, 4294901760
        %v8646 = vsub.f32 %v8644, %v8645
        %v8647 = vand.u32 %v8646, 4294901760
        %8648 = vmatpush.msra.mxu0 %v8647
        %v8649 = vand.u32 %v8544, 4294901760
        %v8650 = vsub.f32 %v8544, %v8649
        %v8651 = vand.u32 %v8650, 4294901760
        %v8652 = vsub.f32 %v8650, %v8651
        %v8653 = vand.u32 %v8652, 4294901760
        %8654 = vmatpush.msra.mxu0 %v8653
        %v8655 = vand.u32 %v8542, 4294901760
        %v8656 = vsub.f32 %v8542, %v8655
        %v8657 = vand.u32 %v8656, 4294901760
        %v8658 = vsub.f32 %v8656, %v8657
        %v8659 = vand.u32 %v8658, 4294901760
        %8660 = vmatpush.msra.mxu0 %v8659
        %v8661 = vand.u32 %v8540, 4294901760
        %v8662 = vsub.f32 %v8540, %v8661
        %v8663 = vand.u32 %v8662, 4294901760
        %v8664 = vsub.f32 %v8662, %v8663
        %v8665 = vand.u32 %v8664, 4294901760
        %8666 = vmatpush.msra.mxu0 %v8665
        %v8667 = vand.u32 %v8538, 4294901760
        %v8668 = vsub.f32 %v8538, %v8667
        %v8669 = vand.u32 %v8668, 4294901760
        %v8670 = vsub.f32 %v8668, %v8669
        %v8671 = vand.u32 %v8670, 4294901760
        %8672 = vmatpush.msra.mxu0 %v8671
        %v8673 = vand.u32 %v8536, 4294901760
        %v8674 = vsub.f32 %v8536, %v8673
        %v8675 = vand.u32 %v8674, 4294901760
        %v8676 = vsub.f32 %v8674, %v8675
        %v8677 = vand.u32 %v8676, 4294901760
        %8678 = vmatpush.msra.mxu0 %v8677
        %v8679 = vand.u32 %v8534, 4294901760
        %v8680 = vsub.f32 %v8534, %v8679
        %v8681 = vand.u32 %v8680, 4294901760
        %v8682 = vsub.f32 %v8680, %v8681
        %v8683 = vand.u32 %v8682, 4294901760
        %8684 = vmatpush.msra.mxu0 %v8683
        %v8685 = vand.u32 %v8532, 4294901760
        %v8686 = vsub.f32 %v8532, %v8685
        %v8687 = vand.u32 %v8686, 4294901760
        %v8688 = vsub.f32 %v8686, %v8687
        %v8689 = vand.u32 %v8688, 4294901760
        %8690 = vmatpush.msra.mxu0 %v8689
        %v8691 = vand.u32 %v8530, 4294901760
        %v8692 = vsub.f32 %v8530, %v8691
        %v8693 = vand.u32 %v8692, 4294901760
        %v8694 = vsub.f32 %v8692, %v8693
        %v8695 = vand.u32 %v8694, 4294901760
        %8696 = vmatpush.msra.mxu0 %v8695
        %v8697 = vand.u32 %v8528, 4294901760
        %v8698 = vsub.f32 %v8528, %v8697
        %v8699 = vand.u32 %v8698, 4294901760
        %v8700 = vsub.f32 %v8698, %v8699
        %v8701 = vand.u32 %v8700, 4294901760
        %8702 = vmatpush.msra.mxu0 %v8701
        %v8703 = vand.u32 %v8526, 4294901760
        %v8704 = vsub.f32 %v8526, %v8703
        %v8705 = vand.u32 %v8704, 4294901760
        %v8706 = vsub.f32 %v8704, %v8705
        %v8707 = vand.u32 %v8706, 4294901760
        %8708 = vmatpush.msra.mxu0 %v8707
        %v8709 = vand.u32 %v8524, 4294901760
        %v8710 = vsub.f32 %v8524, %v8709
        %v8711 = vand.u32 %v8710, 4294901760
        %v8712 = vsub.f32 %v8710, %v8711
        %v8713 = vand.u32 %v8712, 4294901760
        %8714 = vmatpush.msra.mxu0 %v8713
        %v8715 = vand.u32 %v8522, 4294901760
        %v8716 = vsub.f32 %v8522, %v8715
        %v8717 = vand.u32 %v8716, 4294901760
        %v8718 = vsub.f32 %v8716, %v8717
        %v8719 = vand.u32 %v8718, 4294901760
        %8720 = vmatpush.msra.mxu0 %v8719
        %v8721 = vand.u32 %v8520, 4294901760
        %v8722 = vsub.f32 %v8520, %v8721
        %v8723 = vand.u32 %v8722, 4294901760
        %v8724 = vsub.f32 %v8722, %v8723
        %v8725 = vand.u32 %v8724, 4294901760
        %8726 = vmatpush.msra.mxu0 %v8725
        %v8727 = vand.u32 %v8518, 4294901760
        %8728 = vmatmul.f32.gmra.mxu0 %v8727
        %v8729 = vpop.f32.mrf.mxu0
        %v8730 = vadd.f32 %v8629, %v8729
        %8731 = vdwg.mxu0
        %v8732 = vand.u32 %v8550, 4294901760
        %v8733 = vsub.f32 %v8550, %v8732
        %8734 = vmatpush.msra.mxu0 %v8733
        %v8735 = vand.u32 %v8548, 4294901760
        %v8736 = vsub.f32 %v8548, %v8735
        %8737 = vmatpush.msra.mxu0 %v8736
        %v8738 = vand.u32 %v8546, 4294901760
        %v8739 = vsub.f32 %v8546, %v8738
        %8740 = vmatpush.msra.mxu0 %v8739
        %v8741 = vand.u32 %v8544, 4294901760
        %v8742 = vsub.f32 %v8544, %v8741
        %8743 = vmatpush.msra.mxu0 %v8742
        %v8744 = vand.u32 %v8542, 4294901760
        %v8745 = vsub.f32 %v8542, %v8744
        %8746 = vmatpush.msra.mxu0 %v8745
        %v8747 = vand.u32 %v8540, 4294901760
        %v8748 = vsub.f32 %v8540, %v8747
        %8749 = vmatpush.msra.mxu0 %v8748
        %v8750 = vand.u32 %v8538, 4294901760
        %v8751 = vsub.f32 %v8538, %v8750
        %8752 = vmatpush.msra.mxu0 %v8751
        %v8753 = vand.u32 %v8536, 4294901760
        %v8754 = vsub.f32 %v8536, %v8753
        %8755 = vmatpush.msra.mxu0 %v8754
        %v8756 = vand.u32 %v8534, 4294901760
        %v8757 = vsub.f32 %v8534, %v8756
        %8758 = vmatpush.msra.mxu0 %v8757
        %v8759 = vand.u32 %v8532, 4294901760
        %v8760 = vsub.f32 %v8532, %v8759
        %8761 = vmatpush.msra.mxu0 %v8760
        %v8762 = vand.u32 %v8530, 4294901760
        %v8763 = vsub.f32 %v8530, %v8762
        %8764 = vmatpush.msra.mxu0 %v8763
        %v8765 = vand.u32 %v8528, 4294901760
        %v8766 = vsub.f32 %v8528, %v8765
        %8767 = vmatpush.msra.mxu0 %v8766
        %v8768 = vand.u32 %v8526, 4294901760
        %v8769 = vsub.f32 %v8526, %v8768
        %8770 = vmatpush.msra.mxu0 %v8769
        %v8771 = vand.u32 %v8524, 4294901760
        %v8772 = vsub.f32 %v8524, %v8771
        %8773 = vmatpush.msra.mxu0 %v8772
        %v8774 = vand.u32 %v8522, 4294901760
        %v8775 = vsub.f32 %v8522, %v8774
        %8776 = vmatpush.msra.mxu0 %v8775
        %v8777 = vand.u32 %v8520, 4294901760
        %v8778 = vsub.f32 %v8520, %v8777
        %8779 = vmatpush.msra.mxu0 %v8778
        %v8780 = vand.u32 %v8518, 4294901760
        %v8781 = vsub.f32 %v8518, %v8780
        %8782 = vmatmul.f32.gmra.mxu0 %v8781
        %v8783 = vpop.f32.mrf.mxu0
        %v8784 = vadd.f32 %v8730, %v8783
        %8785 = vdwg.mxu0
        %v8786 = vand.u32 %v8550, 4294901760
        %8787 = vmatpush.msra.mxu0 %v8786
        %v8788 = vand.u32 %v8548, 4294901760
        %8789 = vmatpush.msra.mxu0 %v8788
        %v8790 = vand.u32 %v8546, 4294901760
        %8791 = vmatpush.msra.mxu0 %v8790
        %v8792 = vand.u32 %v8544, 4294901760
        %8793 = vmatpush.msra.mxu0 %v8792
        %v8794 = vand.u32 %v8542, 4294901760
        %8795 = vmatpush.msra.mxu0 %v8794
        %v8796 = vand.u32 %v8540, 4294901760
        %8797 = vmatpush.msra.mxu0 %v8796
        %v8798 = vand.u32 %v8538, 4294901760
        %8799 = vmatpush.msra.mxu0 %v8798
        %v8800 = vand.u32 %v8536, 4294901760
        %8801 = vmatpush.msra.mxu0 %v8800
        %v8802 = vand.u32 %v8534, 4294901760
        %8803 = vmatpush.msra.mxu0 %v8802
        %v8804 = vand.u32 %v8532, 4294901760
        %8805 = vmatpush.msra.mxu0 %v8804
        %v8806 = vand.u32 %v8530, 4294901760
        %8807 = vmatpush.msra.mxu0 %v8806
        %v8808 = vand.u32 %v8528, 4294901760
        %8809 = vmatpush.msra.mxu0 %v8808
        %v8810 = vand.u32 %v8526, 4294901760
        %8811 = vmatpush.msra.mxu0 %v8810
        %v8812 = vand.u32 %v8524, 4294901760
        %8813 = vmatpush.msra.mxu0 %v8812
        %v8814 = vand.u32 %v8522, 4294901760
        %8815 = vmatpush.msra.mxu0 %v8814
        %v8816 = vand.u32 %v8520, 4294901760
        %8817 = vmatpush.msra.mxu0 %v8816
        %v8818 = vand.u32 %v8518, 4294901760
        %v8819 = vsub.f32 %v8518, %v8818
        %v8820 = vand.u32 %v8819, 4294901760
        %8821 = vmatmul.f32.gmra.mxu0 %v8820
        %v8822 = vpop.f32.mrf.mxu0
        %v8823 = vadd.f32 %v8784, %v8822
        %8824 = vdwg.mxu0
        %v8825 = vand.u32 %v8550, 4294901760
        %v8826 = vsub.f32 %v8550, %v8825
        %v8827 = vand.u32 %v8826, 4294901760
        %8828 = vmatpush.msra.mxu0 %v8827
        %v8829 = vand.u32 %v8548, 4294901760
        %v8830 = vsub.f32 %v8548, %v8829
        %v8831 = vand.u32 %v8830, 4294901760
        %8832 = vmatpush.msra.mxu0 %v8831
        %v8833 = vand.u32 %v8546, 4294901760
        %v8834 = vsub.f32 %v8546, %v8833
        %v8835 = vand.u32 %v8834, 4294901760
        %8836 = vmatpush.msra.mxu0 %v8835
        %v8837 = vand.u32 %v8544, 4294901760
        %v8838 = vsub.f32 %v8544, %v8837
        %v8839 = vand.u32 %v8838, 4294901760
        %8840 = vmatpush.msra.mxu0 %v8839
        %v8841 = vand.u32 %v8542, 4294901760
        %v8842 = vsub.f32 %v8542, %v8841
        %v8843 = vand.u32 %v8842, 4294901760
        %8844 = vmatpush.msra.mxu0 %v8843
        %v8845 = vand.u32 %v8540, 4294901760
        %v8846 = vsub.f32 %v8540, %v8845
        %v8847 = vand.u32 %v8846, 4294901760
        %8848 = vmatpush.msra.mxu0 %v8847
        %v8849 = vand.u32 %v8538, 4294901760
        %v8850 = vsub.f32 %v8538, %v8849
        %v8851 = vand.u32 %v8850, 4294901760
        %8852 = vmatpush.msra.mxu0 %v8851
        %v8853 = vand.u32 %v8536, 4294901760
        %v8854 = vsub.f32 %v8536, %v8853
        %v8855 = vand.u32 %v8854, 4294901760
        %8856 = vmatpush.msra.mxu0 %v8855
        %v8857 = vand.u32 %v8534, 4294901760
        %v8858 = vsub.f32 %v8534, %v8857
        %v8859 = vand.u32 %v8858, 4294901760
        %8860 = vmatpush.msra.mxu0 %v8859
        %v8861 = vand.u32 %v8532, 4294901760
        %v8862 = vsub.f32 %v8532, %v8861
        %v8863 = vand.u32 %v8862, 4294901760
        %8864 = vmatpush.msra.mxu0 %v8863
        %v8865 = vand.u32 %v8530, 4294901760
        %v8866 = vsub.f32 %v8530, %v8865
        %v8867 = vand.u32 %v8866, 4294901760
        %8868 = vmatpush.msra.mxu0 %v8867
        %v8869 = vand.u32 %v8528, 4294901760
        %v8870 = vsub.f32 %v8528, %v8869
        %v8871 = vand.u32 %v8870, 4294901760
        %8872 = vmatpush.msra.mxu0 %v8871
        %v8873 = vand.u32 %v8526, 4294901760
        %v8874 = vsub.f32 %v8526, %v8873
        %v8875 = vand.u32 %v8874, 4294901760
        %8876 = vmatpush.msra.mxu0 %v8875
        %v8877 = vand.u32 %v8524, 4294901760
        %v8878 = vsub.f32 %v8524, %v8877
        %v8879 = vand.u32 %v8878, 4294901760
        %8880 = vmatpush.msra.mxu0 %v8879
        %v8881 = vand.u32 %v8522, 4294901760
        %v8882 = vsub.f32 %v8522, %v8881
        %v8883 = vand.u32 %v8882, 4294901760
        %8884 = vmatpush.msra.mxu0 %v8883
        %v8885 = vand.u32 %v8520, 4294901760
        %v8886 = vsub.f32 %v8520, %v8885
        %v8887 = vand.u32 %v8886, 4294901760
        %8888 = vmatpush.msra.mxu0 %v8887
        %v8889 = vand.u32 %v8518, 4294901760
        %8890 = vmatmul.f32.gmra.mxu0 %v8889
        %v8891 = vpop.f32.mrf.mxu0
        %v8892 = vadd.f32 %v8823, %v8891
        %8893 = vdwg.mxu0
        %v8894 = vand.u32 %v8550, 4294901760
        %8895 = vmatpush.msra.mxu0 %v8894
        %v8896 = vand.u32 %v8548, 4294901760
        %8897 = vmatpush.msra.mxu0 %v8896
        %v8898 = vand.u32 %v8546, 4294901760
        %8899 = vmatpush.msra.mxu0 %v8898
        %v8900 = vand.u32 %v8544, 4294901760
        %8901 = vmatpush.msra.mxu0 %v8900
        %v8902 = vand.u32 %v8542, 4294901760
        %8903 = vmatpush.msra.mxu0 %v8902
        %v8904 = vand.u32 %v8540, 4294901760
        %8905 = vmatpush.msra.mxu0 %v8904
        %v8906 = vand.u32 %v8538, 4294901760
        %8907 = vmatpush.msra.mxu0 %v8906
        %v8908 = vand.u32 %v8536, 4294901760
        %8909 = vmatpush.msra.mxu0 %v8908
        %v8910 = vand.u32 %v8534, 4294901760
        %8911 = vmatpush.msra.mxu0 %v8910
        %v8912 = vand.u32 %v8532, 4294901760
        %8913 = vmatpush.msra.mxu0 %v8912
        %v8914 = vand.u32 %v8530, 4294901760
        %8915 = vmatpush.msra.mxu0 %v8914
        %v8916 = vand.u32 %v8528, 4294901760
        %8917 = vmatpush.msra.mxu0 %v8916
        %v8918 = vand.u32 %v8526, 4294901760
        %8919 = vmatpush.msra.mxu0 %v8918
        %v8920 = vand.u32 %v8524, 4294901760
        %8921 = vmatpush.msra.mxu0 %v8920
        %v8922 = vand.u32 %v8522, 4294901760
        %8923 = vmatpush.msra.mxu0 %v8922
        %v8924 = vand.u32 %v8520, 4294901760
        %8925 = vmatpush.msra.mxu0 %v8924
        %v8926 = vand.u32 %v8518, 4294901760
        %8927 = vmatmul.f32.gmra.mxu0 %v8926
        %v8928 = vpop.f32.mrf.mxu0
        %v8929 = vadd.f32 %v8892, %v8928
        %8930 = vdwg.mxu0
        %v8931 = vand.u32 %v8582, 4294901760
        %8932 = vmatpush.msra.mxu0 %v8931
        %v8933 = vand.u32 %v8580, 4294901760
        %8934 = vmatpush.msra.mxu0 %v8933
        %v8935 = vand.u32 %v8578, 4294901760
        %8936 = vmatpush.msra.mxu0 %v8935
        %v8937 = vand.u32 %v8576, 4294901760
        %8938 = vmatpush.msra.mxu0 %v8937
        %v8939 = vand.u32 %v8574, 4294901760
        %8940 = vmatpush.msra.mxu0 %v8939
        %v8941 = vand.u32 %v8572, 4294901760
        %8942 = vmatpush.msra.mxu0 %v8941
        %v8943 = vand.u32 %v8570, 4294901760
        %8944 = vmatpush.msra.mxu0 %v8943
        %v8945 = vand.u32 %v8568, 4294901760
        %8946 = vmatpush.msra.mxu0 %v8945
        %v8947 = vand.u32 %v8566, 4294901760
        %8948 = vmatpush.msra.mxu0 %v8947
        %v8949 = vand.u32 %v8564, 4294901760
        %8950 = vmatpush.msra.mxu0 %v8949
        %v8951 = vand.u32 %v8562, 4294901760
        %8952 = vmatpush.msra.mxu0 %v8951
        %v8953 = vand.u32 %v8560, 4294901760
        %8954 = vmatpush.msra.mxu0 %v8953
        %v8955 = vand.u32 %v8558, 4294901760
        %8956 = vmatpush.msra.mxu0 %v8955
        %v8957 = vand.u32 %v8556, 4294901760
        %8958 = vmatpush.msra.mxu0 %v8957
        %v8959 = vand.u32 %v8554, 4294901760
        %8960 = vmatpush.msra.mxu0 %v8959
        %v8961 = vand.u32 %v8552, 4294901760
        %8962 = vmatpush.msra.mxu0 %v8961
        %v8963 = vand.u32 %v8519, 4294901760
        %v8964 = vsub.f32 %v8519, %v8963
        %v8965 = vand.u32 %v8964, 4294901760
        %v8966 = vsub.f32 %v8964, %v8965
        %v8967 = vand.u32 %v8966, 4294901760
        %8968 = vmatmul.f32.gmra.mxu0 %v8967
        %v8969 = vpop.f32.mrf.mxu0
        %v8970 = vadd.f32 %v8929, %v8969
        %8971 = vdwg.mxu0
        %v8972 = vand.u32 %v8582, 4294901760
        %v8973 = vsub.f32 %v8582, %v8972
        %v8974 = vand.u32 %v8973, 4294901760
        %v8975 = vsub.f32 %v8973, %v8974
        %v8976 = vand.u32 %v8975, 4294901760
        %8977 = vmatpush.msra.mxu0 %v8976
        %v8978 = vand.u32 %v8580, 4294901760
        %v8979 = vsub.f32 %v8580, %v8978
        %v8980 = vand.u32 %v8979, 4294901760
        %v8981 = vsub.f32 %v8979, %v8980
        %v8982 = vand.u32 %v8981, 4294901760
        %8983 = vmatpush.msra.mxu0 %v8982
        %v8984 = vand.u32 %v8578, 4294901760
        %v8985 = vsub.f32 %v8578, %v8984
        %v8986 = vand.u32 %v8985, 4294901760
        %v8987 = vsub.f32 %v8985, %v8986
        %v8988 = vand.u32 %v8987, 4294901760
        %8989 = vmatpush.msra.mxu0 %v8988
        %v8990 = vand.u32 %v8576, 4294901760
        %v8991 = vsub.f32 %v8576, %v8990
        %v8992 = vand.u32 %v8991, 4294901760
        %v8993 = vsub.f32 %v8991, %v8992
        %v8994 = vand.u32 %v8993, 4294901760
        %8995 = vmatpush.msra.mxu0 %v8994
        %v8996 = vand.u32 %v8574, 4294901760
        %v8997 = vsub.f32 %v8574, %v8996
        %v8998 = vand.u32 %v8997, 4294901760
        %v8999 = vsub.f32 %v8997, %v8998
        %v9000 = vand.u32 %v8999, 4294901760
        %9001 = vmatpush.msra.mxu0 %v9000
        %v9002 = vand.u32 %v8572, 4294901760
        %v9003 = vsub.f32 %v8572, %v9002
        %v9004 = vand.u32 %v9003, 4294901760
        %v9005 = vsub.f32 %v9003, %v9004
        %v9006 = vand.u32 %v9005, 4294901760
        %9007 = vmatpush.msra.mxu0 %v9006
        %v9008 = vand.u32 %v8570, 4294901760
        %v9009 = vsub.f32 %v8570, %v9008
        %v9010 = vand.u32 %v9009, 4294901760
        %v9011 = vsub.f32 %v9009, %v9010
        %v9012 = vand.u32 %v9011, 4294901760
        %9013 = vmatpush.msra.mxu0 %v9012
        %v9014 = vand.u32 %v8568, 4294901760
        %v9015 = vsub.f32 %v8568, %v9014
        %v9016 = vand.u32 %v9015, 4294901760
        %v9017 = vsub.f32 %v9015, %v9016
        %v9018 = vand.u32 %v9017, 4294901760
        %9019 = vmatpush.msra.mxu0 %v9018
        %v9020 = vand.u32 %v8566, 4294901760
        %v9021 = vsub.f32 %v8566, %v9020
        %v9022 = vand.u32 %v9021, 4294901760
        %v9023 = vsub.f32 %v9021, %v9022
        %v9024 = vand.u32 %v9023, 4294901760
        %9025 = vmatpush.msra.mxu0 %v9024
        %v9026 = vand.u32 %v8564, 4294901760
        %v9027 = vsub.f32 %v8564, %v9026
        %v9028 = vand.u32 %v9027, 4294901760
        %v9029 = vsub.f32 %v9027, %v9028
        %v9030 = vand.u32 %v9029, 4294901760
        %9031 = vmatpush.msra.mxu0 %v9030
        %v9032 = vand.u32 %v8562, 4294901760
        %v9033 = vsub.f32 %v8562, %v9032
        %v9034 = vand.u32 %v9033, 4294901760
        %v9035 = vsub.f32 %v9033, %v9034
        %v9036 = vand.u32 %v9035, 4294901760
        %9037 = vmatpush.msra.mxu0 %v9036
        %v9038 = vand.u32 %v8560, 4294901760
        %v9039 = vsub.f32 %v8560, %v9038
        %v9040 = vand.u32 %v9039, 4294901760
        %v9041 = vsub.f32 %v9039, %v9040
        %v9042 = vand.u32 %v9041, 4294901760
        %9043 = vmatpush.msra.mxu0 %v9042
        %v9044 = vand.u32 %v8558, 4294901760
        %v9045 = vsub.f32 %v8558, %v9044
        %v9046 = vand.u32 %v9045, 4294901760
        %v9047 = vsub.f32 %v9045, %v9046
        %v9048 = vand.u32 %v9047, 4294901760
        %9049 = vmatpush.msra.mxu0 %v9048
        %v9050 = vand.u32 %v8556, 4294901760
        %v9051 = vsub.f32 %v8556, %v9050
        %v9052 = vand.u32 %v9051, 4294901760
        %v9053 = vsub.f32 %v9051, %v9052
        %v9054 = vand.u32 %v9053, 4294901760
        %9055 = vmatpush.msra.mxu0 %v9054
        %v9056 = vand.u32 %v8554, 4294901760
        %v9057 = vsub.f32 %v8554, %v9056
        %v9058 = vand.u32 %v9057, 4294901760
        %v9059 = vsub.f32 %v9057, %v9058
        %v9060 = vand.u32 %v9059, 4294901760
        %9061 = vmatpush.msra.mxu0 %v9060
        %v9062 = vand.u32 %v8552, 4294901760
        %v9063 = vsub.f32 %v8552, %v9062
        %v9064 = vand.u32 %v9063, 4294901760
        %v9065 = vsub.f32 %v9063, %v9064
        %v9066 = vand.u32 %v9065, 4294901760
        %9067 = vmatpush.msra.mxu0 %v9066
        %v9068 = vand.u32 %v8519, 4294901760
        %9069 = vmatmul.f32.gmra.mxu0 %v9068
        %v9070 = vpop.f32.mrf.mxu0
        %v9071 = vadd.f32 %v8970, %v9070
        %9072 = vdwg.mxu0
        %v9073 = vand.u32 %v8582, 4294901760
        %v9074 = vsub.f32 %v8582, %v9073
        %9075 = vmatpush.msra.mxu0 %v9074
        %v9076 = vand.u32 %v8580, 4294901760
        %v9077 = vsub.f32 %v8580, %v9076
        %9078 = vmatpush.msra.mxu0 %v9077
        %v9079 = vand.u32 %v8578, 4294901760
        %v9080 = vsub.f32 %v8578, %v9079
        %9081 = vmatpush.msra.mxu0 %v9080
        %v9082 = vand.u32 %v8576, 4294901760
        %v9083 = vsub.f32 %v8576, %v9082
        %9084 = vmatpush.msra.mxu0 %v9083
        %v9085 = vand.u32 %v8574, 4294901760
        %v9086 = vsub.f32 %v8574, %v9085
        %9087 = vmatpush.msra.mxu0 %v9086
        %v9088 = vand.u32 %v8572, 4294901760
        %v9089 = vsub.f32 %v8572, %v9088
        %9090 = vmatpush.msra.mxu0 %v9089
        %v9091 = vand.u32 %v8570, 4294901760
        %v9092 = vsub.f32 %v8570, %v9091
        %9093 = vmatpush.msra.mxu0 %v9092
        %v9094 = vand.u32 %v8568, 4294901760
        %v9095 = vsub.f32 %v8568, %v9094
        %9096 = vmatpush.msra.mxu0 %v9095
        %v9097 = vand.u32 %v8566, 4294901760
        %v9098 = vsub.f32 %v8566, %v9097
        %9099 = vmatpush.msra.mxu0 %v9098
        %v9100 = vand.u32 %v8564, 4294901760
        %v9101 = vsub.f32 %v8564, %v9100
        %9102 = vmatpush.msra.mxu0 %v9101
        %v9103 = vand.u32 %v8562, 4294901760
        %v9104 = vsub.f32 %v8562, %v9103
        %9105 = vmatpush.msra.mxu0 %v9104
        %v9106 = vand.u32 %v8560, 4294901760
        %v9107 = vsub.f32 %v8560, %v9106
        %9108 = vmatpush.msra.mxu0 %v9107
        %v9109 = vand.u32 %v8558, 4294901760
        %v9110 = vsub.f32 %v8558, %v9109
        %9111 = vmatpush.msra.mxu0 %v9110
        %v9112 = vand.u32 %v8556, 4294901760
        %v9113 = vsub.f32 %v8556, %v9112
        %9114 = vmatpush.msra.mxu0 %v9113
        %v9115 = vand.u32 %v8554, 4294901760
        %v9116 = vsub.f32 %v8554, %v9115
        %9117 = vmatpush.msra.mxu0 %v9116
        %v9118 = vand.u32 %v8552, 4294901760
        %v9119 = vsub.f32 %v8552, %v9118
        %9120 = vmatpush.msra.mxu0 %v9119
        %v9121 = vand.u32 %v8519, 4294901760
        %v9122 = vsub.f32 %v8519, %v9121
        %9123 = vmatmul.f32.gmra.mxu0 %v9122
        %v9124 = vpop.f32.mrf.mxu0
        %v9125 = vadd.f32 %v9071, %v9124
        %9126 = vdwg.mxu0
        %v9127 = vand.u32 %v8582, 4294901760
        %9128 = vmatpush.msra.mxu0 %v9127
        %v9129 = vand.u32 %v8580, 4294901760
        %9130 = vmatpush.msra.mxu0 %v9129
        %v9131 = vand.u32 %v8578, 4294901760
        %9132 = vmatpush.msra.mxu0 %v9131
        %v9133 = vand.u32 %v8576, 4294901760
        %9134 = vmatpush.msra.mxu0 %v9133
        %v9135 = vand.u32 %v8574, 4294901760
        %9136 = vmatpush.msra.mxu0 %v9135
        %v9137 = vand.u32 %v8572, 4294901760
        %9138 = vmatpush.msra.mxu0 %v9137
        %v9139 = vand.u32 %v8570, 4294901760
        %9140 = vmatpush.msra.mxu0 %v9139
        %v9141 = vand.u32 %v8568, 4294901760
        %9142 = vmatpush.msra.mxu0 %v9141
        %v9143 = vand.u32 %v8566, 4294901760
        %9144 = vmatpush.msra.mxu0 %v9143
        %v9145 = vand.u32 %v8564, 4294901760
        %9146 = vmatpush.msra.mxu0 %v9145
        %v9147 = vand.u32 %v8562, 4294901760
        %9148 = vmatpush.msra.mxu0 %v9147
        %v9149 = vand.u32 %v8560, 4294901760
        %9150 = vmatpush.msra.mxu0 %v9149
        %v9151 = vand.u32 %v8558, 4294901760
        %9152 = vmatpush.msra.mxu0 %v9151
        %v9153 = vand.u32 %v8556, 4294901760
        %9154 = vmatpush.msra.mxu0 %v9153
        %v9155 = vand.u32 %v8554, 4294901760
        %9156 = vmatpush.msra.mxu0 %v9155
        %v9157 = vand.u32 %v8552, 4294901760
        %9158 = vmatpush.msra.mxu0 %v9157
        %v9159 = vand.u32 %v8519, 4294901760
        %v9160 = vsub.f32 %v8519, %v9159
        %v9161 = vand.u32 %v9160, 4294901760
        %9162 = vmatmul.f32.gmra.mxu0 %v9161
        %v9163 = vpop.f32.mrf.mxu0
        %v9164 = vadd.f32 %v9125, %v9163
        %9165 = vdwg.mxu0
        %v9166 = vand.u32 %v8582, 4294901760
        %v9167 = vsub.f32 %v8582, %v9166
        %v9168 = vand.u32 %v9167, 4294901760
        %9169 = vmatpush.msra.mxu0 %v9168
        %v9170 = vand.u32 %v8580, 4294901760
        %v9171 = vsub.f32 %v8580, %v9170
        %v9172 = vand.u32 %v9171, 4294901760
        %9173 = vmatpush.msra.mxu0 %v9172
        %v9174 = vand.u32 %v8578, 4294901760
        %v9175 = vsub.f32 %v8578, %v9174
        %v9176 = vand.u32 %v9175, 4294901760
        %9177 = vmatpush.msra.mxu0 %v9176
        %v9178 = vand.u32 %v8576, 4294901760
        %v9179 = vsub.f32 %v8576, %v9178
        %v9180 = vand.u32 %v9179, 4294901760
        %9181 = vmatpush.msra.mxu0 %v9180
        %v9182 = vand.u32 %v8574, 4294901760
        %v9183 = vsub.f32 %v8574, %v9182
        %v9184 = vand.u32 %v9183, 4294901760
        %9185 = vmatpush.msra.mxu0 %v9184
        %v9186 = vand.u32 %v8572, 4294901760
        %v9187 = vsub.f32 %v8572, %v9186
        %v9188 = vand.u32 %v9187, 4294901760
        %9189 = vmatpush.msra.mxu0 %v9188
        %v9190 = vand.u32 %v8570, 4294901760
        %v9191 = vsub.f32 %v8570, %v9190
        %v9192 = vand.u32 %v9191, 4294901760
        %9193 = vmatpush.msra.mxu0 %v9192
        %v9194 = vand.u32 %v8568, 4294901760
        %v9195 = vsub.f32 %v8568, %v9194
        %v9196 = vand.u32 %v9195, 4294901760
        %9197 = vmatpush.msra.mxu0 %v9196
        %v9198 = vand.u32 %v8566, 4294901760
        %v9199 = vsub.f32 %v8566, %v9198
        %v9200 = vand.u32 %v9199, 4294901760
        %9201 = vmatpush.msra.mxu0 %v9200
        %v9202 = vand.u32 %v8564, 4294901760
        %v9203 = vsub.f32 %v8564, %v9202
        %v9204 = vand.u32 %v9203, 4294901760
        %9205 = vmatpush.msra.mxu0 %v9204
        %v9206 = vand.u32 %v8562, 4294901760
        %v9207 = vsub.f32 %v8562, %v9206
        %v9208 = vand.u32 %v9207, 4294901760
        %9209 = vmatpush.msra.mxu0 %v9208
        %v9210 = vand.u32 %v8560, 4294901760
        %v9211 = vsub.f32 %v8560, %v9210
        %v9212 = vand.u32 %v9211, 4294901760
        %9213 = vmatpush.msra.mxu0 %v9212
        %v9214 = vand.u32 %v8558, 4294901760
        %v9215 = vsub.f32 %v8558, %v9214
        %v9216 = vand.u32 %v9215, 4294901760
        %9217 = vmatpush.msra.mxu0 %v9216
        %v9218 = vand.u32 %v8556, 4294901760
        %v9219 = vsub.f32 %v8556, %v9218
        %v9220 = vand.u32 %v9219, 4294901760
        %9221 = vmatpush.msra.mxu0 %v9220
        %v9222 = vand.u32 %v8554, 4294901760
        %v9223 = vsub.f32 %v8554, %v9222
        %v9224 = vand.u32 %v9223, 4294901760
        %9225 = vmatpush.msra.mxu0 %v9224
        %v9226 = vand.u32 %v8552, 4294901760
        %v9227 = vsub.f32 %v8552, %v9226
        %v9228 = vand.u32 %v9227, 4294901760
        %9229 = vmatpush.msra.mxu0 %v9228
        %v9230 = vand.u32 %v8519, 4294901760
        %9231 = vmatmul.f32.gmra.mxu0 %v9230
        %v9232 = vpop.f32.mrf.mxu0
        %v9233 = vadd.f32 %v9164, %v9232
        %9234 = vdwg.mxu0
        %v9235 = vand.u32 %v8582, 4294901760
        %9236 = vmatpush.msra.mxu0 %v9235
        %v9237 = vand.u32 %v8580, 4294901760
        %9238 = vmatpush.msra.mxu0 %v9237
        %v9239 = vand.u32 %v8578, 4294901760
        %9240 = vmatpush.msra.mxu0 %v9239
        %v9241 = vand.u32 %v8576, 4294901760
        %9242 = vmatpush.msra.mxu0 %v9241
        %v9243 = vand.u32 %v8574, 4294901760
        %9244 = vmatpush.msra.mxu0 %v9243
        %v9245 = vand.u32 %v8572, 4294901760
        %9246 = vmatpush.msra.mxu0 %v9245
        %v9247 = vand.u32 %v8570, 4294901760
        %9248 = vmatpush.msra.mxu0 %v9247
        %v9249 = vand.u32 %v8568, 4294901760
        %9250 = vmatpush.msra.mxu0 %v9249
        %v9251 = vand.u32 %v8566, 4294901760
        %9252 = vmatpush.msra.mxu0 %v9251
        %v9253 = vand.u32 %v8564, 4294901760
        %9254 = vmatpush.msra.mxu0 %v9253
        %v9255 = vand.u32 %v8562, 4294901760
        %9256 = vmatpush.msra.mxu0 %v9255
        %v9257 = vand.u32 %v8560, 4294901760
        %9258 = vmatpush.msra.mxu0 %v9257
        %v9259 = vand.u32 %v8558, 4294901760
        %9260 = vmatpush.msra.mxu0 %v9259
        %v9261 = vand.u32 %v8556, 4294901760
        %9262 = vmatpush.msra.mxu0 %v9261
        %v9263 = vand.u32 %v8554, 4294901760
        %9264 = vmatpush.msra.mxu0 %v9263
        %v9265 = vand.u32 %v8552, 4294901760
        %9266 = vmatpush.msra.mxu0 %v9265
        %v9267 = vand.u32 %v8519, 4294901760
        %9268 = vmatmul.f32.gmra.mxu0 %v9267
        %v9269 = vpop.f32.mrf.mxu0
        %v9270 = vadd.f32 %v9233, %v9269
        %9271 = vdwg.mxu0
        %v9272 = vand.u32 %v8551, 4294901760
        %9273 = vmatpush.msra.mxu0 %v9272
        %v9274 = vand.u32 %v8549, 4294901760
        %9275 = vmatpush.msra.mxu0 %v9274
        %v9276 = vand.u32 %v8547, 4294901760
        %9277 = vmatpush.msra.mxu0 %v9276
        %v9278 = vand.u32 %v8545, 4294901760
        %9279 = vmatpush.msra.mxu0 %v9278
        %v9280 = vand.u32 %v8543, 4294901760
        %9281 = vmatpush.msra.mxu0 %v9280
        %v9282 = vand.u32 %v8541, 4294901760
        %9283 = vmatpush.msra.mxu0 %v9282
        %v9284 = vand.u32 %v8539, 4294901760
        %9285 = vmatpush.msra.mxu0 %v9284
        %v9286 = vand.u32 %v8537, 4294901760
        %9287 = vmatpush.msra.mxu0 %v9286
        %v9288 = vand.u32 %v8535, 4294901760
        %9289 = vmatpush.msra.mxu0 %v9288
        %v9290 = vand.u32 %v8533, 4294901760
        %9291 = vmatpush.msra.mxu0 %v9290
        %v9292 = vand.u32 %v8531, 4294901760
        %9293 = vmatpush.msra.mxu0 %v9292
        %v9294 = vand.u32 %v8529, 4294901760
        %9295 = vmatpush.msra.mxu0 %v9294
        %v9296 = vand.u32 %v8527, 4294901760
        %9297 = vmatpush.msra.mxu0 %v9296
        %v9298 = vand.u32 %v8525, 4294901760
        %9299 = vmatpush.msra.mxu0 %v9298
        %v9300 = vand.u32 %v8523, 4294901760
        %9301 = vmatpush.msra.mxu0 %v9300
        %v9302 = vand.u32 %v8521, 4294901760
        %9303 = vmatpush.msra.mxu0 %v9302
        %v9304 = vand.u32 %v8518, 4294901760
        %v9305 = vsub.f32 %v8518, %v9304
        %v9306 = vand.u32 %v9305, 4294901760
        %v9307 = vsub.f32 %v9305, %v9306
        %v9308 = vand.u32 %v9307, 4294901760
        %9309 = vmatmul.f32.gmra.mxu0 %v9308
        %v9310 = vpop.f32.mrf.mxu0
        %v9311 = vadd.f32 %v8587, %v9310
        %9312 = vdwg.mxu0
        %v9313 = vand.u32 %v8551, 4294901760
        %v9314 = vsub.f32 %v8551, %v9313
        %v9315 = vand.u32 %v9314, 4294901760
        %v9316 = vsub.f32 %v9314, %v9315
        %v9317 = vand.u32 %v9316, 4294901760
        %9318 = vmatpush.msra.mxu0 %v9317
        %v9319 = vand.u32 %v8549, 4294901760
        %v9320 = vsub.f32 %v8549, %v9319
        %v9321 = vand.u32 %v9320, 4294901760
        %v9322 = vsub.f32 %v9320, %v9321
        %v9323 = vand.u32 %v9322, 4294901760
        %9324 = vmatpush.msra.mxu0 %v9323
        %v9325 = vand.u32 %v8547, 4294901760
        %v9326 = vsub.f32 %v8547, %v9325
        %v9327 = vand.u32 %v9326, 4294901760
        %v9328 = vsub.f32 %v9326, %v9327
        %v9329 = vand.u32 %v9328, 4294901760
        %9330 = vmatpush.msra.mxu0 %v9329
        %v9331 = vand.u32 %v8545, 4294901760
        %v9332 = vsub.f32 %v8545, %v9331
        %v9333 = vand.u32 %v9332, 4294901760
        %v9334 = vsub.f32 %v9332, %v9333
        %v9335 = vand.u32 %v9334, 4294901760
        %9336 = vmatpush.msra.mxu0 %v9335
        %v9337 = vand.u32 %v8543, 4294901760
        %v9338 = vsub.f32 %v8543, %v9337
        %v9339 = vand.u32 %v9338, 4294901760
        %v9340 = vsub.f32 %v9338, %v9339
        %v9341 = vand.u32 %v9340, 4294901760
        %9342 = vmatpush.msra.mxu0 %v9341
        %v9343 = vand.u32 %v8541, 4294901760
        %v9344 = vsub.f32 %v8541, %v9343
        %v9345 = vand.u32 %v9344, 4294901760
        %v9346 = vsub.f32 %v9344, %v9345
        %v9347 = vand.u32 %v9346, 4294901760
        %9348 = vmatpush.msra.mxu0 %v9347
        %v9349 = vand.u32 %v8539, 4294901760
        %v9350 = vsub.f32 %v8539, %v9349
        %v9351 = vand.u32 %v9350, 4294901760
        %v9352 = vsub.f32 %v9350, %v9351
        %v9353 = vand.u32 %v9352, 4294901760
        %9354 = vmatpush.msra.mxu0 %v9353
        %v9355 = vand.u32 %v8537, 4294901760
        %v9356 = vsub.f32 %v8537, %v9355
        %v9357 = vand.u32 %v9356, 4294901760
        %v9358 = vsub.f32 %v9356, %v9357
        %v9359 = vand.u32 %v9358, 4294901760
        %9360 = vmatpush.msra.mxu0 %v9359
        %v9361 = vand.u32 %v8535, 4294901760
        %v9362 = vsub.f32 %v8535, %v9361
        %v9363 = vand.u32 %v9362, 4294901760
        %v9364 = vsub.f32 %v9362, %v9363
        %v9365 = vand.u32 %v9364, 4294901760
        %9366 = vmatpush.msra.mxu0 %v9365
        %v9367 = vand.u32 %v8533, 4294901760
        %v9368 = vsub.f32 %v8533, %v9367
        %v9369 = vand.u32 %v9368, 4294901760
        %v9370 = vsub.f32 %v9368, %v9369
        %v9371 = vand.u32 %v9370, 4294901760
        %9372 = vmatpush.msra.mxu0 %v9371
        %v9373 = vand.u32 %v8531, 4294901760
        %v9374 = vsub.f32 %v8531, %v9373
        %v9375 = vand.u32 %v9374, 4294901760
        %v9376 = vsub.f32 %v9374, %v9375
        %v9377 = vand.u32 %v9376, 4294901760
        %9378 = vmatpush.msra.mxu0 %v9377
        %v9379 = vand.u32 %v8529, 4294901760
        %v9380 = vsub.f32 %v8529, %v9379
        %v9381 = vand.u32 %v9380, 4294901760
        %v9382 = vsub.f32 %v9380, %v9381
        %v9383 = vand.u32 %v9382, 4294901760
        %9384 = vmatpush.msra.mxu0 %v9383
        %v9385 = vand.u32 %v8527, 4294901760
        %v9386 = vsub.f32 %v8527, %v9385
        %v9387 = vand.u32 %v9386, 4294901760
        %v9388 = vsub.f32 %v9386, %v9387
        %v9389 = vand.u32 %v9388, 4294901760
        %9390 = vmatpush.msra.mxu0 %v9389
        %v9391 = vand.u32 %v8525, 4294901760
        %v9392 = vsub.f32 %v8525, %v9391
        %v9393 = vand.u32 %v9392, 4294901760
        %v9394 = vsub.f32 %v9392, %v9393
        %v9395 = vand.u32 %v9394, 4294901760
        %9396 = vmatpush.msra.mxu0 %v9395
        %v9397 = vand.u32 %v8523, 4294901760
        %v9398 = vsub.f32 %v8523, %v9397
        %v9399 = vand.u32 %v9398, 4294901760
        %v9400 = vsub.f32 %v9398, %v9399
        %v9401 = vand.u32 %v9400, 4294901760
        %9402 = vmatpush.msra.mxu0 %v9401
        %v9403 = vand.u32 %v8521, 4294901760
        %v9404 = vsub.f32 %v8521, %v9403
        %v9405 = vand.u32 %v9404, 4294901760
        %v9406 = vsub.f32 %v9404, %v9405
        %v9407 = vand.u32 %v9406, 4294901760
        %9408 = vmatpush.msra.mxu0 %v9407
        %v9409 = vand.u32 %v8518, 4294901760
        %9410 = vmatmul.f32.gmra.mxu0 %v9409
        %v9411 = vpop.f32.mrf.mxu0
        %v9412 = vadd.f32 %v9311, %v9411
        %9413 = vdwg.mxu0
        %v9414 = vand.u32 %v8551, 4294901760
        %v9415 = vsub.f32 %v8551, %v9414
        %9416 = vmatpush.msra.mxu0 %v9415
        %v9417 = vand.u32 %v8549, 4294901760
        %v9418 = vsub.f32 %v8549, %v9417
        %9419 = vmatpush.msra.mxu0 %v9418
        %v9420 = vand.u32 %v8547, 4294901760
        %v9421 = vsub.f32 %v8547, %v9420
        %9422 = vmatpush.msra.mxu0 %v9421
        %v9423 = vand.u32 %v8545, 4294901760
        %v9424 = vsub.f32 %v8545, %v9423
        %9425 = vmatpush.msra.mxu0 %v9424
        %v9426 = vand.u32 %v8543, 4294901760
        %v9427 = vsub.f32 %v8543, %v9426
        %9428 = vmatpush.msra.mxu0 %v9427
        %v9429 = vand.u32 %v8541, 4294901760
        %v9430 = vsub.f32 %v8541, %v9429
        %9431 = vmatpush.msra.mxu0 %v9430
        %v9432 = vand.u32 %v8539, 4294901760
        %v9433 = vsub.f32 %v8539, %v9432
        %9434 = vmatpush.msra.mxu0 %v9433
        %v9435 = vand.u32 %v8537, 4294901760
        %v9436 = vsub.f32 %v8537, %v9435
        %9437 = vmatpush.msra.mxu0 %v9436
        %v9438 = vand.u32 %v8535, 4294901760
        %v9439 = vsub.f32 %v8535, %v9438
        %9440 = vmatpush.msra.mxu0 %v9439
        %v9441 = vand.u32 %v8533, 4294901760
        %v9442 = vsub.f32 %v8533, %v9441
        %9443 = vmatpush.msra.mxu0 %v9442
        %v9444 = vand.u32 %v8531, 4294901760
        %v9445 = vsub.f32 %v8531, %v9444
        %9446 = vmatpush.msra.mxu0 %v9445
        %v9447 = vand.u32 %v8529, 4294901760
        %v9448 = vsub.f32 %v8529, %v9447
        %9449 = vmatpush.msra.mxu0 %v9448
        %v9450 = vand.u32 %v8527, 4294901760
        %v9451 = vsub.f32 %v8527, %v9450
        %9452 = vmatpush.msra.mxu0 %v9451
        %v9453 = vand.u32 %v8525, 4294901760
        %v9454 = vsub.f32 %v8525, %v9453
        %9455 = vmatpush.msra.mxu0 %v9454
        %v9456 = vand.u32 %v8523, 4294901760
        %v9457 = vsub.f32 %v8523, %v9456
        %9458 = vmatpush.msra.mxu0 %v9457
        %v9459 = vand.u32 %v8521, 4294901760
        %v9460 = vsub.f32 %v8521, %v9459
        %9461 = vmatpush.msra.mxu0 %v9460
        %v9462 = vand.u32 %v8518, 4294901760
        %v9463 = vsub.f32 %v8518, %v9462
        %9464 = vmatmul.f32.gmra.mxu0 %v9463
        %v9465 = vpop.f32.mrf.mxu0
        %v9466 = vadd.f32 %v9412, %v9465
        %9467 = vdwg.mxu0
        %v9468 = vand.u32 %v8551, 4294901760
        %9469 = vmatpush.msra.mxu0 %v9468
        %v9470 = vand.u32 %v8549, 4294901760
        %9471 = vmatpush.msra.mxu0 %v9470
        %v9472 = vand.u32 %v8547, 4294901760
        %9473 = vmatpush.msra.mxu0 %v9472
        %v9474 = vand.u32 %v8545, 4294901760
        %9475 = vmatpush.msra.mxu0 %v9474
        %v9476 = vand.u32 %v8543, 4294901760
        %9477 = vmatpush.msra.mxu0 %v9476
        %v9478 = vand.u32 %v8541, 4294901760
        %9479 = vmatpush.msra.mxu0 %v9478
        %v9480 = vand.u32 %v8539, 4294901760
        %9481 = vmatpush.msra.mxu0 %v9480
        %v9482 = vand.u32 %v8537, 4294901760
        %9483 = vmatpush.msra.mxu0 %v9482
        %v9484 = vand.u32 %v8535, 4294901760
        %9485 = vmatpush.msra.mxu0 %v9484
        %v9486 = vand.u32 %v8533, 4294901760
        %9487 = vmatpush.msra.mxu0 %v9486
        %v9488 = vand.u32 %v8531, 4294901760
        %9489 = vmatpush.msra.mxu0 %v9488
        %v9490 = vand.u32 %v8529, 4294901760
        %9491 = vmatpush.msra.mxu0 %v9490
        %v9492 = vand.u32 %v8527, 4294901760
        %9493 = vmatpush.msra.mxu0 %v9492
        %v9494 = vand.u32 %v8525, 4294901760
        %9495 = vmatpush.msra.mxu0 %v9494
        %v9496 = vand.u32 %v8523, 4294901760
        %9497 = vmatpush.msra.mxu0 %v9496
        %v9498 = vand.u32 %v8521, 4294901760
        %9499 = vmatpush.msra.mxu0 %v9498
        %v9500 = vand.u32 %v8518, 4294901760
        %v9501 = vsub.f32 %v8518, %v9500
        %v9502 = vand.u32 %v9501, 4294901760
        %9503 = vmatmul.f32.gmra.mxu0 %v9502
        %v9504 = vpop.f32.mrf.mxu0
        %v9505 = vadd.f32 %v9466, %v9504
        %9506 = vdwg.mxu0
        %v9507 = vand.u32 %v8551, 4294901760
        %v9508 = vsub.f32 %v8551, %v9507
        %v9509 = vand.u32 %v9508, 4294901760
        %9510 = vmatpush.msra.mxu0 %v9509
        %v9511 = vand.u32 %v8549, 4294901760
        %v9512 = vsub.f32 %v8549, %v9511
        %v9513 = vand.u32 %v9512, 4294901760
        %9514 = vmatpush.msra.mxu0 %v9513
        %v9515 = vand.u32 %v8547, 4294901760
        %v9516 = vsub.f32 %v8547, %v9515
        %v9517 = vand.u32 %v9516, 4294901760
        %9518 = vmatpush.msra.mxu0 %v9517
        %v9519 = vand.u32 %v8545, 4294901760
        %v9520 = vsub.f32 %v8545, %v9519
        %v9521 = vand.u32 %v9520, 4294901760
        %9522 = vmatpush.msra.mxu0 %v9521
        %v9523 = vand.u32 %v8543, 4294901760
        %v9524 = vsub.f32 %v8543, %v9523
        %v9525 = vand.u32 %v9524, 4294901760
        %9526 = vmatpush.msra.mxu0 %v9525
        %v9527 = vand.u32 %v8541, 4294901760
        %v9528 = vsub.f32 %v8541, %v9527
        %v9529 = vand.u32 %v9528, 4294901760
        %9530 = vmatpush.msra.mxu0 %v9529
        %v9531 = vand.u32 %v8539, 4294901760
        %v9532 = vsub.f32 %v8539, %v9531
        %v9533 = vand.u32 %v9532, 4294901760
        %9534 = vmatpush.msra.mxu0 %v9533
        %v9535 = vand.u32 %v8537, 4294901760
        %v9536 = vsub.f32 %v8537, %v9535
        %v9537 = vand.u32 %v9536, 4294901760
        %9538 = vmatpush.msra.mxu0 %v9537
        %v9539 = vand.u32 %v8535, 4294901760
        %v9540 = vsub.f32 %v8535, %v9539
        %v9541 = vand.u32 %v9540, 4294901760
        %9542 = vmatpush.msra.mxu0 %v9541
        %v9543 = vand.u32 %v8533, 4294901760
        %v9544 = vsub.f32 %v8533, %v9543
        %v9545 = vand.u32 %v9544, 4294901760
        %9546 = vmatpush.msra.mxu0 %v9545
        %v9547 = vand.u32 %v8531, 4294901760
        %v9548 = vsub.f32 %v8531, %v9547
        %v9549 = vand.u32 %v9548, 4294901760
        %9550 = vmatpush.msra.mxu0 %v9549
        %v9551 = vand.u32 %v8529, 4294901760
        %v9552 = vsub.f32 %v8529, %v9551
        %v9553 = vand.u32 %v9552, 4294901760
        %9554 = vmatpush.msra.mxu0 %v9553
        %v9555 = vand.u32 %v8527, 4294901760
        %v9556 = vsub.f32 %v8527, %v9555
        %v9557 = vand.u32 %v9556, 4294901760
        %9558 = vmatpush.msra.mxu0 %v9557
        %v9559 = vand.u32 %v8525, 4294901760
        %v9560 = vsub.f32 %v8525, %v9559
        %v9561 = vand.u32 %v9560, 4294901760
        %9562 = vmatpush.msra.mxu0 %v9561
        %v9563 = vand.u32 %v8523, 4294901760
        %v9564 = vsub.f32 %v8523, %v9563
        %v9565 = vand.u32 %v9564, 4294901760
        %9566 = vmatpush.msra.mxu0 %v9565
        %v9567 = vand.u32 %v8521, 4294901760
        %v9568 = vsub.f32 %v8521, %v9567
        %v9569 = vand.u32 %v9568, 4294901760
        %9570 = vmatpush.msra.mxu0 %v9569
        %v9571 = vand.u32 %v8518, 4294901760
        %9572 = vmatmul.f32.gmra.mxu0 %v9571
        %v9573 = vpop.f32.mrf.mxu0
        %v9574 = vadd.f32 %v9505, %v9573
        %9575 = vdwg.mxu0
        %v9576 = vand.u32 %v8551, 4294901760
        %9577 = vmatpush.msra.mxu0 %v9576
        %v9578 = vand.u32 %v8549, 4294901760
        %9579 = vmatpush.msra.mxu0 %v9578
        %v9580 = vand.u32 %v8547, 4294901760
        %9581 = vmatpush.msra.mxu0 %v9580
        %v9582 = vand.u32 %v8545, 4294901760
        %9583 = vmatpush.msra.mxu0 %v9582
        %v9584 = vand.u32 %v8543, 4294901760
        %9585 = vmatpush.msra.mxu0 %v9584
        %v9586 = vand.u32 %v8541, 4294901760
        %9587 = vmatpush.msra.mxu0 %v9586
        %v9588 = vand.u32 %v8539, 4294901760
        %9589 = vmatpush.msra.mxu0 %v9588
        %v9590 = vand.u32 %v8537, 4294901760
        %9591 = vmatpush.msra.mxu0 %v9590
        %v9592 = vand.u32 %v8535, 4294901760
        %9593 = vmatpush.msra.mxu0 %v9592
        %v9594 = vand.u32 %v8533, 4294901760
        %9595 = vmatpush.msra.mxu0 %v9594
        %v9596 = vand.u32 %v8531, 4294901760
        %9597 = vmatpush.msra.mxu0 %v9596
        %v9598 = vand.u32 %v8529, 4294901760
        %9599 = vmatpush.msra.mxu0 %v9598
        %v9600 = vand.u32 %v8527, 4294901760
        %9601 = vmatpush.msra.mxu0 %v9600
        %v9602 = vand.u32 %v8525, 4294901760
        %9603 = vmatpush.msra.mxu0 %v9602
        %v9604 = vand.u32 %v8523, 4294901760
        %9605 = vmatpush.msra.mxu0 %v9604
        %v9606 = vand.u32 %v8521, 4294901760
        %9607 = vmatpush.msra.mxu0 %v9606
        %v9608 = vand.u32 %v8518, 4294901760
        %9609 = vmatmul.f32.gmra.mxu0 %v9608
        %v9610 = vpop.f32.mrf.mxu0
        %v9611 = vadd.f32 %v9574, %v9610
        %9612 = vdwg.mxu0
        %v9613 = vand.u32 %v8583, 4294901760
        %9614 = vmatpush.msra.mxu0 %v9613
        %v9615 = vand.u32 %v8581, 4294901760
        %9616 = vmatpush.msra.mxu0 %v9615
        %v9617 = vand.u32 %v8579, 4294901760
        %9618 = vmatpush.msra.mxu0 %v9617
        %v9619 = vand.u32 %v8577, 4294901760
        %9620 = vmatpush.msra.mxu0 %v9619
        %v9621 = vand.u32 %v8575, 4294901760
        %9622 = vmatpush.msra.mxu0 %v9621
        %v9623 = vand.u32 %v8573, 4294901760
        %9624 = vmatpush.msra.mxu0 %v9623
        %v9625 = vand.u32 %v8571, 4294901760
        %9626 = vmatpush.msra.mxu0 %v9625
        %v9627 = vand.u32 %v8569, 4294901760
        %9628 = vmatpush.msra.mxu0 %v9627
        %v9629 = vand.u32 %v8567, 4294901760
        %9630 = vmatpush.msra.mxu0 %v9629
        %v9631 = vand.u32 %v8565, 4294901760
        %9632 = vmatpush.msra.mxu0 %v9631
        %v9633 = vand.u32 %v8563, 4294901760
        %9634 = vmatpush.msra.mxu0 %v9633
        %v9635 = vand.u32 %v8561, 4294901760
        %9636 = vmatpush.msra.mxu0 %v9635
        %v9637 = vand.u32 %v8559, 4294901760
        %9638 = vmatpush.msra.mxu0 %v9637
        %v9639 = vand.u32 %v8557, 4294901760
        %9640 = vmatpush.msra.mxu0 %v9639
        %v9641 = vand.u32 %v8555, 4294901760
        %9642 = vmatpush.msra.mxu0 %v9641
        %v9643 = vand.u32 %v8553, 4294901760
        %9644 = vmatpush.msra.mxu0 %v9643
        %v9645 = vand.u32 %v8519, 4294901760
        %v9646 = vsub.f32 %v8519, %v9645
        %v9647 = vand.u32 %v9646, 4294901760
        %v9648 = vsub.f32 %v9646, %v9647
        %v9649 = vand.u32 %v9648, 4294901760
        %9650 = vmatmul.f32.gmra.mxu0 %v9649
        %v9651 = vpop.f32.mrf.mxu0
        %v9652 = vadd.f32 %v9611, %v9651
        %9653 = vdwg.mxu0
        %v9654 = vand.u32 %v8583, 4294901760
        %v9655 = vsub.f32 %v8583, %v9654
        %v9656 = vand.u32 %v9655, 4294901760
        %v9657 = vsub.f32 %v9655, %v9656
        %v9658 = vand.u32 %v9657, 4294901760
        %9659 = vmatpush.msra.mxu0 %v9658
        %v9660 = vand.u32 %v8581, 4294901760
        %v9661 = vsub.f32 %v8581, %v9660
        %v9662 = vand.u32 %v9661, 4294901760
        %v9663 = vsub.f32 %v9661, %v9662
        %v9664 = vand.u32 %v9663, 4294901760
        %9665 = vmatpush.msra.mxu0 %v9664
        %v9666 = vand.u32 %v8579, 4294901760
        %v9667 = vsub.f32 %v8579, %v9666
        %v9668 = vand.u32 %v9667, 4294901760
        %v9669 = vsub.f32 %v9667, %v9668
        %v9670 = vand.u32 %v9669, 4294901760
        %9671 = vmatpush.msra.mxu0 %v9670
        %v9672 = vand.u32 %v8577, 4294901760
        %v9673 = vsub.f32 %v8577, %v9672
        %v9674 = vand.u32 %v9673, 4294901760
        %v9675 = vsub.f32 %v9673, %v9674
        %v9676 = vand.u32 %v9675, 4294901760
        %9677 = vmatpush.msra.mxu0 %v9676
        %v9678 = vand.u32 %v8575, 4294901760
        %v9679 = vsub.f32 %v8575, %v9678
        %v9680 = vand.u32 %v9679, 4294901760
        %v9681 = vsub.f32 %v9679, %v9680
        %v9682 = vand.u32 %v9681, 4294901760
        %9683 = vmatpush.msra.mxu0 %v9682
        %v9684 = vand.u32 %v8573, 4294901760
        %v9685 = vsub.f32 %v8573, %v9684
        %v9686 = vand.u32 %v9685, 4294901760
        %v9687 = vsub.f32 %v9685, %v9686
        %v9688 = vand.u32 %v9687, 4294901760
        %9689 = vmatpush.msra.mxu0 %v9688
        %v9690 = vand.u32 %v8571, 4294901760
        %v9691 = vsub.f32 %v8571, %v9690
        %v9692 = vand.u32 %v9691, 4294901760
        %v9693 = vsub.f32 %v9691, %v9692
        %v9694 = vand.u32 %v9693, 4294901760
        %9695 = vmatpush.msra.mxu0 %v9694
        %v9696 = vand.u32 %v8569, 4294901760
        %v9697 = vsub.f32 %v8569, %v9696
        %v9698 = vand.u32 %v9697, 4294901760
        %v9699 = vsub.f32 %v9697, %v9698
        %v9700 = vand.u32 %v9699, 4294901760
        %9701 = vmatpush.msra.mxu0 %v9700
        %v9702 = vand.u32 %v8567, 4294901760
        %v9703 = vsub.f32 %v8567, %v9702
        %v9704 = vand.u32 %v9703, 4294901760
        %v9705 = vsub.f32 %v9703, %v9704
        %v9706 = vand.u32 %v9705, 4294901760
        %9707 = vmatpush.msra.mxu0 %v9706
        %v9708 = vand.u32 %v8565, 4294901760
        %v9709 = vsub.f32 %v8565, %v9708
        %v9710 = vand.u32 %v9709, 4294901760
        %v9711 = vsub.f32 %v9709, %v9710
        %v9712 = vand.u32 %v9711, 4294901760
        %9713 = vmatpush.msra.mxu0 %v9712
        %v9714 = vand.u32 %v8563, 4294901760
        %v9715 = vsub.f32 %v8563, %v9714
        %v9716 = vand.u32 %v9715, 4294901760
        %v9717 = vsub.f32 %v9715, %v9716
        %v9718 = vand.u32 %v9717, 4294901760
        %9719 = vmatpush.msra.mxu0 %v9718
        %v9720 = vand.u32 %v8561, 4294901760
        %v9721 = vsub.f32 %v8561, %v9720
        %v9722 = vand.u32 %v9721, 4294901760
        %v9723 = vsub.f32 %v9721, %v9722
        %v9724 = vand.u32 %v9723, 4294901760
        %9725 = vmatpush.msra.mxu0 %v9724
        %v9726 = vand.u32 %v8559, 4294901760
        %v9727 = vsub.f32 %v8559, %v9726
        %v9728 = vand.u32 %v9727, 4294901760
        %v9729 = vsub.f32 %v9727, %v9728
        %v9730 = vand.u32 %v9729, 4294901760
        %9731 = vmatpush.msra.mxu0 %v9730
        %v9732 = vand.u32 %v8557, 4294901760
        %v9733 = vsub.f32 %v8557, %v9732
        %v9734 = vand.u32 %v9733, 4294901760
        %v9735 = vsub.f32 %v9733, %v9734
        %v9736 = vand.u32 %v9735, 4294901760
        %9737 = vmatpush.msra.mxu0 %v9736
        %v9738 = vand.u32 %v8555, 4294901760
        %v9739 = vsub.f32 %v8555, %v9738
        %v9740 = vand.u32 %v9739, 4294901760
        %v9741 = vsub.f32 %v9739, %v9740
        %v9742 = vand.u32 %v9741, 4294901760
        %9743 = vmatpush.msra.mxu0 %v9742
        %v9744 = vand.u32 %v8553, 4294901760
        %v9745 = vsub.f32 %v8553, %v9744
        %v9746 = vand.u32 %v9745, 4294901760
        %v9747 = vsub.f32 %v9745, %v9746
        %v9748 = vand.u32 %v9747, 4294901760
        %9749 = vmatpush.msra.mxu0 %v9748
        %v9750 = vand.u32 %v8519, 4294901760
        %9751 = vmatmul.f32.gmra.mxu0 %v9750
        %v9752 = vpop.f32.mrf.mxu0
        %v9753 = vadd.f32 %v9652, %v9752
        %9754 = vdwg.mxu0
        %v9755 = vand.u32 %v8583, 4294901760
        %v9756 = vsub.f32 %v8583, %v9755
        %9757 = vmatpush.msra.mxu0 %v9756
        %v9758 = vand.u32 %v8581, 4294901760
        %v9759 = vsub.f32 %v8581, %v9758
        %9760 = vmatpush.msra.mxu0 %v9759
        %v9761 = vand.u32 %v8579, 4294901760
        %v9762 = vsub.f32 %v8579, %v9761
        %9763 = vmatpush.msra.mxu0 %v9762
        %v9764 = vand.u32 %v8577, 4294901760
        %v9765 = vsub.f32 %v8577, %v9764
        %9766 = vmatpush.msra.mxu0 %v9765
        %v9767 = vand.u32 %v8575, 4294901760
        %v9768 = vsub.f32 %v8575, %v9767
        %9769 = vmatpush.msra.mxu0 %v9768
        %v9770 = vand.u32 %v8573, 4294901760
        %v9771 = vsub.f32 %v8573, %v9770
        %9772 = vmatpush.msra.mxu0 %v9771
        %v9773 = vand.u32 %v8571, 4294901760
        %v9774 = vsub.f32 %v8571, %v9773
        %9775 = vmatpush.msra.mxu0 %v9774
        %v9776 = vand.u32 %v8569, 4294901760
        %v9777 = vsub.f32 %v8569, %v9776
        %9778 = vmatpush.msra.mxu0 %v9777
        %v9779 = vand.u32 %v8567, 4294901760
        %v9780 = vsub.f32 %v8567, %v9779
        %9781 = vmatpush.msra.mxu0 %v9780
        %v9782 = vand.u32 %v8565, 4294901760
        %v9783 = vsub.f32 %v8565, %v9782
        %9784 = vmatpush.msra.mxu0 %v9783
        %v9785 = vand.u32 %v8563, 4294901760
        %v9786 = vsub.f32 %v8563, %v9785
        %9787 = vmatpush.msra.mxu0 %v9786
        %v9788 = vand.u32 %v8561, 4294901760
        %v9789 = vsub.f32 %v8561, %v9788
        %9790 = vmatpush.msra.mxu0 %v9789
        %v9791 = vand.u32 %v8559, 4294901760
        %v9792 = vsub.f32 %v8559, %v9791
        %9793 = vmatpush.msra.mxu0 %v9792
        %v9794 = vand.u32 %v8557, 4294901760
        %v9795 = vsub.f32 %v8557, %v9794
        %9796 = vmatpush.msra.mxu0 %v9795
        %v9797 = vand.u32 %v8555, 4294901760
        %v9798 = vsub.f32 %v8555, %v9797
        %9799 = vmatpush.msra.mxu0 %v9798
        %v9800 = vand.u32 %v8553, 4294901760
        %v9801 = vsub.f32 %v8553, %v9800
        %9802 = vmatpush.msra.mxu0 %v9801
        %v9803 = vand.u32 %v8519, 4294901760
        %v9804 = vsub.f32 %v8519, %v9803
        %9805 = vmatmul.f32.gmra.mxu0 %v9804
        %v9806 = vpop.f32.mrf.mxu0
        %v9807 = vadd.f32 %v9753, %v9806
        %9808 = vdwg.mxu0
        %v9809 = vand.u32 %v8583, 4294901760
        %9810 = vmatpush.msra.mxu0 %v9809
        %v9811 = vand.u32 %v8581, 4294901760
        %9812 = vmatpush.msra.mxu0 %v9811
        %v9813 = vand.u32 %v8579, 4294901760
        %9814 = vmatpush.msra.mxu0 %v9813
        %v9815 = vand.u32 %v8577, 4294901760
        %9816 = vmatpush.msra.mxu0 %v9815
        %v9817 = vand.u32 %v8575, 4294901760
        %9818 = vmatpush.msra.mxu0 %v9817
        %v9819 = vand.u32 %v8573, 4294901760
        %9820 = vmatpush.msra.mxu0 %v9819
        %v9821 = vand.u32 %v8571, 4294901760
        %9822 = vmatpush.msra.mxu0 %v9821
        %v9823 = vand.u32 %v8569, 4294901760
        %9824 = vmatpush.msra.mxu0 %v9823
        %v9825 = vand.u32 %v8567, 4294901760
        %9826 = vmatpush.msra.mxu0 %v9825
        %v9827 = vand.u32 %v8565, 4294901760
        %9828 = vmatpush.msra.mxu0 %v9827
        %v9829 = vand.u32 %v8563, 4294901760
        %9830 = vmatpush.msra.mxu0 %v9829
        %v9831 = vand.u32 %v8561, 4294901760
        %9832 = vmatpush.msra.mxu0 %v9831
        %v9833 = vand.u32 %v8559, 4294901760
        %9834 = vmatpush.msra.mxu0 %v9833
        %v9835 = vand.u32 %v8557, 4294901760
        %9836 = vmatpush.msra.mxu0 %v9835
        %v9837 = vand.u32 %v8555, 4294901760
        %9838 = vmatpush.msra.mxu0 %v9837
        %v9839 = vand.u32 %v8553, 4294901760
        %9840 = vmatpush.msra.mxu0 %v9839
        %v9841 = vand.u32 %v8519, 4294901760
        %v9842 = vsub.f32 %v8519, %v9841
        %v9843 = vand.u32 %v9842, 4294901760
        %9844 = vmatmul.f32.gmra.mxu0 %v9843
        %v9845 = vpop.f32.mrf.mxu0
        %v9846 = vadd.f32 %v9807, %v9845
        %9847 = vdwg.mxu0
        %v9848 = vand.u32 %v8583, 4294901760
        %v9849 = vsub.f32 %v8583, %v9848
        %v9850 = vand.u32 %v9849, 4294901760
        %9851 = vmatpush.msra.mxu0 %v9850
        %v9852 = vand.u32 %v8581, 4294901760
        %v9853 = vsub.f32 %v8581, %v9852
        %v9854 = vand.u32 %v9853, 4294901760
        %9855 = vmatpush.msra.mxu0 %v9854
        %v9856 = vand.u32 %v8579, 4294901760
        %v9857 = vsub.f32 %v8579, %v9856
        %v9858 = vand.u32 %v9857, 4294901760
        %9859 = vmatpush.msra.mxu0 %v9858
        %v9860 = vand.u32 %v8577, 4294901760
        %v9861 = vsub.f32 %v8577, %v9860
        %v9862 = vand.u32 %v9861, 4294901760
        %9863 = vmatpush.msra.mxu0 %v9862
        %v9864 = vand.u32 %v8575, 4294901760
        %v9865 = vsub.f32 %v8575, %v9864
        %v9866 = vand.u32 %v9865, 4294901760
        %9867 = vmatpush.msra.mxu0 %v9866
        %v9868 = vand.u32 %v8573, 4294901760
        %v9869 = vsub.f32 %v8573, %v9868
        %v9870 = vand.u32 %v9869, 4294901760
        %9871 = vmatpush.msra.mxu0 %v9870
        %v9872 = vand.u32 %v8571, 4294901760
        %v9873 = vsub.f32 %v8571, %v9872
        %v9874 = vand.u32 %v9873, 4294901760
        %9875 = vmatpush.msra.mxu0 %v9874
        %v9876 = vand.u32 %v8569, 4294901760
        %v9877 = vsub.f32 %v8569, %v9876
        %v9878 = vand.u32 %v9877, 4294901760
        %9879 = vmatpush.msra.mxu0 %v9878
        %v9880 = vand.u32 %v8567, 4294901760
        %v9881 = vsub.f32 %v8567, %v9880
        %v9882 = vand.u32 %v9881, 4294901760
        %9883 = vmatpush.msra.mxu0 %v9882
        %v9884 = vand.u32 %v8565, 4294901760
        %v9885 = vsub.f32 %v8565, %v9884
        %v9886 = vand.u32 %v9885, 4294901760
        %9887 = vmatpush.msra.mxu0 %v9886
        %v9888 = vand.u32 %v8563, 4294901760
        %v9889 = vsub.f32 %v8563, %v9888
        %v9890 = vand.u32 %v9889, 4294901760
        %9891 = vmatpush.msra.mxu0 %v9890
        %v9892 = vand.u32 %v8561, 4294901760
        %v9893 = vsub.f32 %v8561, %v9892
        %v9894 = vand.u32 %v9893, 4294901760
        %9895 = vmatpush.msra.mxu0 %v9894
        %v9896 = vand.u32 %v8559, 4294901760
        %v9897 = vsub.f32 %v8559, %v9896
        %v9898 = vand.u32 %v9897, 4294901760
        %9899 = vmatpush.msra.mxu0 %v9898
        %v9900 = vand.u32 %v8557, 4294901760
        %v9901 = vsub.f32 %v8557, %v9900
        %v9902 = vand.u32 %v9901, 4294901760
        %9903 = vmatpush.msra.mxu0 %v9902
        %v9904 = vand.u32 %v8555, 4294901760
        %v9905 = vsub.f32 %v8555, %v9904
        %v9906 = vand.u32 %v9905, 4294901760
        %9907 = vmatpush.msra.mxu0 %v9906
        %v9908 = vand.u32 %v8553, 4294901760
        %v9909 = vsub.f32 %v8553, %v9908
        %v9910 = vand.u32 %v9909, 4294901760
        %9911 = vmatpush.msra.mxu0 %v9910
        %v9912 = vand.u32 %v8519, 4294901760
        %9913 = vmatmul.f32.gmra.mxu0 %v9912
        %v9914 = vpop.f32.mrf.mxu0
        %v9915 = vadd.f32 %v9846, %v9914
        %9916 = vdwg.mxu0
        %v9917 = vand.u32 %v8583, 4294901760
        %9918 = vmatpush.msra.mxu0 %v9917
        %v9919 = vand.u32 %v8581, 4294901760
        %9920 = vmatpush.msra.mxu0 %v9919
        %v9921 = vand.u32 %v8579, 4294901760
        %9922 = vmatpush.msra.mxu0 %v9921
        %v9923 = vand.u32 %v8577, 4294901760
        %9924 = vmatpush.msra.mxu0 %v9923
        %v9925 = vand.u32 %v8575, 4294901760
        %9926 = vmatpush.msra.mxu0 %v9925
        %v9927 = vand.u32 %v8573, 4294901760
        %9928 = vmatpush.msra.mxu0 %v9927
        %v9929 = vand.u32 %v8571, 4294901760
        %9930 = vmatpush.msra.mxu0 %v9929
        %v9931 = vand.u32 %v8569, 4294901760
        %9932 = vmatpush.msra.mxu0 %v9931
        %v9933 = vand.u32 %v8567, 4294901760
        %9934 = vmatpush.msra.mxu0 %v9933
        %v9935 = vand.u32 %v8565, 4294901760
        %9936 = vmatpush.msra.mxu0 %v9935
        %v9937 = vand.u32 %v8563, 4294901760
        %9938 = vmatpush.msra.mxu0 %v9937
        %v9939 = vand.u32 %v8561, 4294901760
        %9940 = vmatpush.msra.mxu0 %v9939
        %v9941 = vand.u32 %v8559, 4294901760
        %9942 = vmatpush.msra.mxu0 %v9941
        %v9943 = vand.u32 %v8557, 4294901760
        %9944 = vmatpush.msra.mxu0 %v9943
        %v9945 = vand.u32 %v8555, 4294901760
        %9946 = vmatpush.msra.mxu0 %v9945
        %v9947 = vand.u32 %v8553, 4294901760
        %9948 = vmatpush.msra.mxu0 %v9947
        %v9949 = vand.u32 %v8519, 4294901760
        %9950 = vmatmul.f32.gmra.mxu0 %v9949
        %v9951 = vpop.f32.mrf.mxu0
        %v9952 = vadd.f32 %v9915, %v9951
        %9953 = vdwg.mxu0
        %v9954 = vadd.f32 %v7025, %v9270
        %v9955 = vadd.f32 %v7026, %v9952
        %9956 = vst [vmem:[%s613] sm:$0xff] %v9954
        %9957 = vst [vmem:[%s613 + $0x8] sm:$0xff] %v9955
        %s9958 = sand.u32 %s342, 1
        %s9959 = scalar_lea.sflag [#allocation4], %s9958
        %s9960 = sand.u32 %s342, 1
        %s9961 = smul.addr %s9960, 16
        %s9962 = scalar_lea.vmem [#allocation17], %s9961
        // Predicated region
        $region113: #{tpu_custom_call.1} parent=75 // pred_check
          %p9963 = pneg %p352
        $region114: #{tpu_custom_call.1} parent=75 // pred_check_branch
          %9965 = sbr.rel (%p9963) target = $region116
        $region115: #{tpu_custom_call.1} parent=75 // pred_region
          %9967 = vsyncadd %s9959, 0
          %s9968 = smul.addr %s35, 2
          %s9969 = smul.addr %s9968, 8
          %s9970 = scalar_lea.hbm %s14, %s9969
          %s9972 = sshll.u32 %s9962, 4
          %s9973 = int_to_ptr.vmem [resolvable:$true] %s9972
          %s9974 = sshll.u32 %s9970, 4
          %s9975 = int_to_ptr.hbm [resolvable:$true] %s9974
          %9977 = dma.vmem_to_hbm [thread:$0]  %s9973, 256, %s9975, %s9959
        $region116: #{tpu_custom_call.1} parent=75 // pred_fallthru
          _
      $region76: #{tpu_custom_call.1} parent=5 // pred_fallthru
        _
      %p9978 = scmp.le.s32.totalorder 2, %s30
      // Predicated region
      $region117: #{tpu_custom_call.1} parent=5 // pred_check
        %p9979 = pneg %p9978
      $region118: #{tpu_custom_call.1} parent=5 // pred_check_branch
        %9981 = sbr.rel (%p9979) target = $region120
      $region119: #{tpu_custom_call.1} parent=5 // pred_region
        %s9982 = ssub.s32 %s30, 2
        // Predicated region
        $region121: #{tpu_custom_call.1} parent=119 // pred_check
          %p9983 = pneg %p358
        $region122: #{tpu_custom_call.1} parent=119 // pred_check_branch
          %9985 = sbr.rel (%p9983) target = $region124
        $region123: #{tpu_custom_call.1} parent=119 // pred_region
          %s9986 = sand.u32 %s343, 1
          %s9987 = scalar_lea.sflag [#allocation4], %s9986
          %s9988 = sand.u32 %s343, 1
          %s9989 = smul.addr %s9988, 16
          %s9990 = scalar_lea.vmem [#allocation17], %s9989
          %9992 = dma.done %s9987, 256
        $region124: #{tpu_custom_call.1} parent=119 // pred_fallthru
          _
      $region120: #{tpu_custom_call.1} parent=5 // pred_fallthru
        _
    $region6: #{tpu_custom_call.1} parent=1 // loop_footer
      %s34 = sadd.s32 1, %s30
    $region7: #{tpu_custom_call.1} parent=1 // loop_footer_branch
      %29 = sbr.rel target = $region3
    $region8: #{tpu_custom_call.1} parent=1 // loop_exit
      _
    %9993 = vsyncpa [#allocation3], 1
    %s9994 = scalar_lea.sflag [#allocation3], 1
    %9995 = vsyncpa %s9994, 1
    %9996 = vsyncpa [#allocation6], 1
    %9997 = vsyncpa [#allocation9], 1
    %9998 = vsyncpa [#allocation12], 1
    %9999 = vsyncpa [#allocation15], 1
    %10000 = vsyncpa [#allocation4], 1
    %s10001 = scalar_lea.sflag [#allocation4], 1
    %10002 = vsyncpa %s10001, 1

</llo_original>
